<compile_context>
chip_gen: v7x
topology: tpu7x:2x2x1
jax: 0.10.0
libtpu: 0.0.40
codegen_flags: <defaults>
</compile_context>

<pallas_src>
import math
import jax
import jax.numpy as jnp
from jax import lax
from jax.experimental import pallas as pl
from jax.experimental.pallas import tpu as pltpu

# ----------------------------- configuration --------------------------------
VOCAB = 50
VOCAB_PAD = 128      # lane-dense padded vocab width for the output store
HIDDEN = 32          # num_hiddens == query/key/value size == norm_shape == ffn_num_inputs
NUM_HEADS = 4
HEAD_DIM = HIDDEN // NUM_HEADS
FFN_HIDDEN = 64
NUM_LAYERS = 2
BATCH = 2
ENC_STEPS = 8
DEC_STEPS = 8        # num_steps


# ----------------------------- fused Pallas kernel --------------------------
def _transformer_kernel(
    # activations & masks (per-batch blocks)
    x_enc_ref, x_dec_ref, enc_mask_ref, causal_mask_ref, cross_mask_ref,
    # encoder weights, stacked over layers
    e_wqkv_ref, e_wo_ref, e_ln_ref, e_w1_ref, e_b1_ref, e_w2_ref, e_b2_ref,
    # decoder weights, stacked over layers
    d_wqkv1_ref, d_wo1_ref, d_wq2_ref, d_wkv2_ref, d_wo2_ref, d_ln_ref,
    d_w1_ref, d_b1_ref, d_w2_ref, d_b2_ref,
    # final vocab projection (padded to 128 lanes)
    dense_w_ref, dense_b_ref,
    # output
    out_ref,
):
    f32 = jnp.float32
    H, DH, NH = HIDDEN, HEAD_DIM, NUM_HEADS
    inv_sqrt_d = 1.0 / math.sqrt(DH)

    def layer_norm(z, g, b):
        mean = jnp.mean(z, axis=-1, keepdims=True)
        var = jnp.mean(jnp.square(z - mean), axis=-1, keepdims=True)
        return (z - mean) * lax.rsqrt(var + 1e-5) * g + b

    def attention(q, k, v, mask, wo):
        # q: (Tq, H), k/v: (Tk, H), mask: (Tq, Tk) in {0,1}, wo: (H, H)
        # Per-head loop is a static unroll; W_o is fused into the loop as an accumulation,
        # so no head-merge concat/reshape is ever materialized.
        out = jnp.zeros((q.shape[0], H), f32)
        for h in range(NH):
            cs = slice(h * DH, (h + 1) * DH)
            qh, kh, vh = q[:, cs], k[:, cs], v[:, cs]
            s = lax.dot_general(qh, kh, (((1,), (1,)), ((), ())),
                                preferred_element_type=f32) * inv_sqrt_d
            s = jnp.where(mask > 0.5, s, -1e6)          # masked_softmax semantics
            s = s - jnp.max(s, axis=-1, keepdims=True)
            e = jnp.exp(s)
            a = e * pl.reciprocal(jnp.sum(e, axis=-1, keepdims=True), approx=True)
            oh = jnp.dot(a, vh, preferred_element_type=f32)                   # (Tq, DH)
            out = out + jnp.dot(oh, wo[cs, :], preferred_element_type=f32)    # fused W_o
        return out

    def ffn(x, w1, b1, w2, b2):
        hdn = jnp.dot(x, w1, preferred_element_type=f32) + b1
        hdn = jnp.where(hdn > 0, hdn, 0.01 * hdn)       # LeakyReLU(negative_slope=0.01)
        return jnp.dot(hdn, w2, preferred_element_type=f32) + b2

    enc_mask = enc_mask_ref[...]        # (Te, Te)
    causal_mask = causal_mask_ref[...]  # (Td, Td)
    cross_mask = cross_mask_ref[...]    # (Td, Te)

    # ------------------------------ encoder ---------------------------------
    X = x_enc_ref[...]                  # (Te, H)
    for l in range(NUM_LAYERS):
        ln = e_ln_ref[l]                # (4, H): g1, b1, g2, b2
        qkv = jnp.dot(X, e_wqkv_ref[l], preferred_element_type=f32)          # fused QKV
        att = attention(qkv[:, :H], qkv[:, H:2 * H], qkv[:, 2 * H:],
                        enc_mask, e_wo_ref[l])
        X1 = layer_norm(X + att, ln[0:1, :], ln[1:2, :])
        Y = ffn(X1, e_w1_ref[l], e_b1_ref[l], e_w2_ref[l], e_b2_ref[l])
        X = layer_norm(X1 + Y, ln[2:3, :], ln[3:4, :])
    enc_out = X

    # ------------------------------ decoder ---------------------------------
    Yd = x_dec_ref[...]                 # (Td, H)
    for l in range(NUM_LAYERS):
        ln = d_ln_ref[l]                # (6, H): g1, b1, g2, b2, g3, b3
        # masked (causal) self-attention
        qkv = jnp.dot(Yd, d_wqkv1_ref[l], preferred_element_type=f32)
        att1 = attention(qkv[:, :H], qkv[:, H:2 * H], qkv[:, 2 * H:],
                         causal_mask, d_wo1_ref[l])
        X2 = layer_norm(Yd + att1, ln[0:1, :], ln[1:2, :])
        # cross-attention over encoder outputs (fused K/V projection)
        q2 = jnp.dot(X2, d_wq2_ref[l], preferred_element_type=f32)
        kv2 = jnp.dot(enc_out, d_wkv2_ref[l], preferred_element_type=f32)
        att2 = attention(q2, kv2[:, :H], kv2[:, H:], cross_mask, d_wo2_ref[l])
        X3 = layer_norm(X2 + att2, ln[2:3, :], ln[3:4, :])
        # pointwise FFN
        Y3 = ffn(X3, d_w1_ref[l], d_b1_ref[l], d_w2_ref[l], d_b2_ref[l])
        Yd = layer_norm(X3 + Y3, ln[4:5, :], ln[5:6, :])

    # ------------------------ lane-dense vocab projection --------------------
    out_ref[...] = (jnp.dot(Yd, dense_w_ref[...], preferred_element_type=f32)
                    + dense_b_ref[...])


# ----------------------------- BlockSpec helpers ----------------------------
def _full_spec(shape):
    """Whole array resident in VMEM for every grid step."""
    nd = len(shape)

    def imap(b):
        return (0,) * nd

    return pl.BlockSpec(tuple(shape), imap)


def _batch_spec(shape):
    """Per-batch block along the leading axis (squeezed inside the kernel)."""
    nd = len(shape)

    def imap(b):
        return (b,) + (0,) * (nd - 1)

    return pl.BlockSpec((None,) + tuple(shape[1:]), imap)


# ----------------------------- model glue (plain JAX) -----------------------
def position_encoding(T, d):
    pos = jnp.arange(T, dtype=jnp.float32).reshape(-1, 1)
    freq = jnp.power(10000.0, jnp.arange(0, d, 2, dtype=jnp.float32) / d)
    x = pos / freq                                   # (T, d/2)
    p = jnp.zeros((T, d), dtype=jnp.float32)
    p = p.at[:, 0::2].set(jnp.sin(x))
    p = p.at[:, 1::2].set(jnp.cos(x))
    return p                                          # (T, d)


def transformer_forward(params, enc_x, dec_x, enc_valid_lens):
    H = HIDDEN
    B, Te = enc_x.shape
    _, Td = dec_x.shape

    # Embedding lookup + positional encoding stay in plain JAX (gather).
    X = jnp.take(params["enc_emb"], enc_x, axis=0) * math.sqrt(H) + position_encoding(Te, H)[None]
    Y = jnp.take(params["dec_emb"], dec_x, axis=0) * math.sqrt(H) + position_encoding(Td, H)[None]

    # masks (1 = keep, 0 = set score to -1e6), built once in JAX glue
    vl = enc_valid_lens.astype(jnp.float32)
    col = jnp.arange(Te, dtype=jnp.float32)
    key_valid = (col[None, None, :] < vl[:, None, None]).astype(jnp.float32)   # (B, 1, Te)
    enc_self_mask = jnp.broadcast_to(key_valid, (B, Te, Te))
    dec_cross_mask = jnp.broadcast_to(key_valid, (B, Td, Te))
    r = jnp.arange(Td)
    causal_mask = (r[None, :] <= r[:, None]).astype(jnp.float32)               # (Td, Td)

    # pad the vocab projection to a lane-dense 128-wide store
    dense_w = jnp.zeros((H, VOCAB_PAD), jnp.float32).at[:, :VOCAB].set(params["dense_w"])
    dense_b = jnp.zeros((1, VOCAB_PAD), jnp.float32).at[0, :VOCAB].set(params["dense_b"])

    e, d = params["enc"], params["dec"]
    weights = [e["wqkv"], e["wo"], e["ln"], e["w1"], e["b1"], e["w2"], e["b2"],
               d["wqkv1"], d["wo1"], d["wq2"], d["wkv2"], d["wo2"], d["ln"],
               d["w1"], d["b1"], d["w2"], d["b2"],
               dense_w, dense_b]

    inputs = [X, Y, enc_self_mask, causal_mask, dec_cross_mask] + weights
    in_specs = ([_batch_spec(X.shape), _batch_spec(Y.shape), _batch_spec(enc_self_mask.shape),
                 _full_spec(causal_mask.shape), _batch_spec(dec_cross_mask.shape)]
                + [_full_spec(w.shape) for w in weights])

    logits_pad = pl.pallas_call(
        _transformer_kernel,
        out_shape=jax.ShapeDtypeStruct((B, Td, VOCAB_PAD), jnp.float32),
        grid=(B,),
        in_specs=in_specs,
        out_specs=pl.BlockSpec((None, Td, VOCAB_PAD), lambda b: (b, 0, 0)),
        compiler_params=pltpu.CompilerParams(dimension_semantics=("parallel",)),
    )(*inputs)

    return logits_pad[:, :, :VOCAB]
    # TODO(synk): eval-time incremental decoding (kv-cache state list) and the
    # attention_weights bookkeeping are not needed for this training-mode forward.


# ----------------------------- parameter init -------------------------------
def init_params(key):
    def nrm(k, shape, scale=0.1):
        return scale * jax.random.normal(k, shape, dtype=jnp.float32)

    keys = iter(jax.random.split(key, 64))
    L, H, F = NUM_LAYERS, HIDDEN, FFN_HIDDEN
    ln_pair = jnp.stack([jnp.ones((H,), jnp.float32), jnp.zeros((H,), jnp.float32)])  # (2, H)

    enc = {
        "wqkv": nrm(next(keys), (L, H, 3 * H)),            # fused W_q|W_k|W_v (no bias)
        "wo":   nrm(next(keys), (L, H, H)),
        "ln":   jnp.tile(jnp.concatenate([ln_pair, ln_pair], axis=0)[None], (L, 1, 1)),  # (L,4,H)
        "w1":   nrm(next(keys), (L, H, F)),
        "b1":   jnp.zeros((L, 1, F), jnp.float32),
        "w2":   nrm(next(keys), (L, F, H)),
        "b2":   jnp.zeros((L, 1, H), jnp.float32),
    }
    dec = {
        "wqkv1": nrm(next(keys), (L, H, 3 * H)),           # fused self-attn QKV
        "wo1":   nrm(next(keys), (L, H, H)),
        "wq2":   nrm(next(keys), (L, H, H)),               # cross-attn query proj
        "wkv2":  nrm(next(keys), (L, H, 2 * H)),           # fused cross-attn K|V
        "wo2":   nrm(next(keys), (L, H, H)),
        "ln":    jnp.tile(jnp.concatenate([ln_pair, ln_pair, ln_pair], axis=0)[None], (L, 1, 1)),
        "w1":    nrm(next(keys), (L, H, F)),
        "b1":    jnp.zeros((L, 1, F), jnp.float32),
        "w2":    nrm(next(keys), (L, F, H)),
        "b2":    jnp.zeros((L, 1, H), jnp.float32),
    }
    return {
        "enc_emb": nrm(next(keys), (VOCAB, H), scale=1.0),
        "dec_emb": nrm(next(keys), (VOCAB, H), scale=1.0),
        "enc": enc,
        "dec": dec,
        "dense_w": nrm(next(keys), (H, VOCAB)),
        "dense_b": jnp.zeros((VOCAB,), jnp.float32),
    }


# ----------------------------- main ------------------------------------------
if __name__ == "__main__":
    key = jax.random.PRNGKey(0)
    k_params, k_enc, k_dec = jax.random.split(key, 3)

    params = init_params(k_params)
    enc_x = jax.random.randint(k_enc, (BATCH, ENC_STEPS), 0, VOCAB, dtype=jnp.int32)
    dec_x = jax.random.randint(k_dec, (BATCH, DEC_STEPS), 0, VOCAB, dtype=jnp.int32)
    enc_valid_lens = jnp.array([5.0, 8.0], dtype=jnp.float32)

    fwd = jax.jit(transformer_forward)
    logits = fwd(params, enc_x, dec_x, enc_valid_lens)
    jax.block_until_ready(logits)

    assert logits.shape == (BATCH, DEC_STEPS, VOCAB)
    assert bool(jnp.all(jnp.isfinite(logits)))
    print("KERNEL_OK")
</pallas_src>

<mosaic_0001>
module attributes {stable_mosaic.version = 11 : i64} {
  func.func @_transformer_kernel(%arg0: i32, %arg1: memref<1x8x32xf32, #tpu.memory_space<vmem>>, %arg2: memref<1x8x32xf32, #tpu.memory_space<vmem>>, %arg3: memref<1x8x8xf32, #tpu.memory_space<vmem>>, %arg4: memref<8x8xf32, #tpu.memory_space<vmem>>, %arg5: memref<1x8x8xf32, #tpu.memory_space<vmem>>, %arg6: memref<2x32x96xf32, #tpu.memory_space<vmem>>, %arg7: memref<2x32x32xf32, #tpu.memory_space<vmem>>, %arg8: memref<2x4x32xf32, #tpu.memory_space<vmem>>, %arg9: memref<2x32x64xf32, #tpu.memory_space<vmem>>, %arg10: memref<2x1x64xf32, #tpu.memory_space<vmem>>, %arg11: memref<2x64x32xf32, #tpu.memory_space<vmem>>, %arg12: memref<2x1x32xf32, #tpu.memory_space<vmem>>, %arg13: memref<2x32x96xf32, #tpu.memory_space<vmem>>, %arg14: memref<2x32x32xf32, #tpu.memory_space<vmem>>, %arg15: memref<2x32x32xf32, #tpu.memory_space<vmem>>, %arg16: memref<2x32x64xf32, #tpu.memory_space<vmem>>, %arg17: memref<2x32x32xf32, #tpu.memory_space<vmem>>, %arg18: memref<2x6x32xf32, #tpu.memory_space<vmem>>, %arg19: memref<2x32x64xf32, #tpu.memory_space<vmem>>, %arg20: memref<2x1x64xf32, #tpu.memory_space<vmem>>, %arg21: memref<2x64x32xf32, #tpu.memory_space<vmem>>, %arg22: memref<2x1x32xf32, #tpu.memory_space<vmem>>, %arg23: memref<32x128xf32, #tpu.memory_space<vmem>>, %arg24: memref<1x128xf32, #tpu.memory_space<vmem>>, %arg25: memref<1x8x128xf32, #tpu.memory_space<vmem>>) attributes {dimension_semantics = [#tpu.dimension_semantics<parallel>], iteration_bounds = array<i64: 2>, scalar_prefetch = 0 : i64, scratch_operands = 0 : i64, tpu.core_type = #tpu.core_type<tc>, window_params = [{transform_indices = @transform_0, window_bounds = array<i64: 1, 8, 32>}, {transform_indices = @transform_1, window_bounds = array<i64: 1, 8, 32>}, {transform_indices = @transform_2, window_bounds = array<i64: 1, 8, 8>}, {pipeline_mode = #tpu.pipeline_mode<synchronous>, transform_indices = @transform_3, window_bounds = array<i64: 8, 8>}, {transform_indices = @transform_4, window_bounds = array<i64: 1, 8, 8>}, {pipeline_mode = #tpu.pipeline_mode<synchronous>, transform_indices = @transform_5, window_bounds = array<i64: 2, 32, 96>}, {pipeline_mode = #tpu.pipeline_mode<synchronous>, transform_indices = @transform_6, window_bounds = array<i64: 2, 32, 32>}, {pipeline_mode = #tpu.pipeline_mode<synchronous>, transform_indices = @transform_7, window_bounds = array<i64: 2, 4, 32>}, {pipeline_mode = #tpu.pipeline_mode<synchronous>, transform_indices = @transform_8, window_bounds = array<i64: 2, 32, 64>}, {pipeline_mode = #tpu.pipeline_mode<synchronous>, transform_indices = @transform_9, window_bounds = array<i64: 2, 1, 64>}, {pipeline_mode = #tpu.pipeline_mode<synchronous>, transform_indices = @transform_10, window_bounds = array<i64: 2, 64, 32>}, {pipeline_mode = #tpu.pipeline_mode<synchronous>, transform_indices = @transform_11, window_bounds = array<i64: 2, 1, 32>}, {pipeline_mode = #tpu.pipeline_mode<synchronous>, transform_indices = @transform_12, window_bounds = array<i64: 2, 32, 96>}, {pipeline_mode = #tpu.pipeline_mode<synchronous>, transform_indices = @transform_13, window_bounds = array<i64: 2, 32, 32>}, {pipeline_mode = #tpu.pipeline_mode<synchronous>, transform_indices = @transform_14, window_bounds = array<i64: 2, 32, 32>}, {pipeline_mode = #tpu.pipeline_mode<synchronous>, transform_indices = @transform_15, window_bounds = array<i64: 2, 32, 64>}, {pipeline_mode = #tpu.pipeline_mode<synchronous>, transform_indices = @transform_16, window_bounds = array<i64: 2, 32, 32>}, {pipeline_mode = #tpu.pipeline_mode<synchronous>, transform_indices = @transform_17, window_bounds = array<i64: 2, 6, 32>}, {pipeline_mode = #tpu.pipeline_mode<synchronous>, transform_indices = @transform_18, window_bounds = array<i64: 2, 32, 64>}, {pipeline_mode = #tpu.pipeline_mode<synchronous>, transform_indices = @transform_19, window_bounds = array<i64: 2, 1, 64>}, {pipeline_mode = #tpu.pipeline_mode<synchronous>, transform_indices = @transform_20, window_bounds = array<i64: 2, 64, 32>}, {pipeline_mode = #tpu.pipeline_mode<synchronous>, transform_indices = @transform_21, window_bounds = array<i64: 2, 1, 32>}, {pipeline_mode = #tpu.pipeline_mode<synchronous>, transform_indices = @transform_22, window_bounds = array<i64: 32, 128>}, {pipeline_mode = #tpu.pipeline_mode<synchronous>, transform_indices = @transform_23, window_bounds = array<i64: 1, 128>}, {transform_indices = @transform_24, window_bounds = array<i64: 1, 8, 128>}]} {
    %c0 = arith.constant 0 : index
    %c0_0 = arith.constant 0 : index
    %c0_1 = arith.constant 0 : index
    %0 = vector.load %arg3[%c0, %c0_0, %c0_1] : memref<1x8x8xf32, #tpu.memory_space<vmem>>, vector<1x8x8xf32>
    %1 = vector.shape_cast %0 : vector<1x8x8xf32> to vector<8x8xf32>
    %c0_2 = arith.constant 0 : index
    %c0_3 = arith.constant 0 : index
    %2 = vector.load %arg4[%c0_2, %c0_3] : memref<8x8xf32, #tpu.memory_space<vmem>>, vector<8x8xf32>
    %c0_4 = arith.constant 0 : index
    %c0_5 = arith.constant 0 : index
    %c0_6 = arith.constant 0 : index
    %3 = vector.load %arg5[%c0_4, %c0_5, %c0_6] : memref<1x8x8xf32, #tpu.memory_space<vmem>>, vector<1x8x8xf32>
    %4 = vector.shape_cast %3 : vector<1x8x8xf32> to vector<8x8xf32>
    %c0_7 = arith.constant 0 : index
    %c0_8 = arith.constant 0 : index
    %c0_9 = arith.constant 0 : index
    %5 = vector.load %arg1[%c0_7, %c0_8, %c0_9] : memref<1x8x32xf32, #tpu.memory_space<vmem>>, vector<1x8x32xf32>
    %6 = vector.shape_cast %5 : vector<1x8x32xf32> to vector<8x32xf32>
    %c0_10 = arith.constant 0 : index
    %c0_11 = arith.constant 0 : index
    %c0_12 = arith.constant 0 : index
    %7 = vector.load %arg8[%c0_10, %c0_11, %c0_12] : memref<2x4x32xf32, #tpu.memory_space<vmem>>, vector<1x4x32xf32>
    %8 = vector.shape_cast %7 : vector<1x4x32xf32> to vector<4x32xf32>
    %c0_13 = arith.constant 0 : index
    %c0_14 = arith.constant 0 : index
    %c0_15 = arith.constant 0 : index
    %9 = vector.load %arg6[%c0_13, %c0_14, %c0_15] : memref<2x32x96xf32, #tpu.memory_space<vmem>>, vector<1x32x96xf32>
    %10 = vector.shape_cast %9 : vector<1x32x96xf32> to vector<32x96xf32>
    %cst = arith.constant dense<0.000000e+00> : vector<8x96xf32>
    %11 = tpu.matmul %6, %10, %cst {dimension_numbers = #tpu.dot_dimension_numbers<[1], [0], [0], [1], [0, 0, 1, 1], [], []>} : vector<8x32xf32>, vector<32x96xf32>, vector<8x96xf32> -> vector<8x96xf32>
    %12 = vector.extract_strided_slice %11 {offsets = [0, 0], sizes = [8, 32], strides = [1, 1]} : vector<8x96xf32> to vector<8x32xf32>
    %13 = vector.extract_strided_slice %11 {offsets = [0, 32], sizes = [8, 32], strides = [1, 1]} : vector<8x96xf32> to vector<8x32xf32>
    %14 = vector.extract_strided_slice %11 {offsets = [0, 64], sizes = [8, 32], strides = [1, 1]} : vector<8x96xf32> to vector<8x32xf32>
    %c0_16 = arith.constant 0 : index
    %c0_17 = arith.constant 0 : index
    %c0_18 = arith.constant 0 : index
    %15 = vector.load %arg7[%c0_16, %c0_17, %c0_18] : memref<2x32x32xf32, #tpu.memory_space<vmem>>, vector<1x32x32xf32>
    %16 = vector.shape_cast %15 : vector<1x32x32xf32> to vector<32x32xf32>
    %cst_19 = arith.constant 0.000000e+00 : f32
    %17 = vector.broadcast %cst_19 : f32 to vector<8x32xf32>
    %18 = vector.extract_strided_slice %12 {offsets = [0, 0], sizes = [8, 8], strides = [1, 1]} : vector<8x32xf32> to vector<8x8xf32>
    %19 = vector.extract_strided_slice %13 {offsets = [0, 0], sizes = [8, 8], strides = [1, 1]} : vector<8x32xf32> to vector<8x8xf32>
    %20 = vector.extract_strided_slice %14 {offsets = [0, 0], sizes = [8, 8], strides = [1, 1]} : vector<8x32xf32> to vector<8x8xf32>
    %cst_20 = arith.constant dense<0.000000e+00> : vector<8x8xf32>
    %21 = tpu.matmul %18, %19, %cst_20 {dimension_numbers = #tpu.dot_dimension_numbers<[1], [1], [0], [0], [0, 0, 1, 0], [], []>} : vector<8x8xf32>, vector<8x8xf32>, vector<8x8xf32> -> vector<8x8xf32>
    %cst_21 = arith.constant 0.353553385 : f32
    %22 = vector.broadcast %cst_21 : f32 to vector<8x8xf32>
    %23 = arith.mulf %21, %22 : vector<8x8xf32>
    %cst_22 = arith.constant 5.000000e-01 : f32
    %24 = vector.broadcast %cst_22 : f32 to vector<8x8xf32>
    %25 = arith.cmpf ogt, %1, %24 : vector<8x8xf32>
    %cst_23 = arith.constant -1.000000e+06 : f32
    %26 = vector.broadcast %cst_23 : f32 to vector<8x8xf32>
    %27 = arith.select %25, %23, %26 : vector<8x8xi1>, vector<8x8xf32>
    %cst_24 = arith.constant dense<0xFF800000> : vector<8xf32>
    %28 = vector.multi_reduction <maximumf>, %27, %cst_24 [1] : vector<8x8xf32> to vector<8xf32>
    %29 = vector.shape_cast %28 : vector<8xf32> to vector<8x1xf32>
    %30 = vector.broadcast %29 : vector<8x1xf32> to vector<8x8xf32>
    %31 = arith.subf %27, %30 : vector<8x8xf32>
    %32 = math.exp %31 : vector<8x8xf32>
    %cst_25 = arith.constant dense<0.000000e+00> : vector<8xf32>
    %33 = vector.multi_reduction <add>, %32, %cst_25 [1] : vector<8x8xf32> to vector<8xf32>
    %34 = vector.shape_cast %33 : vector<8xf32> to vector<8x1xf32>
    %35 = tpu.reciprocal %34 {approx = true} : vector<8x1xf32> -> vector<8x1xf32>
    %36 = vector.broadcast %35 : vector<8x1xf32> to vector<8x8xf32>
    %37 = arith.mulf %32, %36 : vector<8x8xf32>
    %cst_26 = arith.constant dense<0.000000e+00> : vector<8x8xf32>
    %38 = tpu.matmul %37, %20, %cst_26 {dimension_numbers = #tpu.dot_dimension_numbers<[1], [0], [0], [1], [0, 0, 1, 1], [], []>} : vector<8x8xf32>, vector<8x8xf32>, vector<8x8xf32> -> vector<8x8xf32>
    %39 = vector.extract_strided_slice %16 {offsets = [0, 0], sizes = [8, 32], strides = [1, 1]} : vector<32x32xf32> to vector<8x32xf32>
    %cst_27 = arith.constant dense<0.000000e+00> : vector<8x32xf32>
    %40 = tpu.matmul %38, %39, %cst_27 {dimension_numbers = #tpu.dot_dimension_numbers<[1], [0], [0], [1], [0, 0, 1, 1], [], []>} : vector<8x8xf32>, vector<8x32xf32>, vector<8x32xf32> -> vector<8x32xf32>
    %41 = arith.addf %17, %40 : vector<8x32xf32>
    %42 = vector.extract_strided_slice %12 {offsets = [0, 8], sizes = [8, 8], strides = [1, 1]} : vector<8x32xf32> to vector<8x8xf32>
    %43 = vector.extract_strided_slice %13 {offsets = [0, 8], sizes = [8, 8], strides = [1, 1]} : vector<8x32xf32> to vector<8x8xf32>
    %44 = vector.extract_strided_slice %14 {offsets = [0, 8], sizes = [8, 8], strides = [1, 1]} : vector<8x32xf32> to vector<8x8xf32>
    %cst_28 = arith.constant dense<0.000000e+00> : vector<8x8xf32>
    %45 = tpu.matmul %42, %43, %cst_28 {dimension_numbers = #tpu.dot_dimension_numbers<[1], [1], [0], [0], [0, 0, 1, 0], [], []>} : vector<8x8xf32>, vector<8x8xf32>, vector<8x8xf32> -> vector<8x8xf32>
    %cst_29 = arith.constant 0.353553385 : f32
    %46 = vector.broadcast %cst_29 : f32 to vector<8x8xf32>
    %47 = arith.mulf %45, %46 : vector<8x8xf32>
    %cst_30 = arith.constant 5.000000e-01 : f32
    %48 = vector.broadcast %cst_30 : f32 to vector<8x8xf32>
    %49 = arith.cmpf ogt, %1, %48 : vector<8x8xf32>
    %cst_31 = arith.constant -1.000000e+06 : f32
    %50 = vector.broadcast %cst_31 : f32 to vector<8x8xf32>
    %51 = arith.select %49, %47, %50 : vector<8x8xi1>, vector<8x8xf32>
    %cst_32 = arith.constant dense<0xFF800000> : vector<8xf32>
    %52 = vector.multi_reduction <maximumf>, %51, %cst_32 [1] : vector<8x8xf32> to vector<8xf32>
    %53 = vector.shape_cast %52 : vector<8xf32> to vector<8x1xf32>
    %54 = vector.broadcast %53 : vector<8x1xf32> to vector<8x8xf32>
    %55 = arith.subf %51, %54 : vector<8x8xf32>
    %56 = math.exp %55 : vector<8x8xf32>
    %cst_33 = arith.constant dense<0.000000e+00> : vector<8xf32>
    %57 = vector.multi_reduction <add>, %56, %cst_33 [1] : vector<8x8xf32> to vector<8xf32>
    %58 = vector.shape_cast %57 : vector<8xf32> to vector<8x1xf32>
    %59 = tpu.reciprocal %58 {approx = true} : vector<8x1xf32> -> vector<8x1xf32>
    %60 = vector.broadcast %59 : vector<8x1xf32> to vector<8x8xf32>
    %61 = arith.mulf %56, %60 : vector<8x8xf32>
    %cst_34 = arith.constant dense<0.000000e+00> : vector<8x8xf32>
    %62 = tpu.matmul %61, %44, %cst_34 {dimension_numbers = #tpu.dot_dimension_numbers<[1], [0], [0], [1], [0, 0, 1, 1], [], []>} : vector<8x8xf32>, vector<8x8xf32>, vector<8x8xf32> -> vector<8x8xf32>
    %63 = vector.extract_strided_slice %16 {offsets = [8, 0], sizes = [8, 32], strides = [1, 1]} : vector<32x32xf32> to vector<8x32xf32>
    %cst_35 = arith.constant dense<0.000000e+00> : vector<8x32xf32>
    %64 = tpu.matmul %62, %63, %cst_35 {dimension_numbers = #tpu.dot_dimension_numbers<[1], [0], [0], [1], [0, 0, 1, 1], [], []>} : vector<8x8xf32>, vector<8x32xf32>, vector<8x32xf32> -> vector<8x32xf32>
    %65 = arith.addf %41, %64 : vector<8x32xf32>
    %66 = vector.extract_strided_slice %12 {offsets = [0, 16], sizes = [8, 8], strides = [1, 1]} : vector<8x32xf32> to vector<8x8xf32>
    %67 = vector.extract_strided_slice %13 {offsets = [0, 16], sizes = [8, 8], strides = [1, 1]} : vector<8x32xf32> to vector<8x8xf32>
    %68 = vector.extract_strided_slice %14 {offsets = [0, 16], sizes = [8, 8], strides = [1, 1]} : vector<8x32xf32> to vector<8x8xf32>
    %cst_36 = arith.constant dense<0.000000e+00> : vector<8x8xf32>
    %69 = tpu.matmul %66, %67, %cst_36 {dimension_numbers = #tpu.dot_dimension_numbers<[1], [1], [0], [0], [0, 0, 1, 0], [], []>} : vector<8x8xf32>, vector<8x8xf32>, vector<8x8xf32> -> vector<8x8xf32>
    %cst_37 = arith.constant 0.353553385 : f32
    %70 = vector.broadcast %cst_37 : f32 to vector<8x8xf32>
    %71 = arith.mulf %69, %70 : vector<8x8xf32>
    %cst_38 = arith.constant 5.000000e-01 : f32
    %72 = vector.broadcast %cst_38 : f32 to vector<8x8xf32>
    %73 = arith.cmpf ogt, %1, %72 : vector<8x8xf32>
    %cst_39 = arith.constant -1.000000e+06 : f32
    %74 = vector.broadcast %cst_39 : f32 to vector<8x8xf32>
    %75 = arith.select %73, %71, %74 : vector<8x8xi1>, vector<8x8xf32>
    %cst_40 = arith.constant dense<0xFF800000> : vector<8xf32>
    %76 = vector.multi_reduction <maximumf>, %75, %cst_40 [1] : vector<8x8xf32> to vector<8xf32>
    %77 = vector.shape_cast %76 : vector<8xf32> to vector<8x1xf32>
    %78 = vector.broadcast %77 : vector<8x1xf32> to vector<8x8xf32>
    %79 = arith.subf %75, %78 : vector<8x8xf32>
    %80 = math.exp %79 : vector<8x8xf32>
    %cst_41 = arith.constant dense<0.000000e+00> : vector<8xf32>
    %81 = vector.multi_reduction <add>, %80, %cst_41 [1] : vector<8x8xf32> to vector<8xf32>
    %82 = vector.shape_cast %81 : vector<8xf32> to vector<8x1xf32>
    %83 = tpu.reciprocal %82 {approx = true} : vector<8x1xf32> -> vector<8x1xf32>
    %84 = vector.broadcast %83 : vector<8x1xf32> to vector<8x8xf32>
    %85 = arith.mulf %80, %84 : vector<8x8xf32>
    %cst_42 = arith.constant dense<0.000000e+00> : vector<8x8xf32>
    %86 = tpu.matmul %85, %68, %cst_42 {dimension_numbers = #tpu.dot_dimension_numbers<[1], [0], [0], [1], [0, 0, 1, 1], [], []>} : vector<8x8xf32>, vector<8x8xf32>, vector<8x8xf32> -> vector<8x8xf32>
    %87 = vector.extract_strided_slice %16 {offsets = [16, 0], sizes = [8, 32], strides = [1, 1]} : vector<32x32xf32> to vector<8x32xf32>
    %cst_43 = arith.constant dense<0.000000e+00> : vector<8x32xf32>
    %88 = tpu.matmul %86, %87, %cst_43 {dimension_numbers = #tpu.dot_dimension_numbers<[1], [0], [0], [1], [0, 0, 1, 1], [], []>} : vector<8x8xf32>, vector<8x32xf32>, vector<8x32xf32> -> vector<8x32xf32>
    %89 = arith.addf %65, %88 : vector<8x32xf32>
    %90 = vector.extract_strided_slice %12 {offsets = [0, 24], sizes = [8, 8], strides = [1, 1]} : vector<8x32xf32> to vector<8x8xf32>
    %91 = vector.extract_strided_slice %13 {offsets = [0, 24], sizes = [8, 8], strides = [1, 1]} : vector<8x32xf32> to vector<8x8xf32>
    %92 = vector.extract_strided_slice %14 {offsets = [0, 24], sizes = [8, 8], strides = [1, 1]} : vector<8x32xf32> to vector<8x8xf32>
    %cst_44 = arith.constant dense<0.000000e+00> : vector<8x8xf32>
    %93 = tpu.matmul %90, %91, %cst_44 {dimension_numbers = #tpu.dot_dimension_numbers<[1], [1], [0], [0], [0, 0, 1, 0], [], []>} : vector<8x8xf32>, vector<8x8xf32>, vector<8x8xf32> -> vector<8x8xf32>
    %cst_45 = arith.constant 0.353553385 : f32
    %94 = vector.broadcast %cst_45 : f32 to vector<8x8xf32>
    %95 = arith.mulf %93, %94 : vector<8x8xf32>
    %cst_46 = arith.constant 5.000000e-01 : f32
    %96 = vector.broadcast %cst_46 : f32 to vector<8x8xf32>
    %97 = arith.cmpf ogt, %1, %96 : vector<8x8xf32>
    %cst_47 = arith.constant -1.000000e+06 : f32
    %98 = vector.broadcast %cst_47 : f32 to vector<8x8xf32>
    %99 = arith.select %97, %95, %98 : vector<8x8xi1>, vector<8x8xf32>
    %cst_48 = arith.constant dense<0xFF800000> : vector<8xf32>
    %100 = vector.multi_reduction <maximumf>, %99, %cst_48 [1] : vector<8x8xf32> to vector<8xf32>
    %101 = vector.shape_cast %100 : vector<8xf32> to vector<8x1xf32>
    %102 = vector.broadcast %101 : vector<8x1xf32> to vector<8x8xf32>
    %103 = arith.subf %99, %102 : vector<8x8xf32>
    %104 = math.exp %103 : vector<8x8xf32>
    %cst_49 = arith.constant dense<0.000000e+00> : vector<8xf32>
    %105 = vector.multi_reduction <add>, %104, %cst_49 [1] : vector<8x8xf32> to vector<8xf32>
    %106 = vector.shape_cast %105 : vector<8xf32> to vector<8x1xf32>
    %107 = tpu.reciprocal %106 {approx = true} : vector<8x1xf32> -> vector<8x1xf32>
    %108 = vector.broadcast %107 : vector<8x1xf32> to vector<8x8xf32>
    %109 = arith.mulf %104, %108 : vector<8x8xf32>
    %cst_50 = arith.constant dense<0.000000e+00> : vector<8x8xf32>
    %110 = tpu.matmul %109, %92, %cst_50 {dimension_numbers = #tpu.dot_dimension_numbers<[1], [0], [0], [1], [0, 0, 1, 1], [], []>} : vector<8x8xf32>, vector<8x8xf32>, vector<8x8xf32> -> vector<8x8xf32>
    %111 = vector.extract_strided_slice %16 {offsets = [24, 0], sizes = [8, 32], strides = [1, 1]} : vector<32x32xf32> to vector<8x32xf32>
    %cst_51 = arith.constant dense<0.000000e+00> : vector<8x32xf32>
    %112 = tpu.matmul %110, %111, %cst_51 {dimension_numbers = #tpu.dot_dimension_numbers<[1], [0], [0], [1], [0, 0, 1, 1], [], []>} : vector<8x8xf32>, vector<8x32xf32>, vector<8x32xf32> -> vector<8x32xf32>
    %113 = arith.addf %89, %112 : vector<8x32xf32>
    %114 = arith.addf %6, %113 : vector<8x32xf32>
    %115 = vector.extract_strided_slice %8 {offsets = [0, 0], sizes = [1, 32], strides = [1, 1]} : vector<4x32xf32> to vector<1x32xf32>
    %116 = vector.extract_strided_slice %8 {offsets = [1, 0], sizes = [1, 32], strides = [1, 1]} : vector<4x32xf32> to vector<1x32xf32>
    %cst_52 = arith.constant dense<0.000000e+00> : vector<8xf32>
    %117 = vector.multi_reduction <add>, %114, %cst_52 [1] : vector<8x32xf32> to vector<8xf32>
    %118 = vector.shape_cast %117 : vector<8xf32> to vector<8x1xf32>
    %cst_53 = arith.constant 3.200000e+01 : f32
    %119 = vector.broadcast %cst_53 : f32 to vector<8x1xf32>
    %120 = arith.divf %118, %119 : vector<8x1xf32>
    %121 = vector.broadcast %120 : vector<8x1xf32> to vector<8x32xf32>
    %122 = arith.subf %114, %121 : vector<8x32xf32>
    %123 = arith.mulf %122, %122 : vector<8x32xf32>
    %cst_54 = arith.constant dense<0.000000e+00> : vector<8xf32>
    %124 = vector.multi_reduction <add>, %123, %cst_54 [1] : vector<8x32xf32> to vector<8xf32>
    %125 = vector.shape_cast %124 : vector<8xf32> to vector<8x1xf32>
    %cst_55 = arith.constant 3.200000e+01 : f32
    %126 = vector.broadcast %cst_55 : f32 to vector<8x1xf32>
    %127 = arith.divf %125, %126 : vector<8x1xf32>
    %128 = vector.broadcast %120 : vector<8x1xf32> to vector<8x32xf32>
    %129 = arith.subf %114, %128 : vector<8x32xf32>
    %cst_56 = arith.constant 9.99999974E-6 : f32
    %130 = vector.broadcast %cst_56 : f32 to vector<8x1xf32>
    %131 = arith.addf %127, %130 : vector<8x1xf32>
    %132 = math.rsqrt %131 : vector<8x1xf32>
    %133 = vector.broadcast %132 : vector<8x1xf32> to vector<8x32xf32>
    %134 = arith.mulf %129, %133 : vector<8x32xf32>
    %135 = vector.broadcast %115 : vector<1x32xf32> to vector<8x32xf32>
    %136 = arith.mulf %134, %135 : vector<8x32xf32>
    %137 = vector.broadcast %116 : vector<1x32xf32> to vector<8x32xf32>
    %138 = arith.addf %136, %137 : vector<8x32xf32>
    %c0_57 = arith.constant 0 : index
    %c0_58 = arith.constant 0 : index
    %c0_59 = arith.constant 0 : index
    %139 = vector.load %arg9[%c0_57, %c0_58, %c0_59] : memref<2x32x64xf32, #tpu.memory_space<vmem>>, vector<1x32x64xf32>
    %140 = vector.shape_cast %139 : vector<1x32x64xf32> to vector<32x64xf32>
    %c0_60 = arith.constant 0 : index
    %c0_61 = arith.constant 0 : index
    %c0_62 = arith.constant 0 : index
    %141 = vector.load %arg10[%c0_60, %c0_61, %c0_62] : memref<2x1x64xf32, #tpu.memory_space<vmem>>, vector<1x1x64xf32>
    %142 = vector.shape_cast %141 : vector<1x1x64xf32> to vector<1x64xf32>
    %c0_63 = arith.constant 0 : index
    %c0_64 = arith.constant 0 : index
    %c0_65 = arith.constant 0 : index
    %143 = vector.load %arg11[%c0_63, %c0_64, %c0_65] : memref<2x64x32xf32, #tpu.memory_space<vmem>>, vector<1x64x32xf32>
    %144 = vector.shape_cast %143 : vector<1x64x32xf32> to vector<64x32xf32>
    %c0_66 = arith.constant 0 : index
    %c0_67 = arith.constant 0 : index
    %c0_68 = arith.constant 0 : index
    %145 = vector.load %arg12[%c0_66, %c0_67, %c0_68] : memref<2x1x32xf32, #tpu.memory_space<vmem>>, vector<1x1x32xf32>
    %146 = vector.shape_cast %145 : vector<1x1x32xf32> to vector<1x32xf32>
    %cst_69 = arith.constant dense<0.000000e+00> : vector<8x64xf32>
    %147 = tpu.matmul %138, %140, %cst_69 {dimension_numbers = #tpu.dot_dimension_numbers<[1], [0], [0], [1], [0, 0, 1, 1], [], []>} : vector<8x32xf32>, vector<32x64xf32>, vector<8x64xf32> -> vector<8x64xf32>
    %148 = vector.broadcast %142 : vector<1x64xf32> to vector<8x64xf32>
    %149 = arith.addf %147, %148 : vector<8x64xf32>
    %cst_70 = arith.constant 0.000000e+00 : f32
    %150 = vector.broadcast %cst_70 : f32 to vector<8x64xf32>
    %151 = arith.cmpf ogt, %149, %150 : vector<8x64xf32>
    %cst_71 = arith.constant 0.00999999977 : f32
    %152 = vector.broadcast %cst_71 : f32 to vector<8x64xf32>
    %153 = arith.mulf %152, %149 : vector<8x64xf32>
    %154 = arith.select %151, %149, %153 : vector<8x64xi1>, vector<8x64xf32>
    %cst_72 = arith.constant dense<0.000000e+00> : vector<8x32xf32>
    %155 = tpu.matmul %154, %144, %cst_72 {dimension_numbers = #tpu.dot_dimension_numbers<[1], [0], [0], [1], [0, 0, 1, 1], [], []>} : vector<8x64xf32>, vector<64x32xf32>, vector<8x32xf32> -> vector<8x32xf32>
    %156 = vector.broadcast %146 : vector<1x32xf32> to vector<8x32xf32>
    %157 = arith.addf %155, %156 : vector<8x32xf32>
    %158 = arith.addf %138, %157 : vector<8x32xf32>
    %159 = vector.extract_strided_slice %8 {offsets = [2, 0], sizes = [1, 32], strides = [1, 1]} : vector<4x32xf32> to vector<1x32xf32>
    %160 = vector.extract_strided_slice %8 {offsets = [3, 0], sizes = [1, 32], strides = [1, 1]} : vector<4x32xf32> to vector<1x32xf32>
    %cst_73 = arith.constant dense<0.000000e+00> : vector<8xf32>
    %161 = vector.multi_reduction <add>, %158, %cst_73 [1] : vector<8x32xf32> to vector<8xf32>
    %162 = vector.shape_cast %161 : vector<8xf32> to vector<8x1xf32>
    %cst_74 = arith.constant 3.200000e+01 : f32
    %163 = vector.broadcast %cst_74 : f32 to vector<8x1xf32>
    %164 = arith.divf %162, %163 : vector<8x1xf32>
    %165 = vector.broadcast %164 : vector<8x1xf32> to vector<8x32xf32>
    %166 = arith.subf %158, %165 : vector<8x32xf32>
    %167 = arith.mulf %166, %166 : vector<8x32xf32>
    %cst_75 = arith.constant dense<0.000000e+00> : vector<8xf32>
    %168 = vector.multi_reduction <add>, %167, %cst_75 [1] : vector<8x32xf32> to vector<8xf32>
    %169 = vector.shape_cast %168 : vector<8xf32> to vector<8x1xf32>
    %cst_76 = arith.constant 3.200000e+01 : f32
    %170 = vector.broadcast %cst_76 : f32 to vector<8x1xf32>
    %171 = arith.divf %169, %170 : vector<8x1xf32>
    %172 = vector.broadcast %164 : vector<8x1xf32> to vector<8x32xf32>
    %173 = arith.subf %158, %172 : vector<8x32xf32>
    %cst_77 = arith.constant 9.99999974E-6 : f32
    %174 = vector.broadcast %cst_77 : f32 to vector<8x1xf32>
    %175 = arith.addf %171, %174 : vector<8x1xf32>
    %176 = math.rsqrt %175 : vector<8x1xf32>
    %177 = vector.broadcast %176 : vector<8x1xf32> to vector<8x32xf32>
    %178 = arith.mulf %173, %177 : vector<8x32xf32>
    %179 = vector.broadcast %159 : vector<1x32xf32> to vector<8x32xf32>
    %180 = arith.mulf %178, %179 : vector<8x32xf32>
    %181 = vector.broadcast %160 : vector<1x32xf32> to vector<8x32xf32>
    %182 = arith.addf %180, %181 : vector<8x32xf32>
    %c1 = arith.constant 1 : index
    %c0_78 = arith.constant 0 : index
    %c0_79 = arith.constant 0 : index
    %183 = vector.load %arg8[%c1, %c0_78, %c0_79] : memref<2x4x32xf32, #tpu.memory_space<vmem>>, vector<1x4x32xf32>
    %184 = vector.shape_cast %183 : vector<1x4x32xf32> to vector<4x32xf32>
    %c1_80 = arith.constant 1 : index
    %c0_81 = arith.constant 0 : index
    %c0_82 = arith.constant 0 : index
    %185 = vector.load %arg6[%c1_80, %c0_81, %c0_82] : memref<2x32x96xf32, #tpu.memory_space<vmem>>, vector<1x32x96xf32>
    %186 = vector.shape_cast %185 : vector<1x32x96xf32> to vector<32x96xf32>
    %cst_83 = arith.constant dense<0.000000e+00> : vector<8x96xf32>
    %187 = tpu.matmul %182, %186, %cst_83 {dimension_numbers = #tpu.dot_dimension_numbers<[1], [0], [0], [1], [0, 0, 1, 1], [], []>} : vector<8x32xf32>, vector<32x96xf32>, vector<8x96xf32> -> vector<8x96xf32>
    %188 = vector.extract_strided_slice %187 {offsets = [0, 0], sizes = [8, 32], strides = [1, 1]} : vector<8x96xf32> to vector<8x32xf32>
    %189 = vector.extract_strided_slice %187 {offsets = [0, 32], sizes = [8, 32], strides = [1, 1]} : vector<8x96xf32> to vector<8x32xf32>
    %190 = vector.extract_strided_slice %187 {offsets = [0, 64], sizes = [8, 32], strides = [1, 1]} : vector<8x96xf32> to vector<8x32xf32>
    %c1_84 = arith.constant 1 : index
    %c0_85 = arith.constant 0 : index
    %c0_86 = arith.constant 0 : index
    %191 = vector.load %arg7[%c1_84, %c0_85, %c0_86] : memref<2x32x32xf32, #tpu.memory_space<vmem>>, vector<1x32x32xf32>
    %192 = vector.shape_cast %191 : vector<1x32x32xf32> to vector<32x32xf32>
    %cst_87 = arith.constant 0.000000e+00 : f32
    %193 = vector.broadcast %cst_87 : f32 to vector<8x32xf32>
    %194 = vector.extract_strided_slice %188 {offsets = [0, 0], sizes = [8, 8], strides = [1, 1]} : vector<8x32xf32> to vector<8x8xf32>
    %195 = vector.extract_strided_slice %189 {offsets = [0, 0], sizes = [8, 8], strides = [1, 1]} : vector<8x32xf32> to vector<8x8xf32>
    %196 = vector.extract_strided_slice %190 {offsets = [0, 0], sizes = [8, 8], strides = [1, 1]} : vector<8x32xf32> to vector<8x8xf32>
    %cst_88 = arith.constant dense<0.000000e+00> : vector<8x8xf32>
    %197 = tpu.matmul %194, %195, %cst_88 {dimension_numbers = #tpu.dot_dimension_numbers<[1], [1], [0], [0], [0, 0, 1, 0], [], []>} : vector<8x8xf32>, vector<8x8xf32>, vector<8x8xf32> -> vector<8x8xf32>
    %cst_89 = arith.constant 0.353553385 : f32
    %198 = vector.broadcast %cst_89 : f32 to vector<8x8xf32>
    %199 = arith.mulf %197, %198 : vector<8x8xf32>
    %cst_90 = arith.constant 5.000000e-01 : f32
    %200 = vector.broadcast %cst_90 : f32 to vector<8x8xf32>
    %201 = arith.cmpf ogt, %1, %200 : vector<8x8xf32>
    %cst_91 = arith.constant -1.000000e+06 : f32
    %202 = vector.broadcast %cst_91 : f32 to vector<8x8xf32>
    %203 = arith.select %201, %199, %202 : vector<8x8xi1>, vector<8x8xf32>
    %cst_92 = arith.constant dense<0xFF800000> : vector<8xf32>
    %204 = vector.multi_reduction <maximumf>, %203, %cst_92 [1] : vector<8x8xf32> to vector<8xf32>
    %205 = vector.shape_cast %204 : vector<8xf32> to vector<8x1xf32>
    %206 = vector.broadcast %205 : vector<8x1xf32> to vector<8x8xf32>
    %207 = arith.subf %203, %206 : vector<8x8xf32>
    %208 = math.exp %207 : vector<8x8xf32>
    %cst_93 = arith.constant dense<0.000000e+00> : vector<8xf32>
    %209 = vector.multi_reduction <add>, %208, %cst_93 [1] : vector<8x8xf32> to vector<8xf32>
    %210 = vector.shape_cast %209 : vector<8xf32> to vector<8x1xf32>
    %211 = tpu.reciprocal %210 {approx = true} : vector<8x1xf32> -> vector<8x1xf32>
    %212 = vector.broadcast %211 : vector<8x1xf32> to vector<8x8xf32>
    %213 = arith.mulf %208, %212 : vector<8x8xf32>
    %cst_94 = arith.constant dense<0.000000e+00> : vector<8x8xf32>
    %214 = tpu.matmul %213, %196, %cst_94 {dimension_numbers = #tpu.dot_dimension_numbers<[1], [0], [0], [1], [0, 0, 1, 1], [], []>} : vector<8x8xf32>, vector<8x8xf32>, vector<8x8xf32> -> vector<8x8xf32>
    %215 = vector.extract_strided_slice %192 {offsets = [0, 0], sizes = [8, 32], strides = [1, 1]} : vector<32x32xf32> to vector<8x32xf32>
    %cst_95 = arith.constant dense<0.000000e+00> : vector<8x32xf32>
    %216 = tpu.matmul %214, %215, %cst_95 {dimension_numbers = #tpu.dot_dimension_numbers<[1], [0], [0], [1], [0, 0, 1, 1], [], []>} : vector<8x8xf32>, vector<8x32xf32>, vector<8x32xf32> -> vector<8x32xf32>
    %217 = arith.addf %193, %216 : vector<8x32xf32>
    %218 = vector.extract_strided_slice %188 {offsets = [0, 8], sizes = [8, 8], strides = [1, 1]} : vector<8x32xf32> to vector<8x8xf32>
    %219 = vector.extract_strided_slice %189 {offsets = [0, 8], sizes = [8, 8], strides = [1, 1]} : vector<8x32xf32> to vector<8x8xf32>
    %220 = vector.extract_strided_slice %190 {offsets = [0, 8], sizes = [8, 8], strides = [1, 1]} : vector<8x32xf32> to vector<8x8xf32>
    %cst_96 = arith.constant dense<0.000000e+00> : vector<8x8xf32>
    %221 = tpu.matmul %218, %219, %cst_96 {dimension_numbers = #tpu.dot_dimension_numbers<[1], [1], [0], [0], [0, 0, 1, 0], [], []>} : vector<8x8xf32>, vector<8x8xf32>, vector<8x8xf32> -> vector<8x8xf32>
    %cst_97 = arith.constant 0.353553385 : f32
    %222 = vector.broadcast %cst_97 : f32 to vector<8x8xf32>
    %223 = arith.mulf %221, %222 : vector<8x8xf32>
    %cst_98 = arith.constant 5.000000e-01 : f32
    %224 = vector.broadcast %cst_98 : f32 to vector<8x8xf32>
    %225 = arith.cmpf ogt, %1, %224 : vector<8x8xf32>
    %cst_99 = arith.constant -1.000000e+06 : f32
    %226 = vector.broadcast %cst_99 : f32 to vector<8x8xf32>
    %227 = arith.select %225, %223, %226 : vector<8x8xi1>, vector<8x8xf32>
    %cst_100 = arith.constant dense<0xFF800000> : vector<8xf32>
    %228 = vector.multi_reduction <maximumf>, %227, %cst_100 [1] : vector<8x8xf32> to vector<8xf32>
    %229 = vector.shape_cast %228 : vector<8xf32> to vector<8x1xf32>
    %230 = vector.broadcast %229 : vector<8x1xf32> to vector<8x8xf32>
    %231 = arith.subf %227, %230 : vector<8x8xf32>
    %232 = math.exp %231 : vector<8x8xf32>
    %cst_101 = arith.constant dense<0.000000e+00> : vector<8xf32>
    %233 = vector.multi_reduction <add>, %232, %cst_101 [1] : vector<8x8xf32> to vector<8xf32>
    %234 = vector.shape_cast %233 : vector<8xf32> to vector<8x1xf32>
    %235 = tpu.reciprocal %234 {approx = true} : vector<8x1xf32> -> vector<8x1xf32>
    %236 = vector.broadcast %235 : vector<8x1xf32> to vector<8x8xf32>
    %237 = arith.mulf %232, %236 : vector<8x8xf32>
    %cst_102 = arith.constant dense<0.000000e+00> : vector<8x8xf32>
    %238 = tpu.matmul %237, %220, %cst_102 {dimension_numbers = #tpu.dot_dimension_numbers<[1], [0], [0], [1], [0, 0, 1, 1], [], []>} : vector<8x8xf32>, vector<8x8xf32>, vector<8x8xf32> -> vector<8x8xf32>
    %239 = vector.extract_strided_slice %192 {offsets = [8, 0], sizes = [8, 32], strides = [1, 1]} : vector<32x32xf32> to vector<8x32xf32>
    %cst_103 = arith.constant dense<0.000000e+00> : vector<8x32xf32>
    %240 = tpu.matmul %238, %239, %cst_103 {dimension_numbers = #tpu.dot_dimension_numbers<[1], [0], [0], [1], [0, 0, 1, 1], [], []>} : vector<8x8xf32>, vector<8x32xf32>, vector<8x32xf32> -> vector<8x32xf32>
    %241 = arith.addf %217, %240 : vector<8x32xf32>
    %242 = vector.extract_strided_slice %188 {offsets = [0, 16], sizes = [8, 8], strides = [1, 1]} : vector<8x32xf32> to vector<8x8xf32>
    %243 = vector.extract_strided_slice %189 {offsets = [0, 16], sizes = [8, 8], strides = [1, 1]} : vector<8x32xf32> to vector<8x8xf32>
    %244 = vector.extract_strided_slice %190 {offsets = [0, 16], sizes = [8, 8], strides = [1, 1]} : vector<8x32xf32> to vector<8x8xf32>
    %cst_104 = arith.constant dense<0.000000e+00> : vector<8x8xf32>
    %245 = tpu.matmul %242, %243, %cst_104 {dimension_numbers = #tpu.dot_dimension_numbers<[1], [1], [0], [0], [0, 0, 1, 0], [], []>} : vector<8x8xf32>, vector<8x8xf32>, vector<8x8xf32> -> vector<8x8xf32>
    %cst_105 = arith.constant 0.353553385 : f32
    %246 = vector.broadcast %cst_105 : f32 to vector<8x8xf32>
    %247 = arith.mulf %245, %246 : vector<8x8xf32>
    %cst_106 = arith.constant 5.000000e-01 : f32
    %248 = vector.broadcast %cst_106 : f32 to vector<8x8xf32>
    %249 = arith.cmpf ogt, %1, %248 : vector<8x8xf32>
    %cst_107 = arith.constant -1.000000e+06 : f32
    %250 = vector.broadcast %cst_107 : f32 to vector<8x8xf32>
    %251 = arith.select %249, %247, %250 : vector<8x8xi1>, vector<8x8xf32>
    %cst_108 = arith.constant dense<0xFF800000> : vector<8xf32>
    %252 = vector.multi_reduction <maximumf>, %251, %cst_108 [1] : vector<8x8xf32> to vector<8xf32>
    %253 = vector.shape_cast %252 : vector<8xf32> to vector<8x1xf32>
    %254 = vector.broadcast %253 : vector<8x1xf32> to vector<8x8xf32>
    %255 = arith.subf %251, %254 : vector<8x8xf32>
    %256 = math.exp %255 : vector<8x8xf32>
    %cst_109 = arith.constant dense<0.000000e+00> : vector<8xf32>
    %257 = vector.multi_reduction <add>, %256, %cst_109 [1] : vector<8x8xf32> to vector<8xf32>
    %258 = vector.shape_cast %257 : vector<8xf32> to vector<8x1xf32>
    %259 = tpu.reciprocal %258 {approx = true} : vector<8x1xf32> -> vector<8x1xf32>
    %260 = vector.broadcast %259 : vector<8x1xf32> to vector<8x8xf32>
    %261 = arith.mulf %256, %260 : vector<8x8xf32>
    %cst_110 = arith.constant dense<0.000000e+00> : vector<8x8xf32>
    %262 = tpu.matmul %261, %244, %cst_110 {dimension_numbers = #tpu.dot_dimension_numbers<[1], [0], [0], [1], [0, 0, 1, 1], [], []>} : vector<8x8xf32>, vector<8x8xf32>, vector<8x8xf32> -> vector<8x8xf32>
    %263 = vector.extract_strided_slice %192 {offsets = [16, 0], sizes = [8, 32], strides = [1, 1]} : vector<32x32xf32> to vector<8x32xf32>
    %cst_111 = arith.constant dense<0.000000e+00> : vector<8x32xf32>
    %264 = tpu.matmul %262, %263, %cst_111 {dimension_numbers = #tpu.dot_dimension_numbers<[1], [0], [0], [1], [0, 0, 1, 1], [], []>} : vector<8x8xf32>, vector<8x32xf32>, vector<8x32xf32> -> vector<8x32xf32>
    %265 = arith.addf %241, %264 : vector<8x32xf32>
    %266 = vector.extract_strided_slice %188 {offsets = [0, 24], sizes = [8, 8], strides = [1, 1]} : vector<8x32xf32> to vector<8x8xf32>
    %267 = vector.extract_strided_slice %189 {offsets = [0, 24], sizes = [8, 8], strides = [1, 1]} : vector<8x32xf32> to vector<8x8xf32>
    %268 = vector.extract_strided_slice %190 {offsets = [0, 24], sizes = [8, 8], strides = [1, 1]} : vector<8x32xf32> to vector<8x8xf32>
    %cst_112 = arith.constant dense<0.000000e+00> : vector<8x8xf32>
    %269 = tpu.matmul %266, %267, %cst_112 {dimension_numbers = #tpu.dot_dimension_numbers<[1], [1], [0], [0], [0, 0, 1, 0], [], []>} : vector<8x8xf32>, vector<8x8xf32>, vector<8x8xf32> -> vector<8x8xf32>
    %cst_113 = arith.constant 0.353553385 : f32
    %270 = vector.broadcast %cst_113 : f32 to vector<8x8xf32>
    %271 = arith.mulf %269, %270 : vector<8x8xf32>
    %cst_114 = arith.constant 5.000000e-01 : f32
    %272 = vector.broadcast %cst_114 : f32 to vector<8x8xf32>
    %273 = arith.cmpf ogt, %1, %272 : vector<8x8xf32>
    %cst_115 = arith.constant -1.000000e+06 : f32
    %274 = vector.broadcast %cst_115 : f32 to vector<8x8xf32>
    %275 = arith.select %273, %271, %274 : vector<8x8xi1>, vector<8x8xf32>
    %cst_116 = arith.constant dense<0xFF800000> : vector<8xf32>
    %276 = vector.multi_reduction <maximumf>, %275, %cst_116 [1] : vector<8x8xf32> to vector<8xf32>
    %277 = vector.shape_cast %276 : vector<8xf32> to vector<8x1xf32>
    %278 = vector.broadcast %277 : vector<8x1xf32> to vector<8x8xf32>
    %279 = arith.subf %275, %278 : vector<8x8xf32>
    %280 = math.exp %279 : vector<8x8xf32>
    %cst_117 = arith.constant dense<0.000000e+00> : vector<8xf32>
    %281 = vector.multi_reduction <add>, %280, %cst_117 [1] : vector<8x8xf32> to vector<8xf32>
    %282 = vector.shape_cast %281 : vector<8xf32> to vector<8x1xf32>
    %283 = tpu.reciprocal %282 {approx = true} : vector<8x1xf32> -> vector<8x1xf32>
    %284 = vector.broadcast %283 : vector<8x1xf32> to vector<8x8xf32>
    %285 = arith.mulf %280, %284 : vector<8x8xf32>
    %cst_118 = arith.constant dense<0.000000e+00> : vector<8x8xf32>
    %286 = tpu.matmul %285, %268, %cst_118 {dimension_numbers = #tpu.dot_dimension_numbers<[1], [0], [0], [1], [0, 0, 1, 1], [], []>} : vector<8x8xf32>, vector<8x8xf32>, vector<8x8xf32> -> vector<8x8xf32>
    %287 = vector.extract_strided_slice %192 {offsets = [24, 0], sizes = [8, 32], strides = [1, 1]} : vector<32x32xf32> to vector<8x32xf32>
    %cst_119 = arith.constant dense<0.000000e+00> : vector<8x32xf32>
    %288 = tpu.matmul %286, %287, %cst_119 {dimension_numbers = #tpu.dot_dimension_numbers<[1], [0], [0], [1], [0, 0, 1, 1], [], []>} : vector<8x8xf32>, vector<8x32xf32>, vector<8x32xf32> -> vector<8x32xf32>
    %289 = arith.addf %265, %288 : vector<8x32xf32>
    %290 = arith.addf %182, %289 : vector<8x32xf32>
    %291 = vector.extract_strided_slice %184 {offsets = [0, 0], sizes = [1, 32], strides = [1, 1]} : vector<4x32xf32> to vector<1x32xf32>
    %292 = vector.extract_strided_slice %184 {offsets = [1, 0], sizes = [1, 32], strides = [1, 1]} : vector<4x32xf32> to vector<1x32xf32>
    %cst_120 = arith.constant dense<0.000000e+00> : vector<8xf32>
    %293 = vector.multi_reduction <add>, %290, %cst_120 [1] : vector<8x32xf32> to vector<8xf32>
    %294 = vector.shape_cast %293 : vector<8xf32> to vector<8x1xf32>
    %cst_121 = arith.constant 3.200000e+01 : f32
    %295 = vector.broadcast %cst_121 : f32 to vector<8x1xf32>
    %296 = arith.divf %294, %295 : vector<8x1xf32>
    %297 = vector.broadcast %296 : vector<8x1xf32> to vector<8x32xf32>
    %298 = arith.subf %290, %297 : vector<8x32xf32>
    %299 = arith.mulf %298, %298 : vector<8x32xf32>
    %cst_122 = arith.constant dense<0.000000e+00> : vector<8xf32>
    %300 = vector.multi_reduction <add>, %299, %cst_122 [1] : vector<8x32xf32> to vector<8xf32>
    %301 = vector.shape_cast %300 : vector<8xf32> to vector<8x1xf32>
    %cst_123 = arith.constant 3.200000e+01 : f32
    %302 = vector.broadcast %cst_123 : f32 to vector<8x1xf32>
    %303 = arith.divf %301, %302 : vector<8x1xf32>
    %304 = vector.broadcast %296 : vector<8x1xf32> to vector<8x32xf32>
    %305 = arith.subf %290, %304 : vector<8x32xf32>
    %cst_124 = arith.constant 9.99999974E-6 : f32
    %306 = vector.broadcast %cst_124 : f32 to vector<8x1xf32>
    %307 = arith.addf %303, %306 : vector<8x1xf32>
    %308 = math.rsqrt %307 : vector<8x1xf32>
    %309 = vector.broadcast %308 : vector<8x1xf32> to vector<8x32xf32>
    %310 = arith.mulf %305, %309 : vector<8x32xf32>
    %311 = vector.broadcast %291 : vector<1x32xf32> to vector<8x32xf32>
    %312 = arith.mulf %310, %311 : vector<8x32xf32>
    %313 = vector.broadcast %292 : vector<1x32xf32> to vector<8x32xf32>
    %314 = arith.addf %312, %313 : vector<8x32xf32>
    %c1_125 = arith.constant 1 : index
    %c0_126 = arith.constant 0 : index
    %c0_127 = arith.constant 0 : index
    %315 = vector.load %arg9[%c1_125, %c0_126, %c0_127] : memref<2x32x64xf32, #tpu.memory_space<vmem>>, vector<1x32x64xf32>
    %316 = vector.shape_cast %315 : vector<1x32x64xf32> to vector<32x64xf32>
    %c1_128 = arith.constant 1 : index
    %c0_129 = arith.constant 0 : index
    %c0_130 = arith.constant 0 : index
    %317 = vector.load %arg10[%c1_128, %c0_129, %c0_130] : memref<2x1x64xf32, #tpu.memory_space<vmem>>, vector<1x1x64xf32>
    %318 = vector.shape_cast %317 : vector<1x1x64xf32> to vector<1x64xf32>
    %c1_131 = arith.constant 1 : index
    %c0_132 = arith.constant 0 : index
    %c0_133 = arith.constant 0 : index
    %319 = vector.load %arg11[%c1_131, %c0_132, %c0_133] : memref<2x64x32xf32, #tpu.memory_space<vmem>>, vector<1x64x32xf32>
    %320 = vector.shape_cast %319 : vector<1x64x32xf32> to vector<64x32xf32>
    %c1_134 = arith.constant 1 : index
    %c0_135 = arith.constant 0 : index
    %c0_136 = arith.constant 0 : index
    %321 = vector.load %arg12[%c1_134, %c0_135, %c0_136] : memref<2x1x32xf32, #tpu.memory_space<vmem>>, vector<1x1x32xf32>
    %322 = vector.shape_cast %321 : vector<1x1x32xf32> to vector<1x32xf32>
    %cst_137 = arith.constant dense<0.000000e+00> : vector<8x64xf32>
    %323 = tpu.matmul %314, %316, %cst_137 {dimension_numbers = #tpu.dot_dimension_numbers<[1], [0], [0], [1], [0, 0, 1, 1], [], []>} : vector<8x32xf32>, vector<32x64xf32>, vector<8x64xf32> -> vector<8x64xf32>
    %324 = vector.broadcast %318 : vector<1x64xf32> to vector<8x64xf32>
    %325 = arith.addf %323, %324 : vector<8x64xf32>
    %cst_138 = arith.constant 0.000000e+00 : f32
    %326 = vector.broadcast %cst_138 : f32 to vector<8x64xf32>
    %327 = arith.cmpf ogt, %325, %326 : vector<8x64xf32>
    %cst_139 = arith.constant 0.00999999977 : f32
    %328 = vector.broadcast %cst_139 : f32 to vector<8x64xf32>
    %329 = arith.mulf %328, %325 : vector<8x64xf32>
    %330 = arith.select %327, %325, %329 : vector<8x64xi1>, vector<8x64xf32>
    %cst_140 = arith.constant dense<0.000000e+00> : vector<8x32xf32>
    %331 = tpu.matmul %330, %320, %cst_140 {dimension_numbers = #tpu.dot_dimension_numbers<[1], [0], [0], [1], [0, 0, 1, 1], [], []>} : vector<8x64xf32>, vector<64x32xf32>, vector<8x32xf32> -> vector<8x32xf32>
    %332 = vector.broadcast %322 : vector<1x32xf32> to vector<8x32xf32>
    %333 = arith.addf %331, %332 : vector<8x32xf32>
    %334 = arith.addf %314, %333 : vector<8x32xf32>
    %335 = vector.extract_strided_slice %184 {offsets = [2, 0], sizes = [1, 32], strides = [1, 1]} : vector<4x32xf32> to vector<1x32xf32>
    %336 = vector.extract_strided_slice %184 {offsets = [3, 0], sizes = [1, 32], strides = [1, 1]} : vector<4x32xf32> to vector<1x32xf32>
    %cst_141 = arith.constant dense<0.000000e+00> : vector<8xf32>
    %337 = vector.multi_reduction <add>, %334, %cst_141 [1] : vector<8x32xf32> to vector<8xf32>
    %338 = vector.shape_cast %337 : vector<8xf32> to vector<8x1xf32>
    %cst_142 = arith.constant 3.200000e+01 : f32
    %339 = vector.broadcast %cst_142 : f32 to vector<8x1xf32>
    %340 = arith.divf %338, %339 : vector<8x1xf32>
    %341 = vector.broadcast %340 : vector<8x1xf32> to vector<8x32xf32>
    %342 = arith.subf %334, %341 : vector<8x32xf32>
    %343 = arith.mulf %342, %342 : vector<8x32xf32>
    %cst_143 = arith.constant dense<0.000000e+00> : vector<8xf32>
    %344 = vector.multi_reduction <add>, %343, %cst_143 [1] : vector<8x32xf32> to vector<8xf32>
    %345 = vector.shape_cast %344 : vector<8xf32> to vector<8x1xf32>
    %cst_144 = arith.constant 3.200000e+01 : f32
    %346 = vector.broadcast %cst_144 : f32 to vector<8x1xf32>
    %347 = arith.divf %345, %346 : vector<8x1xf32>
    %348 = vector.broadcast %340 : vector<8x1xf32> to vector<8x32xf32>
    %349 = arith.subf %334, %348 : vector<8x32xf32>
    %cst_145 = arith.constant 9.99999974E-6 : f32
    %350 = vector.broadcast %cst_145 : f32 to vector<8x1xf32>
    %351 = arith.addf %347, %350 : vector<8x1xf32>
    %352 = math.rsqrt %351 : vector<8x1xf32>
    %353 = vector.broadcast %352 : vector<8x1xf32> to vector<8x32xf32>
    %354 = arith.mulf %349, %353 : vector<8x32xf32>
    %355 = vector.broadcast %335 : vector<1x32xf32> to vector<8x32xf32>
    %356 = arith.mulf %354, %355 : vector<8x32xf32>
    %357 = vector.broadcast %336 : vector<1x32xf32> to vector<8x32xf32>
    %358 = arith.addf %356, %357 : vector<8x32xf32>
    %c0_146 = arith.constant 0 : index
    %c0_147 = arith.constant 0 : index
    %c0_148 = arith.constant 0 : index
    %359 = vector.load %arg2[%c0_146, %c0_147, %c0_148] : memref<1x8x32xf32, #tpu.memory_space<vmem>>, vector<1x8x32xf32>
    %360 = vector.shape_cast %359 : vector<1x8x32xf32> to vector<8x32xf32>
    %c0_149 = arith.constant 0 : index
    %c0_150 = arith.constant 0 : index
    %c0_151 = arith.constant 0 : index
    %361 = vector.load %arg18[%c0_149, %c0_150, %c0_151] : memref<2x6x32xf32, #tpu.memory_space<vmem>>, vector<1x6x32xf32>
    %362 = vector.shape_cast %361 : vector<1x6x32xf32> to vector<6x32xf32>
    %c0_152 = arith.constant 0 : index
    %c0_153 = arith.constant 0 : index
    %c0_154 = arith.constant 0 : index
    %363 = vector.load %arg13[%c0_152, %c0_153, %c0_154] : memref<2x32x96xf32, #tpu.memory_space<vmem>>, vector<1x32x96xf32>
    %364 = vector.shape_cast %363 : vector<1x32x96xf32> to vector<32x96xf32>
    %cst_155 = arith.constant dense<0.000000e+00> : vector<8x96xf32>
    %365 = tpu.matmul %360, %364, %cst_155 {dimension_numbers = #tpu.dot_dimension_numbers<[1], [0], [0], [1], [0, 0, 1, 1], [], []>} : vector<8x32xf32>, vector<32x96xf32>, vector<8x96xf32> -> vector<8x96xf32>
    %366 = vector.extract_strided_slice %365 {offsets = [0, 0], sizes = [8, 32], strides = [1, 1]} : vector<8x96xf32> to vector<8x32xf32>
    %367 = vector.extract_strided_slice %365 {offsets = [0, 32], sizes = [8, 32], strides = [1, 1]} : vector<8x96xf32> to vector<8x32xf32>
    %368 = vector.extract_strided_slice %365 {offsets = [0, 64], sizes = [8, 32], strides = [1, 1]} : vector<8x96xf32> to vector<8x32xf32>
    %c0_156 = arith.constant 0 : index
    %c0_157 = arith.constant 0 : index
    %c0_158 = arith.constant 0 : index
    %369 = vector.load %arg14[%c0_156, %c0_157, %c0_158] : memref<2x32x32xf32, #tpu.memory_space<vmem>>, vector<1x32x32xf32>
    %370 = vector.shape_cast %369 : vector<1x32x32xf32> to vector<32x32xf32>
    %cst_159 = arith.constant 0.000000e+00 : f32
    %371 = vector.broadcast %cst_159 : f32 to vector<8x32xf32>
    %372 = vector.extract_strided_slice %366 {offsets = [0, 0], sizes = [8, 8], strides = [1, 1]} : vector<8x32xf32> to vector<8x8xf32>
    %373 = vector.extract_strided_slice %367 {offsets = [0, 0], sizes = [8, 8], strides = [1, 1]} : vector<8x32xf32> to vector<8x8xf32>
    %374 = vector.extract_strided_slice %368 {offsets = [0, 0], sizes = [8, 8], strides = [1, 1]} : vector<8x32xf32> to vector<8x8xf32>
    %cst_160 = arith.constant dense<0.000000e+00> : vector<8x8xf32>
    %375 = tpu.matmul %372, %373, %cst_160 {dimension_numbers = #tpu.dot_dimension_numbers<[1], [1], [0], [0], [0, 0, 1, 0], [], []>} : vector<8x8xf32>, vector<8x8xf32>, vector<8x8xf32> -> vector<8x8xf32>
    %cst_161 = arith.constant 0.353553385 : f32
    %376 = vector.broadcast %cst_161 : f32 to vector<8x8xf32>
    %377 = arith.mulf %375, %376 : vector<8x8xf32>
    %cst_162 = arith.constant 5.000000e-01 : f32
    %378 = vector.broadcast %cst_162 : f32 to vector<8x8xf32>
    %379 = arith.cmpf ogt, %2, %378 : vector<8x8xf32>
    %cst_163 = arith.constant -1.000000e+06 : f32
    %380 = vector.broadcast %cst_163 : f32 to vector<8x8xf32>
    %381 = arith.select %379, %377, %380 : vector<8x8xi1>, vector<8x8xf32>
    %cst_164 = arith.constant dense<0xFF800000> : vector<8xf32>
    %382 = vector.multi_reduction <maximumf>, %381, %cst_164 [1] : vector<8x8xf32> to vector<8xf32>
    %383 = vector.shape_cast %382 : vector<8xf32> to vector<8x1xf32>
    %384 = vector.broadcast %383 : vector<8x1xf32> to vector<8x8xf32>
    %385 = arith.subf %381, %384 : vector<8x8xf32>
    %386 = math.exp %385 : vector<8x8xf32>
    %cst_165 = arith.constant dense<0.000000e+00> : vector<8xf32>
    %387 = vector.multi_reduction <add>, %386, %cst_165 [1] : vector<8x8xf32> to vector<8xf32>
    %388 = vector.shape_cast %387 : vector<8xf32> to vector<8x1xf32>
    %389 = tpu.reciprocal %388 {approx = true} : vector<8x1xf32> -> vector<8x1xf32>
    %390 = vector.broadcast %389 : vector<8x1xf32> to vector<8x8xf32>
    %391 = arith.mulf %386, %390 : vector<8x8xf32>
    %cst_166 = arith.constant dense<0.000000e+00> : vector<8x8xf32>
    %392 = tpu.matmul %391, %374, %cst_166 {dimension_numbers = #tpu.dot_dimension_numbers<[1], [0], [0], [1], [0, 0, 1, 1], [], []>} : vector<8x8xf32>, vector<8x8xf32>, vector<8x8xf32> -> vector<8x8xf32>
    %393 = vector.extract_strided_slice %370 {offsets = [0, 0], sizes = [8, 32], strides = [1, 1]} : vector<32x32xf32> to vector<8x32xf32>
    %cst_167 = arith.constant dense<0.000000e+00> : vector<8x32xf32>
    %394 = tpu.matmul %392, %393, %cst_167 {dimension_numbers = #tpu.dot_dimension_numbers<[1], [0], [0], [1], [0, 0, 1, 1], [], []>} : vector<8x8xf32>, vector<8x32xf32>, vector<8x32xf32> -> vector<8x32xf32>
    %395 = arith.addf %371, %394 : vector<8x32xf32>
    %396 = vector.extract_strided_slice %366 {offsets = [0, 8], sizes = [8, 8], strides = [1, 1]} : vector<8x32xf32> to vector<8x8xf32>
    %397 = vector.extract_strided_slice %367 {offsets = [0, 8], sizes = [8, 8], strides = [1, 1]} : vector<8x32xf32> to vector<8x8xf32>
    %398 = vector.extract_strided_slice %368 {offsets = [0, 8], sizes = [8, 8], strides = [1, 1]} : vector<8x32xf32> to vector<8x8xf32>
    %cst_168 = arith.constant dense<0.000000e+00> : vector<8x8xf32>
    %399 = tpu.matmul %396, %397, %cst_168 {dimension_numbers = #tpu.dot_dimension_numbers<[1], [1], [0], [0], [0, 0, 1, 0], [], []>} : vector<8x8xf32>, vector<8x8xf32>, vector<8x8xf32> -> vector<8x8xf32>
    %cst_169 = arith.constant 0.353553385 : f32
    %400 = vector.broadcast %cst_169 : f32 to vector<8x8xf32>
    %401 = arith.mulf %399, %400 : vector<8x8xf32>
    %cst_170 = arith.constant 5.000000e-01 : f32
    %402 = vector.broadcast %cst_170 : f32 to vector<8x8xf32>
    %403 = arith.cmpf ogt, %2, %402 : vector<8x8xf32>
    %cst_171 = arith.constant -1.000000e+06 : f32
    %404 = vector.broadcast %cst_171 : f32 to vector<8x8xf32>
    %405 = arith.select %403, %401, %404 : vector<8x8xi1>, vector<8x8xf32>
    %cst_172 = arith.constant dense<0xFF800000> : vector<8xf32>
    %406 = vector.multi_reduction <maximumf>, %405, %cst_172 [1] : vector<8x8xf32> to vector<8xf32>
    %407 = vector.shape_cast %406 : vector<8xf32> to vector<8x1xf32>
    %408 = vector.broadcast %407 : vector<8x1xf32> to vector<8x8xf32>
    %409 = arith.subf %405, %408 : vector<8x8xf32>
    %410 = math.exp %409 : vector<8x8xf32>
    %cst_173 = arith.constant dense<0.000000e+00> : vector<8xf32>
    %411 = vector.multi_reduction <add>, %410, %cst_173 [1] : vector<8x8xf32> to vector<8xf32>
    %412 = vector.shape_cast %411 : vector<8xf32> to vector<8x1xf32>
    %413 = tpu.reciprocal %412 {approx = true} : vector<8x1xf32> -> vector<8x1xf32>
    %414 = vector.broadcast %413 : vector<8x1xf32> to vector<8x8xf32>
    %415 = arith.mulf %410, %414 : vector<8x8xf32>
    %cst_174 = arith.constant dense<0.000000e+00> : vector<8x8xf32>
    %416 = tpu.matmul %415, %398, %cst_174 {dimension_numbers = #tpu.dot_dimension_numbers<[1], [0], [0], [1], [0, 0, 1, 1], [], []>} : vector<8x8xf32>, vector<8x8xf32>, vector<8x8xf32> -> vector<8x8xf32>
    %417 = vector.extract_strided_slice %370 {offsets = [8, 0], sizes = [8, 32], strides = [1, 1]} : vector<32x32xf32> to vector<8x32xf32>
    %cst_175 = arith.constant dense<0.000000e+00> : vector<8x32xf32>
    %418 = tpu.matmul %416, %417, %cst_175 {dimension_numbers = #tpu.dot_dimension_numbers<[1], [0], [0], [1], [0, 0, 1, 1], [], []>} : vector<8x8xf32>, vector<8x32xf32>, vector<8x32xf32> -> vector<8x32xf32>
    %419 = arith.addf %395, %418 : vector<8x32xf32>
    %420 = vector.extract_strided_slice %366 {offsets = [0, 16], sizes = [8, 8], strides = [1, 1]} : vector<8x32xf32> to vector<8x8xf32>
    %421 = vector.extract_strided_slice %367 {offsets = [0, 16], sizes = [8, 8], strides = [1, 1]} : vector<8x32xf32> to vector<8x8xf32>
    %422 = vector.extract_strided_slice %368 {offsets = [0, 16], sizes = [8, 8], strides = [1, 1]} : vector<8x32xf32> to vector<8x8xf32>
    %cst_176 = arith.constant dense<0.000000e+00> : vector<8x8xf32>
    %423 = tpu.matmul %420, %421, %cst_176 {dimension_numbers = #tpu.dot_dimension_numbers<[1], [1], [0], [0], [0, 0, 1, 0], [], []>} : vector<8x8xf32>, vector<8x8xf32>, vector<8x8xf32> -> vector<8x8xf32>
    %cst_177 = arith.constant 0.353553385 : f32
    %424 = vector.broadcast %cst_177 : f32 to vector<8x8xf32>
    %425 = arith.mulf %423, %424 : vector<8x8xf32>
    %cst_178 = arith.constant 5.000000e-01 : f32
    %426 = vector.broadcast %cst_178 : f32 to vector<8x8xf32>
    %427 = arith.cmpf ogt, %2, %426 : vector<8x8xf32>
    %cst_179 = arith.constant -1.000000e+06 : f32
    %428 = vector.broadcast %cst_179 : f32 to vector<8x8xf32>
    %429 = arith.select %427, %425, %428 : vector<8x8xi1>, vector<8x8xf32>
    %cst_180 = arith.constant dense<0xFF800000> : vector<8xf32>
    %430 = vector.multi_reduction <maximumf>, %429, %cst_180 [1] : vector<8x8xf32> to vector<8xf32>
    %431 = vector.shape_cast %430 : vector<8xf32> to vector<8x1xf32>
    %432 = vector.broadcast %431 : vector<8x1xf32> to vector<8x8xf32>
    %433 = arith.subf %429, %432 : vector<8x8xf32>
    %434 = math.exp %433 : vector<8x8xf32>
    %cst_181 = arith.constant dense<0.000000e+00> : vector<8xf32>
    %435 = vector.multi_reduction <add>, %434, %cst_181 [1] : vector<8x8xf32> to vector<8xf32>
    %436 = vector.shape_cast %435 : vector<8xf32> to vector<8x1xf32>
    %437 = tpu.reciprocal %436 {approx = true} : vector<8x1xf32> -> vector<8x1xf32>
    %438 = vector.broadcast %437 : vector<8x1xf32> to vector<8x8xf32>
    %439 = arith.mulf %434, %438 : vector<8x8xf32>
    %cst_182 = arith.constant dense<0.000000e+00> : vector<8x8xf32>
    %440 = tpu.matmul %439, %422, %cst_182 {dimension_numbers = #tpu.dot_dimension_numbers<[1], [0], [0], [1], [0, 0, 1, 1], [], []>} : vector<8x8xf32>, vector<8x8xf32>, vector<8x8xf32> -> vector<8x8xf32>
    %441 = vector.extract_strided_slice %370 {offsets = [16, 0], sizes = [8, 32], strides = [1, 1]} : vector<32x32xf32> to vector<8x32xf32>
    %cst_183 = arith.constant dense<0.000000e+00> : vector<8x32xf32>
    %442 = tpu.matmul %440, %441, %cst_183 {dimension_numbers = #tpu.dot_dimension_numbers<[1], [0], [0], [1], [0, 0, 1, 1], [], []>} : vector<8x8xf32>, vector<8x32xf32>, vector<8x32xf32> -> vector<8x32xf32>
    %443 = arith.addf %419, %442 : vector<8x32xf32>
    %444 = vector.extract_strided_slice %366 {offsets = [0, 24], sizes = [8, 8], strides = [1, 1]} : vector<8x32xf32> to vector<8x8xf32>
    %445 = vector.extract_strided_slice %367 {offsets = [0, 24], sizes = [8, 8], strides = [1, 1]} : vector<8x32xf32> to vector<8x8xf32>
    %446 = vector.extract_strided_slice %368 {offsets = [0, 24], sizes = [8, 8], strides = [1, 1]} : vector<8x32xf32> to vector<8x8xf32>
    %cst_184 = arith.constant dense<0.000000e+00> : vector<8x8xf32>
    %447 = tpu.matmul %444, %445, %cst_184 {dimension_numbers = #tpu.dot_dimension_numbers<[1], [1], [0], [0], [0, 0, 1, 0], [], []>} : vector<8x8xf32>, vector<8x8xf32>, vector<8x8xf32> -> vector<8x8xf32>
    %cst_185 = arith.constant 0.353553385 : f32
    %448 = vector.broadcast %cst_185 : f32 to vector<8x8xf32>
    %449 = arith.mulf %447, %448 : vector<8x8xf32>
    %cst_186 = arith.constant 5.000000e-01 : f32
    %450 = vector.broadcast %cst_186 : f32 to vector<8x8xf32>
    %451 = arith.cmpf ogt, %2, %450 : vector<8x8xf32>
    %cst_187 = arith.constant -1.000000e+06 : f32
    %452 = vector.broadcast %cst_187 : f32 to vector<8x8xf32>
    %453 = arith.select %451, %449, %452 : vector<8x8xi1>, vector<8x8xf32>
    %cst_188 = arith.constant dense<0xFF800000> : vector<8xf32>
    %454 = vector.multi_reduction <maximumf>, %453, %cst_188 [1] : vector<8x8xf32> to vector<8xf32>
    %455 = vector.shape_cast %454 : vector<8xf32> to vector<8x1xf32>
    %456 = vector.broadcast %455 : vector<8x1xf32> to vector<8x8xf32>
    %457 = arith.subf %453, %456 : vector<8x8xf32>
    %458 = math.exp %457 : vector<8x8xf32>
    %cst_189 = arith.constant dense<0.000000e+00> : vector<8xf32>
    %459 = vector.multi_reduction <add>, %458, %cst_189 [1] : vector<8x8xf32> to vector<8xf32>
    %460 = vector.shape_cast %459 : vector<8xf32> to vector<8x1xf32>
    %461 = tpu.reciprocal %460 {approx = true} : vector<8x1xf32> -> vector<8x1xf32>
    %462 = vector.broadcast %461 : vector<8x1xf32> to vector<8x8xf32>
    %463 = arith.mulf %458, %462 : vector<8x8xf32>
    %cst_190 = arith.constant dense<0.000000e+00> : vector<8x8xf32>
    %464 = tpu.matmul %463, %446, %cst_190 {dimension_numbers = #tpu.dot_dimension_numbers<[1], [0], [0], [1], [0, 0, 1, 1], [], []>} : vector<8x8xf32>, vector<8x8xf32>, vector<8x8xf32> -> vector<8x8xf32>
    %465 = vector.extract_strided_slice %370 {offsets = [24, 0], sizes = [8, 32], strides = [1, 1]} : vector<32x32xf32> to vector<8x32xf32>
    %cst_191 = arith.constant dense<0.000000e+00> : vector<8x32xf32>
    %466 = tpu.matmul %464, %465, %cst_191 {dimension_numbers = #tpu.dot_dimension_numbers<[1], [0], [0], [1], [0, 0, 1, 1], [], []>} : vector<8x8xf32>, vector<8x32xf32>, vector<8x32xf32> -> vector<8x32xf32>
    %467 = arith.addf %443, %466 : vector<8x32xf32>
    %468 = arith.addf %360, %467 : vector<8x32xf32>
    %469 = vector.extract_strided_slice %362 {offsets = [0, 0], sizes = [1, 32], strides = [1, 1]} : vector<6x32xf32> to vector<1x32xf32>
    %470 = vector.extract_strided_slice %362 {offsets = [1, 0], sizes = [1, 32], strides = [1, 1]} : vector<6x32xf32> to vector<1x32xf32>
    %cst_192 = arith.constant dense<0.000000e+00> : vector<8xf32>
    %471 = vector.multi_reduction <add>, %468, %cst_192 [1] : vector<8x32xf32> to vector<8xf32>
    %472 = vector.shape_cast %471 : vector<8xf32> to vector<8x1xf32>
    %cst_193 = arith.constant 3.200000e+01 : f32
    %473 = vector.broadcast %cst_193 : f32 to vector<8x1xf32>
    %474 = arith.divf %472, %473 : vector<8x1xf32>
    %475 = vector.broadcast %474 : vector<8x1xf32> to vector<8x32xf32>
    %476 = arith.subf %468, %475 : vector<8x32xf32>
    %477 = arith.mulf %476, %476 : vector<8x32xf32>
    %cst_194 = arith.constant dense<0.000000e+00> : vector<8xf32>
    %478 = vector.multi_reduction <add>, %477, %cst_194 [1] : vector<8x32xf32> to vector<8xf32>
    %479 = vector.shape_cast %478 : vector<8xf32> to vector<8x1xf32>
    %cst_195 = arith.constant 3.200000e+01 : f32
    %480 = vector.broadcast %cst_195 : f32 to vector<8x1xf32>
    %481 = arith.divf %479, %480 : vector<8x1xf32>
    %482 = vector.broadcast %474 : vector<8x1xf32> to vector<8x32xf32>
    %483 = arith.subf %468, %482 : vector<8x32xf32>
    %cst_196 = arith.constant 9.99999974E-6 : f32
    %484 = vector.broadcast %cst_196 : f32 to vector<8x1xf32>
    %485 = arith.addf %481, %484 : vector<8x1xf32>
    %486 = math.rsqrt %485 : vector<8x1xf32>
    %487 = vector.broadcast %486 : vector<8x1xf32> to vector<8x32xf32>
    %488 = arith.mulf %483, %487 : vector<8x32xf32>
    %489 = vector.broadcast %469 : vector<1x32xf32> to vector<8x32xf32>
    %490 = arith.mulf %488, %489 : vector<8x32xf32>
    %491 = vector.broadcast %470 : vector<1x32xf32> to vector<8x32xf32>
    %492 = arith.addf %490, %491 : vector<8x32xf32>
    %c0_197 = arith.constant 0 : index
    %c0_198 = arith.constant 0 : index
    %c0_199 = arith.constant 0 : index
    %493 = vector.load %arg15[%c0_197, %c0_198, %c0_199] : memref<2x32x32xf32, #tpu.memory_space<vmem>>, vector<1x32x32xf32>
    %494 = vector.shape_cast %493 : vector<1x32x32xf32> to vector<32x32xf32>
    %cst_200 = arith.constant dense<0.000000e+00> : vector<8x32xf32>
    %495 = tpu.matmul %492, %494, %cst_200 {dimension_numbers = #tpu.dot_dimension_numbers<[1], [0], [0], [1], [0, 0, 1, 1], [], []>} : vector<8x32xf32>, vector<32x32xf32>, vector<8x32xf32> -> vector<8x32xf32>
    %c0_201 = arith.constant 0 : index
    %c0_202 = arith.constant 0 : index
    %c0_203 = arith.constant 0 : index
    %496 = vector.load %arg16[%c0_201, %c0_202, %c0_203] : memref<2x32x64xf32, #tpu.memory_space<vmem>>, vector<1x32x64xf32>
    %497 = vector.shape_cast %496 : vector<1x32x64xf32> to vector<32x64xf32>
    %cst_204 = arith.constant dense<0.000000e+00> : vector<8x64xf32>
    %498 = tpu.matmul %358, %497, %cst_204 {dimension_numbers = #tpu.dot_dimension_numbers<[1], [0], [0], [1], [0, 0, 1, 1], [], []>} : vector<8x32xf32>, vector<32x64xf32>, vector<8x64xf32> -> vector<8x64xf32>
    %499 = vector.extract_strided_slice %498 {offsets = [0, 0], sizes = [8, 32], strides = [1, 1]} : vector<8x64xf32> to vector<8x32xf32>
    %500 = vector.extract_strided_slice %498 {offsets = [0, 32], sizes = [8, 32], strides = [1, 1]} : vector<8x64xf32> to vector<8x32xf32>
    %c0_205 = arith.constant 0 : index
    %c0_206 = arith.constant 0 : index
    %c0_207 = arith.constant 0 : index
    %501 = vector.load %arg17[%c0_205, %c0_206, %c0_207] : memref<2x32x32xf32, #tpu.memory_space<vmem>>, vector<1x32x32xf32>
    %502 = vector.shape_cast %501 : vector<1x32x32xf32> to vector<32x32xf32>
    %cst_208 = arith.constant 0.000000e+00 : f32
    %503 = vector.broadcast %cst_208 : f32 to vector<8x32xf32>
    %504 = vector.extract_strided_slice %495 {offsets = [0, 0], sizes = [8, 8], strides = [1, 1]} : vector<8x32xf32> to vector<8x8xf32>
    %505 = vector.extract_strided_slice %499 {offsets = [0, 0], sizes = [8, 8], strides = [1, 1]} : vector<8x32xf32> to vector<8x8xf32>
    %506 = vector.extract_strided_slice %500 {offsets = [0, 0], sizes = [8, 8], strides = [1, 1]} : vector<8x32xf32> to vector<8x8xf32>
    %cst_209 = arith.constant dense<0.000000e+00> : vector<8x8xf32>
    %507 = tpu.matmul %504, %505, %cst_209 {dimension_numbers = #tpu.dot_dimension_numbers<[1], [1], [0], [0], [0, 0, 1, 0], [], []>} : vector<8x8xf32>, vector<8x8xf32>, vector<8x8xf32> -> vector<8x8xf32>
    %cst_210 = arith.constant 0.353553385 : f32
    %508 = vector.broadcast %cst_210 : f32 to vector<8x8xf32>
    %509 = arith.mulf %507, %508 : vector<8x8xf32>
    %cst_211 = arith.constant 5.000000e-01 : f32
    %510 = vector.broadcast %cst_211 : f32 to vector<8x8xf32>
    %511 = arith.cmpf ogt, %4, %510 : vector<8x8xf32>
    %cst_212 = arith.constant -1.000000e+06 : f32
    %512 = vector.broadcast %cst_212 : f32 to vector<8x8xf32>
    %513 = arith.select %511, %509, %512 : vector<8x8xi1>, vector<8x8xf32>
    %cst_213 = arith.constant dense<0xFF800000> : vector<8xf32>
    %514 = vector.multi_reduction <maximumf>, %513, %cst_213 [1] : vector<8x8xf32> to vector<8xf32>
    %515 = vector.shape_cast %514 : vector<8xf32> to vector<8x1xf32>
    %516 = vector.broadcast %515 : vector<8x1xf32> to vector<8x8xf32>
    %517 = arith.subf %513, %516 : vector<8x8xf32>
    %518 = math.exp %517 : vector<8x8xf32>
    %cst_214 = arith.constant dense<0.000000e+00> : vector<8xf32>
    %519 = vector.multi_reduction <add>, %518, %cst_214 [1] : vector<8x8xf32> to vector<8xf32>
    %520 = vector.shape_cast %519 : vector<8xf32> to vector<8x1xf32>
    %521 = tpu.reciprocal %520 {approx = true} : vector<8x1xf32> -> vector<8x1xf32>
    %522 = vector.broadcast %521 : vector<8x1xf32> to vector<8x8xf32>
    %523 = arith.mulf %518, %522 : vector<8x8xf32>
    %cst_215 = arith.constant dense<0.000000e+00> : vector<8x8xf32>
    %524 = tpu.matmul %523, %506, %cst_215 {dimension_numbers = #tpu.dot_dimension_numbers<[1], [0], [0], [1], [0, 0, 1, 1], [], []>} : vector<8x8xf32>, vector<8x8xf32>, vector<8x8xf32> -> vector<8x8xf32>
    %525 = vector.extract_strided_slice %502 {offsets = [0, 0], sizes = [8, 32], strides = [1, 1]} : vector<32x32xf32> to vector<8x32xf32>
    %cst_216 = arith.constant dense<0.000000e+00> : vector<8x32xf32>
    %526 = tpu.matmul %524, %525, %cst_216 {dimension_numbers = #tpu.dot_dimension_numbers<[1], [0], [0], [1], [0, 0, 1, 1], [], []>} : vector<8x8xf32>, vector<8x32xf32>, vector<8x32xf32> -> vector<8x32xf32>
    %527 = arith.addf %503, %526 : vector<8x32xf32>
    %528 = vector.extract_strided_slice %495 {offsets = [0, 8], sizes = [8, 8], strides = [1, 1]} : vector<8x32xf32> to vector<8x8xf32>
    %529 = vector.extract_strided_slice %499 {offsets = [0, 8], sizes = [8, 8], strides = [1, 1]} : vector<8x32xf32> to vector<8x8xf32>
    %530 = vector.extract_strided_slice %500 {offsets = [0, 8], sizes = [8, 8], strides = [1, 1]} : vector<8x32xf32> to vector<8x8xf32>
    %cst_217 = arith.constant dense<0.000000e+00> : vector<8x8xf32>
    %531 = tpu.matmul %528, %529, %cst_217 {dimension_numbers = #tpu.dot_dimension_numbers<[1], [1], [0], [0], [0, 0, 1, 0], [], []>} : vector<8x8xf32>, vector<8x8xf32>, vector<8x8xf32> -> vector<8x8xf32>
    %cst_218 = arith.constant 0.353553385 : f32
    %532 = vector.broadcast %cst_218 : f32 to vector<8x8xf32>
    %533 = arith.mulf %531, %532 : vector<8x8xf32>
    %cst_219 = arith.constant 5.000000e-01 : f32
    %534 = vector.broadcast %cst_219 : f32 to vector<8x8xf32>
    %535 = arith.cmpf ogt, %4, %534 : vector<8x8xf32>
    %cst_220 = arith.constant -1.000000e+06 : f32
    %536 = vector.broadcast %cst_220 : f32 to vector<8x8xf32>
    %537 = arith.select %535, %533, %536 : vector<8x8xi1>, vector<8x8xf32>
    %cst_221 = arith.constant dense<0xFF800000> : vector<8xf32>
    %538 = vector.multi_reduction <maximumf>, %537, %cst_221 [1] : vector<8x8xf32> to vector<8xf32>
    %539 = vector.shape_cast %538 : vector<8xf32> to vector<8x1xf32>
    %540 = vector.broadcast %539 : vector<8x1xf32> to vector<8x8xf32>
    %541 = arith.subf %537, %540 : vector<8x8xf32>
    %542 = math.exp %541 : vector<8x8xf32>
    %cst_222 = arith.constant dense<0.000000e+00> : vector<8xf32>
    %543 = vector.multi_reduction <add>, %542, %cst_222 [1] : vector<8x8xf32> to vector<8xf32>
    %544 = vector.shape_cast %543 : vector<8xf32> to vector<8x1xf32>
    %545 = tpu.reciprocal %544 {approx = true} : vector<8x1xf32> -> vector<8x1xf32>
    %546 = vector.broadcast %545 : vector<8x1xf32> to vector<8x8xf32>
    %547 = arith.mulf %542, %546 : vector<8x8xf32>
    %cst_223 = arith.constant dense<0.000000e+00> : vector<8x8xf32>
    %548 = tpu.matmul %547, %530, %cst_223 {dimension_numbers = #tpu.dot_dimension_numbers<[1], [0], [0], [1], [0, 0, 1, 1], [], []>} : vector<8x8xf32>, vector<8x8xf32>, vector<8x8xf32> -> vector<8x8xf32>
    %549 = vector.extract_strided_slice %502 {offsets = [8, 0], sizes = [8, 32], strides = [1, 1]} : vector<32x32xf32> to vector<8x32xf32>
    %cst_224 = arith.constant dense<0.000000e+00> : vector<8x32xf32>
    %550 = tpu.matmul %548, %549, %cst_224 {dimension_numbers = #tpu.dot_dimension_numbers<[1], [0], [0], [1], [0, 0, 1, 1], [], []>} : vector<8x8xf32>, vector<8x32xf32>, vector<8x32xf32> -> vector<8x32xf32>
    %551 = arith.addf %527, %550 : vector<8x32xf32>
    %552 = vector.extract_strided_slice %495 {offsets = [0, 16], sizes = [8, 8], strides = [1, 1]} : vector<8x32xf32> to vector<8x8xf32>
    %553 = vector.extract_strided_slice %499 {offsets = [0, 16], sizes = [8, 8], strides = [1, 1]} : vector<8x32xf32> to vector<8x8xf32>
    %554 = vector.extract_strided_slice %500 {offsets = [0, 16], sizes = [8, 8], strides = [1, 1]} : vector<8x32xf32> to vector<8x8xf32>
    %cst_225 = arith.constant dense<0.000000e+00> : vector<8x8xf32>
    %555 = tpu.matmul %552, %553, %cst_225 {dimension_numbers = #tpu.dot_dimension_numbers<[1], [1], [0], [0], [0, 0, 1, 0], [], []>} : vector<8x8xf32>, vector<8x8xf32>, vector<8x8xf32> -> vector<8x8xf32>
    %cst_226 = arith.constant 0.353553385 : f32
    %556 = vector.broadcast %cst_226 : f32 to vector<8x8xf32>
    %557 = arith.mulf %555, %556 : vector<8x8xf32>
    %cst_227 = arith.constant 5.000000e-01 : f32
    %558 = vector.broadcast %cst_227 : f32 to vector<8x8xf32>
    %559 = arith.cmpf ogt, %4, %558 : vector<8x8xf32>
    %cst_228 = arith.constant -1.000000e+06 : f32
    %560 = vector.broadcast %cst_228 : f32 to vector<8x8xf32>
    %561 = arith.select %559, %557, %560 : vector<8x8xi1>, vector<8x8xf32>
    %cst_229 = arith.constant dense<0xFF800000> : vector<8xf32>
    %562 = vector.multi_reduction <maximumf>, %561, %cst_229 [1] : vector<8x8xf32> to vector<8xf32>
    %563 = vector.shape_cast %562 : vector<8xf32> to vector<8x1xf32>
    %564 = vector.broadcast %563 : vector<8x1xf32> to vector<8x8xf32>
    %565 = arith.subf %561, %564 : vector<8x8xf32>
    %566 = math.exp %565 : vector<8x8xf32>
    %cst_230 = arith.constant dense<0.000000e+00> : vector<8xf32>
    %567 = vector.multi_reduction <add>, %566, %cst_230 [1] : vector<8x8xf32> to vector<8xf32>
    %568 = vector.shape_cast %567 : vector<8xf32> to vector<8x1xf32>
    %569 = tpu.reciprocal %568 {approx = true} : vector<8x1xf32> -> vector<8x1xf32>
    %570 = vector.broadcast %569 : vector<8x1xf32> to vector<8x8xf32>
    %571 = arith.mulf %566, %570 : vector<8x8xf32>
    %cst_231 = arith.constant dense<0.000000e+00> : vector<8x8xf32>
    %572 = tpu.matmul %571, %554, %cst_231 {dimension_numbers = #tpu.dot_dimension_numbers<[1], [0], [0], [1], [0, 0, 1, 1], [], []>} : vector<8x8xf32>, vector<8x8xf32>, vector<8x8xf32> -> vector<8x8xf32>
    %573 = vector.extract_strided_slice %502 {offsets = [16, 0], sizes = [8, 32], strides = [1, 1]} : vector<32x32xf32> to vector<8x32xf32>
    %cst_232 = arith.constant dense<0.000000e+00> : vector<8x32xf32>
    %574 = tpu.matmul %572, %573, %cst_232 {dimension_numbers = #tpu.dot_dimension_numbers<[1], [0], [0], [1], [0, 0, 1, 1], [], []>} : vector<8x8xf32>, vector<8x32xf32>, vector<8x32xf32> -> vector<8x32xf32>
    %575 = arith.addf %551, %574 : vector<8x32xf32>
    %576 = vector.extract_strided_slice %495 {offsets = [0, 24], sizes = [8, 8], strides = [1, 1]} : vector<8x32xf32> to vector<8x8xf32>
    %577 = vector.extract_strided_slice %499 {offsets = [0, 24], sizes = [8, 8], strides = [1, 1]} : vector<8x32xf32> to vector<8x8xf32>
    %578 = vector.extract_strided_slice %500 {offsets = [0, 24], sizes = [8, 8], strides = [1, 1]} : vector<8x32xf32> to vector<8x8xf32>
    %cst_233 = arith.constant dense<0.000000e+00> : vector<8x8xf32>
    %579 = tpu.matmul %576, %577, %cst_233 {dimension_numbers = #tpu.dot_dimension_numbers<[1], [1], [0], [0], [0, 0, 1, 0], [], []>} : vector<8x8xf32>, vector<8x8xf32>, vector<8x8xf32> -> vector<8x8xf32>
    %cst_234 = arith.constant 0.353553385 : f32
    %580 = vector.broadcast %cst_234 : f32 to vector<8x8xf32>
    %581 = arith.mulf %579, %580 : vector<8x8xf32>
    %cst_235 = arith.constant 5.000000e-01 : f32
    %582 = vector.broadcast %cst_235 : f32 to vector<8x8xf32>
    %583 = arith.cmpf ogt, %4, %582 : vector<8x8xf32>
    %cst_236 = arith.constant -1.000000e+06 : f32
    %584 = vector.broadcast %cst_236 : f32 to vector<8x8xf32>
    %585 = arith.select %583, %581, %584 : vector<8x8xi1>, vector<8x8xf32>
    %cst_237 = arith.constant dense<0xFF800000> : vector<8xf32>
    %586 = vector.multi_reduction <maximumf>, %585, %cst_237 [1] : vector<8x8xf32> to vector<8xf32>
    %587 = vector.shape_cast %586 : vector<8xf32> to vector<8x1xf32>
    %588 = vector.broadcast %587 : vector<8x1xf32> to vector<8x8xf32>
    %589 = arith.subf %585, %588 : vector<8x8xf32>
    %590 = math.exp %589 : vector<8x8xf32>
    %cst_238 = arith.constant dense<0.000000e+00> : vector<8xf32>
    %591 = vector.multi_reduction <add>, %590, %cst_238 [1] : vector<8x8xf32> to vector<8xf32>
    %592 = vector.shape_cast %591 : vector<8xf32> to vector<8x1xf32>
    %593 = tpu.reciprocal %592 {approx = true} : vector<8x1xf32> -> vector<8x1xf32>
    %594 = vector.broadcast %593 : vector<8x1xf32> to vector<8x8xf32>
    %595 = arith.mulf %590, %594 : vector<8x8xf32>
    %cst_239 = arith.constant dense<0.000000e+00> : vector<8x8xf32>
    %596 = tpu.matmul %595, %578, %cst_239 {dimension_numbers = #tpu.dot_dimension_numbers<[1], [0], [0], [1], [0, 0, 1, 1], [], []>} : vector<8x8xf32>, vector<8x8xf32>, vector<8x8xf32> -> vector<8x8xf32>
    %597 = vector.extract_strided_slice %502 {offsets = [24, 0], sizes = [8, 32], strides = [1, 1]} : vector<32x32xf32> to vector<8x32xf32>
    %cst_240 = arith.constant dense<0.000000e+00> : vector<8x32xf32>
    %598 = tpu.matmul %596, %597, %cst_240 {dimension_numbers = #tpu.dot_dimension_numbers<[1], [0], [0], [1], [0, 0, 1, 1], [], []>} : vector<8x8xf32>, vector<8x32xf32>, vector<8x32xf32> -> vector<8x32xf32>
    %599 = arith.addf %575, %598 : vector<8x32xf32>
    %600 = arith.addf %492, %599 : vector<8x32xf32>
    %601 = vector.extract_strided_slice %362 {offsets = [2, 0], sizes = [1, 32], strides = [1, 1]} : vector<6x32xf32> to vector<1x32xf32>
    %602 = vector.extract_strided_slice %362 {offsets = [3, 0], sizes = [1, 32], strides = [1, 1]} : vector<6x32xf32> to vector<1x32xf32>
    %cst_241 = arith.constant dense<0.000000e+00> : vector<8xf32>
    %603 = vector.multi_reduction <add>, %600, %cst_241 [1] : vector<8x32xf32> to vector<8xf32>
    %604 = vector.shape_cast %603 : vector<8xf32> to vector<8x1xf32>
    %cst_242 = arith.constant 3.200000e+01 : f32
    %605 = vector.broadcast %cst_242 : f32 to vector<8x1xf32>
    %606 = arith.divf %604, %605 : vector<8x1xf32>
    %607 = vector.broadcast %606 : vector<8x1xf32> to vector<8x32xf32>
    %608 = arith.subf %600, %607 : vector<8x32xf32>
    %609 = arith.mulf %608, %608 : vector<8x32xf32>
    %cst_243 = arith.constant dense<0.000000e+00> : vector<8xf32>
    %610 = vector.multi_reduction <add>, %609, %cst_243 [1] : vector<8x32xf32> to vector<8xf32>
    %611 = vector.shape_cast %610 : vector<8xf32> to vector<8x1xf32>
    %cst_244 = arith.constant 3.200000e+01 : f32
    %612 = vector.broadcast %cst_244 : f32 to vector<8x1xf32>
    %613 = arith.divf %611, %612 : vector<8x1xf32>
    %614 = vector.broadcast %606 : vector<8x1xf32> to vector<8x32xf32>
    %615 = arith.subf %600, %614 : vector<8x32xf32>
    %cst_245 = arith.constant 9.99999974E-6 : f32
    %616 = vector.broadcast %cst_245 : f32 to vector<8x1xf32>
    %617 = arith.addf %613, %616 : vector<8x1xf32>
    %618 = math.rsqrt %617 : vector<8x1xf32>
    %619 = vector.broadcast %618 : vector<8x1xf32> to vector<8x32xf32>
    %620 = arith.mulf %615, %619 : vector<8x32xf32>
    %621 = vector.broadcast %601 : vector<1x32xf32> to vector<8x32xf32>
    %622 = arith.mulf %620, %621 : vector<8x32xf32>
    %623 = vector.broadcast %602 : vector<1x32xf32> to vector<8x32xf32>
    %624 = arith.addf %622, %623 : vector<8x32xf32>
    %c0_246 = arith.constant 0 : index
    %c0_247 = arith.constant 0 : index
    %c0_248 = arith.constant 0 : index
    %625 = vector.load %arg19[%c0_246, %c0_247, %c0_248] : memref<2x32x64xf32, #tpu.memory_space<vmem>>, vector<1x32x64xf32>
    %626 = vector.shape_cast %625 : vector<1x32x64xf32> to vector<32x64xf32>
    %c0_249 = arith.constant 0 : index
    %c0_250 = arith.constant 0 : index
    %c0_251 = arith.constant 0 : index
    %627 = vector.load %arg20[%c0_249, %c0_250, %c0_251] : memref<2x1x64xf32, #tpu.memory_space<vmem>>, vector<1x1x64xf32>
    %628 = vector.shape_cast %627 : vector<1x1x64xf32> to vector<1x64xf32>
    %c0_252 = arith.constant 0 : index
    %c0_253 = arith.constant 0 : index
    %c0_254 = arith.constant 0 : index
    %629 = vector.load %arg21[%c0_252, %c0_253, %c0_254] : memref<2x64x32xf32, #tpu.memory_space<vmem>>, vector<1x64x32xf32>
    %630 = vector.shape_cast %629 : vector<1x64x32xf32> to vector<64x32xf32>
    %c0_255 = arith.constant 0 : index
    %c0_256 = arith.constant 0 : index
    %c0_257 = arith.constant 0 : index
    %631 = vector.load %arg22[%c0_255, %c0_256, %c0_257] : memref<2x1x32xf32, #tpu.memory_space<vmem>>, vector<1x1x32xf32>
    %632 = vector.shape_cast %631 : vector<1x1x32xf32> to vector<1x32xf32>
    %cst_258 = arith.constant dense<0.000000e+00> : vector<8x64xf32>
    %633 = tpu.matmul %624, %626, %cst_258 {dimension_numbers = #tpu.dot_dimension_numbers<[1], [0], [0], [1], [0, 0, 1, 1], [], []>} : vector<8x32xf32>, vector<32x64xf32>, vector<8x64xf32> -> vector<8x64xf32>
    %634 = vector.broadcast %628 : vector<1x64xf32> to vector<8x64xf32>
    %635 = arith.addf %633, %634 : vector<8x64xf32>
    %cst_259 = arith.constant 0.000000e+00 : f32
    %636 = vector.broadcast %cst_259 : f32 to vector<8x64xf32>
    %637 = arith.cmpf ogt, %635, %636 : vector<8x64xf32>
    %cst_260 = arith.constant 0.00999999977 : f32
    %638 = vector.broadcast %cst_260 : f32 to vector<8x64xf32>
    %639 = arith.mulf %638, %635 : vector<8x64xf32>
    %640 = arith.select %637, %635, %639 : vector<8x64xi1>, vector<8x64xf32>
    %cst_261 = arith.constant dense<0.000000e+00> : vector<8x32xf32>
    %641 = tpu.matmul %640, %630, %cst_261 {dimension_numbers = #tpu.dot_dimension_numbers<[1], [0], [0], [1], [0, 0, 1, 1], [], []>} : vector<8x64xf32>, vector<64x32xf32>, vector<8x32xf32> -> vector<8x32xf32>
    %642 = vector.broadcast %632 : vector<1x32xf32> to vector<8x32xf32>
    %643 = arith.addf %641, %642 : vector<8x32xf32>
    %644 = arith.addf %624, %643 : vector<8x32xf32>
    %645 = vector.extract_strided_slice %362 {offsets = [4, 0], sizes = [1, 32], strides = [1, 1]} : vector<6x32xf32> to vector<1x32xf32>
    %646 = vector.extract_strided_slice %362 {offsets = [5, 0], sizes = [1, 32], strides = [1, 1]} : vector<6x32xf32> to vector<1x32xf32>
    %cst_262 = arith.constant dense<0.000000e+00> : vector<8xf32>
    %647 = vector.multi_reduction <add>, %644, %cst_262 [1] : vector<8x32xf32> to vector<8xf32>
    %648 = vector.shape_cast %647 : vector<8xf32> to vector<8x1xf32>
    %cst_263 = arith.constant 3.200000e+01 : f32
    %649 = vector.broadcast %cst_263 : f32 to vector<8x1xf32>
    %650 = arith.divf %648, %649 : vector<8x1xf32>
    %651 = vector.broadcast %650 : vector<8x1xf32> to vector<8x32xf32>
    %652 = arith.subf %644, %651 : vector<8x32xf32>
    %653 = arith.mulf %652, %652 : vector<8x32xf32>
    %cst_264 = arith.constant dense<0.000000e+00> : vector<8xf32>
    %654 = vector.multi_reduction <add>, %653, %cst_264 [1] : vector<8x32xf32> to vector<8xf32>
    %655 = vector.shape_cast %654 : vector<8xf32> to vector<8x1xf32>
    %cst_265 = arith.constant 3.200000e+01 : f32
    %656 = vector.broadcast %cst_265 : f32 to vector<8x1xf32>
    %657 = arith.divf %655, %656 : vector<8x1xf32>
    %658 = vector.broadcast %650 : vector<8x1xf32> to vector<8x32xf32>
    %659 = arith.subf %644, %658 : vector<8x32xf32>
    %cst_266 = arith.constant 9.99999974E-6 : f32
    %660 = vector.broadcast %cst_266 : f32 to vector<8x1xf32>
    %661 = arith.addf %657, %660 : vector<8x1xf32>
    %662 = math.rsqrt %661 : vector<8x1xf32>
    %663 = vector.broadcast %662 : vector<8x1xf32> to vector<8x32xf32>
    %664 = arith.mulf %659, %663 : vector<8x32xf32>
    %665 = vector.broadcast %645 : vector<1x32xf32> to vector<8x32xf32>
    %666 = arith.mulf %664, %665 : vector<8x32xf32>
    %667 = vector.broadcast %646 : vector<1x32xf32> to vector<8x32xf32>
    %668 = arith.addf %666, %667 : vector<8x32xf32>
    %c1_267 = arith.constant 1 : index
    %c0_268 = arith.constant 0 : index
    %c0_269 = arith.constant 0 : index
    %669 = vector.load %arg18[%c1_267, %c0_268, %c0_269] : memref<2x6x32xf32, #tpu.memory_space<vmem>>, vector<1x6x32xf32>
    %670 = vector.shape_cast %669 : vector<1x6x32xf32> to vector<6x32xf32>
    %c1_270 = arith.constant 1 : index
    %c0_271 = arith.constant 0 : index
    %c0_272 = arith.constant 0 : index
    %671 = vector.load %arg13[%c1_270, %c0_271, %c0_272] : memref<2x32x96xf32, #tpu.memory_space<vmem>>, vector<1x32x96xf32>
    %672 = vector.shape_cast %671 : vector<1x32x96xf32> to vector<32x96xf32>
    %cst_273 = arith.constant dense<0.000000e+00> : vector<8x96xf32>
    %673 = tpu.matmul %668, %672, %cst_273 {dimension_numbers = #tpu.dot_dimension_numbers<[1], [0], [0], [1], [0, 0, 1, 1], [], []>} : vector<8x32xf32>, vector<32x96xf32>, vector<8x96xf32> -> vector<8x96xf32>
    %674 = vector.extract_strided_slice %673 {offsets = [0, 0], sizes = [8, 32], strides = [1, 1]} : vector<8x96xf32> to vector<8x32xf32>
    %675 = vector.extract_strided_slice %673 {offsets = [0, 32], sizes = [8, 32], strides = [1, 1]} : vector<8x96xf32> to vector<8x32xf32>
    %676 = vector.extract_strided_slice %673 {offsets = [0, 64], sizes = [8, 32], strides = [1, 1]} : vector<8x96xf32> to vector<8x32xf32>
    %c1_274 = arith.constant 1 : index
    %c0_275 = arith.constant 0 : index
    %c0_276 = arith.constant 0 : index
    %677 = vector.load %arg14[%c1_274, %c0_275, %c0_276] : memref<2x32x32xf32, #tpu.memory_space<vmem>>, vector<1x32x32xf32>
    %678 = vector.shape_cast %677 : vector<1x32x32xf32> to vector<32x32xf32>
    %cst_277 = arith.constant 0.000000e+00 : f32
    %679 = vector.broadcast %cst_277 : f32 to vector<8x32xf32>
    %680 = vector.extract_strided_slice %674 {offsets = [0, 0], sizes = [8, 8], strides = [1, 1]} : vector<8x32xf32> to vector<8x8xf32>
    %681 = vector.extract_strided_slice %675 {offsets = [0, 0], sizes = [8, 8], strides = [1, 1]} : vector<8x32xf32> to vector<8x8xf32>
    %682 = vector.extract_strided_slice %676 {offsets = [0, 0], sizes = [8, 8], strides = [1, 1]} : vector<8x32xf32> to vector<8x8xf32>
    %cst_278 = arith.constant dense<0.000000e+00> : vector<8x8xf32>
    %683 = tpu.matmul %680, %681, %cst_278 {dimension_numbers = #tpu.dot_dimension_numbers<[1], [1], [0], [0], [0, 0, 1, 0], [], []>} : vector<8x8xf32>, vector<8x8xf32>, vector<8x8xf32> -> vector<8x8xf32>
    %cst_279 = arith.constant 0.353553385 : f32
    %684 = vector.broadcast %cst_279 : f32 to vector<8x8xf32>
    %685 = arith.mulf %683, %684 : vector<8x8xf32>
    %cst_280 = arith.constant 5.000000e-01 : f32
    %686 = vector.broadcast %cst_280 : f32 to vector<8x8xf32>
    %687 = arith.cmpf ogt, %2, %686 : vector<8x8xf32>
    %cst_281 = arith.constant -1.000000e+06 : f32
    %688 = vector.broadcast %cst_281 : f32 to vector<8x8xf32>
    %689 = arith.select %687, %685, %688 : vector<8x8xi1>, vector<8x8xf32>
    %cst_282 = arith.constant dense<0xFF800000> : vector<8xf32>
    %690 = vector.multi_reduction <maximumf>, %689, %cst_282 [1] : vector<8x8xf32> to vector<8xf32>
    %691 = vector.shape_cast %690 : vector<8xf32> to vector<8x1xf32>
    %692 = vector.broadcast %691 : vector<8x1xf32> to vector<8x8xf32>
    %693 = arith.subf %689, %692 : vector<8x8xf32>
    %694 = math.exp %693 : vector<8x8xf32>
    %cst_283 = arith.constant dense<0.000000e+00> : vector<8xf32>
    %695 = vector.multi_reduction <add>, %694, %cst_283 [1] : vector<8x8xf32> to vector<8xf32>
    %696 = vector.shape_cast %695 : vector<8xf32> to vector<8x1xf32>
    %697 = tpu.reciprocal %696 {approx = true} : vector<8x1xf32> -> vector<8x1xf32>
    %698 = vector.broadcast %697 : vector<8x1xf32> to vector<8x8xf32>
    %699 = arith.mulf %694, %698 : vector<8x8xf32>
    %cst_284 = arith.constant dense<0.000000e+00> : vector<8x8xf32>
    %700 = tpu.matmul %699, %682, %cst_284 {dimension_numbers = #tpu.dot_dimension_numbers<[1], [0], [0], [1], [0, 0, 1, 1], [], []>} : vector<8x8xf32>, vector<8x8xf32>, vector<8x8xf32> -> vector<8x8xf32>
    %701 = vector.extract_strided_slice %678 {offsets = [0, 0], sizes = [8, 32], strides = [1, 1]} : vector<32x32xf32> to vector<8x32xf32>
    %cst_285 = arith.constant dense<0.000000e+00> : vector<8x32xf32>
    %702 = tpu.matmul %700, %701, %cst_285 {dimension_numbers = #tpu.dot_dimension_numbers<[1], [0], [0], [1], [0, 0, 1, 1], [], []>} : vector<8x8xf32>, vector<8x32xf32>, vector<8x32xf32> -> vector<8x32xf32>
    %703 = arith.addf %679, %702 : vector<8x32xf32>
    %704 = vector.extract_strided_slice %674 {offsets = [0, 8], sizes = [8, 8], strides = [1, 1]} : vector<8x32xf32> to vector<8x8xf32>
    %705 = vector.extract_strided_slice %675 {offsets = [0, 8], sizes = [8, 8], strides = [1, 1]} : vector<8x32xf32> to vector<8x8xf32>
    %706 = vector.extract_strided_slice %676 {offsets = [0, 8], sizes = [8, 8], strides = [1, 1]} : vector<8x32xf32> to vector<8x8xf32>
    %cst_286 = arith.constant dense<0.000000e+00> : vector<8x8xf32>
    %707 = tpu.matmul %704, %705, %cst_286 {dimension_numbers = #tpu.dot_dimension_numbers<[1], [1], [0], [0], [0, 0, 1, 0], [], []>} : vector<8x8xf32>, vector<8x8xf32>, vector<8x8xf32> -> vector<8x8xf32>
    %cst_287 = arith.constant 0.353553385 : f32
    %708 = vector.broadcast %cst_287 : f32 to vector<8x8xf32>
    %709 = arith.mulf %707, %708 : vector<8x8xf32>
    %cst_288 = arith.constant 5.000000e-01 : f32
    %710 = vector.broadcast %cst_288 : f32 to vector<8x8xf32>
    %711 = arith.cmpf ogt, %2, %710 : vector<8x8xf32>
    %cst_289 = arith.constant -1.000000e+06 : f32
    %712 = vector.broadcast %cst_289 : f32 to vector<8x8xf32>
    %713 = arith.select %711, %709, %712 : vector<8x8xi1>, vector<8x8xf32>
    %cst_290 = arith.constant dense<0xFF800000> : vector<8xf32>
    %714 = vector.multi_reduction <maximumf>, %713, %cst_290 [1] : vector<8x8xf32> to vector<8xf32>
    %715 = vector.shape_cast %714 : vector<8xf32> to vector<8x1xf32>
    %716 = vector.broadcast %715 : vector<8x1xf32> to vector<8x8xf32>
    %717 = arith.subf %713, %716 : vector<8x8xf32>
    %718 = math.exp %717 : vector<8x8xf32>
    %cst_291 = arith.constant dense<0.000000e+00> : vector<8xf32>
    %719 = vector.multi_reduction <add>, %718, %cst_291 [1] : vector<8x8xf32> to vector<8xf32>
    %720 = vector.shape_cast %719 : vector<8xf32> to vector<8x1xf32>
    %721 = tpu.reciprocal %720 {approx = true} : vector<8x1xf32> -> vector<8x1xf32>
    %722 = vector.broadcast %721 : vector<8x1xf32> to vector<8x8xf32>
    %723 = arith.mulf %718, %722 : vector<8x8xf32>
    %cst_292 = arith.constant dense<0.000000e+00> : vector<8x8xf32>
    %724 = tpu.matmul %723, %706, %cst_292 {dimension_numbers = #tpu.dot_dimension_numbers<[1], [0], [0], [1], [0, 0, 1, 1], [], []>} : vector<8x8xf32>, vector<8x8xf32>, vector<8x8xf32> -> vector<8x8xf32>
    %725 = vector.extract_strided_slice %678 {offsets = [8, 0], sizes = [8, 32], strides = [1, 1]} : vector<32x32xf32> to vector<8x32xf32>
    %cst_293 = arith.constant dense<0.000000e+00> : vector<8x32xf32>
    %726 = tpu.matmul %724, %725, %cst_293 {dimension_numbers = #tpu.dot_dimension_numbers<[1], [0], [0], [1], [0, 0, 1, 1], [], []>} : vector<8x8xf32>, vector<8x32xf32>, vector<8x32xf32> -> vector<8x32xf32>
    %727 = arith.addf %703, %726 : vector<8x32xf32>
    %728 = vector.extract_strided_slice %674 {offsets = [0, 16], sizes = [8, 8], strides = [1, 1]} : vector<8x32xf32> to vector<8x8xf32>
    %729 = vector.extract_strided_slice %675 {offsets = [0, 16], sizes = [8, 8], strides = [1, 1]} : vector<8x32xf32> to vector<8x8xf32>
    %730 = vector.extract_strided_slice %676 {offsets = [0, 16], sizes = [8, 8], strides = [1, 1]} : vector<8x32xf32> to vector<8x8xf32>
    %cst_294 = arith.constant dense<0.000000e+00> : vector<8x8xf32>
    %731 = tpu.matmul %728, %729, %cst_294 {dimension_numbers = #tpu.dot_dimension_numbers<[1], [1], [0], [0], [0, 0, 1, 0], [], []>} : vector<8x8xf32>, vector<8x8xf32>, vector<8x8xf32> -> vector<8x8xf32>
    %cst_295 = arith.constant 0.353553385 : f32
    %732 = vector.broadcast %cst_295 : f32 to vector<8x8xf32>
    %733 = arith.mulf %731, %732 : vector<8x8xf32>
    %cst_296 = arith.constant 5.000000e-01 : f32
    %734 = vector.broadcast %cst_296 : f32 to vector<8x8xf32>
    %735 = arith.cmpf ogt, %2, %734 : vector<8x8xf32>
    %cst_297 = arith.constant -1.000000e+06 : f32
    %736 = vector.broadcast %cst_297 : f32 to vector<8x8xf32>
    %737 = arith.select %735, %733, %736 : vector<8x8xi1>, vector<8x8xf32>
    %cst_298 = arith.constant dense<0xFF800000> : vector<8xf32>
    %738 = vector.multi_reduction <maximumf>, %737, %cst_298 [1] : vector<8x8xf32> to vector<8xf32>
    %739 = vector.shape_cast %738 : vector<8xf32> to vector<8x1xf32>
    %740 = vector.broadcast %739 : vector<8x1xf32> to vector<8x8xf32>
    %741 = arith.subf %737, %740 : vector<8x8xf32>
    %742 = math.exp %741 : vector<8x8xf32>
    %cst_299 = arith.constant dense<0.000000e+00> : vector<8xf32>
    %743 = vector.multi_reduction <add>, %742, %cst_299 [1] : vector<8x8xf32> to vector<8xf32>
    %744 = vector.shape_cast %743 : vector<8xf32> to vector<8x1xf32>
    %745 = tpu.reciprocal %744 {approx = true} : vector<8x1xf32> -> vector<8x1xf32>
    %746 = vector.broadcast %745 : vector<8x1xf32> to vector<8x8xf32>
    %747 = arith.mulf %742, %746 : vector<8x8xf32>
    %cst_300 = arith.constant dense<0.000000e+00> : vector<8x8xf32>
    %748 = tpu.matmul %747, %730, %cst_300 {dimension_numbers = #tpu.dot_dimension_numbers<[1], [0], [0], [1], [0, 0, 1, 1], [], []>} : vector<8x8xf32>, vector<8x8xf32>, vector<8x8xf32> -> vector<8x8xf32>
    %749 = vector.extract_strided_slice %678 {offsets = [16, 0], sizes = [8, 32], strides = [1, 1]} : vector<32x32xf32> to vector<8x32xf32>
    %cst_301 = arith.constant dense<0.000000e+00> : vector<8x32xf32>
    %750 = tpu.matmul %748, %749, %cst_301 {dimension_numbers = #tpu.dot_dimension_numbers<[1], [0], [0], [1], [0, 0, 1, 1], [], []>} : vector<8x8xf32>, vector<8x32xf32>, vector<8x32xf32> -> vector<8x32xf32>
    %751 = arith.addf %727, %750 : vector<8x32xf32>
    %752 = vector.extract_strided_slice %674 {offsets = [0, 24], sizes = [8, 8], strides = [1, 1]} : vector<8x32xf32> to vector<8x8xf32>
    %753 = vector.extract_strided_slice %675 {offsets = [0, 24], sizes = [8, 8], strides = [1, 1]} : vector<8x32xf32> to vector<8x8xf32>
    %754 = vector.extract_strided_slice %676 {offsets = [0, 24], sizes = [8, 8], strides = [1, 1]} : vector<8x32xf32> to vector<8x8xf32>
    %cst_302 = arith.constant dense<0.000000e+00> : vector<8x8xf32>
    %755 = tpu.matmul %752, %753, %cst_302 {dimension_numbers = #tpu.dot_dimension_numbers<[1], [1], [0], [0], [0, 0, 1, 0], [], []>} : vector<8x8xf32>, vector<8x8xf32>, vector<8x8xf32> -> vector<8x8xf32>
    %cst_303 = arith.constant 0.353553385 : f32
    %756 = vector.broadcast %cst_303 : f32 to vector<8x8xf32>
    %757 = arith.mulf %755, %756 : vector<8x8xf32>
    %cst_304 = arith.constant 5.000000e-01 : f32
    %758 = vector.broadcast %cst_304 : f32 to vector<8x8xf32>
    %759 = arith.cmpf ogt, %2, %758 : vector<8x8xf32>
    %cst_305 = arith.constant -1.000000e+06 : f32
    %760 = vector.broadcast %cst_305 : f32 to vector<8x8xf32>
    %761 = arith.select %759, %757, %760 : vector<8x8xi1>, vector<8x8xf32>
    %cst_306 = arith.constant dense<0xFF800000> : vector<8xf32>
    %762 = vector.multi_reduction <maximumf>, %761, %cst_306 [1] : vector<8x8xf32> to vector<8xf32>
    %763 = vector.shape_cast %762 : vector<8xf32> to vector<8x1xf32>
    %764 = vector.broadcast %763 : vector<8x1xf32> to vector<8x8xf32>
    %765 = arith.subf %761, %764 : vector<8x8xf32>
    %766 = math.exp %765 : vector<8x8xf32>
    %cst_307 = arith.constant dense<0.000000e+00> : vector<8xf32>
    %767 = vector.multi_reduction <add>, %766, %cst_307 [1] : vector<8x8xf32> to vector<8xf32>
    %768 = vector.shape_cast %767 : vector<8xf32> to vector<8x1xf32>
    %769 = tpu.reciprocal %768 {approx = true} : vector<8x1xf32> -> vector<8x1xf32>
    %770 = vector.broadcast %769 : vector<8x1xf32> to vector<8x8xf32>
    %771 = arith.mulf %766, %770 : vector<8x8xf32>
    %cst_308 = arith.constant dense<0.000000e+00> : vector<8x8xf32>
    %772 = tpu.matmul %771, %754, %cst_308 {dimension_numbers = #tpu.dot_dimension_numbers<[1], [0], [0], [1], [0, 0, 1, 1], [], []>} : vector<8x8xf32>, vector<8x8xf32>, vector<8x8xf32> -> vector<8x8xf32>
    %773 = vector.extract_strided_slice %678 {offsets = [24, 0], sizes = [8, 32], strides = [1, 1]} : vector<32x32xf32> to vector<8x32xf32>
    %cst_309 = arith.constant dense<0.000000e+00> : vector<8x32xf32>
    %774 = tpu.matmul %772, %773, %cst_309 {dimension_numbers = #tpu.dot_dimension_numbers<[1], [0], [0], [1], [0, 0, 1, 1], [], []>} : vector<8x8xf32>, vector<8x32xf32>, vector<8x32xf32> -> vector<8x32xf32>
    %775 = arith.addf %751, %774 : vector<8x32xf32>
    %776 = arith.addf %668, %775 : vector<8x32xf32>
    %777 = vector.extract_strided_slice %670 {offsets = [0, 0], sizes = [1, 32], strides = [1, 1]} : vector<6x32xf32> to vector<1x32xf32>
    %778 = vector.extract_strided_slice %670 {offsets = [1, 0], sizes = [1, 32], strides = [1, 1]} : vector<6x32xf32> to vector<1x32xf32>
    %cst_310 = arith.constant dense<0.000000e+00> : vector<8xf32>
    %779 = vector.multi_reduction <add>, %776, %cst_310 [1] : vector<8x32xf32> to vector<8xf32>
    %780 = vector.shape_cast %779 : vector<8xf32> to vector<8x1xf32>
    %cst_311 = arith.constant 3.200000e+01 : f32
    %781 = vector.broadcast %cst_311 : f32 to vector<8x1xf32>
    %782 = arith.divf %780, %781 : vector<8x1xf32>
    %783 = vector.broadcast %782 : vector<8x1xf32> to vector<8x32xf32>
    %784 = arith.subf %776, %783 : vector<8x32xf32>
    %785 = arith.mulf %784, %784 : vector<8x32xf32>
    %cst_312 = arith.constant dense<0.000000e+00> : vector<8xf32>
    %786 = vector.multi_reduction <add>, %785, %cst_312 [1] : vector<8x32xf32> to vector<8xf32>
    %787 = vector.shape_cast %786 : vector<8xf32> to vector<8x1xf32>
    %cst_313 = arith.constant 3.200000e+01 : f32
    %788 = vector.broadcast %cst_313 : f32 to vector<8x1xf32>
    %789 = arith.divf %787, %788 : vector<8x1xf32>
    %790 = vector.broadcast %782 : vector<8x1xf32> to vector<8x32xf32>
    %791 = arith.subf %776, %790 : vector<8x32xf32>
    %cst_314 = arith.constant 9.99999974E-6 : f32
    %792 = vector.broadcast %cst_314 : f32 to vector<8x1xf32>
    %793 = arith.addf %789, %792 : vector<8x1xf32>
    %794 = math.rsqrt %793 : vector<8x1xf32>
    %795 = vector.broadcast %794 : vector<8x1xf32> to vector<8x32xf32>
    %796 = arith.mulf %791, %795 : vector<8x32xf32>
    %797 = vector.broadcast %777 : vector<1x32xf32> to vector<8x32xf32>
    %798 = arith.mulf %796, %797 : vector<8x32xf32>
    %799 = vector.broadcast %778 : vector<1x32xf32> to vector<8x32xf32>
    %800 = arith.addf %798, %799 : vector<8x32xf32>
    %c1_315 = arith.constant 1 : index
    %c0_316 = arith.constant 0 : index
    %c0_317 = arith.constant 0 : index
    %801 = vector.load %arg15[%c1_315, %c0_316, %c0_317] : memref<2x32x32xf32, #tpu.memory_space<vmem>>, vector<1x32x32xf32>
    %802 = vector.shape_cast %801 : vector<1x32x32xf32> to vector<32x32xf32>
    %cst_318 = arith.constant dense<0.000000e+00> : vector<8x32xf32>
    %803 = tpu.matmul %800, %802, %cst_318 {dimension_numbers = #tpu.dot_dimension_numbers<[1], [0], [0], [1], [0, 0, 1, 1], [], []>} : vector<8x32xf32>, vector<32x32xf32>, vector<8x32xf32> -> vector<8x32xf32>
    %c1_319 = arith.constant 1 : index
    %c0_320 = arith.constant 0 : index
    %c0_321 = arith.constant 0 : index
    %804 = vector.load %arg16[%c1_319, %c0_320, %c0_321] : memref<2x32x64xf32, #tpu.memory_space<vmem>>, vector<1x32x64xf32>
    %805 = vector.shape_cast %804 : vector<1x32x64xf32> to vector<32x64xf32>
    %cst_322 = arith.constant dense<0.000000e+00> : vector<8x64xf32>
    %806 = tpu.matmul %358, %805, %cst_322 {dimension_numbers = #tpu.dot_dimension_numbers<[1], [0], [0], [1], [0, 0, 1, 1], [], []>} : vector<8x32xf32>, vector<32x64xf32>, vector<8x64xf32> -> vector<8x64xf32>
    %807 = vector.extract_strided_slice %806 {offsets = [0, 0], sizes = [8, 32], strides = [1, 1]} : vector<8x64xf32> to vector<8x32xf32>
    %808 = vector.extract_strided_slice %806 {offsets = [0, 32], sizes = [8, 32], strides = [1, 1]} : vector<8x64xf32> to vector<8x32xf32>
    %c1_323 = arith.constant 1 : index
    %c0_324 = arith.constant 0 : index
    %c0_325 = arith.constant 0 : index
    %809 = vector.load %arg17[%c1_323, %c0_324, %c0_325] : memref<2x32x32xf32, #tpu.memory_space<vmem>>, vector<1x32x32xf32>
    %810 = vector.shape_cast %809 : vector<1x32x32xf32> to vector<32x32xf32>
    %cst_326 = arith.constant 0.000000e+00 : f32
    %811 = vector.broadcast %cst_326 : f32 to vector<8x32xf32>
    %812 = vector.extract_strided_slice %803 {offsets = [0, 0], sizes = [8, 8], strides = [1, 1]} : vector<8x32xf32> to vector<8x8xf32>
    %813 = vector.extract_strided_slice %807 {offsets = [0, 0], sizes = [8, 8], strides = [1, 1]} : vector<8x32xf32> to vector<8x8xf32>
    %814 = vector.extract_strided_slice %808 {offsets = [0, 0], sizes = [8, 8], strides = [1, 1]} : vector<8x32xf32> to vector<8x8xf32>
    %cst_327 = arith.constant dense<0.000000e+00> : vector<8x8xf32>
    %815 = tpu.matmul %812, %813, %cst_327 {dimension_numbers = #tpu.dot_dimension_numbers<[1], [1], [0], [0], [0, 0, 1, 0], [], []>} : vector<8x8xf32>, vector<8x8xf32>, vector<8x8xf32> -> vector<8x8xf32>
    %cst_328 = arith.constant 0.353553385 : f32
    %816 = vector.broadcast %cst_328 : f32 to vector<8x8xf32>
    %817 = arith.mulf %815, %816 : vector<8x8xf32>
    %cst_329 = arith.constant 5.000000e-01 : f32
    %818 = vector.broadcast %cst_329 : f32 to vector<8x8xf32>
    %819 = arith.cmpf ogt, %4, %818 : vector<8x8xf32>
    %cst_330 = arith.constant -1.000000e+06 : f32
    %820 = vector.broadcast %cst_330 : f32 to vector<8x8xf32>
    %821 = arith.select %819, %817, %820 : vector<8x8xi1>, vector<8x8xf32>
    %cst_331 = arith.constant dense<0xFF800000> : vector<8xf32>
    %822 = vector.multi_reduction <maximumf>, %821, %cst_331 [1] : vector<8x8xf32> to vector<8xf32>
    %823 = vector.shape_cast %822 : vector<8xf32> to vector<8x1xf32>
    %824 = vector.broadcast %823 : vector<8x1xf32> to vector<8x8xf32>
    %825 = arith.subf %821, %824 : vector<8x8xf32>
    %826 = math.exp %825 : vector<8x8xf32>
    %cst_332 = arith.constant dense<0.000000e+00> : vector<8xf32>
    %827 = vector.multi_reduction <add>, %826, %cst_332 [1] : vector<8x8xf32> to vector<8xf32>
    %828 = vector.shape_cast %827 : vector<8xf32> to vector<8x1xf32>
    %829 = tpu.reciprocal %828 {approx = true} : vector<8x1xf32> -> vector<8x1xf32>
    %830 = vector.broadcast %829 : vector<8x1xf32> to vector<8x8xf32>
    %831 = arith.mulf %826, %830 : vector<8x8xf32>
    %cst_333 = arith.constant dense<0.000000e+00> : vector<8x8xf32>
    %832 = tpu.matmul %831, %814, %cst_333 {dimension_numbers = #tpu.dot_dimension_numbers<[1], [0], [0], [1], [0, 0, 1, 1], [], []>} : vector<8x8xf32>, vector<8x8xf32>, vector<8x8xf32> -> vector<8x8xf32>
    %833 = vector.extract_strided_slice %810 {offsets = [0, 0], sizes = [8, 32], strides = [1, 1]} : vector<32x32xf32> to vector<8x32xf32>
    %cst_334 = arith.constant dense<0.000000e+00> : vector<8x32xf32>
    %834 = tpu.matmul %832, %833, %cst_334 {dimension_numbers = #tpu.dot_dimension_numbers<[1], [0], [0], [1], [0, 0, 1, 1], [], []>} : vector<8x8xf32>, vector<8x32xf32>, vector<8x32xf32> -> vector<8x32xf32>
    %835 = arith.addf %811, %834 : vector<8x32xf32>
    %836 = vector.extract_strided_slice %803 {offsets = [0, 8], sizes = [8, 8], strides = [1, 1]} : vector<8x32xf32> to vector<8x8xf32>
    %837 = vector.extract_strided_slice %807 {offsets = [0, 8], sizes = [8, 8], strides = [1, 1]} : vector<8x32xf32> to vector<8x8xf32>
    %838 = vector.extract_strided_slice %808 {offsets = [0, 8], sizes = [8, 8], strides = [1, 1]} : vector<8x32xf32> to vector<8x8xf32>
    %cst_335 = arith.constant dense<0.000000e+00> : vector<8x8xf32>
    %839 = tpu.matmul %836, %837, %cst_335 {dimension_numbers = #tpu.dot_dimension_numbers<[1], [1], [0], [0], [0, 0, 1, 0], [], []>} : vector<8x8xf32>, vector<8x8xf32>, vector<8x8xf32> -> vector<8x8xf32>
    %cst_336 = arith.constant 0.353553385 : f32
    %840 = vector.broadcast %cst_336 : f32 to vector<8x8xf32>
    %841 = arith.mulf %839, %840 : vector<8x8xf32>
    %cst_337 = arith.constant 5.000000e-01 : f32
    %842 = vector.broadcast %cst_337 : f32 to vector<8x8xf32>
    %843 = arith.cmpf ogt, %4, %842 : vector<8x8xf32>
    %cst_338 = arith.constant -1.000000e+06 : f32
    %844 = vector.broadcast %cst_338 : f32 to vector<8x8xf32>
    %845 = arith.select %843, %841, %844 : vector<8x8xi1>, vector<8x8xf32>
    %cst_339 = arith.constant dense<0xFF800000> : vector<8xf32>
    %846 = vector.multi_reduction <maximumf>, %845, %cst_339 [1] : vector<8x8xf32> to vector<8xf32>
    %847 = vector.shape_cast %846 : vector<8xf32> to vector<8x1xf32>
    %848 = vector.broadcast %847 : vector<8x1xf32> to vector<8x8xf32>
    %849 = arith.subf %845, %848 : vector<8x8xf32>
    %850 = math.exp %849 : vector<8x8xf32>
    %cst_340 = arith.constant dense<0.000000e+00> : vector<8xf32>
    %851 = vector.multi_reduction <add>, %850, %cst_340 [1] : vector<8x8xf32> to vector<8xf32>
    %852 = vector.shape_cast %851 : vector<8xf32> to vector<8x1xf32>
    %853 = tpu.reciprocal %852 {approx = true} : vector<8x1xf32> -> vector<8x1xf32>
    %854 = vector.broadcast %853 : vector<8x1xf32> to vector<8x8xf32>
    %855 = arith.mulf %850, %854 : vector<8x8xf32>
    %cst_341 = arith.constant dense<0.000000e+00> : vector<8x8xf32>
    %856 = tpu.matmul %855, %838, %cst_341 {dimension_numbers = #tpu.dot_dimension_numbers<[1], [0], [0], [1], [0, 0, 1, 1], [], []>} : vector<8x8xf32>, vector<8x8xf32>, vector<8x8xf32> -> vector<8x8xf32>
    %857 = vector.extract_strided_slice %810 {offsets = [8, 0], sizes = [8, 32], strides = [1, 1]} : vector<32x32xf32> to vector<8x32xf32>
    %cst_342 = arith.constant dense<0.000000e+00> : vector<8x32xf32>
    %858 = tpu.matmul %856, %857, %cst_342 {dimension_numbers = #tpu.dot_dimension_numbers<[1], [0], [0], [1], [0, 0, 1, 1], [], []>} : vector<8x8xf32>, vector<8x32xf32>, vector<8x32xf32> -> vector<8x32xf32>
    %859 = arith.addf %835, %858 : vector<8x32xf32>
    %860 = vector.extract_strided_slice %803 {offsets = [0, 16], sizes = [8, 8], strides = [1, 1]} : vector<8x32xf32> to vector<8x8xf32>
    %861 = vector.extract_strided_slice %807 {offsets = [0, 16], sizes = [8, 8], strides = [1, 1]} : vector<8x32xf32> to vector<8x8xf32>
    %862 = vector.extract_strided_slice %808 {offsets = [0, 16], sizes = [8, 8], strides = [1, 1]} : vector<8x32xf32> to vector<8x8xf32>
    %cst_343 = arith.constant dense<0.000000e+00> : vector<8x8xf32>
    %863 = tpu.matmul %860, %861, %cst_343 {dimension_numbers = #tpu.dot_dimension_numbers<[1], [1], [0], [0], [0, 0, 1, 0], [], []>} : vector<8x8xf32>, vector<8x8xf32>, vector<8x8xf32> -> vector<8x8xf32>
    %cst_344 = arith.constant 0.353553385 : f32
    %864 = vector.broadcast %cst_344 : f32 to vector<8x8xf32>
    %865 = arith.mulf %863, %864 : vector<8x8xf32>
    %cst_345 = arith.constant 5.000000e-01 : f32
    %866 = vector.broadcast %cst_345 : f32 to vector<8x8xf32>
    %867 = arith.cmpf ogt, %4, %866 : vector<8x8xf32>
    %cst_346 = arith.constant -1.000000e+06 : f32
    %868 = vector.broadcast %cst_346 : f32 to vector<8x8xf32>
    %869 = arith.select %867, %865, %868 : vector<8x8xi1>, vector<8x8xf32>
    %cst_347 = arith.constant dense<0xFF800000> : vector<8xf32>
    %870 = vector.multi_reduction <maximumf>, %869, %cst_347 [1] : vector<8x8xf32> to vector<8xf32>
    %871 = vector.shape_cast %870 : vector<8xf32> to vector<8x1xf32>
    %872 = vector.broadcast %871 : vector<8x1xf32> to vector<8x8xf32>
    %873 = arith.subf %869, %872 : vector<8x8xf32>
    %874 = math.exp %873 : vector<8x8xf32>
    %cst_348 = arith.constant dense<0.000000e+00> : vector<8xf32>
    %875 = vector.multi_reduction <add>, %874, %cst_348 [1] : vector<8x8xf32> to vector<8xf32>
    %876 = vector.shape_cast %875 : vector<8xf32> to vector<8x1xf32>
    %877 = tpu.reciprocal %876 {approx = true} : vector<8x1xf32> -> vector<8x1xf32>
    %878 = vector.broadcast %877 : vector<8x1xf32> to vector<8x8xf32>
    %879 = arith.mulf %874, %878 : vector<8x8xf32>
    %cst_349 = arith.constant dense<0.000000e+00> : vector<8x8xf32>
    %880 = tpu.matmul %879, %862, %cst_349 {dimension_numbers = #tpu.dot_dimension_numbers<[1], [0], [0], [1], [0, 0, 1, 1], [], []>} : vector<8x8xf32>, vector<8x8xf32>, vector<8x8xf32> -> vector<8x8xf32>
    %881 = vector.extract_strided_slice %810 {offsets = [16, 0], sizes = [8, 32], strides = [1, 1]} : vector<32x32xf32> to vector<8x32xf32>
    %cst_350 = arith.constant dense<0.000000e+00> : vector<8x32xf32>
    %882 = tpu.matmul %880, %881, %cst_350 {dimension_numbers = #tpu.dot_dimension_numbers<[1], [0], [0], [1], [0, 0, 1, 1], [], []>} : vector<8x8xf32>, vector<8x32xf32>, vector<8x32xf32> -> vector<8x32xf32>
    %883 = arith.addf %859, %882 : vector<8x32xf32>
    %884 = vector.extract_strided_slice %803 {offsets = [0, 24], sizes = [8, 8], strides = [1, 1]} : vector<8x32xf32> to vector<8x8xf32>
    %885 = vector.extract_strided_slice %807 {offsets = [0, 24], sizes = [8, 8], strides = [1, 1]} : vector<8x32xf32> to vector<8x8xf32>
    %886 = vector.extract_strided_slice %808 {offsets = [0, 24], sizes = [8, 8], strides = [1, 1]} : vector<8x32xf32> to vector<8x8xf32>
    %cst_351 = arith.constant dense<0.000000e+00> : vector<8x8xf32>
    %887 = tpu.matmul %884, %885, %cst_351 {dimension_numbers = #tpu.dot_dimension_numbers<[1], [1], [0], [0], [0, 0, 1, 0], [], []>} : vector<8x8xf32>, vector<8x8xf32>, vector<8x8xf32> -> vector<8x8xf32>
    %cst_352 = arith.constant 0.353553385 : f32
    %888 = vector.broadcast %cst_352 : f32 to vector<8x8xf32>
    %889 = arith.mulf %887, %888 : vector<8x8xf32>
    %cst_353 = arith.constant 5.000000e-01 : f32
    %890 = vector.broadcast %cst_353 : f32 to vector<8x8xf32>
    %891 = arith.cmpf ogt, %4, %890 : vector<8x8xf32>
    %cst_354 = arith.constant -1.000000e+06 : f32
    %892 = vector.broadcast %cst_354 : f32 to vector<8x8xf32>
    %893 = arith.select %891, %889, %892 : vector<8x8xi1>, vector<8x8xf32>
    %cst_355 = arith.constant dense<0xFF800000> : vector<8xf32>
    %894 = vector.multi_reduction <maximumf>, %893, %cst_355 [1] : vector<8x8xf32> to vector<8xf32>
    %895 = vector.shape_cast %894 : vector<8xf32> to vector<8x1xf32>
    %896 = vector.broadcast %895 : vector<8x1xf32> to vector<8x8xf32>
    %897 = arith.subf %893, %896 : vector<8x8xf32>
    %898 = math.exp %897 : vector<8x8xf32>
    %cst_356 = arith.constant dense<0.000000e+00> : vector<8xf32>
    %899 = vector.multi_reduction <add>, %898, %cst_356 [1] : vector<8x8xf32> to vector<8xf32>
    %900 = vector.shape_cast %899 : vector<8xf32> to vector<8x1xf32>
    %901 = tpu.reciprocal %900 {approx = true} : vector<8x1xf32> -> vector<8x1xf32>
    %902 = vector.broadcast %901 : vector<8x1xf32> to vector<8x8xf32>
    %903 = arith.mulf %898, %902 : vector<8x8xf32>
    %cst_357 = arith.constant dense<0.000000e+00> : vector<8x8xf32>
    %904 = tpu.matmul %903, %886, %cst_357 {dimension_numbers = #tpu.dot_dimension_numbers<[1], [0], [0], [1], [0, 0, 1, 1], [], []>} : vector<8x8xf32>, vector<8x8xf32>, vector<8x8xf32> -> vector<8x8xf32>
    %905 = vector.extract_strided_slice %810 {offsets = [24, 0], sizes = [8, 32], strides = [1, 1]} : vector<32x32xf32> to vector<8x32xf32>
    %cst_358 = arith.constant dense<0.000000e+00> : vector<8x32xf32>
    %906 = tpu.matmul %904, %905, %cst_358 {dimension_numbers = #tpu.dot_dimension_numbers<[1], [0], [0], [1], [0, 0, 1, 1], [], []>} : vector<8x8xf32>, vector<8x32xf32>, vector<8x32xf32> -> vector<8x32xf32>
    %907 = arith.addf %883, %906 : vector<8x32xf32>
    %908 = arith.addf %800, %907 : vector<8x32xf32>
    %909 = vector.extract_strided_slice %670 {offsets = [2, 0], sizes = [1, 32], strides = [1, 1]} : vector<6x32xf32> to vector<1x32xf32>
    %910 = vector.extract_strided_slice %670 {offsets = [3, 0], sizes = [1, 32], strides = [1, 1]} : vector<6x32xf32> to vector<1x32xf32>
    %cst_359 = arith.constant dense<0.000000e+00> : vector<8xf32>
    %911 = vector.multi_reduction <add>, %908, %cst_359 [1] : vector<8x32xf32> to vector<8xf32>
    %912 = vector.shape_cast %911 : vector<8xf32> to vector<8x1xf32>
    %cst_360 = arith.constant 3.200000e+01 : f32
    %913 = vector.broadcast %cst_360 : f32 to vector<8x1xf32>
    %914 = arith.divf %912, %913 : vector<8x1xf32>
    %915 = vector.broadcast %914 : vector<8x1xf32> to vector<8x32xf32>
    %916 = arith.subf %908, %915 : vector<8x32xf32>
    %917 = arith.mulf %916, %916 : vector<8x32xf32>
    %cst_361 = arith.constant dense<0.000000e+00> : vector<8xf32>
    %918 = vector.multi_reduction <add>, %917, %cst_361 [1] : vector<8x32xf32> to vector<8xf32>
    %919 = vector.shape_cast %918 : vector<8xf32> to vector<8x1xf32>
    %cst_362 = arith.constant 3.200000e+01 : f32
    %920 = vector.broadcast %cst_362 : f32 to vector<8x1xf32>
    %921 = arith.divf %919, %920 : vector<8x1xf32>
    %922 = vector.broadcast %914 : vector<8x1xf32> to vector<8x32xf32>
    %923 = arith.subf %908, %922 : vector<8x32xf32>
    %cst_363 = arith.constant 9.99999974E-6 : f32
    %924 = vector.broadcast %cst_363 : f32 to vector<8x1xf32>
    %925 = arith.addf %921, %924 : vector<8x1xf32>
    %926 = math.rsqrt %925 : vector<8x1xf32>
    %927 = vector.broadcast %926 : vector<8x1xf32> to vector<8x32xf32>
    %928 = arith.mulf %923, %927 : vector<8x32xf32>
    %929 = vector.broadcast %909 : vector<1x32xf32> to vector<8x32xf32>
    %930 = arith.mulf %928, %929 : vector<8x32xf32>
    %931 = vector.broadcast %910 : vector<1x32xf32> to vector<8x32xf32>
    %932 = arith.addf %930, %931 : vector<8x32xf32>
    %c1_364 = arith.constant 1 : index
    %c0_365 = arith.constant 0 : index
    %c0_366 = arith.constant 0 : index
    %933 = vector.load %arg19[%c1_364, %c0_365, %c0_366] : memref<2x32x64xf32, #tpu.memory_space<vmem>>, vector<1x32x64xf32>
    %934 = vector.shape_cast %933 : vector<1x32x64xf32> to vector<32x64xf32>
    %c1_367 = arith.constant 1 : index
    %c0_368 = arith.constant 0 : index
    %c0_369 = arith.constant 0 : index
    %935 = vector.load %arg20[%c1_367, %c0_368, %c0_369] : memref<2x1x64xf32, #tpu.memory_space<vmem>>, vector<1x1x64xf32>
    %936 = vector.shape_cast %935 : vector<1x1x64xf32> to vector<1x64xf32>
    %c1_370 = arith.constant 1 : index
    %c0_371 = arith.constant 0 : index
    %c0_372 = arith.constant 0 : index
    %937 = vector.load %arg21[%c1_370, %c0_371, %c0_372] : memref<2x64x32xf32, #tpu.memory_space<vmem>>, vector<1x64x32xf32>
    %938 = vector.shape_cast %937 : vector<1x64x32xf32> to vector<64x32xf32>
    %c1_373 = arith.constant 1 : index
    %c0_374 = arith.constant 0 : index
    %c0_375 = arith.constant 0 : index
    %939 = vector.load %arg22[%c1_373, %c0_374, %c0_375] : memref<2x1x32xf32, #tpu.memory_space<vmem>>, vector<1x1x32xf32>
    %940 = vector.shape_cast %939 : vector<1x1x32xf32> to vector<1x32xf32>
    %cst_376 = arith.constant dense<0.000000e+00> : vector<8x64xf32>
    %941 = tpu.matmul %932, %934, %cst_376 {dimension_numbers = #tpu.dot_dimension_numbers<[1], [0], [0], [1], [0, 0, 1, 1], [], []>} : vector<8x32xf32>, vector<32x64xf32>, vector<8x64xf32> -> vector<8x64xf32>
    %942 = vector.broadcast %936 : vector<1x64xf32> to vector<8x64xf32>
    %943 = arith.addf %941, %942 : vector<8x64xf32>
    %cst_377 = arith.constant 0.000000e+00 : f32
    %944 = vector.broadcast %cst_377 : f32 to vector<8x64xf32>
    %945 = arith.cmpf ogt, %943, %944 : vector<8x64xf32>
    %cst_378 = arith.constant 0.00999999977 : f32
    %946 = vector.broadcast %cst_378 : f32 to vector<8x64xf32>
    %947 = arith.mulf %946, %943 : vector<8x64xf32>
    %948 = arith.select %945, %943, %947 : vector<8x64xi1>, vector<8x64xf32>
    %cst_379 = arith.constant dense<0.000000e+00> : vector<8x32xf32>
    %949 = tpu.matmul %948, %938, %cst_379 {dimension_numbers = #tpu.dot_dimension_numbers<[1], [0], [0], [1], [0, 0, 1, 1], [], []>} : vector<8x64xf32>, vector<64x32xf32>, vector<8x32xf32> -> vector<8x32xf32>
    %950 = vector.broadcast %940 : vector<1x32xf32> to vector<8x32xf32>
    %951 = arith.addf %949, %950 : vector<8x32xf32>
    %952 = arith.addf %932, %951 : vector<8x32xf32>
    %953 = vector.extract_strided_slice %670 {offsets = [4, 0], sizes = [1, 32], strides = [1, 1]} : vector<6x32xf32> to vector<1x32xf32>
    %954 = vector.extract_strided_slice %670 {offsets = [5, 0], sizes = [1, 32], strides = [1, 1]} : vector<6x32xf32> to vector<1x32xf32>
    %cst_380 = arith.constant dense<0.000000e+00> : vector<8xf32>
    %955 = vector.multi_reduction <add>, %952, %cst_380 [1] : vector<8x32xf32> to vector<8xf32>
    %956 = vector.shape_cast %955 : vector<8xf32> to vector<8x1xf32>
    %cst_381 = arith.constant 3.200000e+01 : f32
    %957 = vector.broadcast %cst_381 : f32 to vector<8x1xf32>
    %958 = arith.divf %956, %957 : vector<8x1xf32>
    %959 = vector.broadcast %958 : vector<8x1xf32> to vector<8x32xf32>
    %960 = arith.subf %952, %959 : vector<8x32xf32>
    %961 = arith.mulf %960, %960 : vector<8x32xf32>
    %cst_382 = arith.constant dense<0.000000e+00> : vector<8xf32>
    %962 = vector.multi_reduction <add>, %961, %cst_382 [1] : vector<8x32xf32> to vector<8xf32>
    %963 = vector.shape_cast %962 : vector<8xf32> to vector<8x1xf32>
    %cst_383 = arith.constant 3.200000e+01 : f32
    %964 = vector.broadcast %cst_383 : f32 to vector<8x1xf32>
    %965 = arith.divf %963, %964 : vector<8x1xf32>
    %966 = vector.broadcast %958 : vector<8x1xf32> to vector<8x32xf32>
    %967 = arith.subf %952, %966 : vector<8x32xf32>
    %cst_384 = arith.constant 9.99999974E-6 : f32
    %968 = vector.broadcast %cst_384 : f32 to vector<8x1xf32>
    %969 = arith.addf %965, %968 : vector<8x1xf32>
    %970 = math.rsqrt %969 : vector<8x1xf32>
    %971 = vector.broadcast %970 : vector<8x1xf32> to vector<8x32xf32>
    %972 = arith.mulf %967, %971 : vector<8x32xf32>
    %973 = vector.broadcast %953 : vector<1x32xf32> to vector<8x32xf32>
    %974 = arith.mulf %972, %973 : vector<8x32xf32>
    %975 = vector.broadcast %954 : vector<1x32xf32> to vector<8x32xf32>
    %976 = arith.addf %974, %975 : vector<8x32xf32>
    %c0_385 = arith.constant 0 : index
    %c0_386 = arith.constant 0 : index
    %977 = vector.load %arg23[%c0_385, %c0_386] : memref<32x128xf32, #tpu.memory_space<vmem>>, vector<32x128xf32>
    %cst_387 = arith.constant dense<0.000000e+00> : vector<8x128xf32>
    %978 = tpu.matmul %976, %977, %cst_387 {dimension_numbers = #tpu.dot_dimension_numbers<[1], [0], [0], [1], [0, 0, 1, 1], [], []>} : vector<8x32xf32>, vector<32x128xf32>, vector<8x128xf32> -> vector<8x128xf32>
    %c0_388 = arith.constant 0 : index
    %c0_389 = arith.constant 0 : index
    %979 = vector.load %arg24[%c0_388, %c0_389] : memref<1x128xf32, #tpu.memory_space<vmem>>, vector<1x128xf32>
    %980 = vector.broadcast %979 : vector<1x128xf32> to vector<8x128xf32>
    %981 = arith.addf %978, %980 : vector<8x128xf32>
    %c0_390 = arith.constant 0 : index
    %c0_391 = arith.constant 0 : index
    %c0_392 = arith.constant 0 : index
    %982 = vector.load %arg25[%c0_390, %c0_391, %c0_392] : memref<1x8x128xf32, #tpu.memory_space<vmem>>, vector<1x8x128xf32>
    %983 = vector.shape_cast %982 : vector<1x8x128xf32> to vector<8x128xf32>
    %984 = vector.shape_cast %981 : vector<8x128xf32> to vector<1x8x128xf32>
    tpu.vector_store %arg25[%c0_390, %c0_391, %c0_392], %984 {strides = array<i32>} : memref<1x8x128xf32, #tpu.memory_space<vmem>>, vector<1x8x128xf32>,
    return
  }
  func.func @transform_0(%arg0: i32) -> (i32, i32, i32) {
    %c0_i32 = arith.constant 0 : i32
    %c0_i32_0 = arith.constant 0 : i32
    %c0_i32_1 = arith.constant 0 : i32
    return %arg0, %c0_i32, %c0_i32_0 : i32, i32, i32
  }
  func.func @transform_1(%arg0: i32) -> (i32, i32, i32) {
    %c0_i32 = arith.constant 0 : i32
    %c0_i32_0 = arith.constant 0 : i32
    %c0_i32_1 = arith.constant 0 : i32
    return %arg0, %c0_i32, %c0_i32_0 : i32, i32, i32
  }
  func.func @transform_2(%arg0: i32) -> (i32, i32, i32) {
    %c0_i32 = arith.constant 0 : i32
    %c0_i32_0 = arith.constant 0 : i32
    %c0_i32_1 = arith.constant 0 : i32
    return %arg0, %c0_i32, %c0_i32_0 : i32, i32, i32
  }
  func.func @transform_3(%arg0: i32) -> (i32, i32) {
    %c0_i32 = arith.constant 0 : i32
    %c0_i32_0 = arith.constant 0 : i32
    %c0_i32_1 = arith.constant 0 : i32
    return %c0_i32, %c0_i32_0 : i32, i32
  }
  func.func @transform_4(%arg0: i32) -> (i32, i32, i32) {
    %c0_i32 = arith.constant 0 : i32
    %c0_i32_0 = arith.constant 0 : i32
    %c0_i32_1 = arith.constant 0 : i32
    return %arg0, %c0_i32, %c0_i32_0 : i32, i32, i32
  }
  func.func @transform_5(%arg0: i32) -> (i32, i32, i32) {
    %c0_i32 = arith.constant 0 : i32
    %c0_i32_0 = arith.constant 0 : i32
    %c0_i32_1 = arith.constant 0 : i32
    %c0_i32_2 = arith.constant 0 : i32
    return %c0_i32, %c0_i32_0, %c0_i32_1 : i32, i32, i32
  }
  func.func @transform_6(%arg0: i32) -> (i32, i32, i32) {
    %c0_i32 = arith.constant 0 : i32
    %c0_i32_0 = arith.constant 0 : i32
    %c0_i32_1 = arith.constant 0 : i32
    %c0_i32_2 = arith.constant 0 : i32
    return %c0_i32, %c0_i32_0, %c0_i32_1 : i32, i32, i32
  }
  func.func @transform_7(%arg0: i32) -> (i32, i32, i32) {
    %c0_i32 = arith.constant 0 : i32
    %c0_i32_0 = arith.constant 0 : i32
    %c0_i32_1 = arith.constant 0 : i32
    %c0_i32_2 = arith.constant 0 : i32
    return %c0_i32, %c0_i32_0, %c0_i32_1 : i32, i32, i32
  }
  func.func @transform_8(%arg0: i32) -> (i32, i32, i32) {
    %c0_i32 = arith.constant 0 : i32
    %c0_i32_0 = arith.constant 0 : i32
    %c0_i32_1 = arith.constant 0 : i32
    %c0_i32_2 = arith.constant 0 : i32
    return %c0_i32, %c0_i32_0, %c0_i32_1 : i32, i32, i32
  }
  func.func @transform_9(%arg0: i32) -> (i32, i32, i32) {
    %c0_i32 = arith.constant 0 : i32
    %c0_i32_0 = arith.constant 0 : i32
    %c0_i32_1 = arith.constant 0 : i32
    %c0_i32_2 = arith.constant 0 : i32
    return %c0_i32, %c0_i32_0, %c0_i32_1 : i32, i32, i32
  }
  func.func @transform_10(%arg0: i32) -> (i32, i32, i32) {
    %c0_i32 = arith.constant 0 : i32
    %c0_i32_0 = arith.constant 0 : i32
    %c0_i32_1 = arith.constant 0 : i32
    %c0_i32_2 = arith.constant 0 : i32
    return %c0_i32, %c0_i32_0, %c0_i32_1 : i32, i32, i32
  }
  func.func @transform_11(%arg0: i32) -> (i32, i32, i32) {
    %c0_i32 = arith.constant 0 : i32
    %c0_i32_0 = arith.constant 0 : i32
    %c0_i32_1 = arith.constant 0 : i32
    %c0_i32_2 = arith.constant 0 : i32
    return %c0_i32, %c0_i32_0, %c0_i32_1 : i32, i32, i32
  }
  func.func @transform_12(%arg0: i32) -> (i32, i32, i32) {
    %c0_i32 = arith.constant 0 : i32
    %c0_i32_0 = arith.constant 0 : i32
    %c0_i32_1 = arith.constant 0 : i32
    %c0_i32_2 = arith.constant 0 : i32
    return %c0_i32, %c0_i32_0, %c0_i32_1 : i32, i32, i32
  }
  func.func @transform_13(%arg0: i32) -> (i32, i32, i32) {
    %c0_i32 = arith.constant 0 : i32
    %c0_i32_0 = arith.constant 0 : i32
    %c0_i32_1 = arith.constant 0 : i32
    %c0_i32_2 = arith.constant 0 : i32
    return %c0_i32, %c0_i32_0, %c0_i32_1 : i32, i32, i32
  }
  func.func @transform_14(%arg0: i32) -> (i32, i32, i32) {
    %c0_i32 = arith.constant 0 : i32
    %c0_i32_0 = arith.constant 0 : i32
    %c0_i32_1 = arith.constant 0 : i32
    %c0_i32_2 = arith.constant 0 : i32
    return %c0_i32, %c0_i32_0, %c0_i32_1 : i32, i32, i32
  }
  func.func @transform_15(%arg0: i32) -> (i32, i32, i32) {
    %c0_i32 = arith.constant 0 : i32
    %c0_i32_0 = arith.constant 0 : i32
    %c0_i32_1 = arith.constant 0 : i32
    %c0_i32_2 = arith.constant 0 : i32
    return %c0_i32, %c0_i32_0, %c0_i32_1 : i32, i32, i32
  }
  func.func @transform_16(%arg0: i32) -> (i32, i32, i32) {
    %c0_i32 = arith.constant 0 : i32
    %c0_i32_0 = arith.constant 0 : i32
    %c0_i32_1 = arith.constant 0 : i32
    %c0_i32_2 = arith.constant 0 : i32
    return %c0_i32, %c0_i32_0, %c0_i32_1 : i32, i32, i32
  }
  func.func @transform_17(%arg0: i32) -> (i32, i32, i32) {
    %c0_i32 = arith.constant 0 : i32
    %c0_i32_0 = arith.constant 0 : i32
    %c0_i32_1 = arith.constant 0 : i32
    %c0_i32_2 = arith.constant 0 : i32
    return %c0_i32, %c0_i32_0, %c0_i32_1 : i32, i32, i32
  }
  func.func @transform_18(%arg0: i32) -> (i32, i32, i32) {
    %c0_i32 = arith.constant 0 : i32
    %c0_i32_0 = arith.constant 0 : i32
    %c0_i32_1 = arith.constant 0 : i32
    %c0_i32_2 = arith.constant 0 : i32
    return %c0_i32, %c0_i32_0, %c0_i32_1 : i32, i32, i32
  }
  func.func @transform_19(%arg0: i32) -> (i32, i32, i32) {
    %c0_i32 = arith.constant 0 : i32
    %c0_i32_0 = arith.constant 0 : i32
    %c0_i32_1 = arith.constant 0 : i32
    %c0_i32_2 = arith.constant 0 : i32
    return %c0_i32, %c0_i32_0, %c0_i32_1 : i32, i32, i32
  }
  func.func @transform_20(%arg0: i32) -> (i32, i32, i32) {
    %c0_i32 = arith.constant 0 : i32
    %c0_i32_0 = arith.constant 0 : i32
    %c0_i32_1 = arith.constant 0 : i32
    %c0_i32_2 = arith.constant 0 : i32
    return %c0_i32, %c0_i32_0, %c0_i32_1 : i32, i32, i32
  }
  func.func @transform_21(%arg0: i32) -> (i32, i32, i32) {
    %c0_i32 = arith.constant 0 : i32
    %c0_i32_0 = arith.constant 0 : i32
    %c0_i32_1 = arith.constant 0 : i32
    %c0_i32_2 = arith.constant 0 : i32
    return %c0_i32, %c0_i32_0, %c0_i32_1 : i32, i32, i32
  }
  func.func @transform_22(%arg0: i32) -> (i32, i32) {
    %c0_i32 = arith.constant 0 : i32
    %c0_i32_0 = arith.constant 0 : i32
    %c0_i32_1 = arith.constant 0 : i32
    return %c0_i32, %c0_i32_0 : i32, i32
  }
  func.func @transform_23(%arg0: i32) -> (i32, i32) {
    %c0_i32 = arith.constant 0 : i32
    %c0_i32_0 = arith.constant 0 : i32
    %c0_i32_1 = arith.constant 0 : i32
    return %c0_i32, %c0_i32_0 : i32, i32
  }
  func.func @transform_24(%arg0: i32) -> (i32, i32, i32) {
    %c0_i32 = arith.constant 0 : i32
    %c0_i32_0 = arith.constant 0 : i32
    %c0_i32_1 = arith.constant 0 : i32
    return %arg0, %c0_i32, %c0_i32_0 : i32, i32, i32
  }
}

</mosaic_0001>

<llo_original>
// kernel: transformer_forward.1
$region0: #{transformer_forward.1}
  #allocation0 [shape = 'u32[]', space=smem, size = 0x4, offset = 0x4, fixed_abs, tag = 'smem constant byte address 0x4 - core index']
  #allocation1 [shape = 'u32[144,128]{1,0:T(1,128)}', space=vmem, size = 0x12000, scoped, tag = 'internal scratch']
  %s0 = inlined_call_operand.vmem [shape: f32[2,8,32], index: 0, kind: input, shape index: {}]
  %s1 = inlined_call_operand.vmem [shape: f32[2,8,32], index: 1, kind: input, shape index: {}]
  %s2 = inlined_call_operand.vmem [shape: f32[2,8,8], index: 2, kind: input, shape index: {}, may-alias: {2,4}]
  %s3 = inlined_call_operand.vmem [shape: f32[8,8], index: 3, kind: input, shape index: {}]
  %s4 = inlined_call_operand.vmem [shape: f32[2,8,8], index: 4, kind: input, shape index: {}, may-alias: {2,4}]
  %s5 = inlined_call_operand.vmem [shape: f32[2,32,96], index: 5, kind: input, shape index: {}]
  %s6 = inlined_call_operand.vmem [shape: f32[2,32,32], index: 6, kind: input, shape index: {}]
  %s7 = inlined_call_operand.vmem [shape: f32[2,4,32], index: 7, kind: input, shape index: {}]
  %s8 = inlined_call_operand.vmem [shape: f32[2,32,64], index: 8, kind: input, shape index: {}]
  %s9 = inlined_call_operand.vmem [shape: f32[2,1,64], index: 9, kind: input, shape index: {}]
  %s10 = inlined_call_operand.vmem [shape: f32[2,64,32], index: 10, kind: input, shape index: {}]
  %s11 = inlined_call_operand.vmem [shape: f32[2,1,32], index: 11, kind: input, shape index: {}]
  %s12 = inlined_call_operand.vmem [shape: f32[2,32,96], index: 12, kind: input, shape index: {}]
  %s13 = inlined_call_operand.vmem [shape: f32[2,32,32], index: 13, kind: input, shape index: {}]
  %s14 = inlined_call_operand.vmem [shape: f32[2,32,32], index: 14, kind: input, shape index: {}]
  %s15 = inlined_call_operand.vmem [shape: f32[2,32,64], index: 15, kind: input, shape index: {}]
  %s16 = inlined_call_operand.vmem [shape: f32[2,32,32], index: 16, kind: input, shape index: {}]
  %s17 = inlined_call_operand.vmem [shape: f32[2,6,32], index: 17, kind: input, shape index: {}]
  %s18 = inlined_call_operand.vmem [shape: f32[2,32,64], index: 18, kind: input, shape index: {}]
  %s19 = inlined_call_operand.vmem [shape: f32[2,1,64], index: 19, kind: input, shape index: {}]
  %s20 = inlined_call_operand.vmem [shape: f32[2,64,32], index: 20, kind: input, shape index: {}]
  %s21 = inlined_call_operand.vmem [shape: f32[2,1,32], index: 21, kind: input, shape index: {}]
  %s22 = inlined_call_operand.vmem [shape: f32[32,128], index: 22, kind: input, shape index: {}]
  %s23 = inlined_call_operand.vmem [shape: f32[1,128], index: 23, kind: input, shape index: {}]
  %s24 = inlined_call_operand.hbm [shape: f32[2,8,128], index: 24, kind: output, shape index: {}]
  %s25 = sld [smem:[#allocation0]]
  $region129: #{transformer_forward.1} parent=0
    _
  %s27 = ssub.s32 1, %s25
  %s28 = scalar_select 0, %s27, %s25
  $region1: #{transformer_forward.1} parent=0
    #allocation2 [shape = 'u8[8192]{0}', space=vmem, size = 0x2000, scoped, tag = 'output window, operand 0']
    #allocation3 [shape = 's32[2]{0}', space=sflag, size = 0x8, scoped, tag = 'scoped memory for transformer_forward.1']
    %29 = vsyncpa [#allocation3], 0
    %s30 = scalar_lea.sflag [#allocation3], 1
    %31 = vsyncpa %s30, 0
    loop: start=0, step=1, limit=4
    $region2: #{transformer_forward.1} parent=1 // loop_pre_header
      _
    $region3: #{transformer_forward.1} parent=1 // loop_header
      %s33 = sphi 0, %s37
      %p34 = scmp.ge.s32.totalorder %s33, 4
      %s43 = sphi 0, %s45
      %s46 = sphi 0, %s43
      %s47 = sphi 0, %s46
      %s63 = sphi 0, %s47
      %s69 = sphi 0, %s71
      %s72 = sphi 0, %s69
      %s73 = sphi 0, %s72
      %s89 = sphi 0, %s73
      %s95 = sphi 0, %s97
      %s98 = sphi 0, %s95
      %s99 = sphi 0, %s98
      %s115 = sphi 0, %s99
      %s119 = sphi 0, %s119
      %s121 = sphi 0, %s119
      %s122 = sphi 0, %s121
      %s136 = sphi 0, %s122
      %s142 = sphi 0, %s144
      %s145 = sphi 0, %s142
      %s146 = sphi 0, %s145
      %s162 = sphi 0, %s146
      %s166 = sphi 0, %s166
      %s168 = sphi 0, %s166
      %s169 = sphi 0, %s168
      %s183 = sphi 0, %s169
      %s187 = sphi 0, %s187
      %s189 = sphi 0, %s187
      %s190 = sphi 0, %s189
      %s204 = sphi 0, %s190
      %s208 = sphi 0, %s208
      %s210 = sphi 0, %s208
      %s211 = sphi 0, %s210
      %s225 = sphi 0, %s211
      %s229 = sphi 0, %s229
      %s231 = sphi 0, %s229
      %s232 = sphi 0, %s231
      %s246 = sphi 0, %s232
      %s250 = sphi 0, %s250
      %s252 = sphi 0, %s250
      %s253 = sphi 0, %s252
      %s267 = sphi 0, %s253
      %s271 = sphi 0, %s271
      %s273 = sphi 0, %s271
      %s274 = sphi 0, %s273
      %s288 = sphi 0, %s274
      %s292 = sphi 0, %s292
      %s294 = sphi 0, %s292
      %s295 = sphi 0, %s294
      %s309 = sphi 0, %s295
      %s313 = sphi 0, %s313
      %s315 = sphi 0, %s313
      %s316 = sphi 0, %s315
      %s330 = sphi 0, %s316
      %s334 = sphi 0, %s334
      %s336 = sphi 0, %s334
      %s337 = sphi 0, %s336
      %s351 = sphi 0, %s337
      %s355 = sphi 0, %s355
      %s357 = sphi 0, %s355
      %s358 = sphi 0, %s357
      %s372 = sphi 0, %s358
      %s376 = sphi 0, %s376
      %s378 = sphi 0, %s376
      %s379 = sphi 0, %s378
      %s393 = sphi 0, %s379
      %s397 = sphi 0, %s397
      %s399 = sphi 0, %s397
      %s400 = sphi 0, %s399
      %s414 = sphi 0, %s400
      %s418 = sphi 0, %s418
      %s420 = sphi 0, %s418
      %s421 = sphi 0, %s420
      %s435 = sphi 0, %s421
      %s439 = sphi 0, %s439
      %s441 = sphi 0, %s439
      %s442 = sphi 0, %s441
      %s456 = sphi 0, %s442
      %s460 = sphi 0, %s460
      %s462 = sphi 0, %s460
      %s463 = sphi 0, %s462
      %s477 = sphi 0, %s463
      %s481 = sphi 0, %s481
      %s483 = sphi 0, %s481
      %s484 = sphi 0, %s483
      %s498 = sphi 0, %s484
      %s502 = sphi 0, %s502
      %s504 = sphi 0, %s502
      %s505 = sphi 0, %s504
      %s519 = sphi 0, %s505
      %s523 = sphi 0, %s523
      %s525 = sphi 0, %s523
      %s526 = sphi 0, %s525
      %s540 = sphi 0, %s526
      %s544 = sphi 0, %s544
      %s546 = sphi 0, %s544
      %s547 = sphi 0, %s546
      %s561 = sphi 0, %s547
      %s567 = sphi 0, %s569
      %s570 = sphi 0, %s567
      %s571 = sphi 0, %s570
      %s587 = sphi 0, %s571
    $region4: #{transformer_forward.1} parent=1 // loop_header_branch
      %36 = sbr.rel (%p34) target = $region8
    $region5: #{transformer_forward.1} parent=1 // loop_body
      %s38 = ssub.s32 %s33, 1
      %s39 = ssub.s32 %s33, 2
      %s40 = sadd.s32 %s33, 1
      %s41 = ssub.s32 %s33, %s40
      %p42 = scmp.eq.s32.totalorder %s41, 0
      %s44 = sadd.s32 %s43, 1
      %s45 = scalar_select %p42, %s43, %s44
      %p48 = pneg %p42
      %p49 = scmp.eq.s32.totalorder %s33, 1
      %p50 = por %p48, %p49
      %p51 = scmp.ne.s32.totalorder %s43, %s46
      %p52 = scmp.eq.s32.totalorder %s33, 0
      %p53 = por %p51, %p52
      %p54 = scmp.ne.s32.totalorder %s43, %s46
      %p55 = scmp.eq.s32.totalorder %s38, 1
      %p56 = por %p54, %p55
      %p57 = scmp.ne.s32.totalorder %s46, %s47
      %p58 = scmp.eq.s32.totalorder %s38, 0
      %p59 = por %p57, %p58
      %p60 = scmp.ne.s32.totalorder %s46, %s47
      %p61 = scmp.eq.s32.totalorder %s39, 1
      %p62 = por %p60, %p61
      %p64 = scmp.ne.s32.totalorder %s47, %s63
      %p65 = scmp.eq.s32.totalorder %s39, 0
      %p66 = por %p64, %p65
      %s67 = ssub.s32 %s33, %s40
      %p68 = scmp.eq.s32.totalorder %s67, 0
      %s70 = sadd.s32 %s69, 1
      %s71 = scalar_select %p68, %s69, %s70
      %p74 = pneg %p68
      %p75 = scmp.eq.s32.totalorder %s33, 1
      %p76 = por %p74, %p75
      %p77 = scmp.ne.s32.totalorder %s69, %s72
      %p78 = scmp.eq.s32.totalorder %s33, 0
      %p79 = por %p77, %p78
      %p80 = scmp.ne.s32.totalorder %s69, %s72
      %p81 = scmp.eq.s32.totalorder %s38, 1
      %p82 = por %p80, %p81
      %p83 = scmp.ne.s32.totalorder %s72, %s73
      %p84 = scmp.eq.s32.totalorder %s38, 0
      %p85 = por %p83, %p84
      %p86 = scmp.ne.s32.totalorder %s72, %s73
      %p87 = scmp.eq.s32.totalorder %s39, 1
      %p88 = por %p86, %p87
      %p90 = scmp.ne.s32.totalorder %s73, %s89
      %p91 = scmp.eq.s32.totalorder %s39, 0
      %p92 = por %p90, %p91
      %s93 = ssub.s32 %s33, %s40
      %p94 = scmp.eq.s32.totalorder %s93, 0
      %s96 = sadd.s32 %s95, 1
      %s97 = scalar_select %p94, %s95, %s96
      %p100 = pneg %p94
      %p101 = scmp.eq.s32.totalorder %s33, 1
      %p102 = por %p100, %p101
      %p103 = scmp.ne.s32.totalorder %s95, %s98
      %p104 = scmp.eq.s32.totalorder %s33, 0
      %p105 = por %p103, %p104
      %p106 = scmp.ne.s32.totalorder %s95, %s98
      %p107 = scmp.eq.s32.totalorder %s38, 1
      %p108 = por %p106, %p107
      %p109 = scmp.ne.s32.totalorder %s98, %s99
      %p110 = scmp.eq.s32.totalorder %s38, 0
      %p111 = por %p109, %p110
      %p112 = scmp.ne.s32.totalorder %s98, %s99
      %p113 = scmp.eq.s32.totalorder %s39, 1
      %p114 = por %p112, %p113
      %p116 = scmp.ne.s32.totalorder %s99, %s115
      %p117 = scmp.eq.s32.totalorder %s39, 0
      %p118 = por %p116, %p117
      %s120 = sadd.s32 %s119, 1
      %p123 = scmp.eq.s32.totalorder %s33, 1
      %p124 = scmp.ne.s32.totalorder %s119, %s121
      %p125 = scmp.eq.s32.totalorder %s33, 0
      %p126 = por %p124, %p125
      %p127 = scmp.ne.s32.totalorder %s119, %s121
      %p128 = scmp.eq.s32.totalorder %s38, 1
      %p129 = por %p127, %p128
      %p130 = scmp.ne.s32.totalorder %s121, %s122
      %p131 = scmp.eq.s32.totalorder %s38, 0
      %p132 = por %p130, %p131
      %p133 = scmp.ne.s32.totalorder %s121, %s122
      %p134 = scmp.eq.s32.totalorder %s39, 1
      %p135 = por %p133, %p134
      %p137 = scmp.ne.s32.totalorder %s122, %s136
      %p138 = scmp.eq.s32.totalorder %s39, 0
      %p139 = por %p137, %p138
      %s140 = ssub.s32 %s33, %s40
      %p141 = scmp.eq.s32.totalorder %s140, 0
      %s143 = sadd.s32 %s142, 1
      %s144 = scalar_select %p141, %s142, %s143
      %p147 = pneg %p141
      %p148 = scmp.eq.s32.totalorder %s33, 1
      %p149 = por %p147, %p148
      %p150 = scmp.ne.s32.totalorder %s142, %s145
      %p151 = scmp.eq.s32.totalorder %s33, 0
      %p152 = por %p150, %p151
      %p153 = scmp.ne.s32.totalorder %s142, %s145
      %p154 = scmp.eq.s32.totalorder %s38, 1
      %p155 = por %p153, %p154
      %p156 = scmp.ne.s32.totalorder %s145, %s146
      %p157 = scmp.eq.s32.totalorder %s38, 0
      %p158 = por %p156, %p157
      %p159 = scmp.ne.s32.totalorder %s145, %s146
      %p160 = scmp.eq.s32.totalorder %s39, 1
      %p161 = por %p159, %p160
      %p163 = scmp.ne.s32.totalorder %s146, %s162
      %p164 = scmp.eq.s32.totalorder %s39, 0
      %p165 = por %p163, %p164
      %s167 = sadd.s32 %s166, 1
      %p170 = scmp.eq.s32.totalorder %s33, 1
      %p171 = scmp.ne.s32.totalorder %s166, %s168
      %p172 = scmp.eq.s32.totalorder %s33, 0
      %p173 = por %p171, %p172
      %p174 = scmp.ne.s32.totalorder %s166, %s168
      %p175 = scmp.eq.s32.totalorder %s38, 1
      %p176 = por %p174, %p175
      %p177 = scmp.ne.s32.totalorder %s168, %s169
      %p178 = scmp.eq.s32.totalorder %s38, 0
      %p179 = por %p177, %p178
      %p180 = scmp.ne.s32.totalorder %s168, %s169
      %p181 = scmp.eq.s32.totalorder %s39, 1
      %p182 = por %p180, %p181
      %p184 = scmp.ne.s32.totalorder %s169, %s183
      %p185 = scmp.eq.s32.totalorder %s39, 0
      %p186 = por %p184, %p185
      %s188 = sadd.s32 %s187, 1
      %p191 = scmp.eq.s32.totalorder %s33, 1
      %p192 = scmp.ne.s32.totalorder %s187, %s189
      %p193 = scmp.eq.s32.totalorder %s33, 0
      %p194 = por %p192, %p193
      %p195 = scmp.ne.s32.totalorder %s187, %s189
      %p196 = scmp.eq.s32.totalorder %s38, 1
      %p197 = por %p195, %p196
      %p198 = scmp.ne.s32.totalorder %s189, %s190
      %p199 = scmp.eq.s32.totalorder %s38, 0
      %p200 = por %p198, %p199
      %p201 = scmp.ne.s32.totalorder %s189, %s190
      %p202 = scmp.eq.s32.totalorder %s39, 1
      %p203 = por %p201, %p202
      %p205 = scmp.ne.s32.totalorder %s190, %s204
      %p206 = scmp.eq.s32.totalorder %s39, 0
      %p207 = por %p205, %p206
      %s209 = sadd.s32 %s208, 1
      %p212 = scmp.eq.s32.totalorder %s33, 1
      %p213 = scmp.ne.s32.totalorder %s208, %s210
      %p214 = scmp.eq.s32.totalorder %s33, 0
      %p215 = por %p213, %p214
      %p216 = scmp.ne.s32.totalorder %s208, %s210
      %p217 = scmp.eq.s32.totalorder %s38, 1
      %p218 = por %p216, %p217
      %p219 = scmp.ne.s32.totalorder %s210, %s211
      %p220 = scmp.eq.s32.totalorder %s38, 0
      %p221 = por %p219, %p220
      %p222 = scmp.ne.s32.totalorder %s210, %s211
      %p223 = scmp.eq.s32.totalorder %s39, 1
      %p224 = por %p222, %p223
      %p226 = scmp.ne.s32.totalorder %s211, %s225
      %p227 = scmp.eq.s32.totalorder %s39, 0
      %p228 = por %p226, %p227
      %s230 = sadd.s32 %s229, 1
      %p233 = scmp.eq.s32.totalorder %s33, 1
      %p234 = scmp.ne.s32.totalorder %s229, %s231
      %p235 = scmp.eq.s32.totalorder %s33, 0
      %p236 = por %p234, %p235
      %p237 = scmp.ne.s32.totalorder %s229, %s231
      %p238 = scmp.eq.s32.totalorder %s38, 1
      %p239 = por %p237, %p238
      %p240 = scmp.ne.s32.totalorder %s231, %s232
      %p241 = scmp.eq.s32.totalorder %s38, 0
      %p242 = por %p240, %p241
      %p243 = scmp.ne.s32.totalorder %s231, %s232
      %p244 = scmp.eq.s32.totalorder %s39, 1
      %p245 = por %p243, %p244
      %p247 = scmp.ne.s32.totalorder %s232, %s246
      %p248 = scmp.eq.s32.totalorder %s39, 0
      %p249 = por %p247, %p248
      %s251 = sadd.s32 %s250, 1
      %p254 = scmp.eq.s32.totalorder %s33, 1
      %p255 = scmp.ne.s32.totalorder %s250, %s252
      %p256 = scmp.eq.s32.totalorder %s33, 0
      %p257 = por %p255, %p256
      %p258 = scmp.ne.s32.totalorder %s250, %s252
      %p259 = scmp.eq.s32.totalorder %s38, 1
      %p260 = por %p258, %p259
      %p261 = scmp.ne.s32.totalorder %s252, %s253
      %p262 = scmp.eq.s32.totalorder %s38, 0
      %p263 = por %p261, %p262
      %p264 = scmp.ne.s32.totalorder %s252, %s253
      %p265 = scmp.eq.s32.totalorder %s39, 1
      %p266 = por %p264, %p265
      %p268 = scmp.ne.s32.totalorder %s253, %s267
      %p269 = scmp.eq.s32.totalorder %s39, 0
      %p270 = por %p268, %p269
      %s272 = sadd.s32 %s271, 1
      %p275 = scmp.eq.s32.totalorder %s33, 1
      %p276 = scmp.ne.s32.totalorder %s271, %s273
      %p277 = scmp.eq.s32.totalorder %s33, 0
      %p278 = por %p276, %p277
      %p279 = scmp.ne.s32.totalorder %s271, %s273
      %p280 = scmp.eq.s32.totalorder %s38, 1
      %p281 = por %p279, %p280
      %p282 = scmp.ne.s32.totalorder %s273, %s274
      %p283 = scmp.eq.s32.totalorder %s38, 0
      %p284 = por %p282, %p283
      %p285 = scmp.ne.s32.totalorder %s273, %s274
      %p286 = scmp.eq.s32.totalorder %s39, 1
      %p287 = por %p285, %p286
      %p289 = scmp.ne.s32.totalorder %s274, %s288
      %p290 = scmp.eq.s32.totalorder %s39, 0
      %p291 = por %p289, %p290
      %s293 = sadd.s32 %s292, 1
      %p296 = scmp.eq.s32.totalorder %s33, 1
      %p297 = scmp.ne.s32.totalorder %s292, %s294
      %p298 = scmp.eq.s32.totalorder %s33, 0
      %p299 = por %p297, %p298
      %p300 = scmp.ne.s32.totalorder %s292, %s294
      %p301 = scmp.eq.s32.totalorder %s38, 1
      %p302 = por %p300, %p301
      %p303 = scmp.ne.s32.totalorder %s294, %s295
      %p304 = scmp.eq.s32.totalorder %s38, 0
      %p305 = por %p303, %p304
      %p306 = scmp.ne.s32.totalorder %s294, %s295
      %p307 = scmp.eq.s32.totalorder %s39, 1
      %p308 = por %p306, %p307
      %p310 = scmp.ne.s32.totalorder %s295, %s309
      %p311 = scmp.eq.s32.totalorder %s39, 0
      %p312 = por %p310, %p311
      %s314 = sadd.s32 %s313, 1
      %p317 = scmp.eq.s32.totalorder %s33, 1
      %p318 = scmp.ne.s32.totalorder %s313, %s315
      %p319 = scmp.eq.s32.totalorder %s33, 0
      %p320 = por %p318, %p319
      %p321 = scmp.ne.s32.totalorder %s313, %s315
      %p322 = scmp.eq.s32.totalorder %s38, 1
      %p323 = por %p321, %p322
      %p324 = scmp.ne.s32.totalorder %s315, %s316
      %p325 = scmp.eq.s32.totalorder %s38, 0
      %p326 = por %p324, %p325
      %p327 = scmp.ne.s32.totalorder %s315, %s316
      %p328 = scmp.eq.s32.totalorder %s39, 1
      %p329 = por %p327, %p328
      %p331 = scmp.ne.s32.totalorder %s316, %s330
      %p332 = scmp.eq.s32.totalorder %s39, 0
      %p333 = por %p331, %p332
      %s335 = sadd.s32 %s334, 1
      %p338 = scmp.eq.s32.totalorder %s33, 1
      %p339 = scmp.ne.s32.totalorder %s334, %s336
      %p340 = scmp.eq.s32.totalorder %s33, 0
      %p341 = por %p339, %p340
      %p342 = scmp.ne.s32.totalorder %s334, %s336
      %p343 = scmp.eq.s32.totalorder %s38, 1
      %p344 = por %p342, %p343
      %p345 = scmp.ne.s32.totalorder %s336, %s337
      %p346 = scmp.eq.s32.totalorder %s38, 0
      %p347 = por %p345, %p346
      %p348 = scmp.ne.s32.totalorder %s336, %s337
      %p349 = scmp.eq.s32.totalorder %s39, 1
      %p350 = por %p348, %p349
      %p352 = scmp.ne.s32.totalorder %s337, %s351
      %p353 = scmp.eq.s32.totalorder %s39, 0
      %p354 = por %p352, %p353
      %s356 = sadd.s32 %s355, 1
      %p359 = scmp.eq.s32.totalorder %s33, 1
      %p360 = scmp.ne.s32.totalorder %s355, %s357
      %p361 = scmp.eq.s32.totalorder %s33, 0
      %p362 = por %p360, %p361
      %p363 = scmp.ne.s32.totalorder %s355, %s357
      %p364 = scmp.eq.s32.totalorder %s38, 1
      %p365 = por %p363, %p364
      %p366 = scmp.ne.s32.totalorder %s357, %s358
      %p367 = scmp.eq.s32.totalorder %s38, 0
      %p368 = por %p366, %p367
      %p369 = scmp.ne.s32.totalorder %s357, %s358
      %p370 = scmp.eq.s32.totalorder %s39, 1
      %p371 = por %p369, %p370
      %p373 = scmp.ne.s32.totalorder %s358, %s372
      %p374 = scmp.eq.s32.totalorder %s39, 0
      %p375 = por %p373, %p374
      %s377 = sadd.s32 %s376, 1
      %p380 = scmp.eq.s32.totalorder %s33, 1
      %p381 = scmp.ne.s32.totalorder %s376, %s378
      %p382 = scmp.eq.s32.totalorder %s33, 0
      %p383 = por %p381, %p382
      %p384 = scmp.ne.s32.totalorder %s376, %s378
      %p385 = scmp.eq.s32.totalorder %s38, 1
      %p386 = por %p384, %p385
      %p387 = scmp.ne.s32.totalorder %s378, %s379
      %p388 = scmp.eq.s32.totalorder %s38, 0
      %p389 = por %p387, %p388
      %p390 = scmp.ne.s32.totalorder %s378, %s379
      %p391 = scmp.eq.s32.totalorder %s39, 1
      %p392 = por %p390, %p391
      %p394 = scmp.ne.s32.totalorder %s379, %s393
      %p395 = scmp.eq.s32.totalorder %s39, 0
      %p396 = por %p394, %p395
      %s398 = sadd.s32 %s397, 1
      %p401 = scmp.eq.s32.totalorder %s33, 1
      %p402 = scmp.ne.s32.totalorder %s397, %s399
      %p403 = scmp.eq.s32.totalorder %s33, 0
      %p404 = por %p402, %p403
      %p405 = scmp.ne.s32.totalorder %s397, %s399
      %p406 = scmp.eq.s32.totalorder %s38, 1
      %p407 = por %p405, %p406
      %p408 = scmp.ne.s32.totalorder %s399, %s400
      %p409 = scmp.eq.s32.totalorder %s38, 0
      %p410 = por %p408, %p409
      %p411 = scmp.ne.s32.totalorder %s399, %s400
      %p412 = scmp.eq.s32.totalorder %s39, 1
      %p413 = por %p411, %p412
      %p415 = scmp.ne.s32.totalorder %s400, %s414
      %p416 = scmp.eq.s32.totalorder %s39, 0
      %p417 = por %p415, %p416
      %s419 = sadd.s32 %s418, 1
      %p422 = scmp.eq.s32.totalorder %s33, 1
      %p423 = scmp.ne.s32.totalorder %s418, %s420
      %p424 = scmp.eq.s32.totalorder %s33, 0
      %p425 = por %p423, %p424
      %p426 = scmp.ne.s32.totalorder %s418, %s420
      %p427 = scmp.eq.s32.totalorder %s38, 1
      %p428 = por %p426, %p427
      %p429 = scmp.ne.s32.totalorder %s420, %s421
      %p430 = scmp.eq.s32.totalorder %s38, 0
      %p431 = por %p429, %p430
      %p432 = scmp.ne.s32.totalorder %s420, %s421
      %p433 = scmp.eq.s32.totalorder %s39, 1
      %p434 = por %p432, %p433
      %p436 = scmp.ne.s32.totalorder %s421, %s435
      %p437 = scmp.eq.s32.totalorder %s39, 0
      %p438 = por %p436, %p437
      %s440 = sadd.s32 %s439, 1
      %p443 = scmp.eq.s32.totalorder %s33, 1
      %p444 = scmp.ne.s32.totalorder %s439, %s441
      %p445 = scmp.eq.s32.totalorder %s33, 0
      %p446 = por %p444, %p445
      %p447 = scmp.ne.s32.totalorder %s439, %s441
      %p448 = scmp.eq.s32.totalorder %s38, 1
      %p449 = por %p447, %p448
      %p450 = scmp.ne.s32.totalorder %s441, %s442
      %p451 = scmp.eq.s32.totalorder %s38, 0
      %p452 = por %p450, %p451
      %p453 = scmp.ne.s32.totalorder %s441, %s442
      %p454 = scmp.eq.s32.totalorder %s39, 1
      %p455 = por %p453, %p454
      %p457 = scmp.ne.s32.totalorder %s442, %s456
      %p458 = scmp.eq.s32.totalorder %s39, 0
      %p459 = por %p457, %p458
      %s461 = sadd.s32 %s460, 1
      %p464 = scmp.eq.s32.totalorder %s33, 1
      %p465 = scmp.ne.s32.totalorder %s460, %s462
      %p466 = scmp.eq.s32.totalorder %s33, 0
      %p467 = por %p465, %p466
      %p468 = scmp.ne.s32.totalorder %s460, %s462
      %p469 = scmp.eq.s32.totalorder %s38, 1
      %p470 = por %p468, %p469
      %p471 = scmp.ne.s32.totalorder %s462, %s463
      %p472 = scmp.eq.s32.totalorder %s38, 0
      %p473 = por %p471, %p472
      %p474 = scmp.ne.s32.totalorder %s462, %s463
      %p475 = scmp.eq.s32.totalorder %s39, 1
      %p476 = por %p474, %p475
      %p478 = scmp.ne.s32.totalorder %s463, %s477
      %p479 = scmp.eq.s32.totalorder %s39, 0
      %p480 = por %p478, %p479
      %s482 = sadd.s32 %s481, 1
      %p485 = scmp.eq.s32.totalorder %s33, 1
      %p486 = scmp.ne.s32.totalorder %s481, %s483
      %p487 = scmp.eq.s32.totalorder %s33, 0
      %p488 = por %p486, %p487
      %p489 = scmp.ne.s32.totalorder %s481, %s483
      %p490 = scmp.eq.s32.totalorder %s38, 1
      %p491 = por %p489, %p490
      %p492 = scmp.ne.s32.totalorder %s483, %s484
      %p493 = scmp.eq.s32.totalorder %s38, 0
      %p494 = por %p492, %p493
      %p495 = scmp.ne.s32.totalorder %s483, %s484
      %p496 = scmp.eq.s32.totalorder %s39, 1
      %p497 = por %p495, %p496
      %p499 = scmp.ne.s32.totalorder %s484, %s498
      %p500 = scmp.eq.s32.totalorder %s39, 0
      %p501 = por %p499, %p500
      %s503 = sadd.s32 %s502, 1
      %p506 = scmp.eq.s32.totalorder %s33, 1
      %p507 = scmp.ne.s32.totalorder %s502, %s504
      %p508 = scmp.eq.s32.totalorder %s33, 0
      %p509 = por %p507, %p508
      %p510 = scmp.ne.s32.totalorder %s502, %s504
      %p511 = scmp.eq.s32.totalorder %s38, 1
      %p512 = por %p510, %p511
      %p513 = scmp.ne.s32.totalorder %s504, %s505
      %p514 = scmp.eq.s32.totalorder %s38, 0
      %p515 = por %p513, %p514
      %p516 = scmp.ne.s32.totalorder %s504, %s505
      %p517 = scmp.eq.s32.totalorder %s39, 1
      %p518 = por %p516, %p517
      %p520 = scmp.ne.s32.totalorder %s505, %s519
      %p521 = scmp.eq.s32.totalorder %s39, 0
      %p522 = por %p520, %p521
      %s524 = sadd.s32 %s523, 1
      %p527 = scmp.eq.s32.totalorder %s33, 1
      %p528 = scmp.ne.s32.totalorder %s523, %s525
      %p529 = scmp.eq.s32.totalorder %s33, 0
      %p530 = por %p528, %p529
      %p531 = scmp.ne.s32.totalorder %s523, %s525
      %p532 = scmp.eq.s32.totalorder %s38, 1
      %p533 = por %p531, %p532
      %p534 = scmp.ne.s32.totalorder %s525, %s526
      %p535 = scmp.eq.s32.totalorder %s38, 0
      %p536 = por %p534, %p535
      %p537 = scmp.ne.s32.totalorder %s525, %s526
      %p538 = scmp.eq.s32.totalorder %s39, 1
      %p539 = por %p537, %p538
      %p541 = scmp.ne.s32.totalorder %s526, %s540
      %p542 = scmp.eq.s32.totalorder %s39, 0
      %p543 = por %p541, %p542
      %s545 = sadd.s32 %s544, 1
      %p548 = scmp.eq.s32.totalorder %s33, 1
      %p549 = scmp.ne.s32.totalorder %s544, %s546
      %p550 = scmp.eq.s32.totalorder %s33, 0
      %p551 = por %p549, %p550
      %p552 = scmp.ne.s32.totalorder %s544, %s546
      %p553 = scmp.eq.s32.totalorder %s38, 1
      %p554 = por %p552, %p553
      %p555 = scmp.ne.s32.totalorder %s546, %s547
      %p556 = scmp.eq.s32.totalorder %s38, 0
      %p557 = por %p555, %p556
      %p558 = scmp.ne.s32.totalorder %s546, %s547
      %p559 = scmp.eq.s32.totalorder %s39, 1
      %p560 = por %p558, %p559
      %p562 = scmp.ne.s32.totalorder %s547, %s561
      %p563 = scmp.eq.s32.totalorder %s39, 0
      %p564 = por %p562, %p563
      %s565 = ssub.s32 %s33, %s40
      %p566 = scmp.eq.s32.totalorder %s565, 0
      %s568 = sadd.s32 %s567, 1
      %s569 = scalar_select %p566, %s567, %s568
      %p572 = pneg %p566
      %p573 = scmp.eq.s32.totalorder %s33, 1
      %p574 = por %p572, %p573
      %p575 = scmp.ne.s32.totalorder %s567, %s570
      %p576 = scmp.eq.s32.totalorder %s33, 0
      %p577 = por %p575, %p576
      %p578 = scmp.ne.s32.totalorder %s567, %s570
      %p579 = scmp.eq.s32.totalorder %s38, 1
      %p580 = por %p578, %p579
      %p581 = scmp.ne.s32.totalorder %s570, %s571
      %p582 = scmp.eq.s32.totalorder %s38, 0
      %p583 = por %p581, %p582
      %p584 = scmp.ne.s32.totalorder %s570, %s571
      %p585 = scmp.eq.s32.totalorder %s39, 1
      %p586 = por %p584, %p585
      %p588 = scmp.ne.s32.totalorder %s571, %s587
      %p589 = scmp.eq.s32.totalorder %s39, 0
      %p590 = por %p588, %p589
      %p591 = scmp.le.s32.totalorder 1, %s33
      %p592 = scmp.lt.s32.totalorder %s33, 3
      %p593 = pnand %p591, %p592
      %p594 = pneg %p593
      // Predicated region
      $region9: #{transformer_forward.1} parent=5 // pred_check
        _
      $region10: #{transformer_forward.1} parent=5 // pred_check_branch
        %596 = sbr.rel (%p593) target = $region12
      $region11: #{transformer_forward.1} parent=5 // pred_region
        %s597 = ssub.s32 %s33, 1
        // Predicated region
        $region13: #{transformer_forward.1} parent=11 // pred_check
          %p598 = pneg %p132
        $region14: #{transformer_forward.1} parent=11 // pred_check_branch
          %600 = sbr.rel (%p598) target = $region16
        $region15: #{transformer_forward.1} parent=11 // pred_region
          _
        $region16: #{transformer_forward.1} parent=11 // pred_fallthru
          _
        // Predicated region
        $region17: #{transformer_forward.1} parent=11 // pred_check
          %p601 = pneg %p179
        $region18: #{transformer_forward.1} parent=11 // pred_check_branch
          %603 = sbr.rel (%p601) target = $region20
        $region19: #{transformer_forward.1} parent=11 // pred_region
          _
        $region20: #{transformer_forward.1} parent=11 // pred_fallthru
          _
        // Predicated region
        $region21: #{transformer_forward.1} parent=11 // pred_check
          %p604 = pneg %p200
        $region22: #{transformer_forward.1} parent=11 // pred_check_branch
          %606 = sbr.rel (%p604) target = $region24
        $region23: #{transformer_forward.1} parent=11 // pred_region
          _
        $region24: #{transformer_forward.1} parent=11 // pred_fallthru
          _
        // Predicated region
        $region25: #{transformer_forward.1} parent=11 // pred_check
          %p607 = pneg %p221
        $region26: #{transformer_forward.1} parent=11 // pred_check_branch
          %609 = sbr.rel (%p607) target = $region28
        $region27: #{transformer_forward.1} parent=11 // pred_region
          _
        $region28: #{transformer_forward.1} parent=11 // pred_fallthru
          _
        // Predicated region
        $region29: #{transformer_forward.1} parent=11 // pred_check
          %p610 = pneg %p242
        $region30: #{transformer_forward.1} parent=11 // pred_check_branch
          %612 = sbr.rel (%p610) target = $region32
        $region31: #{transformer_forward.1} parent=11 // pred_region
          _
        $region32: #{transformer_forward.1} parent=11 // pred_fallthru
          _
        // Predicated region
        $region33: #{transformer_forward.1} parent=11 // pred_check
          %p613 = pneg %p263
        $region34: #{transformer_forward.1} parent=11 // pred_check_branch
          %615 = sbr.rel (%p613) target = $region36
        $region35: #{transformer_forward.1} parent=11 // pred_region
          _
        $region36: #{transformer_forward.1} parent=11 // pred_fallthru
          _
        // Predicated region
        $region37: #{transformer_forward.1} parent=11 // pred_check
          %p616 = pneg %p284
        $region38: #{transformer_forward.1} parent=11 // pred_check_branch
          %618 = sbr.rel (%p616) target = $region40
        $region39: #{transformer_forward.1} parent=11 // pred_region
          _
        $region40: #{transformer_forward.1} parent=11 // pred_fallthru
          _
        // Predicated region
        $region41: #{transformer_forward.1} parent=11 // pred_check
          %p619 = pneg %p305
        $region42: #{transformer_forward.1} parent=11 // pred_check_branch
          %621 = sbr.rel (%p619) target = $region44
        $region43: #{transformer_forward.1} parent=11 // pred_region
          _
        $region44: #{transformer_forward.1} parent=11 // pred_fallthru
          _
        // Predicated region
        $region45: #{transformer_forward.1} parent=11 // pred_check
          %p622 = pneg %p326
        $region46: #{transformer_forward.1} parent=11 // pred_check_branch
          %624 = sbr.rel (%p622) target = $region48
        $region47: #{transformer_forward.1} parent=11 // pred_region
          _
        $region48: #{transformer_forward.1} parent=11 // pred_fallthru
          _
        // Predicated region
        $region49: #{transformer_forward.1} parent=11 // pred_check
          %p625 = pneg %p347
        $region50: #{transformer_forward.1} parent=11 // pred_check_branch
          %627 = sbr.rel (%p625) target = $region52
        $region51: #{transformer_forward.1} parent=11 // pred_region
          _
        $region52: #{transformer_forward.1} parent=11 // pred_fallthru
          _
        // Predicated region
        $region53: #{transformer_forward.1} parent=11 // pred_check
          %p628 = pneg %p368
        $region54: #{transformer_forward.1} parent=11 // pred_check_branch
          %630 = sbr.rel (%p628) target = $region56
        $region55: #{transformer_forward.1} parent=11 // pred_region
          _
        $region56: #{transformer_forward.1} parent=11 // pred_fallthru
          _
        // Predicated region
        $region57: #{transformer_forward.1} parent=11 // pred_check
          %p631 = pneg %p389
        $region58: #{transformer_forward.1} parent=11 // pred_check_branch
          %633 = sbr.rel (%p631) target = $region60
        $region59: #{transformer_forward.1} parent=11 // pred_region
          _
        $region60: #{transformer_forward.1} parent=11 // pred_fallthru
          _
        // Predicated region
        $region61: #{transformer_forward.1} parent=11 // pred_check
          %p634 = pneg %p410
        $region62: #{transformer_forward.1} parent=11 // pred_check_branch
          %636 = sbr.rel (%p634) target = $region64
        $region63: #{transformer_forward.1} parent=11 // pred_region
          _
        $region64: #{transformer_forward.1} parent=11 // pred_fallthru
          _
        // Predicated region
        $region65: #{transformer_forward.1} parent=11 // pred_check
          %p637 = pneg %p431
        $region66: #{transformer_forward.1} parent=11 // pred_check_branch
          %639 = sbr.rel (%p637) target = $region68
        $region67: #{transformer_forward.1} parent=11 // pred_region
          _
        $region68: #{transformer_forward.1} parent=11 // pred_fallthru
          _
        // Predicated region
        $region69: #{transformer_forward.1} parent=11 // pred_check
          %p640 = pneg %p452
        $region70: #{transformer_forward.1} parent=11 // pred_check_branch
          %642 = sbr.rel (%p640) target = $region72
        $region71: #{transformer_forward.1} parent=11 // pred_region
          _
        $region72: #{transformer_forward.1} parent=11 // pred_fallthru
          _
        // Predicated region
        $region73: #{transformer_forward.1} parent=11 // pred_check
          %p643 = pneg %p473
        $region74: #{transformer_forward.1} parent=11 // pred_check_branch
          %645 = sbr.rel (%p643) target = $region76
        $region75: #{transformer_forward.1} parent=11 // pred_region
          _
        $region76: #{transformer_forward.1} parent=11 // pred_fallthru
          _
        // Predicated region
        $region77: #{transformer_forward.1} parent=11 // pred_check
          %p646 = pneg %p494
        $region78: #{transformer_forward.1} parent=11 // pred_check_branch
          %648 = sbr.rel (%p646) target = $region80
        $region79: #{transformer_forward.1} parent=11 // pred_region
          _
        $region80: #{transformer_forward.1} parent=11 // pred_fallthru
          _
        // Predicated region
        $region81: #{transformer_forward.1} parent=11 // pred_check
          %p649 = pneg %p515
        $region82: #{transformer_forward.1} parent=11 // pred_check_branch
          %651 = sbr.rel (%p649) target = $region84
        $region83: #{transformer_forward.1} parent=11 // pred_region
          _
        $region84: #{transformer_forward.1} parent=11 // pred_fallthru
          _
        // Predicated region
        $region85: #{transformer_forward.1} parent=11 // pred_check
          %p652 = pneg %p536
        $region86: #{transformer_forward.1} parent=11 // pred_check_branch
          %654 = sbr.rel (%p652) target = $region88
        $region87: #{transformer_forward.1} parent=11 // pred_region
          _
        $region88: #{transformer_forward.1} parent=11 // pred_fallthru
          _
        // Predicated region
        $region89: #{transformer_forward.1} parent=11 // pred_check
          %p655 = pneg %p557
        $region90: #{transformer_forward.1} parent=11 // pred_check_branch
          %657 = sbr.rel (%p655) target = $region92
        $region91: #{transformer_forward.1} parent=11 // pred_region
          _
        $region92: #{transformer_forward.1} parent=11 // pred_fallthru
          _
      $region12: #{transformer_forward.1} parent=5 // pred_fallthru
        _
      %p658 = scmp.lt.s32.totalorder %s33, 2
      // Predicated region
      $region93: #{transformer_forward.1} parent=5 // pred_check
        %p659 = pneg %p658
      $region94: #{transformer_forward.1} parent=5 // pred_check_branch
        %661 = sbr.rel (%p659) target = $region96
      $region95: #{transformer_forward.1} parent=5 // pred_region
        // Predicated region
        $region97: #{transformer_forward.1} parent=95 // pred_check
          %p662 = pneg %p53
        $region98: #{transformer_forward.1} parent=95 // pred_check_branch
          %664 = sbr.rel (%p662) target = $region100
        $region99: #{transformer_forward.1} parent=95 // pred_region
          %p665 = scmp.lt.s32.totalorder %s33, 1
          %s666 = scalar_select %p665, %s33, 1
          %s667 = smul.addr %s666, 8
          %s668 = scalar_lea.vmem %s0, %s667
        $region100: #{transformer_forward.1} parent=95 // pred_fallthru
          _
        // Predicated region
        $region101: #{transformer_forward.1} parent=95 // pred_check
          %p669 = pneg %p79
        $region102: #{transformer_forward.1} parent=95 // pred_check_branch
          %671 = sbr.rel (%p669) target = $region104
        $region103: #{transformer_forward.1} parent=95 // pred_region
          %p672 = scmp.lt.s32.totalorder %s33, 1
          %s673 = scalar_select %p672, %s33, 1
          %s674 = smul.addr %s673, 8
          %s675 = scalar_lea.vmem %s1, %s674
        $region104: #{transformer_forward.1} parent=95 // pred_fallthru
          _
        // Predicated region
        $region105: #{transformer_forward.1} parent=95 // pred_check
          %p676 = pneg %p105
        $region106: #{transformer_forward.1} parent=95 // pred_check_branch
          %678 = sbr.rel (%p676) target = $region108
        $region107: #{transformer_forward.1} parent=95 // pred_region
          %p679 = scmp.lt.s32.totalorder %s33, 1
          %s680 = scalar_select %p679, %s33, 1
          %s681 = smul.addr %s680, 8
          %s682 = scalar_lea.vmem %s2, %s681
        $region108: #{transformer_forward.1} parent=95 // pred_fallthru
          _
        // Predicated region
        $region109: #{transformer_forward.1} parent=95 // pred_check
          %p683 = pneg %p152
        $region110: #{transformer_forward.1} parent=95 // pred_check_branch
          %685 = sbr.rel (%p683) target = $region112
        $region111: #{transformer_forward.1} parent=95 // pred_region
          %p686 = scmp.lt.s32.totalorder %s33, 1
          %s687 = scalar_select %p686, %s33, 1
          %s688 = smul.addr %s687, 8
          %s689 = scalar_lea.vmem %s4, %s688
        $region112: #{transformer_forward.1} parent=95 // pred_fallthru
          _
      $region96: #{transformer_forward.1} parent=5 // pred_fallthru
        _
      %p690 = scmp.le.s32.totalorder 1, %s33
      %p691 = scmp.lt.s32.totalorder %s33, 3
      %p692 = pnand %p690, %p691
      %p693 = pneg %p692
      // Predicated region
      $region113: #{transformer_forward.1} parent=5 // pred_check
        _
      $region114: #{transformer_forward.1} parent=5 // pred_check_branch
        %695 = sbr.rel (%p692) target = $region116
      $region115: #{transformer_forward.1} parent=5 // pred_region
        %s696 = ssub.s32 %s33, 1
        %p697 = scmp.lt.s32.totalorder %s38, 1
        %s698 = scalar_select %p697, %s38, 1
        %s699 = smul.addr %s698, 8
        %s700 = scalar_lea.vmem %s0, %s699
        %p701 = pneg %p59
        %p702 = pneg %p56
        %p703 = scmp.lt.s32.totalorder %s38, 1
        %s704 = scalar_select %p703, %s38, 1
        %s705 = smul.addr %s704, 8
        %s706 = scalar_lea.vmem %s1, %s705
        %p707 = pneg %p85
        %p708 = pneg %p82
        %p709 = scmp.lt.s32.totalorder %s38, 1
        %s710 = scalar_select %p709, %s38, 1
        %s711 = smul.addr %s710, 8
        %s712 = scalar_lea.vmem %s2, %s711
        %p713 = pneg %p111
        %p714 = pneg %p108
        %p715 = pneg %p132
        %p716 = pneg %p129
        %p717 = scmp.lt.s32.totalorder %s38, 1
        %s718 = scalar_select %p717, %s38, 1
        %s719 = smul.addr %s718, 8
        %s720 = scalar_lea.vmem %s4, %s719
        %p721 = pneg %p158
        %p722 = pneg %p155
        %p723 = pneg %p179
        %p724 = pneg %p176
        %p725 = pneg %p200
        %p726 = pneg %p197
        %p727 = pneg %p221
        %p728 = pneg %p218
        %p729 = pneg %p242
        %p730 = pneg %p239
        %p731 = pneg %p263
        %p732 = pneg %p260
        %p733 = pneg %p284
        %p734 = pneg %p281
        %p735 = pneg %p305
        %p736 = pneg %p302
        %p737 = pneg %p326
        %p738 = pneg %p323
        %p739 = pneg %p347
        %p740 = pneg %p344
        %p741 = pneg %p368
        %p742 = pneg %p365
        %p743 = pneg %p389
        %p744 = pneg %p386
        %p745 = pneg %p410
        %p746 = pneg %p407
        %p747 = pneg %p431
        %p748 = pneg %p428
        %p749 = pneg %p452
        %p750 = pneg %p449
        %p751 = pneg %p473
        %p752 = pneg %p470
        %p753 = pneg %p494
        %p754 = pneg %p491
        %p755 = pneg %p515
        %p756 = pneg %p512
        %p757 = pneg %p536
        %p758 = pneg %p533
        %p759 = pneg %p557
        %p760 = pneg %p554
        %p761 = pneg %p583
        %p762 = pneg %p580
        %s763 = sand.u32 %s570, 1
        %s764 = scalar_lea.sflag [#allocation3], %s763
        %s765 = sand.u32 %s570, 1
        %s766 = smul.addr %s765, 8
        %s767 = scalar_lea.vmem [#allocation2], %s766
        %p768 = scmp.lt.s32.totalorder %s38, 1
        %s769 = scalar_select %p768, %s38, 1
        %s770 = smul.addr %s769, 8
        %s771 = scalar_lea.vmem %s0, %s770
        %p772 = scmp.lt.s32.totalorder %s38, 1
        %s773 = scalar_select %p772, %s38, 1
        %s774 = smul.addr %s773, 8
        %s775 = scalar_lea.vmem %s1, %s774
        %p776 = scmp.lt.s32.totalorder %s38, 1
        %s777 = scalar_select %p776, %s38, 1
        %s778 = smul.addr %s777, 8
        %s779 = scalar_lea.vmem %s2, %s778
        %p780 = scmp.lt.s32.totalorder %s38, 1
        %s781 = scalar_select %p780, %s38, 1
        %s782 = smul.addr %s781, 8
        %s783 = scalar_lea.vmem %s4, %s782
        %v784 = vld [vmem:[%s779] sm:$0xff]
        %v785 = vld [vmem:[%s3] sm:$0xff]
        %v786 = vld [vmem:[%s783] sm:$0xff]
        %v787 = vld [vmem:[%s771] sm:$0xff]
        %v788 = vld [vmem:[%s7] sm:$0xf]
        %v789 = vld [vmem:[%s5] sm:$0xff]
        %v790 = vld [vmem:[%s5 + $0x8] sm:$0xff]
        %v791 = vld [vmem:[%s5 + $0x10] sm:$0xff]
        %v792 = vld [vmem:[%s5 + $0x18] sm:$0xff]
        %vm793 = vcmask 261120
        %v795 = vsel %vm793, %v787, 0
        %797 = vmatprep.subr.mxu0 0.0
        %798 = vmatpush1.msra.mxu0 %v789
        %799 = vmatprep.subr.mxu0 0.0
        %800 = vmatpush1.msra.mxu0 %v790
        %801 = vmatprep.subr.mxu0 0.0
        %802 = vmatpush1.msra.mxu0 %v791
        %803 = vmatprep.subr.mxu0 0.0
        %804 = vmatpush1.msra.mxu0 %v792
        %805 = vmatprep.subr.mxu0 0.0
        %806 = vmatpush1.msra.mxu0 0.0
        %807 = vmatprep.subr.mxu0 0.0
        %808 = vmatpush1.msra.mxu0 0.0
        %809 = vmatprep.subr.mxu0 0.0
        %810 = vmatpush1.msra.mxu0 0.0
        %811 = vmatprep.subr.mxu0 0.0
        %812 = vmatpush1.msra.mxu0 0.0
        %813 = vmatprep.subr.mxu0 0.0
        %814 = vmatpush1.msra.mxu0 0.0
        %815 = vmatprep.subr.mxu0 0.0
        %816 = vmatpush1.msra.mxu0 0.0
        %817 = vmatprep.subr.mxu0 0.0
        %818 = vmatpush1.msra.mxu0 0.0
        %819 = vmatprep.subr.mxu0 0.0
        %820 = vmatpush1.msra.mxu0 0.0
        %821 = vmatprep.subr.mxu0 0.0
        %822 = vmatpush1.msra.mxu0 0.0
        %823 = vmatprep.subr.mxu0 0.0
        %824 = vmatpush1.msra.mxu0 0.0
        %825 = vmatprep.subr.mxu0 0.0
        %826 = vmatpush1.msra.mxu0 0.0
        %827 = vmatprep.subr.mxu0 0.0
        %828 = vmatpush1.msra.mxu0 0.0
        %829 = vmatprep.subr.mxu0 0.0
        %830 = vmatpush1.msra.mxu0 0.0
        %831 = vmatprep.subr.mxu0 0.0
        %832 = vmatpush1.msra.mxu0 0.0
        %833 = vmatprep.subr.mxu0 0.0
        %834 = vmatpush1.msra.mxu0 0.0
        %835 = vmatprep.subr.mxu0 0.0
        %836 = vmatpush1.msra.mxu0 0.0
        %837 = vmatprep.subr.mxu0 0.0
        %838 = vmatpush1.msra.mxu0 0.0
        %839 = vmatprep.subr.mxu0 0.0
        %840 = vmatpush1.msra.mxu0 0.0
        %841 = vmatprep.subr.mxu0 0.0
        %842 = vmatpush1.msra.mxu0 0.0
        %843 = vmatprep.subr.mxu0 0.0
        %844 = vmatpush1.msra.mxu0 0.0
        %845 = vmatprep.subr.mxu0 0.0
        %846 = vmatpush1.msra.mxu0 0.0
        %847 = vmatprep.subr.mxu0 0.0
        %848 = vmatpush1.msra.mxu0 0.0
        %849 = vmatprep.subr.mxu0 0.0
        %850 = vmatpush1.msra.mxu0 0.0
        %851 = vmatprep.subr.mxu0 0.0
        %852 = vmatpush1.msra.mxu0 0.0
        %853 = vmatprep.subr.mxu0 0.0
        %854 = vmatpush1.msra.mxu0 0.0
        %855 = vmatprep.subr.mxu0 0.0
        %856 = vmatpush1.msra.mxu0 0.0
        %857 = vmatprep.subr.mxu0 0.0
        %858 = vmatpush1.msra.mxu0 0.0
        %859 = vmatprep.subr.mxu0 0.0
        %860 = vmatpush1.msra.mxu0 0.0
        %861 = vmatprep.mubr.f32.mxu0 0.0
        %862 = vmatmul.mubr.f32.gmra.mrb[0].mxu0 %v795
        %v863 = vpop.f32.mrb[0].mxu0
        %v864 = vadd.f32 0.0, %v863
        %v865 = vpop.f32.mrb[0].mxu0
        %866 = vdwg.mxu0
        %v867 = vld [vmem:[%s6] sm:$0xff]
        %v868 = vld [vmem:[%s6 + $0x8] sm:$0xff]
        %v869 = vld [vmem:[%s6 + $0x10] sm:$0xff]
        %v870 = vld [vmem:[%s6 + $0x18] sm:$0xff]
        %872 = vrot.lane.b32.xlu0 %v864, 96
        %v873 = vpop.permute.xlu0 %872
        %vm874 = vcmask 64512
        %v875 = vsel %vm874, %v864, 0
        %v877 = vsel %vm874, %v873, 0
        %879 = vmatprep.subr.mxu0 0.0
        %880 = vmatpush1.xpose.msra.mxu0 %v877
        %881 = vmatprep.subr.mxu0 0.0
        %882 = vmatpush1.xpose.msra.mxu0 0.0
        %883 = vmatprep.subr.mxu0 0.0
        %884 = vmatpush1.xpose.msra.mxu0 0.0
        %885 = vmatprep.subr.mxu0 0.0
        %886 = vmatpush1.xpose.msra.mxu0 0.0
        %887 = vmatprep.subr.mxu0 0.0
        %888 = vmatpush1.xpose.msra.mxu0 0.0
        %889 = vmatprep.subr.mxu0 0.0
        %890 = vmatpush1.xpose.msra.mxu0 0.0
        %891 = vmatprep.subr.mxu0 0.0
        %892 = vmatpush1.xpose.msra.mxu0 0.0
        %893 = vmatprep.subr.mxu0 0.0
        %894 = vmatpush1.xpose.msra.mxu0 0.0
        %895 = vmatprep.subr.mxu0 0.0
        %896 = vmatpush1.xpose.msra.mxu0 0.0
        %897 = vmatprep.subr.mxu0 0.0
        %898 = vmatpush1.xpose.msra.mxu0 0.0
        %899 = vmatprep.subr.mxu0 0.0
        %900 = vmatpush1.xpose.msra.mxu0 0.0
        %901 = vmatprep.subr.mxu0 0.0
        %902 = vmatpush1.xpose.msra.mxu0 0.0
        %903 = vmatprep.subr.mxu0 0.0
        %904 = vmatpush1.xpose.msra.mxu0 0.0
        %905 = vmatprep.subr.mxu0 0.0
        %906 = vmatpush1.xpose.msra.mxu0 0.0
        %907 = vmatprep.subr.mxu0 0.0
        %908 = vmatpush1.xpose.msra.mxu0 0.0
        %909 = vmatprep.subr.mxu0 0.0
        %910 = vmatpush1.xpose.msra.mxu0 0.0
        %911 = vmatprep.subr.mxu0 0.0
        %912 = vmatpush1.xpose.msra.mxu0 0.0
        %913 = vmatprep.subr.mxu0 0.0
        %914 = vmatpush1.xpose.msra.mxu0 0.0
        %915 = vmatprep.subr.mxu0 0.0
        %916 = vmatpush1.xpose.msra.mxu0 0.0
        %917 = vmatprep.subr.mxu0 0.0
        %918 = vmatpush1.xpose.msra.mxu0 0.0
        %919 = vmatprep.subr.mxu0 0.0
        %920 = vmatpush1.xpose.msra.mxu0 0.0
        %921 = vmatprep.subr.mxu0 0.0
        %922 = vmatpush1.xpose.msra.mxu0 0.0
        %923 = vmatprep.subr.mxu0 0.0
        %924 = vmatpush1.xpose.msra.mxu0 0.0
        %925 = vmatprep.subr.mxu0 0.0
        %926 = vmatpush1.xpose.msra.mxu0 0.0
        %927 = vmatprep.subr.mxu0 0.0
        %928 = vmatpush1.xpose.msra.mxu0 0.0
        %929 = vmatprep.subr.mxu0 0.0
        %930 = vmatpush1.xpose.msra.mxu0 0.0
        %931 = vmatprep.subr.mxu0 0.0
        %932 = vmatpush1.xpose.msra.mxu0 0.0
        %933 = vmatprep.subr.mxu0 0.0
        %934 = vmatpush1.xpose.msra.mxu0 0.0
        %935 = vmatprep.subr.mxu0 0.0
        %936 = vmatpush1.xpose.msra.mxu0 0.0
        %937 = vmatprep.subr.mxu0 0.0
        %938 = vmatpush1.xpose.msra.mxu0 0.0
        %939 = vmatprep.subr.mxu0 0.0
        %940 = vmatpush1.xpose.msra.mxu0 0.0
        %941 = vmatprep.subr.mxu0 0.0
        %942 = vmatpush1.xpose.msra.mxu0 0.0
        %943 = vmatprep.mubr.f32.mxu0 0.0
        %944 = vmatmul.mubr.f32.gmra.mrb[0].mxu0 %v875
        %v945 = vpop.f32.mrb[0].mxu0
        %v946 = vadd.f32 0.0, %v945
        %v947 = vpop.f32.mrb[0].mxu0
        %948 = vdwg.mxu0
        %v949 = vmul.f32 %v946, 0.35355338
        %vm950 = vcmp.gt.f32.partialorder %v784, 0.5
        %v951 = vsel %vm950, %v949, -1000000.0
        %v952 = vsel %vm874, %v951, -inf
        %953 = vmax.xlane.f32.xlu0 %v952
        %v954 = vpop.xlane.xlu0 %953
        %v955 = vsub.f32 %v951, %v954
        %v956 = vmul.f32 %v955, 1.442695
        %v957 = vpow.pop %v956
        %v958 = vsel %vm874, %v957, 0.0
        %959 = vadd.xlane.f32.xlu0 %v958
        %v960 = vpop.xlane.xlu0 %959
        %v961 = vrcp.pop %v960
        %v962 = vmul.f32 %v957, %v961
        %963 = vrot.lane.b32.xlu0 %v864, 64
        %v964 = vpop.permute.xlu0 %963
        %v967 = vsel %vm874, %v962, 0
        %969 = vmatprep.subr.mxu0 0.0
        %970 = vmatpush1.msra.mxu0 %v964
        %971 = vmatprep.subr.mxu0 0.0
        %972 = vmatpush1.msra.mxu0 0.0
        %973 = vmatprep.subr.mxu0 0.0
        %974 = vmatpush1.msra.mxu0 0.0
        %975 = vmatprep.subr.mxu0 0.0
        %976 = vmatpush1.msra.mxu0 0.0
        %977 = vmatprep.subr.mxu0 0.0
        %978 = vmatpush1.msra.mxu0 0.0
        %979 = vmatprep.subr.mxu0 0.0
        %980 = vmatpush1.msra.mxu0 0.0
        %981 = vmatprep.subr.mxu0 0.0
        %982 = vmatpush1.msra.mxu0 0.0
        %983 = vmatprep.subr.mxu0 0.0
        %984 = vmatpush1.msra.mxu0 0.0
        %985 = vmatprep.subr.mxu0 0.0
        %986 = vmatpush1.msra.mxu0 0.0
        %987 = vmatprep.subr.mxu0 0.0
        %988 = vmatpush1.msra.mxu0 0.0
        %989 = vmatprep.subr.mxu0 0.0
        %990 = vmatpush1.msra.mxu0 0.0
        %991 = vmatprep.subr.mxu0 0.0
        %992 = vmatpush1.msra.mxu0 0.0
        %993 = vmatprep.subr.mxu0 0.0
        %994 = vmatpush1.msra.mxu0 0.0
        %995 = vmatprep.subr.mxu0 0.0
        %996 = vmatpush1.msra.mxu0 0.0
        %997 = vmatprep.subr.mxu0 0.0
        %998 = vmatpush1.msra.mxu0 0.0
        %999 = vmatprep.subr.mxu0 0.0
        %1000 = vmatpush1.msra.mxu0 0.0
        %1001 = vmatprep.subr.mxu0 0.0
        %1002 = vmatpush1.msra.mxu0 0.0
        %1003 = vmatprep.subr.mxu0 0.0
        %1004 = vmatpush1.msra.mxu0 0.0
        %1005 = vmatprep.subr.mxu0 0.0
        %1006 = vmatpush1.msra.mxu0 0.0
        %1007 = vmatprep.subr.mxu0 0.0
        %1008 = vmatpush1.msra.mxu0 0.0
        %1009 = vmatprep.subr.mxu0 0.0
        %1010 = vmatpush1.msra.mxu0 0.0
        %1011 = vmatprep.subr.mxu0 0.0
        %1012 = vmatpush1.msra.mxu0 0.0
        %1013 = vmatprep.subr.mxu0 0.0
        %1014 = vmatpush1.msra.mxu0 0.0
        %1015 = vmatprep.subr.mxu0 0.0
        %1016 = vmatpush1.msra.mxu0 0.0
        %1017 = vmatprep.subr.mxu0 0.0
        %1018 = vmatpush1.msra.mxu0 0.0
        %1019 = vmatprep.subr.mxu0 0.0
        %1020 = vmatpush1.msra.mxu0 0.0
        %1021 = vmatprep.subr.mxu0 0.0
        %1022 = vmatpush1.msra.mxu0 0.0
        %1023 = vmatprep.subr.mxu0 0.0
        %1024 = vmatpush1.msra.mxu0 0.0
        %1025 = vmatprep.subr.mxu0 0.0
        %1026 = vmatpush1.msra.mxu0 0.0
        %1027 = vmatprep.subr.mxu0 0.0
        %1028 = vmatpush1.msra.mxu0 0.0
        %1029 = vmatprep.subr.mxu0 0.0
        %1030 = vmatpush1.msra.mxu0 0.0
        %1031 = vmatprep.subr.mxu0 0.0
        %1032 = vmatpush1.msra.mxu0 0.0
        %1033 = vmatprep.mubr.f32.mxu0 0.0
        %1034 = vmatmul.mubr.f32.gmra.mrb[0].mxu0 %v967
        %v1035 = vpop.f32.mrb[0].mxu0
        %v1036 = vadd.f32 0.0, %v1035
        %v1037 = vpop.f32.mrb[0].mxu0
        %1038 = vdwg.mxu0
        %1039 = vrot.lane.b32.xlu0 %v864, 120
        %v1040 = vpop.permute.xlu0 %1039
        %1041 = vrot.lane.b32.xlu0 %v864, 88
        %v1042 = vpop.permute.xlu0 %1041
        %v1043 = vsel %vm874, %v1040, 0
        %v1045 = vsel %vm874, %v1042, 0
        %1047 = vmatprep.subr.mxu0 0.0
        %1048 = vmatpush1.xpose.msra.mxu0 %v1045
        %1049 = vmatprep.subr.mxu0 0.0
        %1050 = vmatpush1.xpose.msra.mxu0 0.0
        %1051 = vmatprep.subr.mxu0 0.0
        %1052 = vmatpush1.xpose.msra.mxu0 0.0
        %1053 = vmatprep.subr.mxu0 0.0
        %1054 = vmatpush1.xpose.msra.mxu0 0.0
        %1055 = vmatprep.subr.mxu0 0.0
        %1056 = vmatpush1.xpose.msra.mxu0 0.0
        %1057 = vmatprep.subr.mxu0 0.0
        %1058 = vmatpush1.xpose.msra.mxu0 0.0
        %1059 = vmatprep.subr.mxu0 0.0
        %1060 = vmatpush1.xpose.msra.mxu0 0.0
        %1061 = vmatprep.subr.mxu0 0.0
        %1062 = vmatpush1.xpose.msra.mxu0 0.0
        %1063 = vmatprep.subr.mxu0 0.0
        %1064 = vmatpush1.xpose.msra.mxu0 0.0
        %1065 = vmatprep.subr.mxu0 0.0
        %1066 = vmatpush1.xpose.msra.mxu0 0.0
        %1067 = vmatprep.subr.mxu0 0.0
        %1068 = vmatpush1.xpose.msra.mxu0 0.0
        %1069 = vmatprep.subr.mxu0 0.0
        %1070 = vmatpush1.xpose.msra.mxu0 0.0
        %1071 = vmatprep.subr.mxu0 0.0
        %1072 = vmatpush1.xpose.msra.mxu0 0.0
        %1073 = vmatprep.subr.mxu0 0.0
        %1074 = vmatpush1.xpose.msra.mxu0 0.0
        %1075 = vmatprep.subr.mxu0 0.0
        %1076 = vmatpush1.xpose.msra.mxu0 0.0
        %1077 = vmatprep.subr.mxu0 0.0
        %1078 = vmatpush1.xpose.msra.mxu0 0.0
        %1079 = vmatprep.subr.mxu0 0.0
        %1080 = vmatpush1.xpose.msra.mxu0 0.0
        %1081 = vmatprep.subr.mxu0 0.0
        %1082 = vmatpush1.xpose.msra.mxu0 0.0
        %1083 = vmatprep.subr.mxu0 0.0
        %1084 = vmatpush1.xpose.msra.mxu0 0.0
        %1085 = vmatprep.subr.mxu0 0.0
        %1086 = vmatpush1.xpose.msra.mxu0 0.0
        %1087 = vmatprep.subr.mxu0 0.0
        %1088 = vmatpush1.xpose.msra.mxu0 0.0
        %1089 = vmatprep.subr.mxu0 0.0
        %1090 = vmatpush1.xpose.msra.mxu0 0.0
        %1091 = vmatprep.subr.mxu0 0.0
        %1092 = vmatpush1.xpose.msra.mxu0 0.0
        %1093 = vmatprep.subr.mxu0 0.0
        %1094 = vmatpush1.xpose.msra.mxu0 0.0
        %1095 = vmatprep.subr.mxu0 0.0
        %1096 = vmatpush1.xpose.msra.mxu0 0.0
        %1097 = vmatprep.subr.mxu0 0.0
        %1098 = vmatpush1.xpose.msra.mxu0 0.0
        %1099 = vmatprep.subr.mxu0 0.0
        %1100 = vmatpush1.xpose.msra.mxu0 0.0
        %1101 = vmatprep.subr.mxu0 0.0
        %1102 = vmatpush1.xpose.msra.mxu0 0.0
        %1103 = vmatprep.subr.mxu0 0.0
        %1104 = vmatpush1.xpose.msra.mxu0 0.0
        %1105 = vmatprep.subr.mxu0 0.0
        %1106 = vmatpush1.xpose.msra.mxu0 0.0
        %1107 = vmatprep.subr.mxu0 0.0
        %1108 = vmatpush1.xpose.msra.mxu0 0.0
        %1109 = vmatprep.subr.mxu0 0.0
        %1110 = vmatpush1.xpose.msra.mxu0 0.0
        %1111 = vmatprep.mubr.f32.mxu0 0.0
        %1112 = vmatmul.mubr.f32.gmra.mrb[0].mxu0 %v1043
        %v1113 = vpop.f32.mrb[0].mxu0
        %v1114 = vadd.f32 0.0, %v1113
        %v1115 = vpop.f32.mrb[0].mxu0
        %1116 = vdwg.mxu0
        %v1117 = vmul.f32 %v1114, 0.35355338
        %v1118 = vsel %vm950, %v1117, -1000000.0
        %v1119 = vsel %vm874, %v1118, -inf
        %1120 = vmax.xlane.f32.xlu0 %v1119
        %v1121 = vpop.xlane.xlu0 %1120
        %v1122 = vsub.f32 %v1118, %v1121
        %v1123 = vmul.f32 %v1122, 1.442695
        %v1124 = vpow.pop %v1123
        %v1125 = vsel %vm874, %v1124, 0.0
        %1126 = vadd.xlane.f32.xlu0 %v1125
        %v1127 = vpop.xlane.xlu0 %1126
        %v1128 = vrcp.pop %v1127
        %v1129 = vmul.f32 %v1124, %v1128
        %1130 = vrot.lane.b32.xlu0 %v864, 56
        %v1131 = vpop.permute.xlu0 %1130
        %v1134 = vsel %vm874, %v1129, 0
        %1136 = vmatprep.subr.mxu0 0.0
        %1137 = vmatpush1.msra.mxu0 %v1131
        %1138 = vmatprep.subr.mxu0 0.0
        %1139 = vmatpush1.msra.mxu0 0.0
        %1140 = vmatprep.subr.mxu0 0.0
        %1141 = vmatpush1.msra.mxu0 0.0
        %1142 = vmatprep.subr.mxu0 0.0
        %1143 = vmatpush1.msra.mxu0 0.0
        %1144 = vmatprep.subr.mxu0 0.0
        %1145 = vmatpush1.msra.mxu0 0.0
        %1146 = vmatprep.subr.mxu0 0.0
        %1147 = vmatpush1.msra.mxu0 0.0
        %1148 = vmatprep.subr.mxu0 0.0
        %1149 = vmatpush1.msra.mxu0 0.0
        %1150 = vmatprep.subr.mxu0 0.0
        %1151 = vmatpush1.msra.mxu0 0.0
        %1152 = vmatprep.subr.mxu0 0.0
        %1153 = vmatpush1.msra.mxu0 0.0
        %1154 = vmatprep.subr.mxu0 0.0
        %1155 = vmatpush1.msra.mxu0 0.0
        %1156 = vmatprep.subr.mxu0 0.0
        %1157 = vmatpush1.msra.mxu0 0.0
        %1158 = vmatprep.subr.mxu0 0.0
        %1159 = vmatpush1.msra.mxu0 0.0
        %1160 = vmatprep.subr.mxu0 0.0
        %1161 = vmatpush1.msra.mxu0 0.0
        %1162 = vmatprep.subr.mxu0 0.0
        %1163 = vmatpush1.msra.mxu0 0.0
        %1164 = vmatprep.subr.mxu0 0.0
        %1165 = vmatpush1.msra.mxu0 0.0
        %1166 = vmatprep.subr.mxu0 0.0
        %1167 = vmatpush1.msra.mxu0 0.0
        %1168 = vmatprep.subr.mxu0 0.0
        %1169 = vmatpush1.msra.mxu0 0.0
        %1170 = vmatprep.subr.mxu0 0.0
        %1171 = vmatpush1.msra.mxu0 0.0
        %1172 = vmatprep.subr.mxu0 0.0
        %1173 = vmatpush1.msra.mxu0 0.0
        %1174 = vmatprep.subr.mxu0 0.0
        %1175 = vmatpush1.msra.mxu0 0.0
        %1176 = vmatprep.subr.mxu0 0.0
        %1177 = vmatpush1.msra.mxu0 0.0
        %1178 = vmatprep.subr.mxu0 0.0
        %1179 = vmatpush1.msra.mxu0 0.0
        %1180 = vmatprep.subr.mxu0 0.0
        %1181 = vmatpush1.msra.mxu0 0.0
        %1182 = vmatprep.subr.mxu0 0.0
        %1183 = vmatpush1.msra.mxu0 0.0
        %1184 = vmatprep.subr.mxu0 0.0
        %1185 = vmatpush1.msra.mxu0 0.0
        %1186 = vmatprep.subr.mxu0 0.0
        %1187 = vmatpush1.msra.mxu0 0.0
        %1188 = vmatprep.subr.mxu0 0.0
        %1189 = vmatpush1.msra.mxu0 0.0
        %1190 = vmatprep.subr.mxu0 0.0
        %1191 = vmatpush1.msra.mxu0 0.0
        %1192 = vmatprep.subr.mxu0 0.0
        %1193 = vmatpush1.msra.mxu0 0.0
        %1194 = vmatprep.subr.mxu0 0.0
        %1195 = vmatpush1.msra.mxu0 0.0
        %1196 = vmatprep.subr.mxu0 0.0
        %1197 = vmatpush1.msra.mxu0 0.0
        %1198 = vmatprep.subr.mxu0 0.0
        %1199 = vmatpush1.msra.mxu0 0.0
        %1200 = vmatprep.mubr.f32.mxu0 0.0
        %1201 = vmatmul.mubr.f32.gmra.mrb[0].mxu0 %v1134
        %v1202 = vpop.f32.mrb[0].mxu0
        %v1203 = vadd.f32 0.0, %v1202
        %v1204 = vpop.f32.mrb[0].mxu0
        %1205 = vdwg.mxu0
        %v1207 = vsel %vm874, %v1203, 0
        %1209 = vmatprep.subr.mxu0 0.0
        %1210 = vmatpush1.msra.mxu0 %v868
        %1211 = vmatprep.subr.mxu0 0.0
        %1212 = vmatpush1.msra.mxu0 0.0
        %1213 = vmatprep.subr.mxu0 0.0
        %1214 = vmatpush1.msra.mxu0 0.0
        %1215 = vmatprep.subr.mxu0 0.0
        %1216 = vmatpush1.msra.mxu0 0.0
        %1217 = vmatprep.subr.mxu0 0.0
        %1218 = vmatpush1.msra.mxu0 0.0
        %1219 = vmatprep.subr.mxu0 0.0
        %1220 = vmatpush1.msra.mxu0 0.0
        %1221 = vmatprep.subr.mxu0 0.0
        %1222 = vmatpush1.msra.mxu0 0.0
        %1223 = vmatprep.subr.mxu0 0.0
        %1224 = vmatpush1.msra.mxu0 0.0
        %1225 = vmatprep.subr.mxu0 0.0
        %1226 = vmatpush1.msra.mxu0 0.0
        %1227 = vmatprep.subr.mxu0 0.0
        %1228 = vmatpush1.msra.mxu0 0.0
        %1229 = vmatprep.subr.mxu0 0.0
        %1230 = vmatpush1.msra.mxu0 0.0
        %1231 = vmatprep.subr.mxu0 0.0
        %1232 = vmatpush1.msra.mxu0 0.0
        %1233 = vmatprep.subr.mxu0 0.0
        %1234 = vmatpush1.msra.mxu0 0.0
        %1235 = vmatprep.subr.mxu0 0.0
        %1236 = vmatpush1.msra.mxu0 0.0
        %1237 = vmatprep.subr.mxu0 0.0
        %1238 = vmatpush1.msra.mxu0 0.0
        %1239 = vmatprep.subr.mxu0 0.0
        %1240 = vmatpush1.msra.mxu0 0.0
        %1241 = vmatprep.subr.mxu0 0.0
        %1242 = vmatpush1.msra.mxu0 0.0
        %1243 = vmatprep.subr.mxu0 0.0
        %1244 = vmatpush1.msra.mxu0 0.0
        %1245 = vmatprep.subr.mxu0 0.0
        %1246 = vmatpush1.msra.mxu0 0.0
        %1247 = vmatprep.subr.mxu0 0.0
        %1248 = vmatpush1.msra.mxu0 0.0
        %1249 = vmatprep.subr.mxu0 0.0
        %1250 = vmatpush1.msra.mxu0 0.0
        %1251 = vmatprep.subr.mxu0 0.0
        %1252 = vmatpush1.msra.mxu0 0.0
        %1253 = vmatprep.subr.mxu0 0.0
        %1254 = vmatpush1.msra.mxu0 0.0
        %1255 = vmatprep.subr.mxu0 0.0
        %1256 = vmatpush1.msra.mxu0 0.0
        %1257 = vmatprep.subr.mxu0 0.0
        %1258 = vmatpush1.msra.mxu0 0.0
        %1259 = vmatprep.subr.mxu0 0.0
        %1260 = vmatpush1.msra.mxu0 0.0
        %1261 = vmatprep.subr.mxu0 0.0
        %1262 = vmatpush1.msra.mxu0 0.0
        %1263 = vmatprep.subr.mxu0 0.0
        %1264 = vmatpush1.msra.mxu0 0.0
        %1265 = vmatprep.subr.mxu0 0.0
        %1266 = vmatpush1.msra.mxu0 0.0
        %1267 = vmatprep.subr.mxu0 0.0
        %1268 = vmatpush1.msra.mxu0 0.0
        %1269 = vmatprep.subr.mxu0 0.0
        %1270 = vmatpush1.msra.mxu0 0.0
        %1271 = vmatprep.subr.mxu0 0.0
        %1272 = vmatpush1.msra.mxu0 0.0
        %1273 = vmatprep.mubr.f32.mxu0 0.0
        %1274 = vmatmul.mubr.f32.gmra.mrb[0].mxu0 %v1207
        %v1275 = vpop.f32.mrb[0].mxu0
        %v1276 = vadd.f32 0.0, %v1275
        %v1277 = vpop.f32.mrb[0].mxu0
        %1278 = vdwg.mxu0
        %v1280 = vsel %vm874, %v1036, 0
        %1282 = vmatprep.subr.mxu0 0.0
        %1283 = vmatpush1.msra.mxu0 %v867
        %1284 = vmatprep.subr.mxu0 0.0
        %1285 = vmatpush1.msra.mxu0 0.0
        %1286 = vmatprep.subr.mxu0 0.0
        %1287 = vmatpush1.msra.mxu0 0.0
        %1288 = vmatprep.subr.mxu0 0.0
        %1289 = vmatpush1.msra.mxu0 0.0
        %1290 = vmatprep.subr.mxu0 0.0
        %1291 = vmatpush1.msra.mxu0 0.0
        %1292 = vmatprep.subr.mxu0 0.0
        %1293 = vmatpush1.msra.mxu0 0.0
        %1294 = vmatprep.subr.mxu0 0.0
        %1295 = vmatpush1.msra.mxu0 0.0
        %1296 = vmatprep.subr.mxu0 0.0
        %1297 = vmatpush1.msra.mxu0 0.0
        %1298 = vmatprep.subr.mxu0 0.0
        %1299 = vmatpush1.msra.mxu0 0.0
        %1300 = vmatprep.subr.mxu0 0.0
        %1301 = vmatpush1.msra.mxu0 0.0
        %1302 = vmatprep.subr.mxu0 0.0
        %1303 = vmatpush1.msra.mxu0 0.0
        %1304 = vmatprep.subr.mxu0 0.0
        %1305 = vmatpush1.msra.mxu0 0.0
        %1306 = vmatprep.subr.mxu0 0.0
        %1307 = vmatpush1.msra.mxu0 0.0
        %1308 = vmatprep.subr.mxu0 0.0
        %1309 = vmatpush1.msra.mxu0 0.0
        %1310 = vmatprep.subr.mxu0 0.0
        %1311 = vmatpush1.msra.mxu0 0.0
        %1312 = vmatprep.subr.mxu0 0.0
        %1313 = vmatpush1.msra.mxu0 0.0
        %1314 = vmatprep.subr.mxu0 0.0
        %1315 = vmatpush1.msra.mxu0 0.0
        %1316 = vmatprep.subr.mxu0 0.0
        %1317 = vmatpush1.msra.mxu0 0.0
        %1318 = vmatprep.subr.mxu0 0.0
        %1319 = vmatpush1.msra.mxu0 0.0
        %1320 = vmatprep.subr.mxu0 0.0
        %1321 = vmatpush1.msra.mxu0 0.0
        %1322 = vmatprep.subr.mxu0 0.0
        %1323 = vmatpush1.msra.mxu0 0.0
        %1324 = vmatprep.subr.mxu0 0.0
        %1325 = vmatpush1.msra.mxu0 0.0
        %1326 = vmatprep.subr.mxu0 0.0
        %1327 = vmatpush1.msra.mxu0 0.0
        %1328 = vmatprep.subr.mxu0 0.0
        %1329 = vmatpush1.msra.mxu0 0.0
        %1330 = vmatprep.subr.mxu0 0.0
        %1331 = vmatpush1.msra.mxu0 0.0
        %1332 = vmatprep.subr.mxu0 0.0
        %1333 = vmatpush1.msra.mxu0 0.0
        %1334 = vmatprep.subr.mxu0 0.0
        %1335 = vmatpush1.msra.mxu0 0.0
        %1336 = vmatprep.subr.mxu0 0.0
        %1337 = vmatpush1.msra.mxu0 0.0
        %1338 = vmatprep.subr.mxu0 0.0
        %1339 = vmatpush1.msra.mxu0 0.0
        %1340 = vmatprep.subr.mxu0 0.0
        %1341 = vmatpush1.msra.mxu0 0.0
        %1342 = vmatprep.subr.mxu0 0.0
        %1343 = vmatpush1.msra.mxu0 0.0
        %1344 = vmatprep.subr.mxu0 0.0
        %1345 = vmatpush1.msra.mxu0 0.0
        %1346 = vmatprep.mubr.f32.mxu0 0.0
        %1347 = vmatmul.mubr.f32.gmra.mrb[0].mxu0 %v1280
        %v1348 = vpop.f32.mrb[0].mxu0
        %v1349 = vadd.f32 %v1276, %v1348
        %v1350 = vpop.f32.mrb[0].mxu0
        %1351 = vdwg.mxu0
        %1352 = vrot.lane.b32.xlu0 %v864, 112
        %v1353 = vpop.permute.xlu0 %1352
        %1354 = vrot.lane.b32.xlu0 %v864, 80
        %v1355 = vpop.permute.xlu0 %1354
        %v1356 = vsel %vm874, %v1353, 0
        %v1358 = vsel %vm874, %v1355, 0
        %1360 = vmatprep.subr.mxu0 0.0
        %1361 = vmatpush1.xpose.msra.mxu0 %v1358
        %1362 = vmatprep.subr.mxu0 0.0
        %1363 = vmatpush1.xpose.msra.mxu0 0.0
        %1364 = vmatprep.subr.mxu0 0.0
        %1365 = vmatpush1.xpose.msra.mxu0 0.0
        %1366 = vmatprep.subr.mxu0 0.0
        %1367 = vmatpush1.xpose.msra.mxu0 0.0
        %1368 = vmatprep.subr.mxu0 0.0
        %1369 = vmatpush1.xpose.msra.mxu0 0.0
        %1370 = vmatprep.subr.mxu0 0.0
        %1371 = vmatpush1.xpose.msra.mxu0 0.0
        %1372 = vmatprep.subr.mxu0 0.0
        %1373 = vmatpush1.xpose.msra.mxu0 0.0
        %1374 = vmatprep.subr.mxu0 0.0
        %1375 = vmatpush1.xpose.msra.mxu0 0.0
        %1376 = vmatprep.subr.mxu0 0.0
        %1377 = vmatpush1.xpose.msra.mxu0 0.0
        %1378 = vmatprep.subr.mxu0 0.0
        %1379 = vmatpush1.xpose.msra.mxu0 0.0
        %1380 = vmatprep.subr.mxu0 0.0
        %1381 = vmatpush1.xpose.msra.mxu0 0.0
        %1382 = vmatprep.subr.mxu0 0.0
        %1383 = vmatpush1.xpose.msra.mxu0 0.0
        %1384 = vmatprep.subr.mxu0 0.0
        %1385 = vmatpush1.xpose.msra.mxu0 0.0
        %1386 = vmatprep.subr.mxu0 0.0
        %1387 = vmatpush1.xpose.msra.mxu0 0.0
        %1388 = vmatprep.subr.mxu0 0.0
        %1389 = vmatpush1.xpose.msra.mxu0 0.0
        %1390 = vmatprep.subr.mxu0 0.0
        %1391 = vmatpush1.xpose.msra.mxu0 0.0
        %1392 = vmatprep.subr.mxu0 0.0
        %1393 = vmatpush1.xpose.msra.mxu0 0.0
        %1394 = vmatprep.subr.mxu0 0.0
        %1395 = vmatpush1.xpose.msra.mxu0 0.0
        %1396 = vmatprep.subr.mxu0 0.0
        %1397 = vmatpush1.xpose.msra.mxu0 0.0
        %1398 = vmatprep.subr.mxu0 0.0
        %1399 = vmatpush1.xpose.msra.mxu0 0.0
        %1400 = vmatprep.subr.mxu0 0.0
        %1401 = vmatpush1.xpose.msra.mxu0 0.0
        %1402 = vmatprep.subr.mxu0 0.0
        %1403 = vmatpush1.xpose.msra.mxu0 0.0
        %1404 = vmatprep.subr.mxu0 0.0
        %1405 = vmatpush1.xpose.msra.mxu0 0.0
        %1406 = vmatprep.subr.mxu0 0.0
        %1407 = vmatpush1.xpose.msra.mxu0 0.0
        %1408 = vmatprep.subr.mxu0 0.0
        %1409 = vmatpush1.xpose.msra.mxu0 0.0
        %1410 = vmatprep.subr.mxu0 0.0
        %1411 = vmatpush1.xpose.msra.mxu0 0.0
        %1412 = vmatprep.subr.mxu0 0.0
        %1413 = vmatpush1.xpose.msra.mxu0 0.0
        %1414 = vmatprep.subr.mxu0 0.0
        %1415 = vmatpush1.xpose.msra.mxu0 0.0
        %1416 = vmatprep.subr.mxu0 0.0
        %1417 = vmatpush1.xpose.msra.mxu0 0.0
        %1418 = vmatprep.subr.mxu0 0.0
        %1419 = vmatpush1.xpose.msra.mxu0 0.0
        %1420 = vmatprep.subr.mxu0 0.0
        %1421 = vmatpush1.xpose.msra.mxu0 0.0
        %1422 = vmatprep.subr.mxu0 0.0
        %1423 = vmatpush1.xpose.msra.mxu0 0.0
        %1424 = vmatprep.mubr.f32.mxu0 0.0
        %1425 = vmatmul.mubr.f32.gmra.mrb[0].mxu0 %v1356
        %v1426 = vpop.f32.mrb[0].mxu0
        %v1427 = vadd.f32 0.0, %v1426
        %v1428 = vpop.f32.mrb[0].mxu0
        %1429 = vdwg.mxu0
        %v1430 = vmul.f32 %v1427, 0.35355338
        %v1431 = vsel %vm950, %v1430, -1000000.0
        %v1432 = vsel %vm874, %v1431, -inf
        %1433 = vmax.xlane.f32.xlu0 %v1432
        %v1434 = vpop.xlane.xlu0 %1433
        %v1435 = vsub.f32 %v1431, %v1434
        %v1436 = vmul.f32 %v1435, 1.442695
        %v1437 = vpow.pop %v1436
        %v1438 = vsel %vm874, %v1437, 0.0
        %1439 = vadd.xlane.f32.xlu0 %v1438
        %v1440 = vpop.xlane.xlu0 %1439
        %v1441 = vrcp.pop %v1440
        %v1442 = vmul.f32 %v1437, %v1441
        %1443 = vrot.lane.b32.xlu0 %v864, 48
        %v1444 = vpop.permute.xlu0 %1443
        %v1447 = vsel %vm874, %v1442, 0
        %1449 = vmatprep.subr.mxu0 0.0
        %1450 = vmatpush1.msra.mxu0 %v1444
        %1451 = vmatprep.subr.mxu0 0.0
        %1452 = vmatpush1.msra.mxu0 0.0
        %1453 = vmatprep.subr.mxu0 0.0
        %1454 = vmatpush1.msra.mxu0 0.0
        %1455 = vmatprep.subr.mxu0 0.0
        %1456 = vmatpush1.msra.mxu0 0.0
        %1457 = vmatprep.subr.mxu0 0.0
        %1458 = vmatpush1.msra.mxu0 0.0
        %1459 = vmatprep.subr.mxu0 0.0
        %1460 = vmatpush1.msra.mxu0 0.0
        %1461 = vmatprep.subr.mxu0 0.0
        %1462 = vmatpush1.msra.mxu0 0.0
        %1463 = vmatprep.subr.mxu0 0.0
        %1464 = vmatpush1.msra.mxu0 0.0
        %1465 = vmatprep.subr.mxu0 0.0
        %1466 = vmatpush1.msra.mxu0 0.0
        %1467 = vmatprep.subr.mxu0 0.0
        %1468 = vmatpush1.msra.mxu0 0.0
        %1469 = vmatprep.subr.mxu0 0.0
        %1470 = vmatpush1.msra.mxu0 0.0
        %1471 = vmatprep.subr.mxu0 0.0
        %1472 = vmatpush1.msra.mxu0 0.0
        %1473 = vmatprep.subr.mxu0 0.0
        %1474 = vmatpush1.msra.mxu0 0.0
        %1475 = vmatprep.subr.mxu0 0.0
        %1476 = vmatpush1.msra.mxu0 0.0
        %1477 = vmatprep.subr.mxu0 0.0
        %1478 = vmatpush1.msra.mxu0 0.0
        %1479 = vmatprep.subr.mxu0 0.0
        %1480 = vmatpush1.msra.mxu0 0.0
        %1481 = vmatprep.subr.mxu0 0.0
        %1482 = vmatpush1.msra.mxu0 0.0
        %1483 = vmatprep.subr.mxu0 0.0
        %1484 = vmatpush1.msra.mxu0 0.0
        %1485 = vmatprep.subr.mxu0 0.0
        %1486 = vmatpush1.msra.mxu0 0.0
        %1487 = vmatprep.subr.mxu0 0.0
        %1488 = vmatpush1.msra.mxu0 0.0
        %1489 = vmatprep.subr.mxu0 0.0
        %1490 = vmatpush1.msra.mxu0 0.0
        %1491 = vmatprep.subr.mxu0 0.0
        %1492 = vmatpush1.msra.mxu0 0.0
        %1493 = vmatprep.subr.mxu0 0.0
        %1494 = vmatpush1.msra.mxu0 0.0
        %1495 = vmatprep.subr.mxu0 0.0
        %1496 = vmatpush1.msra.mxu0 0.0
        %1497 = vmatprep.subr.mxu0 0.0
        %1498 = vmatpush1.msra.mxu0 0.0
        %1499 = vmatprep.subr.mxu0 0.0
        %1500 = vmatpush1.msra.mxu0 0.0
        %1501 = vmatprep.subr.mxu0 0.0
        %1502 = vmatpush1.msra.mxu0 0.0
        %1503 = vmatprep.subr.mxu0 0.0
        %1504 = vmatpush1.msra.mxu0 0.0
        %1505 = vmatprep.subr.mxu0 0.0
        %1506 = vmatpush1.msra.mxu0 0.0
        %1507 = vmatprep.subr.mxu0 0.0
        %1508 = vmatpush1.msra.mxu0 0.0
        %1509 = vmatprep.subr.mxu0 0.0
        %1510 = vmatpush1.msra.mxu0 0.0
        %1511 = vmatprep.subr.mxu0 0.0
        %1512 = vmatpush1.msra.mxu0 0.0
        %1513 = vmatprep.mubr.f32.mxu0 0.0
        %1514 = vmatmul.mubr.f32.gmra.mrb[0].mxu0 %v1447
        %v1515 = vpop.f32.mrb[0].mxu0
        %v1516 = vadd.f32 0.0, %v1515
        %v1517 = vpop.f32.mrb[0].mxu0
        %1518 = vdwg.mxu0
        %v1520 = vsel %vm874, %v1516, 0
        %1522 = vmatprep.subr.mxu0 0.0
        %1523 = vmatpush1.msra.mxu0 %v869
        %1524 = vmatprep.subr.mxu0 0.0
        %1525 = vmatpush1.msra.mxu0 0.0
        %1526 = vmatprep.subr.mxu0 0.0
        %1527 = vmatpush1.msra.mxu0 0.0
        %1528 = vmatprep.subr.mxu0 0.0
        %1529 = vmatpush1.msra.mxu0 0.0
        %1530 = vmatprep.subr.mxu0 0.0
        %1531 = vmatpush1.msra.mxu0 0.0
        %1532 = vmatprep.subr.mxu0 0.0
        %1533 = vmatpush1.msra.mxu0 0.0
        %1534 = vmatprep.subr.mxu0 0.0
        %1535 = vmatpush1.msra.mxu0 0.0
        %1536 = vmatprep.subr.mxu0 0.0
        %1537 = vmatpush1.msra.mxu0 0.0
        %1538 = vmatprep.subr.mxu0 0.0
        %1539 = vmatpush1.msra.mxu0 0.0
        %1540 = vmatprep.subr.mxu0 0.0
        %1541 = vmatpush1.msra.mxu0 0.0
        %1542 = vmatprep.subr.mxu0 0.0
        %1543 = vmatpush1.msra.mxu0 0.0
        %1544 = vmatprep.subr.mxu0 0.0
        %1545 = vmatpush1.msra.mxu0 0.0
        %1546 = vmatprep.subr.mxu0 0.0
        %1547 = vmatpush1.msra.mxu0 0.0
        %1548 = vmatprep.subr.mxu0 0.0
        %1549 = vmatpush1.msra.mxu0 0.0
        %1550 = vmatprep.subr.mxu0 0.0
        %1551 = vmatpush1.msra.mxu0 0.0
        %1552 = vmatprep.subr.mxu0 0.0
        %1553 = vmatpush1.msra.mxu0 0.0
        %1554 = vmatprep.subr.mxu0 0.0
        %1555 = vmatpush1.msra.mxu0 0.0
        %1556 = vmatprep.subr.mxu0 0.0
        %1557 = vmatpush1.msra.mxu0 0.0
        %1558 = vmatprep.subr.mxu0 0.0
        %1559 = vmatpush1.msra.mxu0 0.0
        %1560 = vmatprep.subr.mxu0 0.0
        %1561 = vmatpush1.msra.mxu0 0.0
        %1562 = vmatprep.subr.mxu0 0.0
        %1563 = vmatpush1.msra.mxu0 0.0
        %1564 = vmatprep.subr.mxu0 0.0
        %1565 = vmatpush1.msra.mxu0 0.0
        %1566 = vmatprep.subr.mxu0 0.0
        %1567 = vmatpush1.msra.mxu0 0.0
        %1568 = vmatprep.subr.mxu0 0.0
        %1569 = vmatpush1.msra.mxu0 0.0
        %1570 = vmatprep.subr.mxu0 0.0
        %1571 = vmatpush1.msra.mxu0 0.0
        %1572 = vmatprep.subr.mxu0 0.0
        %1573 = vmatpush1.msra.mxu0 0.0
        %1574 = vmatprep.subr.mxu0 0.0
        %1575 = vmatpush1.msra.mxu0 0.0
        %1576 = vmatprep.subr.mxu0 0.0
        %1577 = vmatpush1.msra.mxu0 0.0
        %1578 = vmatprep.subr.mxu0 0.0
        %1579 = vmatpush1.msra.mxu0 0.0
        %1580 = vmatprep.subr.mxu0 0.0
        %1581 = vmatpush1.msra.mxu0 0.0
        %1582 = vmatprep.subr.mxu0 0.0
        %1583 = vmatpush1.msra.mxu0 0.0
        %1584 = vmatprep.subr.mxu0 0.0
        %1585 = vmatpush1.msra.mxu0 0.0
        %1586 = vmatprep.mubr.f32.mxu0 0.0
        %1587 = vmatmul.mubr.f32.gmra.mrb[0].mxu0 %v1520
        %v1588 = vpop.f32.mrb[0].mxu0
        %v1589 = vadd.f32 0.0, %v1588
        %v1590 = vpop.f32.mrb[0].mxu0
        %1591 = vdwg.mxu0
        %v1592 = vadd.f32 %v1349, %v1589
        %1593 = vrot.lane.b32.xlu0 %v864, 104
        %v1594 = vpop.permute.xlu0 %1593
        %1595 = vrot.lane.b32.xlu0 %v864, 72
        %v1596 = vpop.permute.xlu0 %1595
        %v1597 = vsel %vm874, %v1594, 0
        %v1599 = vsel %vm874, %v1596, 0
        %1601 = vmatprep.subr.mxu0 0.0
        %1602 = vmatpush1.xpose.msra.mxu0 %v1599
        %1603 = vmatprep.subr.mxu0 0.0
        %1604 = vmatpush1.xpose.msra.mxu0 0.0
        %1605 = vmatprep.subr.mxu0 0.0
        %1606 = vmatpush1.xpose.msra.mxu0 0.0
        %1607 = vmatprep.subr.mxu0 0.0
        %1608 = vmatpush1.xpose.msra.mxu0 0.0
        %1609 = vmatprep.subr.mxu0 0.0
        %1610 = vmatpush1.xpose.msra.mxu0 0.0
        %1611 = vmatprep.subr.mxu0 0.0
        %1612 = vmatpush1.xpose.msra.mxu0 0.0
        %1613 = vmatprep.subr.mxu0 0.0
        %1614 = vmatpush1.xpose.msra.mxu0 0.0
        %1615 = vmatprep.subr.mxu0 0.0
        %1616 = vmatpush1.xpose.msra.mxu0 0.0
        %1617 = vmatprep.subr.mxu0 0.0
        %1618 = vmatpush1.xpose.msra.mxu0 0.0
        %1619 = vmatprep.subr.mxu0 0.0
        %1620 = vmatpush1.xpose.msra.mxu0 0.0
        %1621 = vmatprep.subr.mxu0 0.0
        %1622 = vmatpush1.xpose.msra.mxu0 0.0
        %1623 = vmatprep.subr.mxu0 0.0
        %1624 = vmatpush1.xpose.msra.mxu0 0.0
        %1625 = vmatprep.subr.mxu0 0.0
        %1626 = vmatpush1.xpose.msra.mxu0 0.0
        %1627 = vmatprep.subr.mxu0 0.0
        %1628 = vmatpush1.xpose.msra.mxu0 0.0
        %1629 = vmatprep.subr.mxu0 0.0
        %1630 = vmatpush1.xpose.msra.mxu0 0.0
        %1631 = vmatprep.subr.mxu0 0.0
        %1632 = vmatpush1.xpose.msra.mxu0 0.0
        %1633 = vmatprep.subr.mxu0 0.0
        %1634 = vmatpush1.xpose.msra.mxu0 0.0
        %1635 = vmatprep.subr.mxu0 0.0
        %1636 = vmatpush1.xpose.msra.mxu0 0.0
        %1637 = vmatprep.subr.mxu0 0.0
        %1638 = vmatpush1.xpose.msra.mxu0 0.0
        %1639 = vmatprep.subr.mxu0 0.0
        %1640 = vmatpush1.xpose.msra.mxu0 0.0
        %1641 = vmatprep.subr.mxu0 0.0
        %1642 = vmatpush1.xpose.msra.mxu0 0.0
        %1643 = vmatprep.subr.mxu0 0.0
        %1644 = vmatpush1.xpose.msra.mxu0 0.0
        %1645 = vmatprep.subr.mxu0 0.0
        %1646 = vmatpush1.xpose.msra.mxu0 0.0
        %1647 = vmatprep.subr.mxu0 0.0
        %1648 = vmatpush1.xpose.msra.mxu0 0.0
        %1649 = vmatprep.subr.mxu0 0.0
        %1650 = vmatpush1.xpose.msra.mxu0 0.0
        %1651 = vmatprep.subr.mxu0 0.0
        %1652 = vmatpush1.xpose.msra.mxu0 0.0
        %1653 = vmatprep.subr.mxu0 0.0
        %1654 = vmatpush1.xpose.msra.mxu0 0.0
        %1655 = vmatprep.subr.mxu0 0.0
        %1656 = vmatpush1.xpose.msra.mxu0 0.0
        %1657 = vmatprep.subr.mxu0 0.0
        %1658 = vmatpush1.xpose.msra.mxu0 0.0
        %1659 = vmatprep.subr.mxu0 0.0
        %1660 = vmatpush1.xpose.msra.mxu0 0.0
        %1661 = vmatprep.subr.mxu0 0.0
        %1662 = vmatpush1.xpose.msra.mxu0 0.0
        %1663 = vmatprep.subr.mxu0 0.0
        %1664 = vmatpush1.xpose.msra.mxu0 0.0
        %1665 = vmatprep.mubr.f32.mxu0 0.0
        %1666 = vmatmul.mubr.f32.gmra.mrb[0].mxu0 %v1597
        %v1667 = vpop.f32.mrb[0].mxu0
        %v1668 = vadd.f32 0.0, %v1667
        %v1669 = vpop.f32.mrb[0].mxu0
        %1670 = vdwg.mxu0
        %v1671 = vmul.f32 %v1668, 0.35355338
        %v1672 = vsel %vm950, %v1671, -1000000.0
        %v1673 = vsel %vm874, %v1672, -inf
        %1674 = vmax.xlane.f32.xlu0 %v1673
        %v1675 = vpop.xlane.xlu0 %1674
        %v1676 = vsub.f32 %v1672, %v1675
        %v1677 = vmul.f32 %v1676, 1.442695
        %v1678 = vpow.pop %v1677
        %v1679 = vsel %vm874, %v1678, 0.0
        %1680 = vadd.xlane.f32.xlu0 %v1679
        %v1681 = vpop.xlane.xlu0 %1680
        %v1682 = vrcp.pop %v1681
        %v1683 = vmul.f32 %v1678, %v1682
        %1684 = vrot.lane.b32.xlu0 %v864, 40
        %v1685 = vpop.permute.xlu0 %1684
        %v1688 = vsel %vm874, %v1683, 0
        %1690 = vmatprep.subr.mxu0 0.0
        %1691 = vmatpush1.msra.mxu0 %v1685
        %1692 = vmatprep.subr.mxu0 0.0
        %1693 = vmatpush1.msra.mxu0 0.0
        %1694 = vmatprep.subr.mxu0 0.0
        %1695 = vmatpush1.msra.mxu0 0.0
        %1696 = vmatprep.subr.mxu0 0.0
        %1697 = vmatpush1.msra.mxu0 0.0
        %1698 = vmatprep.subr.mxu0 0.0
        %1699 = vmatpush1.msra.mxu0 0.0
        %1700 = vmatprep.subr.mxu0 0.0
        %1701 = vmatpush1.msra.mxu0 0.0
        %1702 = vmatprep.subr.mxu0 0.0
        %1703 = vmatpush1.msra.mxu0 0.0
        %1704 = vmatprep.subr.mxu0 0.0
        %1705 = vmatpush1.msra.mxu0 0.0
        %1706 = vmatprep.subr.mxu0 0.0
        %1707 = vmatpush1.msra.mxu0 0.0
        %1708 = vmatprep.subr.mxu0 0.0
        %1709 = vmatpush1.msra.mxu0 0.0
        %1710 = vmatprep.subr.mxu0 0.0
        %1711 = vmatpush1.msra.mxu0 0.0
        %1712 = vmatprep.subr.mxu0 0.0
        %1713 = vmatpush1.msra.mxu0 0.0
        %1714 = vmatprep.subr.mxu0 0.0
        %1715 = vmatpush1.msra.mxu0 0.0
        %1716 = vmatprep.subr.mxu0 0.0
        %1717 = vmatpush1.msra.mxu0 0.0
        %1718 = vmatprep.subr.mxu0 0.0
        %1719 = vmatpush1.msra.mxu0 0.0
        %1720 = vmatprep.subr.mxu0 0.0
        %1721 = vmatpush1.msra.mxu0 0.0
        %1722 = vmatprep.subr.mxu0 0.0
        %1723 = vmatpush1.msra.mxu0 0.0
        %1724 = vmatprep.subr.mxu0 0.0
        %1725 = vmatpush1.msra.mxu0 0.0
        %1726 = vmatprep.subr.mxu0 0.0
        %1727 = vmatpush1.msra.mxu0 0.0
        %1728 = vmatprep.subr.mxu0 0.0
        %1729 = vmatpush1.msra.mxu0 0.0
        %1730 = vmatprep.subr.mxu0 0.0
        %1731 = vmatpush1.msra.mxu0 0.0
        %1732 = vmatprep.subr.mxu0 0.0
        %1733 = vmatpush1.msra.mxu0 0.0
        %1734 = vmatprep.subr.mxu0 0.0
        %1735 = vmatpush1.msra.mxu0 0.0
        %1736 = vmatprep.subr.mxu0 0.0
        %1737 = vmatpush1.msra.mxu0 0.0
        %1738 = vmatprep.subr.mxu0 0.0
        %1739 = vmatpush1.msra.mxu0 0.0
        %1740 = vmatprep.subr.mxu0 0.0
        %1741 = vmatpush1.msra.mxu0 0.0
        %1742 = vmatprep.subr.mxu0 0.0
        %1743 = vmatpush1.msra.mxu0 0.0
        %1744 = vmatprep.subr.mxu0 0.0
        %1745 = vmatpush1.msra.mxu0 0.0
        %1746 = vmatprep.subr.mxu0 0.0
        %1747 = vmatpush1.msra.mxu0 0.0
        %1748 = vmatprep.subr.mxu0 0.0
        %1749 = vmatpush1.msra.mxu0 0.0
        %1750 = vmatprep.subr.mxu0 0.0
        %1751 = vmatpush1.msra.mxu0 0.0
        %1752 = vmatprep.subr.mxu0 0.0
        %1753 = vmatpush1.msra.mxu0 0.0
        %1754 = vmatprep.mubr.f32.mxu0 0.0
        %1755 = vmatmul.mubr.f32.gmra.mrb[0].mxu0 %v1688
        %v1756 = vpop.f32.mrb[0].mxu0
        %v1757 = vadd.f32 0.0, %v1756
        %v1758 = vpop.f32.mrb[0].mxu0
        %1759 = vdwg.mxu0
        %v1761 = vsel %vm874, %v1757, 0
        %1763 = vmatprep.subr.mxu0 0.0
        %1764 = vmatpush1.msra.mxu0 %v870
        %1765 = vmatprep.subr.mxu0 0.0
        %1766 = vmatpush1.msra.mxu0 0.0
        %1767 = vmatprep.subr.mxu0 0.0
        %1768 = vmatpush1.msra.mxu0 0.0
        %1769 = vmatprep.subr.mxu0 0.0
        %1770 = vmatpush1.msra.mxu0 0.0
        %1771 = vmatprep.subr.mxu0 0.0
        %1772 = vmatpush1.msra.mxu0 0.0
        %1773 = vmatprep.subr.mxu0 0.0
        %1774 = vmatpush1.msra.mxu0 0.0
        %1775 = vmatprep.subr.mxu0 0.0
        %1776 = vmatpush1.msra.mxu0 0.0
        %1777 = vmatprep.subr.mxu0 0.0
        %1778 = vmatpush1.msra.mxu0 0.0
        %1779 = vmatprep.subr.mxu0 0.0
        %1780 = vmatpush1.msra.mxu0 0.0
        %1781 = vmatprep.subr.mxu0 0.0
        %1782 = vmatpush1.msra.mxu0 0.0
        %1783 = vmatprep.subr.mxu0 0.0
        %1784 = vmatpush1.msra.mxu0 0.0
        %1785 = vmatprep.subr.mxu0 0.0
        %1786 = vmatpush1.msra.mxu0 0.0
        %1787 = vmatprep.subr.mxu0 0.0
        %1788 = vmatpush1.msra.mxu0 0.0
        %1789 = vmatprep.subr.mxu0 0.0
        %1790 = vmatpush1.msra.mxu0 0.0
        %1791 = vmatprep.subr.mxu0 0.0
        %1792 = vmatpush1.msra.mxu0 0.0
        %1793 = vmatprep.subr.mxu0 0.0
        %1794 = vmatpush1.msra.mxu0 0.0
        %1795 = vmatprep.subr.mxu0 0.0
        %1796 = vmatpush1.msra.mxu0 0.0
        %1797 = vmatprep.subr.mxu0 0.0
        %1798 = vmatpush1.msra.mxu0 0.0
        %1799 = vmatprep.subr.mxu0 0.0
        %1800 = vmatpush1.msra.mxu0 0.0
        %1801 = vmatprep.subr.mxu0 0.0
        %1802 = vmatpush1.msra.mxu0 0.0
        %1803 = vmatprep.subr.mxu0 0.0
        %1804 = vmatpush1.msra.mxu0 0.0
        %1805 = vmatprep.subr.mxu0 0.0
        %1806 = vmatpush1.msra.mxu0 0.0
        %1807 = vmatprep.subr.mxu0 0.0
        %1808 = vmatpush1.msra.mxu0 0.0
        %1809 = vmatprep.subr.mxu0 0.0
        %1810 = vmatpush1.msra.mxu0 0.0
        %1811 = vmatprep.subr.mxu0 0.0
        %1812 = vmatpush1.msra.mxu0 0.0
        %1813 = vmatprep.subr.mxu0 0.0
        %1814 = vmatpush1.msra.mxu0 0.0
        %1815 = vmatprep.subr.mxu0 0.0
        %1816 = vmatpush1.msra.mxu0 0.0
        %1817 = vmatprep.subr.mxu0 0.0
        %1818 = vmatpush1.msra.mxu0 0.0
        %1819 = vmatprep.subr.mxu0 0.0
        %1820 = vmatpush1.msra.mxu0 0.0
        %1821 = vmatprep.subr.mxu0 0.0
        %1822 = vmatpush1.msra.mxu0 0.0
        %1823 = vmatprep.subr.mxu0 0.0
        %1824 = vmatpush1.msra.mxu0 0.0
        %1825 = vmatprep.subr.mxu0 0.0
        %1826 = vmatpush1.msra.mxu0 0.0
        %1827 = vmatprep.mubr.f32.mxu0 0.0
        %1828 = vmatmul.mubr.f32.gmra.mrb[0].mxu0 %v1761
        %v1829 = vpop.f32.mrb[0].mxu0
        %v1830 = vadd.f32 0.0, %v1829
        %v1831 = vpop.f32.mrb[0].mxu0
        %1832 = vdwg.mxu0
        %v1833 = vadd.f32 %v1592, %v1830
        %v1834 = vadd.f32 %v787, %v1833
        %v1835 = vsel %vm793, %v1834, 0.0
        %1836 = vadd.xlane.f32.xlu0 %v1835
        %v1837 = vpop.xlane.xlu0 %1836
        %v1838 = vrcp.pop 32.0
        %v1839 = vmul.f32 %v1837, %v1838
        %v1840 = vsub.f32 %v1834, %v1839
        %v1841 = vmul.f32 %v1840, %v1840
        %v1842 = vsel %vm793, %v1841, 0.0
        %1843 = vadd.xlane.f32.xlu0 %v1842
        %v1844 = vpop.xlane.xlu0 %1843
        %v1845 = vmul.f32 %v1844, %v1838
        %v1846 = vadd.f32 %v1845, 1e-05
        %v1847 = vrsqrt.pop %v1846
        %v1848 = vmul.f32 %v1840, %v1847
        %v1849 = vlaneseq
        %v1850 = vshrl.u32 %v1849, 7
        %v1851 = vsub.s32 0, %v1850
        %v1852 = vrot.slane %v788, %v1851
        %v1853 = vmul.f32 %v1848, %v1852
        %v1854 = vlaneseq
        %v1855 = vshrl.u32 %v1854, 7
        %v1856 = vsub.s32 1, %v1855
        %v1857 = vrot.slane %v788, %v1856
        %v1858 = vadd.f32 %v1853, %v1857
        %v1859 = vld [vmem:[%s8] sm:$0xff]
        %v1860 = vld [vmem:[%s8 + $0x8] sm:$0xff]
        %v1861 = vld [vmem:[%s8 + $0x10] sm:$0xff]
        %v1862 = vld [vmem:[%s8 + $0x18] sm:$0xff]
        %v1863 = vld [vmem:[%s9] sm:$0x1]
        %v1864 = vld [vmem:[%s10] sm:$0xff]
        %v1865 = vld [vmem:[%s10 + $0x8] sm:$0xff]
        %v1866 = vld [vmem:[%s10 + $0x10] sm:$0xff]
        %v1867 = vld [vmem:[%s10 + $0x18] sm:$0xff]
        %v1868 = vld [vmem:[%s10 + $0x20] sm:$0xff]
        %v1869 = vld [vmem:[%s10 + $0x28] sm:$0xff]
        %v1870 = vld [vmem:[%s10 + $0x30] sm:$0xff]
        %v1871 = vld [vmem:[%s10 + $0x38] sm:$0xff]
        %v1872 = vld [vmem:[%s11] sm:$0x1]
        %v1874 = vlaneseq
        %v1875 = vshrl.u32 %v1874, 7
        %v1876 = vsub.s32 0, %v1875
        %v1877 = vrot.slane %v1863, %v1876
        %v1880 = vsel %vm793, %v1858, 0
        %1882 = vmatprep.subr.mxu0 0.0
        %1883 = vmatpush1.msra.mxu0 %v1859
        %1884 = vmatprep.subr.mxu0 0.0
        %1885 = vmatpush1.msra.mxu0 %v1860
        %1886 = vmatprep.subr.mxu0 0.0
        %1887 = vmatpush1.msra.mxu0 %v1861
        %1888 = vmatprep.subr.mxu0 0.0
        %1889 = vmatpush1.msra.mxu0 %v1862
        %1890 = vmatprep.subr.mxu0 0.0
        %1891 = vmatpush1.msra.mxu0 0.0
        %1892 = vmatprep.subr.mxu0 0.0
        %1893 = vmatpush1.msra.mxu0 0.0
        %1894 = vmatprep.subr.mxu0 0.0
        %1895 = vmatpush1.msra.mxu0 0.0
        %1896 = vmatprep.subr.mxu0 0.0
        %1897 = vmatpush1.msra.mxu0 0.0
        %1898 = vmatprep.subr.mxu0 0.0
        %1899 = vmatpush1.msra.mxu0 0.0
        %1900 = vmatprep.subr.mxu0 0.0
        %1901 = vmatpush1.msra.mxu0 0.0
        %1902 = vmatprep.subr.mxu0 0.0
        %1903 = vmatpush1.msra.mxu0 0.0
        %1904 = vmatprep.subr.mxu0 0.0
        %1905 = vmatpush1.msra.mxu0 0.0
        %1906 = vmatprep.subr.mxu0 0.0
        %1907 = vmatpush1.msra.mxu0 0.0
        %1908 = vmatprep.subr.mxu0 0.0
        %1909 = vmatpush1.msra.mxu0 0.0
        %1910 = vmatprep.subr.mxu0 0.0
        %1911 = vmatpush1.msra.mxu0 0.0
        %1912 = vmatprep.subr.mxu0 0.0
        %1913 = vmatpush1.msra.mxu0 0.0
        %1914 = vmatprep.subr.mxu0 0.0
        %1915 = vmatpush1.msra.mxu0 0.0
        %1916 = vmatprep.subr.mxu0 0.0
        %1917 = vmatpush1.msra.mxu0 0.0
        %1918 = vmatprep.subr.mxu0 0.0
        %1919 = vmatpush1.msra.mxu0 0.0
        %1920 = vmatprep.subr.mxu0 0.0
        %1921 = vmatpush1.msra.mxu0 0.0
        %1922 = vmatprep.subr.mxu0 0.0
        %1923 = vmatpush1.msra.mxu0 0.0
        %1924 = vmatprep.subr.mxu0 0.0
        %1925 = vmatpush1.msra.mxu0 0.0
        %1926 = vmatprep.subr.mxu0 0.0
        %1927 = vmatpush1.msra.mxu0 0.0
        %1928 = vmatprep.subr.mxu0 0.0
        %1929 = vmatpush1.msra.mxu0 0.0
        %1930 = vmatprep.subr.mxu0 0.0
        %1931 = vmatpush1.msra.mxu0 0.0
        %1932 = vmatprep.subr.mxu0 0.0
        %1933 = vmatpush1.msra.mxu0 0.0
        %1934 = vmatprep.subr.mxu0 0.0
        %1935 = vmatpush1.msra.mxu0 0.0
        %1936 = vmatprep.subr.mxu0 0.0
        %1937 = vmatpush1.msra.mxu0 0.0
        %1938 = vmatprep.subr.mxu0 0.0
        %1939 = vmatpush1.msra.mxu0 0.0
        %1940 = vmatprep.subr.mxu0 0.0
        %1941 = vmatpush1.msra.mxu0 0.0
        %1942 = vmatprep.subr.mxu0 0.0
        %1943 = vmatpush1.msra.mxu0 0.0
        %1944 = vmatprep.subr.mxu0 0.0
        %1945 = vmatpush1.msra.mxu0 0.0
        %1946 = vmatprep.mubr.f32.mxu0 0.0
        %1947 = vmatmul.mubr.f32.gmra.mrb[0].mxu0 %v1880
        %v1948 = vpop.f32.mrb[0].mxu0
        %v1949 = vadd.f32 %v1877, %v1948
        %v1950 = vpop.f32.mrb[0].mxu0
        %1951 = vdwg.mxu0
        %vm1952 = vcmp.gt.f32.partialorder %v1949, 0.0
        %v1953 = vmul.f32 %v1949, 0.01
        %v1954 = vsel %vm1952, %v1949, %v1953
        %v1956 = vlaneseq
        %v1957 = vshrl.u32 %v1956, 7
        %v1958 = vsub.s32 0, %v1957
        %v1959 = vrot.slane %v1872, %v1958
        %vm1961 = vcmask 523264
        %v1963 = vsel %vm1961, %v1954, 0
        %1965 = vmatprep.subr.mxu0 0.0
        %1966 = vmatpush1.msra.mxu0 %v1864
        %1967 = vmatprep.subr.mxu0 0.0
        %1968 = vmatpush1.msra.mxu0 %v1865
        %1969 = vmatprep.subr.mxu0 0.0
        %1970 = vmatpush1.msra.mxu0 %v1866
        %1971 = vmatprep.subr.mxu0 0.0
        %1972 = vmatpush1.msra.mxu0 %v1867
        %1973 = vmatprep.subr.mxu0 0.0
        %1974 = vmatpush1.msra.mxu0 %v1868
        %1975 = vmatprep.subr.mxu0 0.0
        %1976 = vmatpush1.msra.mxu0 %v1869
        %1977 = vmatprep.subr.mxu0 0.0
        %1978 = vmatpush1.msra.mxu0 %v1870
        %1979 = vmatprep.subr.mxu0 0.0
        %1980 = vmatpush1.msra.mxu0 %v1871
        %1981 = vmatprep.subr.mxu0 0.0
        %1982 = vmatpush1.msra.mxu0 0.0
        %1983 = vmatprep.subr.mxu0 0.0
        %1984 = vmatpush1.msra.mxu0 0.0
        %1985 = vmatprep.subr.mxu0 0.0
        %1986 = vmatpush1.msra.mxu0 0.0
        %1987 = vmatprep.subr.mxu0 0.0
        %1988 = vmatpush1.msra.mxu0 0.0
        %1989 = vmatprep.subr.mxu0 0.0
        %1990 = vmatpush1.msra.mxu0 0.0
        %1991 = vmatprep.subr.mxu0 0.0
        %1992 = vmatpush1.msra.mxu0 0.0
        %1993 = vmatprep.subr.mxu0 0.0
        %1994 = vmatpush1.msra.mxu0 0.0
        %1995 = vmatprep.subr.mxu0 0.0
        %1996 = vmatpush1.msra.mxu0 0.0
        %1997 = vmatprep.subr.mxu0 0.0
        %1998 = vmatpush1.msra.mxu0 0.0
        %1999 = vmatprep.subr.mxu0 0.0
        %2000 = vmatpush1.msra.mxu0 0.0
        %2001 = vmatprep.subr.mxu0 0.0
        %2002 = vmatpush1.msra.mxu0 0.0
        %2003 = vmatprep.subr.mxu0 0.0
        %2004 = vmatpush1.msra.mxu0 0.0
        %2005 = vmatprep.subr.mxu0 0.0
        %2006 = vmatpush1.msra.mxu0 0.0
        %2007 = vmatprep.subr.mxu0 0.0
        %2008 = vmatpush1.msra.mxu0 0.0
        %2009 = vmatprep.subr.mxu0 0.0
        %2010 = vmatpush1.msra.mxu0 0.0
        %2011 = vmatprep.subr.mxu0 0.0
        %2012 = vmatpush1.msra.mxu0 0.0
        %2013 = vmatprep.subr.mxu0 0.0
        %2014 = vmatpush1.msra.mxu0 0.0
        %2015 = vmatprep.subr.mxu0 0.0
        %2016 = vmatpush1.msra.mxu0 0.0
        %2017 = vmatprep.subr.mxu0 0.0
        %2018 = vmatpush1.msra.mxu0 0.0
        %2019 = vmatprep.subr.mxu0 0.0
        %2020 = vmatpush1.msra.mxu0 0.0
        %2021 = vmatprep.subr.mxu0 0.0
        %2022 = vmatpush1.msra.mxu0 0.0
        %2023 = vmatprep.subr.mxu0 0.0
        %2024 = vmatpush1.msra.mxu0 0.0
        %2025 = vmatprep.subr.mxu0 0.0
        %2026 = vmatpush1.msra.mxu0 0.0
        %2027 = vmatprep.subr.mxu0 0.0
        %2028 = vmatpush1.msra.mxu0 0.0
        %2029 = vmatprep.mubr.f32.mxu0 0.0
        %2030 = vmatmul.mubr.f32.gmra.mrb[0].mxu0 %v1963
        %v2031 = vpop.f32.mrb[0].mxu0
        %v2032 = vadd.f32 %v1959, %v2031
        %v2033 = vpop.f32.mrb[0].mxu0
        %2034 = vdwg.mxu0
        %v2035 = vadd.f32 %v1858, %v2032
        %v2036 = vsel %vm793, %v2035, 0.0
        %2037 = vadd.xlane.f32.xlu0 %v2036
        %v2038 = vpop.xlane.xlu0 %2037
        %v2039 = vmul.f32 %v2038, %v1838
        %v2040 = vsub.f32 %v2035, %v2039
        %v2041 = vmul.f32 %v2040, %v2040
        %v2042 = vsel %vm793, %v2041, 0.0
        %2043 = vadd.xlane.f32.xlu0 %v2042
        %v2044 = vpop.xlane.xlu0 %2043
        %v2045 = vmul.f32 %v2044, %v1838
        %v2046 = vadd.f32 %v2045, 1e-05
        %v2047 = vrsqrt.pop %v2046
        %v2048 = vmul.f32 %v2040, %v2047
        %v2049 = vlaneseq
        %v2050 = vshrl.u32 %v2049, 7
        %v2051 = vsub.s32 2, %v2050
        %v2052 = vrot.slane %v788, %v2051
        %v2053 = vmul.f32 %v2048, %v2052
        %v2054 = vlaneseq
        %v2055 = vshrl.u32 %v2054, 7
        %v2056 = vsub.s32 3, %v2055
        %v2057 = vrot.slane %v788, %v2056
        %v2058 = vadd.f32 %v2053, %v2057
        %s2059 = scalar_lea.vmem %s7, 4
        %v2060 = vld [vmem:[%s2059] sm:$0xf]
        %s2061 = scalar_lea.vmem %s5, 32
        %v2062 = vld [vmem:[%s2061] sm:$0xff]
        %v2063 = vld [vmem:[%s2061 + $0x8] sm:$0xff]
        %v2064 = vld [vmem:[%s2061 + $0x10] sm:$0xff]
        %v2065 = vld [vmem:[%s2061 + $0x18] sm:$0xff]
        %v2067 = vsel %vm793, %v2058, 0
        %2069 = vmatprep.subr.mxu0 0.0
        %2070 = vmatpush1.msra.mxu0 %v2062
        %2071 = vmatprep.subr.mxu0 0.0
        %2072 = vmatpush1.msra.mxu0 %v2063
        %2073 = vmatprep.subr.mxu0 0.0
        %2074 = vmatpush1.msra.mxu0 %v2064
        %2075 = vmatprep.subr.mxu0 0.0
        %2076 = vmatpush1.msra.mxu0 %v2065
        %2077 = vmatprep.subr.mxu0 0.0
        %2078 = vmatpush1.msra.mxu0 0.0
        %2079 = vmatprep.subr.mxu0 0.0
        %2080 = vmatpush1.msra.mxu0 0.0
        %2081 = vmatprep.subr.mxu0 0.0
        %2082 = vmatpush1.msra.mxu0 0.0
        %2083 = vmatprep.subr.mxu0 0.0
        %2084 = vmatpush1.msra.mxu0 0.0
        %2085 = vmatprep.subr.mxu0 0.0
        %2086 = vmatpush1.msra.mxu0 0.0
        %2087 = vmatprep.subr.mxu0 0.0
        %2088 = vmatpush1.msra.mxu0 0.0
        %2089 = vmatprep.subr.mxu0 0.0
        %2090 = vmatpush1.msra.mxu0 0.0
        %2091 = vmatprep.subr.mxu0 0.0
        %2092 = vmatpush1.msra.mxu0 0.0
        %2093 = vmatprep.subr.mxu0 0.0
        %2094 = vmatpush1.msra.mxu0 0.0
        %2095 = vmatprep.subr.mxu0 0.0
        %2096 = vmatpush1.msra.mxu0 0.0
        %2097 = vmatprep.subr.mxu0 0.0
        %2098 = vmatpush1.msra.mxu0 0.0
        %2099 = vmatprep.subr.mxu0 0.0
        %2100 = vmatpush1.msra.mxu0 0.0
        %2101 = vmatprep.subr.mxu0 0.0
        %2102 = vmatpush1.msra.mxu0 0.0
        %2103 = vmatprep.subr.mxu0 0.0
        %2104 = vmatpush1.msra.mxu0 0.0
        %2105 = vmatprep.subr.mxu0 0.0
        %2106 = vmatpush1.msra.mxu0 0.0
        %2107 = vmatprep.subr.mxu0 0.0
        %2108 = vmatpush1.msra.mxu0 0.0
        %2109 = vmatprep.subr.mxu0 0.0
        %2110 = vmatpush1.msra.mxu0 0.0
        %2111 = vmatprep.subr.mxu0 0.0
        %2112 = vmatpush1.msra.mxu0 0.0
        %2113 = vmatprep.subr.mxu0 0.0
        %2114 = vmatpush1.msra.mxu0 0.0
        %2115 = vmatprep.subr.mxu0 0.0
        %2116 = vmatpush1.msra.mxu0 0.0
        %2117 = vmatprep.subr.mxu0 0.0
        %2118 = vmatpush1.msra.mxu0 0.0
        %2119 = vmatprep.subr.mxu0 0.0
        %2120 = vmatpush1.msra.mxu0 0.0
        %2121 = vmatprep.subr.mxu0 0.0
        %2122 = vmatpush1.msra.mxu0 0.0
        %2123 = vmatprep.subr.mxu0 0.0
        %2124 = vmatpush1.msra.mxu0 0.0
        %2125 = vmatprep.subr.mxu0 0.0
        %2126 = vmatpush1.msra.mxu0 0.0
        %2127 = vmatprep.subr.mxu0 0.0
        %2128 = vmatpush1.msra.mxu0 0.0
        %2129 = vmatprep.subr.mxu0 0.0
        %2130 = vmatpush1.msra.mxu0 0.0
        %2131 = vmatprep.subr.mxu0 0.0
        %2132 = vmatpush1.msra.mxu0 0.0
        %2133 = vmatprep.mubr.f32.mxu0 0.0
        %2134 = vmatmul.mubr.f32.gmra.mrb[0].mxu0 %v2067
        %v2135 = vpop.f32.mrb[0].mxu0
        %v2136 = vadd.f32 0.0, %v2135
        %v2137 = vpop.f32.mrb[0].mxu0
        %2138 = vdwg.mxu0
        %s2139 = scalar_lea.vmem %s6, 32
        %v2140 = vld [vmem:[%s2139] sm:$0xff]
        %v2141 = vld [vmem:[%s2139 + $0x8] sm:$0xff]
        %v2142 = vld [vmem:[%s2139 + $0x10] sm:$0xff]
        %v2143 = vld [vmem:[%s2139 + $0x18] sm:$0xff]
        %2145 = vrot.lane.b32.xlu0 %v2136, 96
        %v2146 = vpop.permute.xlu0 %2145
        %v2147 = vsel %vm874, %v2136, 0
        %v2149 = vsel %vm874, %v2146, 0
        %2151 = vmatprep.subr.mxu0 0.0
        %2152 = vmatpush1.xpose.msra.mxu0 %v2149
        %2153 = vmatprep.subr.mxu0 0.0
        %2154 = vmatpush1.xpose.msra.mxu0 0.0
        %2155 = vmatprep.subr.mxu0 0.0
        %2156 = vmatpush1.xpose.msra.mxu0 0.0
        %2157 = vmatprep.subr.mxu0 0.0
        %2158 = vmatpush1.xpose.msra.mxu0 0.0
        %2159 = vmatprep.subr.mxu0 0.0
        %2160 = vmatpush1.xpose.msra.mxu0 0.0
        %2161 = vmatprep.subr.mxu0 0.0
        %2162 = vmatpush1.xpose.msra.mxu0 0.0
        %2163 = vmatprep.subr.mxu0 0.0
        %2164 = vmatpush1.xpose.msra.mxu0 0.0
        %2165 = vmatprep.subr.mxu0 0.0
        %2166 = vmatpush1.xpose.msra.mxu0 0.0
        %2167 = vmatprep.subr.mxu0 0.0
        %2168 = vmatpush1.xpose.msra.mxu0 0.0
        %2169 = vmatprep.subr.mxu0 0.0
        %2170 = vmatpush1.xpose.msra.mxu0 0.0
        %2171 = vmatprep.subr.mxu0 0.0
        %2172 = vmatpush1.xpose.msra.mxu0 0.0
        %2173 = vmatprep.subr.mxu0 0.0
        %2174 = vmatpush1.xpose.msra.mxu0 0.0
        %2175 = vmatprep.subr.mxu0 0.0
        %2176 = vmatpush1.xpose.msra.mxu0 0.0
        %2177 = vmatprep.subr.mxu0 0.0
        %2178 = vmatpush1.xpose.msra.mxu0 0.0
        %2179 = vmatprep.subr.mxu0 0.0
        %2180 = vmatpush1.xpose.msra.mxu0 0.0
        %2181 = vmatprep.subr.mxu0 0.0
        %2182 = vmatpush1.xpose.msra.mxu0 0.0
        %2183 = vmatprep.subr.mxu0 0.0
        %2184 = vmatpush1.xpose.msra.mxu0 0.0
        %2185 = vmatprep.subr.mxu0 0.0
        %2186 = vmatpush1.xpose.msra.mxu0 0.0
        %2187 = vmatprep.subr.mxu0 0.0
        %2188 = vmatpush1.xpose.msra.mxu0 0.0
        %2189 = vmatprep.subr.mxu0 0.0
        %2190 = vmatpush1.xpose.msra.mxu0 0.0
        %2191 = vmatprep.subr.mxu0 0.0
        %2192 = vmatpush1.xpose.msra.mxu0 0.0
        %2193 = vmatprep.subr.mxu0 0.0
        %2194 = vmatpush1.xpose.msra.mxu0 0.0
        %2195 = vmatprep.subr.mxu0 0.0
        %2196 = vmatpush1.xpose.msra.mxu0 0.0
        %2197 = vmatprep.subr.mxu0 0.0
        %2198 = vmatpush1.xpose.msra.mxu0 0.0
        %2199 = vmatprep.subr.mxu0 0.0
        %2200 = vmatpush1.xpose.msra.mxu0 0.0
        %2201 = vmatprep.subr.mxu0 0.0
        %2202 = vmatpush1.xpose.msra.mxu0 0.0
        %2203 = vmatprep.subr.mxu0 0.0
        %2204 = vmatpush1.xpose.msra.mxu0 0.0
        %2205 = vmatprep.subr.mxu0 0.0
        %2206 = vmatpush1.xpose.msra.mxu0 0.0
        %2207 = vmatprep.subr.mxu0 0.0
        %2208 = vmatpush1.xpose.msra.mxu0 0.0
        %2209 = vmatprep.subr.mxu0 0.0
        %2210 = vmatpush1.xpose.msra.mxu0 0.0
        %2211 = vmatprep.subr.mxu0 0.0
        %2212 = vmatpush1.xpose.msra.mxu0 0.0
        %2213 = vmatprep.subr.mxu0 0.0
        %2214 = vmatpush1.xpose.msra.mxu0 0.0
        %2215 = vmatprep.mubr.f32.mxu0 0.0
        %2216 = vmatmul.mubr.f32.gmra.mrb[0].mxu0 %v2147
        %v2217 = vpop.f32.mrb[0].mxu0
        %v2218 = vadd.f32 0.0, %v2217
        %v2219 = vpop.f32.mrb[0].mxu0
        %2220 = vdwg.mxu0
        %v2221 = vmul.f32 %v2218, 0.35355338
        %v2222 = vsel %vm950, %v2221, -1000000.0
        %v2223 = vsel %vm874, %v2222, -inf
        %2224 = vmax.xlane.f32.xlu0 %v2223
        %v2225 = vpop.xlane.xlu0 %2224
        %v2226 = vsub.f32 %v2222, %v2225
        %v2227 = vmul.f32 %v2226, 1.442695
        %v2228 = vpow.pop %v2227
        %v2229 = vsel %vm874, %v2228, 0.0
        %2230 = vadd.xlane.f32.xlu0 %v2229
        %v2231 = vpop.xlane.xlu0 %2230
        %v2232 = vrcp.pop %v2231
        %v2233 = vmul.f32 %v2228, %v2232
        %2234 = vrot.lane.b32.xlu0 %v2136, 64
        %v2235 = vpop.permute.xlu0 %2234
        %v2238 = vsel %vm874, %v2233, 0
        %2240 = vmatprep.subr.mxu0 0.0
        %2241 = vmatpush1.msra.mxu0 %v2235
        %2242 = vmatprep.subr.mxu0 0.0
        %2243 = vmatpush1.msra.mxu0 0.0
        %2244 = vmatprep.subr.mxu0 0.0
        %2245 = vmatpush1.msra.mxu0 0.0
        %2246 = vmatprep.subr.mxu0 0.0
        %2247 = vmatpush1.msra.mxu0 0.0
        %2248 = vmatprep.subr.mxu0 0.0
        %2249 = vmatpush1.msra.mxu0 0.0
        %2250 = vmatprep.subr.mxu0 0.0
        %2251 = vmatpush1.msra.mxu0 0.0
        %2252 = vmatprep.subr.mxu0 0.0
        %2253 = vmatpush1.msra.mxu0 0.0
        %2254 = vmatprep.subr.mxu0 0.0
        %2255 = vmatpush1.msra.mxu0 0.0
        %2256 = vmatprep.subr.mxu0 0.0
        %2257 = vmatpush1.msra.mxu0 0.0
        %2258 = vmatprep.subr.mxu0 0.0
        %2259 = vmatpush1.msra.mxu0 0.0
        %2260 = vmatprep.subr.mxu0 0.0
        %2261 = vmatpush1.msra.mxu0 0.0
        %2262 = vmatprep.subr.mxu0 0.0
        %2263 = vmatpush1.msra.mxu0 0.0
        %2264 = vmatprep.subr.mxu0 0.0
        %2265 = vmatpush1.msra.mxu0 0.0
        %2266 = vmatprep.subr.mxu0 0.0
        %2267 = vmatpush1.msra.mxu0 0.0
        %2268 = vmatprep.subr.mxu0 0.0
        %2269 = vmatpush1.msra.mxu0 0.0
        %2270 = vmatprep.subr.mxu0 0.0
        %2271 = vmatpush1.msra.mxu0 0.0
        %2272 = vmatprep.subr.mxu0 0.0
        %2273 = vmatpush1.msra.mxu0 0.0
        %2274 = vmatprep.subr.mxu0 0.0
        %2275 = vmatpush1.msra.mxu0 0.0
        %2276 = vmatprep.subr.mxu0 0.0
        %2277 = vmatpush1.msra.mxu0 0.0
        %2278 = vmatprep.subr.mxu0 0.0
        %2279 = vmatpush1.msra.mxu0 0.0
        %2280 = vmatprep.subr.mxu0 0.0
        %2281 = vmatpush1.msra.mxu0 0.0
        %2282 = vmatprep.subr.mxu0 0.0
        %2283 = vmatpush1.msra.mxu0 0.0
        %2284 = vmatprep.subr.mxu0 0.0
        %2285 = vmatpush1.msra.mxu0 0.0
        %2286 = vmatprep.subr.mxu0 0.0
        %2287 = vmatpush1.msra.mxu0 0.0
        %2288 = vmatprep.subr.mxu0 0.0
        %2289 = vmatpush1.msra.mxu0 0.0
        %2290 = vmatprep.subr.mxu0 0.0
        %2291 = vmatpush1.msra.mxu0 0.0
        %2292 = vmatprep.subr.mxu0 0.0
        %2293 = vmatpush1.msra.mxu0 0.0
        %2294 = vmatprep.subr.mxu0 0.0
        %2295 = vmatpush1.msra.mxu0 0.0
        %2296 = vmatprep.subr.mxu0 0.0
        %2297 = vmatpush1.msra.mxu0 0.0
        %2298 = vmatprep.subr.mxu0 0.0
        %2299 = vmatpush1.msra.mxu0 0.0
        %2300 = vmatprep.subr.mxu0 0.0
        %2301 = vmatpush1.msra.mxu0 0.0
        %2302 = vmatprep.subr.mxu0 0.0
        %2303 = vmatpush1.msra.mxu0 0.0
        %2304 = vmatprep.mubr.f32.mxu0 0.0
        %2305 = vmatmul.mubr.f32.gmra.mrb[0].mxu0 %v2238
        %v2306 = vpop.f32.mrb[0].mxu0
        %v2307 = vadd.f32 0.0, %v2306
        %v2308 = vpop.f32.mrb[0].mxu0
        %2309 = vdwg.mxu0
        %2310 = vrot.lane.b32.xlu0 %v2136, 120
        %v2311 = vpop.permute.xlu0 %2310
        %2312 = vrot.lane.b32.xlu0 %v2136, 88
        %v2313 = vpop.permute.xlu0 %2312
        %v2314 = vsel %vm874, %v2311, 0
        %v2316 = vsel %vm874, %v2313, 0
        %2318 = vmatprep.subr.mxu0 0.0
        %2319 = vmatpush1.xpose.msra.mxu0 %v2316
        %2320 = vmatprep.subr.mxu0 0.0
        %2321 = vmatpush1.xpose.msra.mxu0 0.0
        %2322 = vmatprep.subr.mxu0 0.0
        %2323 = vmatpush1.xpose.msra.mxu0 0.0
        %2324 = vmatprep.subr.mxu0 0.0
        %2325 = vmatpush1.xpose.msra.mxu0 0.0
        %2326 = vmatprep.subr.mxu0 0.0
        %2327 = vmatpush1.xpose.msra.mxu0 0.0
        %2328 = vmatprep.subr.mxu0 0.0
        %2329 = vmatpush1.xpose.msra.mxu0 0.0
        %2330 = vmatprep.subr.mxu0 0.0
        %2331 = vmatpush1.xpose.msra.mxu0 0.0
        %2332 = vmatprep.subr.mxu0 0.0
        %2333 = vmatpush1.xpose.msra.mxu0 0.0
        %2334 = vmatprep.subr.mxu0 0.0
        %2335 = vmatpush1.xpose.msra.mxu0 0.0
        %2336 = vmatprep.subr.mxu0 0.0
        %2337 = vmatpush1.xpose.msra.mxu0 0.0
        %2338 = vmatprep.subr.mxu0 0.0
        %2339 = vmatpush1.xpose.msra.mxu0 0.0
        %2340 = vmatprep.subr.mxu0 0.0
        %2341 = vmatpush1.xpose.msra.mxu0 0.0
        %2342 = vmatprep.subr.mxu0 0.0
        %2343 = vmatpush1.xpose.msra.mxu0 0.0
        %2344 = vmatprep.subr.mxu0 0.0
        %2345 = vmatpush1.xpose.msra.mxu0 0.0
        %2346 = vmatprep.subr.mxu0 0.0
        %2347 = vmatpush1.xpose.msra.mxu0 0.0
        %2348 = vmatprep.subr.mxu0 0.0
        %2349 = vmatpush1.xpose.msra.mxu0 0.0
        %2350 = vmatprep.subr.mxu0 0.0
        %2351 = vmatpush1.xpose.msra.mxu0 0.0
        %2352 = vmatprep.subr.mxu0 0.0
        %2353 = vmatpush1.xpose.msra.mxu0 0.0
        %2354 = vmatprep.subr.mxu0 0.0
        %2355 = vmatpush1.xpose.msra.mxu0 0.0
        %2356 = vmatprep.subr.mxu0 0.0
        %2357 = vmatpush1.xpose.msra.mxu0 0.0
        %2358 = vmatprep.subr.mxu0 0.0
        %2359 = vmatpush1.xpose.msra.mxu0 0.0
        %2360 = vmatprep.subr.mxu0 0.0
        %2361 = vmatpush1.xpose.msra.mxu0 0.0
        %2362 = vmatprep.subr.mxu0 0.0
        %2363 = vmatpush1.xpose.msra.mxu0 0.0
        %2364 = vmatprep.subr.mxu0 0.0
        %2365 = vmatpush1.xpose.msra.mxu0 0.0
        %2366 = vmatprep.subr.mxu0 0.0
        %2367 = vmatpush1.xpose.msra.mxu0 0.0
        %2368 = vmatprep.subr.mxu0 0.0
        %2369 = vmatpush1.xpose.msra.mxu0 0.0
        %2370 = vmatprep.subr.mxu0 0.0
        %2371 = vmatpush1.xpose.msra.mxu0 0.0
        %2372 = vmatprep.subr.mxu0 0.0
        %2373 = vmatpush1.xpose.msra.mxu0 0.0
        %2374 = vmatprep.subr.mxu0 0.0
        %2375 = vmatpush1.xpose.msra.mxu0 0.0
        %2376 = vmatprep.subr.mxu0 0.0
        %2377 = vmatpush1.xpose.msra.mxu0 0.0
        %2378 = vmatprep.subr.mxu0 0.0
        %2379 = vmatpush1.xpose.msra.mxu0 0.0
        %2380 = vmatprep.subr.mxu0 0.0
        %2381 = vmatpush1.xpose.msra.mxu0 0.0
        %2382 = vmatprep.mubr.f32.mxu0 0.0
        %2383 = vmatmul.mubr.f32.gmra.mrb[0].mxu0 %v2314
        %v2384 = vpop.f32.mrb[0].mxu0
        %v2385 = vadd.f32 0.0, %v2384
        %v2386 = vpop.f32.mrb[0].mxu0
        %2387 = vdwg.mxu0
        %v2388 = vmul.f32 %v2385, 0.35355338
        %v2389 = vsel %vm950, %v2388, -1000000.0
        %v2390 = vsel %vm874, %v2389, -inf
        %2391 = vmax.xlane.f32.xlu0 %v2390
        %v2392 = vpop.xlane.xlu0 %2391
        %v2393 = vsub.f32 %v2389, %v2392
        %v2394 = vmul.f32 %v2393, 1.442695
        %v2395 = vpow.pop %v2394
        %v2396 = vsel %vm874, %v2395, 0.0
        %2397 = vadd.xlane.f32.xlu0 %v2396
        %v2398 = vpop.xlane.xlu0 %2397
        %v2399 = vrcp.pop %v2398
        %v2400 = vmul.f32 %v2395, %v2399
        %2401 = vrot.lane.b32.xlu0 %v2136, 56
        %v2402 = vpop.permute.xlu0 %2401
        %v2405 = vsel %vm874, %v2400, 0
        %2407 = vmatprep.subr.mxu0 0.0
        %2408 = vmatpush1.msra.mxu0 %v2402
        %2409 = vmatprep.subr.mxu0 0.0
        %2410 = vmatpush1.msra.mxu0 0.0
        %2411 = vmatprep.subr.mxu0 0.0
        %2412 = vmatpush1.msra.mxu0 0.0
        %2413 = vmatprep.subr.mxu0 0.0
        %2414 = vmatpush1.msra.mxu0 0.0
        %2415 = vmatprep.subr.mxu0 0.0
        %2416 = vmatpush1.msra.mxu0 0.0
        %2417 = vmatprep.subr.mxu0 0.0
        %2418 = vmatpush1.msra.mxu0 0.0
        %2419 = vmatprep.subr.mxu0 0.0
        %2420 = vmatpush1.msra.mxu0 0.0
        %2421 = vmatprep.subr.mxu0 0.0
        %2422 = vmatpush1.msra.mxu0 0.0
        %2423 = vmatprep.subr.mxu0 0.0
        %2424 = vmatpush1.msra.mxu0 0.0
        %2425 = vmatprep.subr.mxu0 0.0
        %2426 = vmatpush1.msra.mxu0 0.0
        %2427 = vmatprep.subr.mxu0 0.0
        %2428 = vmatpush1.msra.mxu0 0.0
        %2429 = vmatprep.subr.mxu0 0.0
        %2430 = vmatpush1.msra.mxu0 0.0
        %2431 = vmatprep.subr.mxu0 0.0
        %2432 = vmatpush1.msra.mxu0 0.0
        %2433 = vmatprep.subr.mxu0 0.0
        %2434 = vmatpush1.msra.mxu0 0.0
        %2435 = vmatprep.subr.mxu0 0.0
        %2436 = vmatpush1.msra.mxu0 0.0
        %2437 = vmatprep.subr.mxu0 0.0
        %2438 = vmatpush1.msra.mxu0 0.0
        %2439 = vmatprep.subr.mxu0 0.0
        %2440 = vmatpush1.msra.mxu0 0.0
        %2441 = vmatprep.subr.mxu0 0.0
        %2442 = vmatpush1.msra.mxu0 0.0
        %2443 = vmatprep.subr.mxu0 0.0
        %2444 = vmatpush1.msra.mxu0 0.0
        %2445 = vmatprep.subr.mxu0 0.0
        %2446 = vmatpush1.msra.mxu0 0.0
        %2447 = vmatprep.subr.mxu0 0.0
        %2448 = vmatpush1.msra.mxu0 0.0
        %2449 = vmatprep.subr.mxu0 0.0
        %2450 = vmatpush1.msra.mxu0 0.0
        %2451 = vmatprep.subr.mxu0 0.0
        %2452 = vmatpush1.msra.mxu0 0.0
        %2453 = vmatprep.subr.mxu0 0.0
        %2454 = vmatpush1.msra.mxu0 0.0
        %2455 = vmatprep.subr.mxu0 0.0
        %2456 = vmatpush1.msra.mxu0 0.0
        %2457 = vmatprep.subr.mxu0 0.0
        %2458 = vmatpush1.msra.mxu0 0.0
        %2459 = vmatprep.subr.mxu0 0.0
        %2460 = vmatpush1.msra.mxu0 0.0
        %2461 = vmatprep.subr.mxu0 0.0
        %2462 = vmatpush1.msra.mxu0 0.0
        %2463 = vmatprep.subr.mxu0 0.0
        %2464 = vmatpush1.msra.mxu0 0.0
        %2465 = vmatprep.subr.mxu0 0.0
        %2466 = vmatpush1.msra.mxu0 0.0
        %2467 = vmatprep.subr.mxu0 0.0
        %2468 = vmatpush1.msra.mxu0 0.0
        %2469 = vmatprep.subr.mxu0 0.0
        %2470 = vmatpush1.msra.mxu0 0.0
        %2471 = vmatprep.mubr.f32.mxu0 0.0
        %2472 = vmatmul.mubr.f32.gmra.mrb[0].mxu0 %v2405
        %v2473 = vpop.f32.mrb[0].mxu0
        %v2474 = vadd.f32 0.0, %v2473
        %v2475 = vpop.f32.mrb[0].mxu0
        %2476 = vdwg.mxu0
        %v2478 = vsel %vm874, %v2474, 0
        %2480 = vmatprep.subr.mxu0 0.0
        %2481 = vmatpush1.msra.mxu0 %v2141
        %2482 = vmatprep.subr.mxu0 0.0
        %2483 = vmatpush1.msra.mxu0 0.0
        %2484 = vmatprep.subr.mxu0 0.0
        %2485 = vmatpush1.msra.mxu0 0.0
        %2486 = vmatprep.subr.mxu0 0.0
        %2487 = vmatpush1.msra.mxu0 0.0
        %2488 = vmatprep.subr.mxu0 0.0
        %2489 = vmatpush1.msra.mxu0 0.0
        %2490 = vmatprep.subr.mxu0 0.0
        %2491 = vmatpush1.msra.mxu0 0.0
        %2492 = vmatprep.subr.mxu0 0.0
        %2493 = vmatpush1.msra.mxu0 0.0
        %2494 = vmatprep.subr.mxu0 0.0
        %2495 = vmatpush1.msra.mxu0 0.0
        %2496 = vmatprep.subr.mxu0 0.0
        %2497 = vmatpush1.msra.mxu0 0.0
        %2498 = vmatprep.subr.mxu0 0.0
        %2499 = vmatpush1.msra.mxu0 0.0
        %2500 = vmatprep.subr.mxu0 0.0
        %2501 = vmatpush1.msra.mxu0 0.0
        %2502 = vmatprep.subr.mxu0 0.0
        %2503 = vmatpush1.msra.mxu0 0.0
        %2504 = vmatprep.subr.mxu0 0.0
        %2505 = vmatpush1.msra.mxu0 0.0
        %2506 = vmatprep.subr.mxu0 0.0
        %2507 = vmatpush1.msra.mxu0 0.0
        %2508 = vmatprep.subr.mxu0 0.0
        %2509 = vmatpush1.msra.mxu0 0.0
        %2510 = vmatprep.subr.mxu0 0.0
        %2511 = vmatpush1.msra.mxu0 0.0
        %2512 = vmatprep.subr.mxu0 0.0
        %2513 = vmatpush1.msra.mxu0 0.0
        %2514 = vmatprep.subr.mxu0 0.0
        %2515 = vmatpush1.msra.mxu0 0.0
        %2516 = vmatprep.subr.mxu0 0.0
        %2517 = vmatpush1.msra.mxu0 0.0
        %2518 = vmatprep.subr.mxu0 0.0
        %2519 = vmatpush1.msra.mxu0 0.0
        %2520 = vmatprep.subr.mxu0 0.0
        %2521 = vmatpush1.msra.mxu0 0.0
        %2522 = vmatprep.subr.mxu0 0.0
        %2523 = vmatpush1.msra.mxu0 0.0
        %2524 = vmatprep.subr.mxu0 0.0
        %2525 = vmatpush1.msra.mxu0 0.0
        %2526 = vmatprep.subr.mxu0 0.0
        %2527 = vmatpush1.msra.mxu0 0.0
        %2528 = vmatprep.subr.mxu0 0.0
        %2529 = vmatpush1.msra.mxu0 0.0
        %2530 = vmatprep.subr.mxu0 0.0
        %2531 = vmatpush1.msra.mxu0 0.0
        %2532 = vmatprep.subr.mxu0 0.0
        %2533 = vmatpush1.msra.mxu0 0.0
        %2534 = vmatprep.subr.mxu0 0.0
        %2535 = vmatpush1.msra.mxu0 0.0
        %2536 = vmatprep.subr.mxu0 0.0
        %2537 = vmatpush1.msra.mxu0 0.0
        %2538 = vmatprep.subr.mxu0 0.0
        %2539 = vmatpush1.msra.mxu0 0.0
        %2540 = vmatprep.subr.mxu0 0.0
        %2541 = vmatpush1.msra.mxu0 0.0
        %2542 = vmatprep.subr.mxu0 0.0
        %2543 = vmatpush1.msra.mxu0 0.0
        %2544 = vmatprep.mubr.f32.mxu0 0.0
        %2545 = vmatmul.mubr.f32.gmra.mrb[0].mxu0 %v2478
        %v2546 = vpop.f32.mrb[0].mxu0
        %v2547 = vadd.f32 0.0, %v2546
        %v2548 = vpop.f32.mrb[0].mxu0
        %2549 = vdwg.mxu0
        %v2551 = vsel %vm874, %v2307, 0
        %2553 = vmatprep.subr.mxu0 0.0
        %2554 = vmatpush1.msra.mxu0 %v2140
        %2555 = vmatprep.subr.mxu0 0.0
        %2556 = vmatpush1.msra.mxu0 0.0
        %2557 = vmatprep.subr.mxu0 0.0
        %2558 = vmatpush1.msra.mxu0 0.0
        %2559 = vmatprep.subr.mxu0 0.0
        %2560 = vmatpush1.msra.mxu0 0.0
        %2561 = vmatprep.subr.mxu0 0.0
        %2562 = vmatpush1.msra.mxu0 0.0
        %2563 = vmatprep.subr.mxu0 0.0
        %2564 = vmatpush1.msra.mxu0 0.0
        %2565 = vmatprep.subr.mxu0 0.0
        %2566 = vmatpush1.msra.mxu0 0.0
        %2567 = vmatprep.subr.mxu0 0.0
        %2568 = vmatpush1.msra.mxu0 0.0
        %2569 = vmatprep.subr.mxu0 0.0
        %2570 = vmatpush1.msra.mxu0 0.0
        %2571 = vmatprep.subr.mxu0 0.0
        %2572 = vmatpush1.msra.mxu0 0.0
        %2573 = vmatprep.subr.mxu0 0.0
        %2574 = vmatpush1.msra.mxu0 0.0
        %2575 = vmatprep.subr.mxu0 0.0
        %2576 = vmatpush1.msra.mxu0 0.0
        %2577 = vmatprep.subr.mxu0 0.0
        %2578 = vmatpush1.msra.mxu0 0.0
        %2579 = vmatprep.subr.mxu0 0.0
        %2580 = vmatpush1.msra.mxu0 0.0
        %2581 = vmatprep.subr.mxu0 0.0
        %2582 = vmatpush1.msra.mxu0 0.0
        %2583 = vmatprep.subr.mxu0 0.0
        %2584 = vmatpush1.msra.mxu0 0.0
        %2585 = vmatprep.subr.mxu0 0.0
        %2586 = vmatpush1.msra.mxu0 0.0
        %2587 = vmatprep.subr.mxu0 0.0
        %2588 = vmatpush1.msra.mxu0 0.0
        %2589 = vmatprep.subr.mxu0 0.0
        %2590 = vmatpush1.msra.mxu0 0.0
        %2591 = vmatprep.subr.mxu0 0.0
        %2592 = vmatpush1.msra.mxu0 0.0
        %2593 = vmatprep.subr.mxu0 0.0
        %2594 = vmatpush1.msra.mxu0 0.0
        %2595 = vmatprep.subr.mxu0 0.0
        %2596 = vmatpush1.msra.mxu0 0.0
        %2597 = vmatprep.subr.mxu0 0.0
        %2598 = vmatpush1.msra.mxu0 0.0
        %2599 = vmatprep.subr.mxu0 0.0
        %2600 = vmatpush1.msra.mxu0 0.0
        %2601 = vmatprep.subr.mxu0 0.0
        %2602 = vmatpush1.msra.mxu0 0.0
        %2603 = vmatprep.subr.mxu0 0.0
        %2604 = vmatpush1.msra.mxu0 0.0
        %2605 = vmatprep.subr.mxu0 0.0
        %2606 = vmatpush1.msra.mxu0 0.0
        %2607 = vmatprep.subr.mxu0 0.0
        %2608 = vmatpush1.msra.mxu0 0.0
        %2609 = vmatprep.subr.mxu0 0.0
        %2610 = vmatpush1.msra.mxu0 0.0
        %2611 = vmatprep.subr.mxu0 0.0
        %2612 = vmatpush1.msra.mxu0 0.0
        %2613 = vmatprep.subr.mxu0 0.0
        %2614 = vmatpush1.msra.mxu0 0.0
        %2615 = vmatprep.subr.mxu0 0.0
        %2616 = vmatpush1.msra.mxu0 0.0
        %2617 = vmatprep.mubr.f32.mxu0 0.0
        %2618 = vmatmul.mubr.f32.gmra.mrb[0].mxu0 %v2551
        %v2619 = vpop.f32.mrb[0].mxu0
        %v2620 = vadd.f32 %v2547, %v2619
        %v2621 = vpop.f32.mrb[0].mxu0
        %2622 = vdwg.mxu0
        %2623 = vrot.lane.b32.xlu0 %v2136, 112
        %v2624 = vpop.permute.xlu0 %2623
        %2625 = vrot.lane.b32.xlu0 %v2136, 80
        %v2626 = vpop.permute.xlu0 %2625
        %v2627 = vsel %vm874, %v2624, 0
        %v2629 = vsel %vm874, %v2626, 0
        %2631 = vmatprep.subr.mxu0 0.0
        %2632 = vmatpush1.xpose.msra.mxu0 %v2629
        %2633 = vmatprep.subr.mxu0 0.0
        %2634 = vmatpush1.xpose.msra.mxu0 0.0
        %2635 = vmatprep.subr.mxu0 0.0
        %2636 = vmatpush1.xpose.msra.mxu0 0.0
        %2637 = vmatprep.subr.mxu0 0.0
        %2638 = vmatpush1.xpose.msra.mxu0 0.0
        %2639 = vmatprep.subr.mxu0 0.0
        %2640 = vmatpush1.xpose.msra.mxu0 0.0
        %2641 = vmatprep.subr.mxu0 0.0
        %2642 = vmatpush1.xpose.msra.mxu0 0.0
        %2643 = vmatprep.subr.mxu0 0.0
        %2644 = vmatpush1.xpose.msra.mxu0 0.0
        %2645 = vmatprep.subr.mxu0 0.0
        %2646 = vmatpush1.xpose.msra.mxu0 0.0
        %2647 = vmatprep.subr.mxu0 0.0
        %2648 = vmatpush1.xpose.msra.mxu0 0.0
        %2649 = vmatprep.subr.mxu0 0.0
        %2650 = vmatpush1.xpose.msra.mxu0 0.0
        %2651 = vmatprep.subr.mxu0 0.0
        %2652 = vmatpush1.xpose.msra.mxu0 0.0
        %2653 = vmatprep.subr.mxu0 0.0
        %2654 = vmatpush1.xpose.msra.mxu0 0.0
        %2655 = vmatprep.subr.mxu0 0.0
        %2656 = vmatpush1.xpose.msra.mxu0 0.0
        %2657 = vmatprep.subr.mxu0 0.0
        %2658 = vmatpush1.xpose.msra.mxu0 0.0
        %2659 = vmatprep.subr.mxu0 0.0
        %2660 = vmatpush1.xpose.msra.mxu0 0.0
        %2661 = vmatprep.subr.mxu0 0.0
        %2662 = vmatpush1.xpose.msra.mxu0 0.0
        %2663 = vmatprep.subr.mxu0 0.0
        %2664 = vmatpush1.xpose.msra.mxu0 0.0
        %2665 = vmatprep.subr.mxu0 0.0
        %2666 = vmatpush1.xpose.msra.mxu0 0.0
        %2667 = vmatprep.subr.mxu0 0.0
        %2668 = vmatpush1.xpose.msra.mxu0 0.0
        %2669 = vmatprep.subr.mxu0 0.0
        %2670 = vmatpush1.xpose.msra.mxu0 0.0
        %2671 = vmatprep.subr.mxu0 0.0
        %2672 = vmatpush1.xpose.msra.mxu0 0.0
        %2673 = vmatprep.subr.mxu0 0.0
        %2674 = vmatpush1.xpose.msra.mxu0 0.0
        %2675 = vmatprep.subr.mxu0 0.0
        %2676 = vmatpush1.xpose.msra.mxu0 0.0
        %2677 = vmatprep.subr.mxu0 0.0
        %2678 = vmatpush1.xpose.msra.mxu0 0.0
        %2679 = vmatprep.subr.mxu0 0.0
        %2680 = vmatpush1.xpose.msra.mxu0 0.0
        %2681 = vmatprep.subr.mxu0 0.0
        %2682 = vmatpush1.xpose.msra.mxu0 0.0
        %2683 = vmatprep.subr.mxu0 0.0
        %2684 = vmatpush1.xpose.msra.mxu0 0.0
        %2685 = vmatprep.subr.mxu0 0.0
        %2686 = vmatpush1.xpose.msra.mxu0 0.0
        %2687 = vmatprep.subr.mxu0 0.0
        %2688 = vmatpush1.xpose.msra.mxu0 0.0
        %2689 = vmatprep.subr.mxu0 0.0
        %2690 = vmatpush1.xpose.msra.mxu0 0.0
        %2691 = vmatprep.subr.mxu0 0.0
        %2692 = vmatpush1.xpose.msra.mxu0 0.0
        %2693 = vmatprep.subr.mxu0 0.0
        %2694 = vmatpush1.xpose.msra.mxu0 0.0
        %2695 = vmatprep.mubr.f32.mxu0 0.0
        %2696 = vmatmul.mubr.f32.gmra.mrb[0].mxu0 %v2627
        %v2697 = vpop.f32.mrb[0].mxu0
        %v2698 = vadd.f32 0.0, %v2697
        %v2699 = vpop.f32.mrb[0].mxu0
        %2700 = vdwg.mxu0
        %v2701 = vmul.f32 %v2698, 0.35355338
        %v2702 = vsel %vm950, %v2701, -1000000.0
        %v2703 = vsel %vm874, %v2702, -inf
        %2704 = vmax.xlane.f32.xlu0 %v2703
        %v2705 = vpop.xlane.xlu0 %2704
        %v2706 = vsub.f32 %v2702, %v2705
        %v2707 = vmul.f32 %v2706, 1.442695
        %v2708 = vpow.pop %v2707
        %v2709 = vsel %vm874, %v2708, 0.0
        %2710 = vadd.xlane.f32.xlu0 %v2709
        %v2711 = vpop.xlane.xlu0 %2710
        %v2712 = vrcp.pop %v2711
        %v2713 = vmul.f32 %v2708, %v2712
        %2714 = vrot.lane.b32.xlu0 %v2136, 48
        %v2715 = vpop.permute.xlu0 %2714
        %v2718 = vsel %vm874, %v2713, 0
        %2720 = vmatprep.subr.mxu0 0.0
        %2721 = vmatpush1.msra.mxu0 %v2715
        %2722 = vmatprep.subr.mxu0 0.0
        %2723 = vmatpush1.msra.mxu0 0.0
        %2724 = vmatprep.subr.mxu0 0.0
        %2725 = vmatpush1.msra.mxu0 0.0
        %2726 = vmatprep.subr.mxu0 0.0
        %2727 = vmatpush1.msra.mxu0 0.0
        %2728 = vmatprep.subr.mxu0 0.0
        %2729 = vmatpush1.msra.mxu0 0.0
        %2730 = vmatprep.subr.mxu0 0.0
        %2731 = vmatpush1.msra.mxu0 0.0
        %2732 = vmatprep.subr.mxu0 0.0
        %2733 = vmatpush1.msra.mxu0 0.0
        %2734 = vmatprep.subr.mxu0 0.0
        %2735 = vmatpush1.msra.mxu0 0.0
        %2736 = vmatprep.subr.mxu0 0.0
        %2737 = vmatpush1.msra.mxu0 0.0
        %2738 = vmatprep.subr.mxu0 0.0
        %2739 = vmatpush1.msra.mxu0 0.0
        %2740 = vmatprep.subr.mxu0 0.0
        %2741 = vmatpush1.msra.mxu0 0.0
        %2742 = vmatprep.subr.mxu0 0.0
        %2743 = vmatpush1.msra.mxu0 0.0
        %2744 = vmatprep.subr.mxu0 0.0
        %2745 = vmatpush1.msra.mxu0 0.0
        %2746 = vmatprep.subr.mxu0 0.0
        %2747 = vmatpush1.msra.mxu0 0.0
        %2748 = vmatprep.subr.mxu0 0.0
        %2749 = vmatpush1.msra.mxu0 0.0
        %2750 = vmatprep.subr.mxu0 0.0
        %2751 = vmatpush1.msra.mxu0 0.0
        %2752 = vmatprep.subr.mxu0 0.0
        %2753 = vmatpush1.msra.mxu0 0.0
        %2754 = vmatprep.subr.mxu0 0.0
        %2755 = vmatpush1.msra.mxu0 0.0
        %2756 = vmatprep.subr.mxu0 0.0
        %2757 = vmatpush1.msra.mxu0 0.0
        %2758 = vmatprep.subr.mxu0 0.0
        %2759 = vmatpush1.msra.mxu0 0.0
        %2760 = vmatprep.subr.mxu0 0.0
        %2761 = vmatpush1.msra.mxu0 0.0
        %2762 = vmatprep.subr.mxu0 0.0
        %2763 = vmatpush1.msra.mxu0 0.0
        %2764 = vmatprep.subr.mxu0 0.0
        %2765 = vmatpush1.msra.mxu0 0.0
        %2766 = vmatprep.subr.mxu0 0.0
        %2767 = vmatpush1.msra.mxu0 0.0
        %2768 = vmatprep.subr.mxu0 0.0
        %2769 = vmatpush1.msra.mxu0 0.0
        %2770 = vmatprep.subr.mxu0 0.0
        %2771 = vmatpush1.msra.mxu0 0.0
        %2772 = vmatprep.subr.mxu0 0.0
        %2773 = vmatpush1.msra.mxu0 0.0
        %2774 = vmatprep.subr.mxu0 0.0
        %2775 = vmatpush1.msra.mxu0 0.0
        %2776 = vmatprep.subr.mxu0 0.0
        %2777 = vmatpush1.msra.mxu0 0.0
        %2778 = vmatprep.subr.mxu0 0.0
        %2779 = vmatpush1.msra.mxu0 0.0
        %2780 = vmatprep.subr.mxu0 0.0
        %2781 = vmatpush1.msra.mxu0 0.0
        %2782 = vmatprep.subr.mxu0 0.0
        %2783 = vmatpush1.msra.mxu0 0.0
        %2784 = vmatprep.mubr.f32.mxu0 0.0
        %2785 = vmatmul.mubr.f32.gmra.mrb[0].mxu0 %v2718
        %v2786 = vpop.f32.mrb[0].mxu0
        %v2787 = vadd.f32 0.0, %v2786
        %v2788 = vpop.f32.mrb[0].mxu0
        %2789 = vdwg.mxu0
        %v2791 = vsel %vm874, %v2787, 0
        %2793 = vmatprep.subr.mxu0 0.0
        %2794 = vmatpush1.msra.mxu0 %v2142
        %2795 = vmatprep.subr.mxu0 0.0
        %2796 = vmatpush1.msra.mxu0 0.0
        %2797 = vmatprep.subr.mxu0 0.0
        %2798 = vmatpush1.msra.mxu0 0.0
        %2799 = vmatprep.subr.mxu0 0.0
        %2800 = vmatpush1.msra.mxu0 0.0
        %2801 = vmatprep.subr.mxu0 0.0
        %2802 = vmatpush1.msra.mxu0 0.0
        %2803 = vmatprep.subr.mxu0 0.0
        %2804 = vmatpush1.msra.mxu0 0.0
        %2805 = vmatprep.subr.mxu0 0.0
        %2806 = vmatpush1.msra.mxu0 0.0
        %2807 = vmatprep.subr.mxu0 0.0
        %2808 = vmatpush1.msra.mxu0 0.0
        %2809 = vmatprep.subr.mxu0 0.0
        %2810 = vmatpush1.msra.mxu0 0.0
        %2811 = vmatprep.subr.mxu0 0.0
        %2812 = vmatpush1.msra.mxu0 0.0
        %2813 = vmatprep.subr.mxu0 0.0
        %2814 = vmatpush1.msra.mxu0 0.0
        %2815 = vmatprep.subr.mxu0 0.0
        %2816 = vmatpush1.msra.mxu0 0.0
        %2817 = vmatprep.subr.mxu0 0.0
        %2818 = vmatpush1.msra.mxu0 0.0
        %2819 = vmatprep.subr.mxu0 0.0
        %2820 = vmatpush1.msra.mxu0 0.0
        %2821 = vmatprep.subr.mxu0 0.0
        %2822 = vmatpush1.msra.mxu0 0.0
        %2823 = vmatprep.subr.mxu0 0.0
        %2824 = vmatpush1.msra.mxu0 0.0
        %2825 = vmatprep.subr.mxu0 0.0
        %2826 = vmatpush1.msra.mxu0 0.0
        %2827 = vmatprep.subr.mxu0 0.0
        %2828 = vmatpush1.msra.mxu0 0.0
        %2829 = vmatprep.subr.mxu0 0.0
        %2830 = vmatpush1.msra.mxu0 0.0
        %2831 = vmatprep.subr.mxu0 0.0
        %2832 = vmatpush1.msra.mxu0 0.0
        %2833 = vmatprep.subr.mxu0 0.0
        %2834 = vmatpush1.msra.mxu0 0.0
        %2835 = vmatprep.subr.mxu0 0.0
        %2836 = vmatpush1.msra.mxu0 0.0
        %2837 = vmatprep.subr.mxu0 0.0
        %2838 = vmatpush1.msra.mxu0 0.0
        %2839 = vmatprep.subr.mxu0 0.0
        %2840 = vmatpush1.msra.mxu0 0.0
        %2841 = vmatprep.subr.mxu0 0.0
        %2842 = vmatpush1.msra.mxu0 0.0
        %2843 = vmatprep.subr.mxu0 0.0
        %2844 = vmatpush1.msra.mxu0 0.0
        %2845 = vmatprep.subr.mxu0 0.0
        %2846 = vmatpush1.msra.mxu0 0.0
        %2847 = vmatprep.subr.mxu0 0.0
        %2848 = vmatpush1.msra.mxu0 0.0
        %2849 = vmatprep.subr.mxu0 0.0
        %2850 = vmatpush1.msra.mxu0 0.0
        %2851 = vmatprep.subr.mxu0 0.0
        %2852 = vmatpush1.msra.mxu0 0.0
        %2853 = vmatprep.subr.mxu0 0.0
        %2854 = vmatpush1.msra.mxu0 0.0
        %2855 = vmatprep.subr.mxu0 0.0
        %2856 = vmatpush1.msra.mxu0 0.0
        %2857 = vmatprep.mubr.f32.mxu0 0.0
        %2858 = vmatmul.mubr.f32.gmra.mrb[0].mxu0 %v2791
        %v2859 = vpop.f32.mrb[0].mxu0
        %v2860 = vadd.f32 0.0, %v2859
        %v2861 = vpop.f32.mrb[0].mxu0
        %2862 = vdwg.mxu0
        %v2863 = vadd.f32 %v2620, %v2860
        %2864 = vrot.lane.b32.xlu0 %v2136, 104
        %v2865 = vpop.permute.xlu0 %2864
        %2866 = vrot.lane.b32.xlu0 %v2136, 72
        %v2867 = vpop.permute.xlu0 %2866
        %v2868 = vsel %vm874, %v2865, 0
        %v2870 = vsel %vm874, %v2867, 0
        %2872 = vmatprep.subr.mxu0 0.0
        %2873 = vmatpush1.xpose.msra.mxu0 %v2870
        %2874 = vmatprep.subr.mxu0 0.0
        %2875 = vmatpush1.xpose.msra.mxu0 0.0
        %2876 = vmatprep.subr.mxu0 0.0
        %2877 = vmatpush1.xpose.msra.mxu0 0.0
        %2878 = vmatprep.subr.mxu0 0.0
        %2879 = vmatpush1.xpose.msra.mxu0 0.0
        %2880 = vmatprep.subr.mxu0 0.0
        %2881 = vmatpush1.xpose.msra.mxu0 0.0
        %2882 = vmatprep.subr.mxu0 0.0
        %2883 = vmatpush1.xpose.msra.mxu0 0.0
        %2884 = vmatprep.subr.mxu0 0.0
        %2885 = vmatpush1.xpose.msra.mxu0 0.0
        %2886 = vmatprep.subr.mxu0 0.0
        %2887 = vmatpush1.xpose.msra.mxu0 0.0
        %2888 = vmatprep.subr.mxu0 0.0
        %2889 = vmatpush1.xpose.msra.mxu0 0.0
        %2890 = vmatprep.subr.mxu0 0.0
        %2891 = vmatpush1.xpose.msra.mxu0 0.0
        %2892 = vmatprep.subr.mxu0 0.0
        %2893 = vmatpush1.xpose.msra.mxu0 0.0
        %2894 = vmatprep.subr.mxu0 0.0
        %2895 = vmatpush1.xpose.msra.mxu0 0.0
        %2896 = vmatprep.subr.mxu0 0.0
        %2897 = vmatpush1.xpose.msra.mxu0 0.0
        %2898 = vmatprep.subr.mxu0 0.0
        %2899 = vmatpush1.xpose.msra.mxu0 0.0
        %2900 = vmatprep.subr.mxu0 0.0
        %2901 = vmatpush1.xpose.msra.mxu0 0.0
        %2902 = vmatprep.subr.mxu0 0.0
        %2903 = vmatpush1.xpose.msra.mxu0 0.0
        %2904 = vmatprep.subr.mxu0 0.0
        %2905 = vmatpush1.xpose.msra.mxu0 0.0
        %2906 = vmatprep.subr.mxu0 0.0
        %2907 = vmatpush1.xpose.msra.mxu0 0.0
        %2908 = vmatprep.subr.mxu0 0.0
        %2909 = vmatpush1.xpose.msra.mxu0 0.0
        %2910 = vmatprep.subr.mxu0 0.0
        %2911 = vmatpush1.xpose.msra.mxu0 0.0
        %2912 = vmatprep.subr.mxu0 0.0
        %2913 = vmatpush1.xpose.msra.mxu0 0.0
        %2914 = vmatprep.subr.mxu0 0.0
        %2915 = vmatpush1.xpose.msra.mxu0 0.0
        %2916 = vmatprep.subr.mxu0 0.0
        %2917 = vmatpush1.xpose.msra.mxu0 0.0
        %2918 = vmatprep.subr.mxu0 0.0
        %2919 = vmatpush1.xpose.msra.mxu0 0.0
        %2920 = vmatprep.subr.mxu0 0.0
        %2921 = vmatpush1.xpose.msra.mxu0 0.0
        %2922 = vmatprep.subr.mxu0 0.0
        %2923 = vmatpush1.xpose.msra.mxu0 0.0
        %2924 = vmatprep.subr.mxu0 0.0
        %2925 = vmatpush1.xpose.msra.mxu0 0.0
        %2926 = vmatprep.subr.mxu0 0.0
        %2927 = vmatpush1.xpose.msra.mxu0 0.0
        %2928 = vmatprep.subr.mxu0 0.0
        %2929 = vmatpush1.xpose.msra.mxu0 0.0
        %2930 = vmatprep.subr.mxu0 0.0
        %2931 = vmatpush1.xpose.msra.mxu0 0.0
        %2932 = vmatprep.subr.mxu0 0.0
        %2933 = vmatpush1.xpose.msra.mxu0 0.0
        %2934 = vmatprep.subr.mxu0 0.0
        %2935 = vmatpush1.xpose.msra.mxu0 0.0
        %2936 = vmatprep.mubr.f32.mxu0 0.0
        %2937 = vmatmul.mubr.f32.gmra.mrb[0].mxu0 %v2868
        %v2938 = vpop.f32.mrb[0].mxu0
        %v2939 = vadd.f32 0.0, %v2938
        %v2940 = vpop.f32.mrb[0].mxu0
        %2941 = vdwg.mxu0
        %v2942 = vmul.f32 %v2939, 0.35355338
        %v2943 = vsel %vm950, %v2942, -1000000.0
        %v2944 = vsel %vm874, %v2943, -inf
        %2945 = vmax.xlane.f32.xlu0 %v2944
        %v2946 = vpop.xlane.xlu0 %2945
        %v2947 = vsub.f32 %v2943, %v2946
        %v2948 = vmul.f32 %v2947, 1.442695
        %v2949 = vpow.pop %v2948
        %v2950 = vsel %vm874, %v2949, 0.0
        %2951 = vadd.xlane.f32.xlu0 %v2950
        %v2952 = vpop.xlane.xlu0 %2951
        %v2953 = vrcp.pop %v2952
        %v2954 = vmul.f32 %v2949, %v2953
        %2955 = vrot.lane.b32.xlu0 %v2136, 40
        %v2956 = vpop.permute.xlu0 %2955
        %v2959 = vsel %vm874, %v2954, 0
        %2961 = vmatprep.subr.mxu0 0.0
        %2962 = vmatpush1.msra.mxu0 %v2956
        %2963 = vmatprep.subr.mxu0 0.0
        %2964 = vmatpush1.msra.mxu0 0.0
        %2965 = vmatprep.subr.mxu0 0.0
        %2966 = vmatpush1.msra.mxu0 0.0
        %2967 = vmatprep.subr.mxu0 0.0
        %2968 = vmatpush1.msra.mxu0 0.0
        %2969 = vmatprep.subr.mxu0 0.0
        %2970 = vmatpush1.msra.mxu0 0.0
        %2971 = vmatprep.subr.mxu0 0.0
        %2972 = vmatpush1.msra.mxu0 0.0
        %2973 = vmatprep.subr.mxu0 0.0
        %2974 = vmatpush1.msra.mxu0 0.0
        %2975 = vmatprep.subr.mxu0 0.0
        %2976 = vmatpush1.msra.mxu0 0.0
        %2977 = vmatprep.subr.mxu0 0.0
        %2978 = vmatpush1.msra.mxu0 0.0
        %2979 = vmatprep.subr.mxu0 0.0
        %2980 = vmatpush1.msra.mxu0 0.0
        %2981 = vmatprep.subr.mxu0 0.0
        %2982 = vmatpush1.msra.mxu0 0.0
        %2983 = vmatprep.subr.mxu0 0.0
        %2984 = vmatpush1.msra.mxu0 0.0
        %2985 = vmatprep.subr.mxu0 0.0
        %2986 = vmatpush1.msra.mxu0 0.0
        %2987 = vmatprep.subr.mxu0 0.0
        %2988 = vmatpush1.msra.mxu0 0.0
        %2989 = vmatprep.subr.mxu0 0.0
        %2990 = vmatpush1.msra.mxu0 0.0
        %2991 = vmatprep.subr.mxu0 0.0
        %2992 = vmatpush1.msra.mxu0 0.0
        %2993 = vmatprep.subr.mxu0 0.0
        %2994 = vmatpush1.msra.mxu0 0.0
        %2995 = vmatprep.subr.mxu0 0.0
        %2996 = vmatpush1.msra.mxu0 0.0
        %2997 = vmatprep.subr.mxu0 0.0
        %2998 = vmatpush1.msra.mxu0 0.0
        %2999 = vmatprep.subr.mxu0 0.0
        %3000 = vmatpush1.msra.mxu0 0.0
        %3001 = vmatprep.subr.mxu0 0.0
        %3002 = vmatpush1.msra.mxu0 0.0
        %3003 = vmatprep.subr.mxu0 0.0
        %3004 = vmatpush1.msra.mxu0 0.0
        %3005 = vmatprep.subr.mxu0 0.0
        %3006 = vmatpush1.msra.mxu0 0.0
        %3007 = vmatprep.subr.mxu0 0.0
        %3008 = vmatpush1.msra.mxu0 0.0
        %3009 = vmatprep.subr.mxu0 0.0
        %3010 = vmatpush1.msra.mxu0 0.0
        %3011 = vmatprep.subr.mxu0 0.0
        %3012 = vmatpush1.msra.mxu0 0.0
        %3013 = vmatprep.subr.mxu0 0.0
        %3014 = vmatpush1.msra.mxu0 0.0
        %3015 = vmatprep.subr.mxu0 0.0
        %3016 = vmatpush1.msra.mxu0 0.0
        %3017 = vmatprep.subr.mxu0 0.0
        %3018 = vmatpush1.msra.mxu0 0.0
        %3019 = vmatprep.subr.mxu0 0.0
        %3020 = vmatpush1.msra.mxu0 0.0
        %3021 = vmatprep.subr.mxu0 0.0
        %3022 = vmatpush1.msra.mxu0 0.0
        %3023 = vmatprep.subr.mxu0 0.0
        %3024 = vmatpush1.msra.mxu0 0.0
        %3025 = vmatprep.mubr.f32.mxu0 0.0
        %3026 = vmatmul.mubr.f32.gmra.mrb[0].mxu0 %v2959
        %v3027 = vpop.f32.mrb[0].mxu0
        %v3028 = vadd.f32 0.0, %v3027
        %v3029 = vpop.f32.mrb[0].mxu0
        %3030 = vdwg.mxu0
        %v3032 = vsel %vm874, %v3028, 0
        %3034 = vmatprep.subr.mxu0 0.0
        %3035 = vmatpush1.msra.mxu0 %v2143
        %3036 = vmatprep.subr.mxu0 0.0
        %3037 = vmatpush1.msra.mxu0 0.0
        %3038 = vmatprep.subr.mxu0 0.0
        %3039 = vmatpush1.msra.mxu0 0.0
        %3040 = vmatprep.subr.mxu0 0.0
        %3041 = vmatpush1.msra.mxu0 0.0
        %3042 = vmatprep.subr.mxu0 0.0
        %3043 = vmatpush1.msra.mxu0 0.0
        %3044 = vmatprep.subr.mxu0 0.0
        %3045 = vmatpush1.msra.mxu0 0.0
        %3046 = vmatprep.subr.mxu0 0.0
        %3047 = vmatpush1.msra.mxu0 0.0
        %3048 = vmatprep.subr.mxu0 0.0
        %3049 = vmatpush1.msra.mxu0 0.0
        %3050 = vmatprep.subr.mxu0 0.0
        %3051 = vmatpush1.msra.mxu0 0.0
        %3052 = vmatprep.subr.mxu0 0.0
        %3053 = vmatpush1.msra.mxu0 0.0
        %3054 = vmatprep.subr.mxu0 0.0
        %3055 = vmatpush1.msra.mxu0 0.0
        %3056 = vmatprep.subr.mxu0 0.0
        %3057 = vmatpush1.msra.mxu0 0.0
        %3058 = vmatprep.subr.mxu0 0.0
        %3059 = vmatpush1.msra.mxu0 0.0
        %3060 = vmatprep.subr.mxu0 0.0
        %3061 = vmatpush1.msra.mxu0 0.0
        %3062 = vmatprep.subr.mxu0 0.0
        %3063 = vmatpush1.msra.mxu0 0.0
        %3064 = vmatprep.subr.mxu0 0.0
        %3065 = vmatpush1.msra.mxu0 0.0
        %3066 = vmatprep.subr.mxu0 0.0
        %3067 = vmatpush1.msra.mxu0 0.0
        %3068 = vmatprep.subr.mxu0 0.0
        %3069 = vmatpush1.msra.mxu0 0.0
        %3070 = vmatprep.subr.mxu0 0.0
        %3071 = vmatpush1.msra.mxu0 0.0
        %3072 = vmatprep.subr.mxu0 0.0
        %3073 = vmatpush1.msra.mxu0 0.0
        %3074 = vmatprep.subr.mxu0 0.0
        %3075 = vmatpush1.msra.mxu0 0.0
        %3076 = vmatprep.subr.mxu0 0.0
        %3077 = vmatpush1.msra.mxu0 0.0
        %3078 = vmatprep.subr.mxu0 0.0
        %3079 = vmatpush1.msra.mxu0 0.0
        %3080 = vmatprep.subr.mxu0 0.0
        %3081 = vmatpush1.msra.mxu0 0.0
        %3082 = vmatprep.subr.mxu0 0.0
        %3083 = vmatpush1.msra.mxu0 0.0
        %3084 = vmatprep.subr.mxu0 0.0
        %3085 = vmatpush1.msra.mxu0 0.0
        %3086 = vmatprep.subr.mxu0 0.0
        %3087 = vmatpush1.msra.mxu0 0.0
        %3088 = vmatprep.subr.mxu0 0.0
        %3089 = vmatpush1.msra.mxu0 0.0
        %3090 = vmatprep.subr.mxu0 0.0
        %3091 = vmatpush1.msra.mxu0 0.0
        %3092 = vmatprep.subr.mxu0 0.0
        %3093 = vmatpush1.msra.mxu0 0.0
        %3094 = vmatprep.subr.mxu0 0.0
        %3095 = vmatpush1.msra.mxu0 0.0
        %3096 = vmatprep.subr.mxu0 0.0
        %3097 = vmatpush1.msra.mxu0 0.0
        %3098 = vmatprep.mubr.f32.mxu0 0.0
        %3099 = vmatmul.mubr.f32.gmra.mrb[0].mxu0 %v3032
        %v3100 = vpop.f32.mrb[0].mxu0
        %v3101 = vadd.f32 0.0, %v3100
        %v3102 = vpop.f32.mrb[0].mxu0
        %3103 = vdwg.mxu0
        %v3104 = vadd.f32 %v2863, %v3101
        %v3105 = vadd.f32 %v2058, %v3104
        %v3106 = vsel %vm793, %v3105, 0.0
        %3107 = vadd.xlane.f32.xlu0 %v3106
        %v3108 = vpop.xlane.xlu0 %3107
        %v3109 = vmul.f32 %v3108, %v1838
        %v3110 = vsub.f32 %v3105, %v3109
        %v3111 = vmul.f32 %v3110, %v3110
        %v3112 = vsel %vm793, %v3111, 0.0
        %3113 = vadd.xlane.f32.xlu0 %v3112
        %v3114 = vpop.xlane.xlu0 %3113
        %v3115 = vmul.f32 %v3114, %v1838
        %v3116 = vadd.f32 %v3115, 1e-05
        %v3117 = vrsqrt.pop %v3116
        %v3118 = vmul.f32 %v3110, %v3117
        %v3119 = vlaneseq
        %v3120 = vshrl.u32 %v3119, 7
        %v3121 = vsub.s32 0, %v3120
        %v3122 = vrot.slane %v2060, %v3121
        %v3123 = vmul.f32 %v3118, %v3122
        %v3124 = vlaneseq
        %v3125 = vshrl.u32 %v3124, 7
        %v3126 = vsub.s32 1, %v3125
        %v3127 = vrot.slane %v2060, %v3126
        %v3128 = vadd.f32 %v3123, %v3127
        %s3129 = scalar_lea.vmem %s8, 32
        %v3130 = vld [vmem:[%s3129] sm:$0xff]
        %v3131 = vld [vmem:[%s3129 + $0x8] sm:$0xff]
        %v3132 = vld [vmem:[%s3129 + $0x10] sm:$0xff]
        %v3133 = vld [vmem:[%s3129 + $0x18] sm:$0xff]
        %s3134 = scalar_lea.vmem %s9, 1
        %v3135 = vld [vmem:[%s3134] sm:$0x1]
        %s3136 = scalar_lea.vmem %s10, 64
        %v3137 = vld [vmem:[%s3136] sm:$0xff]
        %v3138 = vld [vmem:[%s3136 + $0x8] sm:$0xff]
        %v3139 = vld [vmem:[%s3136 + $0x10] sm:$0xff]
        %v3140 = vld [vmem:[%s3136 + $0x18] sm:$0xff]
        %v3141 = vld [vmem:[%s3136 + $0x20] sm:$0xff]
        %v3142 = vld [vmem:[%s3136 + $0x28] sm:$0xff]
        %v3143 = vld [vmem:[%s3136 + $0x30] sm:$0xff]
        %v3144 = vld [vmem:[%s3136 + $0x38] sm:$0xff]
        %s3145 = scalar_lea.vmem %s11, 1
        %v3146 = vld [vmem:[%s3145] sm:$0x1]
        %v3148 = vlaneseq
        %v3149 = vshrl.u32 %v3148, 7
        %v3150 = vsub.s32 0, %v3149
        %v3151 = vrot.slane %v3135, %v3150
        %v3154 = vsel %vm793, %v3128, 0
        %3156 = vmatprep.subr.mxu0 0.0
        %3157 = vmatpush1.msra.mxu0 %v3130
        %3158 = vmatprep.subr.mxu0 0.0
        %3159 = vmatpush1.msra.mxu0 %v3131
        %3160 = vmatprep.subr.mxu0 0.0
        %3161 = vmatpush1.msra.mxu0 %v3132
        %3162 = vmatprep.subr.mxu0 0.0
        %3163 = vmatpush1.msra.mxu0 %v3133
        %3164 = vmatprep.subr.mxu0 0.0
        %3165 = vmatpush1.msra.mxu0 0.0
        %3166 = vmatprep.subr.mxu0 0.0
        %3167 = vmatpush1.msra.mxu0 0.0
        %3168 = vmatprep.subr.mxu0 0.0
        %3169 = vmatpush1.msra.mxu0 0.0
        %3170 = vmatprep.subr.mxu0 0.0
        %3171 = vmatpush1.msra.mxu0 0.0
        %3172 = vmatprep.subr.mxu0 0.0
        %3173 = vmatpush1.msra.mxu0 0.0
        %3174 = vmatprep.subr.mxu0 0.0
        %3175 = vmatpush1.msra.mxu0 0.0
        %3176 = vmatprep.subr.mxu0 0.0
        %3177 = vmatpush1.msra.mxu0 0.0
        %3178 = vmatprep.subr.mxu0 0.0
        %3179 = vmatpush1.msra.mxu0 0.0
        %3180 = vmatprep.subr.mxu0 0.0
        %3181 = vmatpush1.msra.mxu0 0.0
        %3182 = vmatprep.subr.mxu0 0.0
        %3183 = vmatpush1.msra.mxu0 0.0
        %3184 = vmatprep.subr.mxu0 0.0
        %3185 = vmatpush1.msra.mxu0 0.0
        %3186 = vmatprep.subr.mxu0 0.0
        %3187 = vmatpush1.msra.mxu0 0.0
        %3188 = vmatprep.subr.mxu0 0.0
        %3189 = vmatpush1.msra.mxu0 0.0
        %3190 = vmatprep.subr.mxu0 0.0
        %3191 = vmatpush1.msra.mxu0 0.0
        %3192 = vmatprep.subr.mxu0 0.0
        %3193 = vmatpush1.msra.mxu0 0.0
        %3194 = vmatprep.subr.mxu0 0.0
        %3195 = vmatpush1.msra.mxu0 0.0
        %3196 = vmatprep.subr.mxu0 0.0
        %3197 = vmatpush1.msra.mxu0 0.0
        %3198 = vmatprep.subr.mxu0 0.0
        %3199 = vmatpush1.msra.mxu0 0.0
        %3200 = vmatprep.subr.mxu0 0.0
        %3201 = vmatpush1.msra.mxu0 0.0
        %3202 = vmatprep.subr.mxu0 0.0
        %3203 = vmatpush1.msra.mxu0 0.0
        %3204 = vmatprep.subr.mxu0 0.0
        %3205 = vmatpush1.msra.mxu0 0.0
        %3206 = vmatprep.subr.mxu0 0.0
        %3207 = vmatpush1.msra.mxu0 0.0
        %3208 = vmatprep.subr.mxu0 0.0
        %3209 = vmatpush1.msra.mxu0 0.0
        %3210 = vmatprep.subr.mxu0 0.0
        %3211 = vmatpush1.msra.mxu0 0.0
        %3212 = vmatprep.subr.mxu0 0.0
        %3213 = vmatpush1.msra.mxu0 0.0
        %3214 = vmatprep.subr.mxu0 0.0
        %3215 = vmatpush1.msra.mxu0 0.0
        %3216 = vmatprep.subr.mxu0 0.0
        %3217 = vmatpush1.msra.mxu0 0.0
        %3218 = vmatprep.subr.mxu0 0.0
        %3219 = vmatpush1.msra.mxu0 0.0
        %3220 = vmatprep.mubr.f32.mxu0 0.0
        %3221 = vmatmul.mubr.f32.gmra.mrb[0].mxu0 %v3154
        %v3222 = vpop.f32.mrb[0].mxu0
        %v3223 = vadd.f32 %v3151, %v3222
        %v3224 = vpop.f32.mrb[0].mxu0
        %3225 = vdwg.mxu0
        %vm3226 = vcmp.gt.f32.partialorder %v3223, 0.0
        %v3227 = vmul.f32 %v3223, 0.01
        %v3228 = vsel %vm3226, %v3223, %v3227
        %v3230 = vlaneseq
        %v3231 = vshrl.u32 %v3230, 7
        %v3232 = vsub.s32 0, %v3231
        %v3233 = vrot.slane %v3146, %v3232
        %v3236 = vsel %vm1961, %v3228, 0
        %3238 = vmatprep.subr.mxu0 0.0
        %3239 = vmatpush1.msra.mxu0 %v3137
        %3240 = vmatprep.subr.mxu0 0.0
        %3241 = vmatpush1.msra.mxu0 %v3138
        %3242 = vmatprep.subr.mxu0 0.0
        %3243 = vmatpush1.msra.mxu0 %v3139
        %3244 = vmatprep.subr.mxu0 0.0
        %3245 = vmatpush1.msra.mxu0 %v3140
        %3246 = vmatprep.subr.mxu0 0.0
        %3247 = vmatpush1.msra.mxu0 %v3141
        %3248 = vmatprep.subr.mxu0 0.0
        %3249 = vmatpush1.msra.mxu0 %v3142
        %3250 = vmatprep.subr.mxu0 0.0
        %3251 = vmatpush1.msra.mxu0 %v3143
        %3252 = vmatprep.subr.mxu0 0.0
        %3253 = vmatpush1.msra.mxu0 %v3144
        %3254 = vmatprep.subr.mxu0 0.0
        %3255 = vmatpush1.msra.mxu0 0.0
        %3256 = vmatprep.subr.mxu0 0.0
        %3257 = vmatpush1.msra.mxu0 0.0
        %3258 = vmatprep.subr.mxu0 0.0
        %3259 = vmatpush1.msra.mxu0 0.0
        %3260 = vmatprep.subr.mxu0 0.0
        %3261 = vmatpush1.msra.mxu0 0.0
        %3262 = vmatprep.subr.mxu0 0.0
        %3263 = vmatpush1.msra.mxu0 0.0
        %3264 = vmatprep.subr.mxu0 0.0
        %3265 = vmatpush1.msra.mxu0 0.0
        %3266 = vmatprep.subr.mxu0 0.0
        %3267 = vmatpush1.msra.mxu0 0.0
        %3268 = vmatprep.subr.mxu0 0.0
        %3269 = vmatpush1.msra.mxu0 0.0
        %3270 = vmatprep.subr.mxu0 0.0
        %3271 = vmatpush1.msra.mxu0 0.0
        %3272 = vmatprep.subr.mxu0 0.0
        %3273 = vmatpush1.msra.mxu0 0.0
        %3274 = vmatprep.subr.mxu0 0.0
        %3275 = vmatpush1.msra.mxu0 0.0
        %3276 = vmatprep.subr.mxu0 0.0
        %3277 = vmatpush1.msra.mxu0 0.0
        %3278 = vmatprep.subr.mxu0 0.0
        %3279 = vmatpush1.msra.mxu0 0.0
        %3280 = vmatprep.subr.mxu0 0.0
        %3281 = vmatpush1.msra.mxu0 0.0
        %3282 = vmatprep.subr.mxu0 0.0
        %3283 = vmatpush1.msra.mxu0 0.0
        %3284 = vmatprep.subr.mxu0 0.0
        %3285 = vmatpush1.msra.mxu0 0.0
        %3286 = vmatprep.subr.mxu0 0.0
        %3287 = vmatpush1.msra.mxu0 0.0
        %3288 = vmatprep.subr.mxu0 0.0
        %3289 = vmatpush1.msra.mxu0 0.0
        %3290 = vmatprep.subr.mxu0 0.0
        %3291 = vmatpush1.msra.mxu0 0.0
        %3292 = vmatprep.subr.mxu0 0.0
        %3293 = vmatpush1.msra.mxu0 0.0
        %3294 = vmatprep.subr.mxu0 0.0
        %3295 = vmatpush1.msra.mxu0 0.0
        %3296 = vmatprep.subr.mxu0 0.0
        %3297 = vmatpush1.msra.mxu0 0.0
        %3298 = vmatprep.subr.mxu0 0.0
        %3299 = vmatpush1.msra.mxu0 0.0
        %3300 = vmatprep.subr.mxu0 0.0
        %3301 = vmatpush1.msra.mxu0 0.0
        %3302 = vmatprep.mubr.f32.mxu0 0.0
        %3303 = vmatmul.mubr.f32.gmra.mrb[0].mxu0 %v3236
        %v3304 = vpop.f32.mrb[0].mxu0
        %v3305 = vadd.f32 %v3233, %v3304
        %v3306 = vpop.f32.mrb[0].mxu0
        %3307 = vdwg.mxu0
        %v3308 = vadd.f32 %v3128, %v3305
        %v3309 = vsel %vm793, %v3308, 0.0
        %3310 = vadd.xlane.f32.xlu0 %v3309
        %v3311 = vpop.xlane.xlu0 %3310
        %v3312 = vmul.f32 %v3311, %v1838
        %v3313 = vsub.f32 %v3308, %v3312
        %v3314 = vmul.f32 %v3313, %v3313
        %v3315 = vsel %vm793, %v3314, 0.0
        %3316 = vadd.xlane.f32.xlu0 %v3315
        %v3317 = vpop.xlane.xlu0 %3316
        %v3318 = vmul.f32 %v3317, %v1838
        %v3319 = vadd.f32 %v3318, 1e-05
        %v3320 = vrsqrt.pop %v3319
        %v3321 = vmul.f32 %v3313, %v3320
        %v3322 = vlaneseq
        %v3323 = vshrl.u32 %v3322, 7
        %v3324 = vsub.s32 2, %v3323
        %v3325 = vrot.slane %v2060, %v3324
        %v3326 = vmul.f32 %v3321, %v3325
        %v3327 = vlaneseq
        %v3328 = vshrl.u32 %v3327, 7
        %v3329 = vsub.s32 3, %v3328
        %v3330 = vrot.slane %v2060, %v3329
        %v3331 = vadd.f32 %v3326, %v3330
        %v3332 = vld [vmem:[%s775] sm:$0xff]
        %v3333 = vld [vmem:[%s17] sm:$0x3f]
        %v3334 = vld [vmem:[%s12] sm:$0xff]
        %v3335 = vld [vmem:[%s12 + $0x8] sm:$0xff]
        %v3336 = vld [vmem:[%s12 + $0x10] sm:$0xff]
        %v3337 = vld [vmem:[%s12 + $0x18] sm:$0xff]
        %v3339 = vsel %vm793, %v3332, 0
        %3341 = vmatprep.subr.mxu0 0.0
        %3342 = vmatpush1.msra.mxu0 %v3334
        %3343 = vmatprep.subr.mxu0 0.0
        %3344 = vmatpush1.msra.mxu0 %v3335
        %3345 = vmatprep.subr.mxu0 0.0
        %3346 = vmatpush1.msra.mxu0 %v3336
        %3347 = vmatprep.subr.mxu0 0.0
        %3348 = vmatpush1.msra.mxu0 %v3337
        %3349 = vmatprep.subr.mxu0 0.0
        %3350 = vmatpush1.msra.mxu0 0.0
        %3351 = vmatprep.subr.mxu0 0.0
        %3352 = vmatpush1.msra.mxu0 0.0
        %3353 = vmatprep.subr.mxu0 0.0
        %3354 = vmatpush1.msra.mxu0 0.0
        %3355 = vmatprep.subr.mxu0 0.0
        %3356 = vmatpush1.msra.mxu0 0.0
        %3357 = vmatprep.subr.mxu0 0.0
        %3358 = vmatpush1.msra.mxu0 0.0
        %3359 = vmatprep.subr.mxu0 0.0
        %3360 = vmatpush1.msra.mxu0 0.0
        %3361 = vmatprep.subr.mxu0 0.0
        %3362 = vmatpush1.msra.mxu0 0.0
        %3363 = vmatprep.subr.mxu0 0.0
        %3364 = vmatpush1.msra.mxu0 0.0
        %3365 = vmatprep.subr.mxu0 0.0
        %3366 = vmatpush1.msra.mxu0 0.0
        %3367 = vmatprep.subr.mxu0 0.0
        %3368 = vmatpush1.msra.mxu0 0.0
        %3369 = vmatprep.subr.mxu0 0.0
        %3370 = vmatpush1.msra.mxu0 0.0
        %3371 = vmatprep.subr.mxu0 0.0
        %3372 = vmatpush1.msra.mxu0 0.0
        %3373 = vmatprep.subr.mxu0 0.0
        %3374 = vmatpush1.msra.mxu0 0.0
        %3375 = vmatprep.subr.mxu0 0.0
        %3376 = vmatpush1.msra.mxu0 0.0
        %3377 = vmatprep.subr.mxu0 0.0
        %3378 = vmatpush1.msra.mxu0 0.0
        %3379 = vmatprep.subr.mxu0 0.0
        %3380 = vmatpush1.msra.mxu0 0.0
        %3381 = vmatprep.subr.mxu0 0.0
        %3382 = vmatpush1.msra.mxu0 0.0
        %3383 = vmatprep.subr.mxu0 0.0
        %3384 = vmatpush1.msra.mxu0 0.0
        %3385 = vmatprep.subr.mxu0 0.0
        %3386 = vmatpush1.msra.mxu0 0.0
        %3387 = vmatprep.subr.mxu0 0.0
        %3388 = vmatpush1.msra.mxu0 0.0
        %3389 = vmatprep.subr.mxu0 0.0
        %3390 = vmatpush1.msra.mxu0 0.0
        %3391 = vmatprep.subr.mxu0 0.0
        %3392 = vmatpush1.msra.mxu0 0.0
        %3393 = vmatprep.subr.mxu0 0.0
        %3394 = vmatpush1.msra.mxu0 0.0
        %3395 = vmatprep.subr.mxu0 0.0
        %3396 = vmatpush1.msra.mxu0 0.0
        %3397 = vmatprep.subr.mxu0 0.0
        %3398 = vmatpush1.msra.mxu0 0.0
        %3399 = vmatprep.subr.mxu0 0.0
        %3400 = vmatpush1.msra.mxu0 0.0
        %3401 = vmatprep.subr.mxu0 0.0
        %3402 = vmatpush1.msra.mxu0 0.0
        %3403 = vmatprep.subr.mxu0 0.0
        %3404 = vmatpush1.msra.mxu0 0.0
        %3405 = vmatprep.mubr.f32.mxu0 0.0
        %3406 = vmatmul.mubr.f32.gmra.mrb[0].mxu0 %v3339
        %v3407 = vpop.f32.mrb[0].mxu0
        %v3408 = vadd.f32 0.0, %v3407
        %v3409 = vpop.f32.mrb[0].mxu0
        %3410 = vdwg.mxu0
        %v3411 = vld [vmem:[%s13] sm:$0xff]
        %v3412 = vld [vmem:[%s13 + $0x8] sm:$0xff]
        %v3413 = vld [vmem:[%s13 + $0x10] sm:$0xff]
        %v3414 = vld [vmem:[%s13 + $0x18] sm:$0xff]
        %3416 = vrot.lane.b32.xlu0 %v3408, 96
        %v3417 = vpop.permute.xlu0 %3416
        %v3418 = vsel %vm874, %v3408, 0
        %v3420 = vsel %vm874, %v3417, 0
        %3422 = vmatprep.subr.mxu0 0.0
        %3423 = vmatpush1.xpose.msra.mxu0 %v3420
        %3424 = vmatprep.subr.mxu0 0.0
        %3425 = vmatpush1.xpose.msra.mxu0 0.0
        %3426 = vmatprep.subr.mxu0 0.0
        %3427 = vmatpush1.xpose.msra.mxu0 0.0
        %3428 = vmatprep.subr.mxu0 0.0
        %3429 = vmatpush1.xpose.msra.mxu0 0.0
        %3430 = vmatprep.subr.mxu0 0.0
        %3431 = vmatpush1.xpose.msra.mxu0 0.0
        %3432 = vmatprep.subr.mxu0 0.0
        %3433 = vmatpush1.xpose.msra.mxu0 0.0
        %3434 = vmatprep.subr.mxu0 0.0
        %3435 = vmatpush1.xpose.msra.mxu0 0.0
        %3436 = vmatprep.subr.mxu0 0.0
        %3437 = vmatpush1.xpose.msra.mxu0 0.0
        %3438 = vmatprep.subr.mxu0 0.0
        %3439 = vmatpush1.xpose.msra.mxu0 0.0
        %3440 = vmatprep.subr.mxu0 0.0
        %3441 = vmatpush1.xpose.msra.mxu0 0.0
        %3442 = vmatprep.subr.mxu0 0.0
        %3443 = vmatpush1.xpose.msra.mxu0 0.0
        %3444 = vmatprep.subr.mxu0 0.0
        %3445 = vmatpush1.xpose.msra.mxu0 0.0
        %3446 = vmatprep.subr.mxu0 0.0
        %3447 = vmatpush1.xpose.msra.mxu0 0.0
        %3448 = vmatprep.subr.mxu0 0.0
        %3449 = vmatpush1.xpose.msra.mxu0 0.0
        %3450 = vmatprep.subr.mxu0 0.0
        %3451 = vmatpush1.xpose.msra.mxu0 0.0
        %3452 = vmatprep.subr.mxu0 0.0
        %3453 = vmatpush1.xpose.msra.mxu0 0.0
        %3454 = vmatprep.subr.mxu0 0.0
        %3455 = vmatpush1.xpose.msra.mxu0 0.0
        %3456 = vmatprep.subr.mxu0 0.0
        %3457 = vmatpush1.xpose.msra.mxu0 0.0
        %3458 = vmatprep.subr.mxu0 0.0
        %3459 = vmatpush1.xpose.msra.mxu0 0.0
        %3460 = vmatprep.subr.mxu0 0.0
        %3461 = vmatpush1.xpose.msra.mxu0 0.0
        %3462 = vmatprep.subr.mxu0 0.0
        %3463 = vmatpush1.xpose.msra.mxu0 0.0
        %3464 = vmatprep.subr.mxu0 0.0
        %3465 = vmatpush1.xpose.msra.mxu0 0.0
        %3466 = vmatprep.subr.mxu0 0.0
        %3467 = vmatpush1.xpose.msra.mxu0 0.0
        %3468 = vmatprep.subr.mxu0 0.0
        %3469 = vmatpush1.xpose.msra.mxu0 0.0
        %3470 = vmatprep.subr.mxu0 0.0
        %3471 = vmatpush1.xpose.msra.mxu0 0.0
        %3472 = vmatprep.subr.mxu0 0.0
        %3473 = vmatpush1.xpose.msra.mxu0 0.0
        %3474 = vmatprep.subr.mxu0 0.0
        %3475 = vmatpush1.xpose.msra.mxu0 0.0
        %3476 = vmatprep.subr.mxu0 0.0
        %3477 = vmatpush1.xpose.msra.mxu0 0.0
        %3478 = vmatprep.subr.mxu0 0.0
        %3479 = vmatpush1.xpose.msra.mxu0 0.0
        %3480 = vmatprep.subr.mxu0 0.0
        %3481 = vmatpush1.xpose.msra.mxu0 0.0
        %3482 = vmatprep.subr.mxu0 0.0
        %3483 = vmatpush1.xpose.msra.mxu0 0.0
        %3484 = vmatprep.subr.mxu0 0.0
        %3485 = vmatpush1.xpose.msra.mxu0 0.0
        %3486 = vmatprep.mubr.f32.mxu0 0.0
        %3487 = vmatmul.mubr.f32.gmra.mrb[0].mxu0 %v3418
        %v3488 = vpop.f32.mrb[0].mxu0
        %v3489 = vadd.f32 0.0, %v3488
        %v3490 = vpop.f32.mrb[0].mxu0
        %3491 = vdwg.mxu0
        %v3492 = vmul.f32 %v3489, 0.35355338
        %vm3493 = vcmp.gt.f32.partialorder %v785, 0.5
        %v3494 = vsel %vm3493, %v3492, -1000000.0
        %v3495 = vsel %vm874, %v3494, -inf
        %3496 = vmax.xlane.f32.xlu0 %v3495
        %v3497 = vpop.xlane.xlu0 %3496
        %v3498 = vsub.f32 %v3494, %v3497
        %v3499 = vmul.f32 %v3498, 1.442695
        %v3500 = vpow.pop %v3499
        %v3501 = vsel %vm874, %v3500, 0.0
        %3502 = vadd.xlane.f32.xlu0 %v3501
        %v3503 = vpop.xlane.xlu0 %3502
        %v3504 = vrcp.pop %v3503
        %v3505 = vmul.f32 %v3500, %v3504
        %3506 = vrot.lane.b32.xlu0 %v3408, 64
        %v3507 = vpop.permute.xlu0 %3506
        %v3510 = vsel %vm874, %v3505, 0
        %3512 = vmatprep.subr.mxu0 0.0
        %3513 = vmatpush1.msra.mxu0 %v3507
        %3514 = vmatprep.subr.mxu0 0.0
        %3515 = vmatpush1.msra.mxu0 0.0
        %3516 = vmatprep.subr.mxu0 0.0
        %3517 = vmatpush1.msra.mxu0 0.0
        %3518 = vmatprep.subr.mxu0 0.0
        %3519 = vmatpush1.msra.mxu0 0.0
        %3520 = vmatprep.subr.mxu0 0.0
        %3521 = vmatpush1.msra.mxu0 0.0
        %3522 = vmatprep.subr.mxu0 0.0
        %3523 = vmatpush1.msra.mxu0 0.0
        %3524 = vmatprep.subr.mxu0 0.0
        %3525 = vmatpush1.msra.mxu0 0.0
        %3526 = vmatprep.subr.mxu0 0.0
        %3527 = vmatpush1.msra.mxu0 0.0
        %3528 = vmatprep.subr.mxu0 0.0
        %3529 = vmatpush1.msra.mxu0 0.0
        %3530 = vmatprep.subr.mxu0 0.0
        %3531 = vmatpush1.msra.mxu0 0.0
        %3532 = vmatprep.subr.mxu0 0.0
        %3533 = vmatpush1.msra.mxu0 0.0
        %3534 = vmatprep.subr.mxu0 0.0
        %3535 = vmatpush1.msra.mxu0 0.0
        %3536 = vmatprep.subr.mxu0 0.0
        %3537 = vmatpush1.msra.mxu0 0.0
        %3538 = vmatprep.subr.mxu0 0.0
        %3539 = vmatpush1.msra.mxu0 0.0
        %3540 = vmatprep.subr.mxu0 0.0
        %3541 = vmatpush1.msra.mxu0 0.0
        %3542 = vmatprep.subr.mxu0 0.0
        %3543 = vmatpush1.msra.mxu0 0.0
        %3544 = vmatprep.subr.mxu0 0.0
        %3545 = vmatpush1.msra.mxu0 0.0
        %3546 = vmatprep.subr.mxu0 0.0
        %3547 = vmatpush1.msra.mxu0 0.0
        %3548 = vmatprep.subr.mxu0 0.0
        %3549 = vmatpush1.msra.mxu0 0.0
        %3550 = vmatprep.subr.mxu0 0.0
        %3551 = vmatpush1.msra.mxu0 0.0
        %3552 = vmatprep.subr.mxu0 0.0
        %3553 = vmatpush1.msra.mxu0 0.0
        %3554 = vmatprep.subr.mxu0 0.0
        %3555 = vmatpush1.msra.mxu0 0.0
        %3556 = vmatprep.subr.mxu0 0.0
        %3557 = vmatpush1.msra.mxu0 0.0
        %3558 = vmatprep.subr.mxu0 0.0
        %3559 = vmatpush1.msra.mxu0 0.0
        %3560 = vmatprep.subr.mxu0 0.0
        %3561 = vmatpush1.msra.mxu0 0.0
        %3562 = vmatprep.subr.mxu0 0.0
        %3563 = vmatpush1.msra.mxu0 0.0
        %3564 = vmatprep.subr.mxu0 0.0
        %3565 = vmatpush1.msra.mxu0 0.0
        %3566 = vmatprep.subr.mxu0 0.0
        %3567 = vmatpush1.msra.mxu0 0.0
        %3568 = vmatprep.subr.mxu0 0.0
        %3569 = vmatpush1.msra.mxu0 0.0
        %3570 = vmatprep.subr.mxu0 0.0
        %3571 = vmatpush1.msra.mxu0 0.0
        %3572 = vmatprep.subr.mxu0 0.0
        %3573 = vmatpush1.msra.mxu0 0.0
        %3574 = vmatprep.subr.mxu0 0.0
        %3575 = vmatpush1.msra.mxu0 0.0
        %3576 = vmatprep.mubr.f32.mxu0 0.0
        %3577 = vmatmul.mubr.f32.gmra.mrb[0].mxu0 %v3510
        %v3578 = vpop.f32.mrb[0].mxu0
        %v3579 = vadd.f32 0.0, %v3578
        %v3580 = vpop.f32.mrb[0].mxu0
        %3581 = vdwg.mxu0
        %3582 = vrot.lane.b32.xlu0 %v3408, 120
        %v3583 = vpop.permute.xlu0 %3582
        %3584 = vrot.lane.b32.xlu0 %v3408, 88
        %v3585 = vpop.permute.xlu0 %3584
        %v3586 = vsel %vm874, %v3583, 0
        %v3588 = vsel %vm874, %v3585, 0
        %3590 = vmatprep.subr.mxu0 0.0
        %3591 = vmatpush1.xpose.msra.mxu0 %v3588
        %3592 = vmatprep.subr.mxu0 0.0
        %3593 = vmatpush1.xpose.msra.mxu0 0.0
        %3594 = vmatprep.subr.mxu0 0.0
        %3595 = vmatpush1.xpose.msra.mxu0 0.0
        %3596 = vmatprep.subr.mxu0 0.0
        %3597 = vmatpush1.xpose.msra.mxu0 0.0
        %3598 = vmatprep.subr.mxu0 0.0
        %3599 = vmatpush1.xpose.msra.mxu0 0.0
        %3600 = vmatprep.subr.mxu0 0.0
        %3601 = vmatpush1.xpose.msra.mxu0 0.0
        %3602 = vmatprep.subr.mxu0 0.0
        %3603 = vmatpush1.xpose.msra.mxu0 0.0
        %3604 = vmatprep.subr.mxu0 0.0
        %3605 = vmatpush1.xpose.msra.mxu0 0.0
        %3606 = vmatprep.subr.mxu0 0.0
        %3607 = vmatpush1.xpose.msra.mxu0 0.0
        %3608 = vmatprep.subr.mxu0 0.0
        %3609 = vmatpush1.xpose.msra.mxu0 0.0
        %3610 = vmatprep.subr.mxu0 0.0
        %3611 = vmatpush1.xpose.msra.mxu0 0.0
        %3612 = vmatprep.subr.mxu0 0.0
        %3613 = vmatpush1.xpose.msra.mxu0 0.0
        %3614 = vmatprep.subr.mxu0 0.0
        %3615 = vmatpush1.xpose.msra.mxu0 0.0
        %3616 = vmatprep.subr.mxu0 0.0
        %3617 = vmatpush1.xpose.msra.mxu0 0.0
        %3618 = vmatprep.subr.mxu0 0.0
        %3619 = vmatpush1.xpose.msra.mxu0 0.0
        %3620 = vmatprep.subr.mxu0 0.0
        %3621 = vmatpush1.xpose.msra.mxu0 0.0
        %3622 = vmatprep.subr.mxu0 0.0
        %3623 = vmatpush1.xpose.msra.mxu0 0.0
        %3624 = vmatprep.subr.mxu0 0.0
        %3625 = vmatpush1.xpose.msra.mxu0 0.0
        %3626 = vmatprep.subr.mxu0 0.0
        %3627 = vmatpush1.xpose.msra.mxu0 0.0
        %3628 = vmatprep.subr.mxu0 0.0
        %3629 = vmatpush1.xpose.msra.mxu0 0.0
        %3630 = vmatprep.subr.mxu0 0.0
        %3631 = vmatpush1.xpose.msra.mxu0 0.0
        %3632 = vmatprep.subr.mxu0 0.0
        %3633 = vmatpush1.xpose.msra.mxu0 0.0
        %3634 = vmatprep.subr.mxu0 0.0
        %3635 = vmatpush1.xpose.msra.mxu0 0.0
        %3636 = vmatprep.subr.mxu0 0.0
        %3637 = vmatpush1.xpose.msra.mxu0 0.0
        %3638 = vmatprep.subr.mxu0 0.0
        %3639 = vmatpush1.xpose.msra.mxu0 0.0
        %3640 = vmatprep.subr.mxu0 0.0
        %3641 = vmatpush1.xpose.msra.mxu0 0.0
        %3642 = vmatprep.subr.mxu0 0.0
        %3643 = vmatpush1.xpose.msra.mxu0 0.0
        %3644 = vmatprep.subr.mxu0 0.0
        %3645 = vmatpush1.xpose.msra.mxu0 0.0
        %3646 = vmatprep.subr.mxu0 0.0
        %3647 = vmatpush1.xpose.msra.mxu0 0.0
        %3648 = vmatprep.subr.mxu0 0.0
        %3649 = vmatpush1.xpose.msra.mxu0 0.0
        %3650 = vmatprep.subr.mxu0 0.0
        %3651 = vmatpush1.xpose.msra.mxu0 0.0
        %3652 = vmatprep.subr.mxu0 0.0
        %3653 = vmatpush1.xpose.msra.mxu0 0.0
        %3654 = vmatprep.mubr.f32.mxu0 0.0
        %3655 = vmatmul.mubr.f32.gmra.mrb[0].mxu0 %v3586
        %v3656 = vpop.f32.mrb[0].mxu0
        %v3657 = vadd.f32 0.0, %v3656
        %v3658 = vpop.f32.mrb[0].mxu0
        %3659 = vdwg.mxu0
        %v3660 = vmul.f32 %v3657, 0.35355338
        %v3661 = vsel %vm3493, %v3660, -1000000.0
        %v3662 = vsel %vm874, %v3661, -inf
        %3663 = vmax.xlane.f32.xlu0 %v3662
        %v3664 = vpop.xlane.xlu0 %3663
        %v3665 = vsub.f32 %v3661, %v3664
        %v3666 = vmul.f32 %v3665, 1.442695
        %v3667 = vpow.pop %v3666
        %v3668 = vsel %vm874, %v3667, 0.0
        %3669 = vadd.xlane.f32.xlu0 %v3668
        %v3670 = vpop.xlane.xlu0 %3669
        %v3671 = vrcp.pop %v3670
        %v3672 = vmul.f32 %v3667, %v3671
        %3673 = vrot.lane.b32.xlu0 %v3408, 56
        %v3674 = vpop.permute.xlu0 %3673
        %v3677 = vsel %vm874, %v3672, 0
        %3679 = vmatprep.subr.mxu0 0.0
        %3680 = vmatpush1.msra.mxu0 %v3674
        %3681 = vmatprep.subr.mxu0 0.0
        %3682 = vmatpush1.msra.mxu0 0.0
        %3683 = vmatprep.subr.mxu0 0.0
        %3684 = vmatpush1.msra.mxu0 0.0
        %3685 = vmatprep.subr.mxu0 0.0
        %3686 = vmatpush1.msra.mxu0 0.0
        %3687 = vmatprep.subr.mxu0 0.0
        %3688 = vmatpush1.msra.mxu0 0.0
        %3689 = vmatprep.subr.mxu0 0.0
        %3690 = vmatpush1.msra.mxu0 0.0
        %3691 = vmatprep.subr.mxu0 0.0
        %3692 = vmatpush1.msra.mxu0 0.0
        %3693 = vmatprep.subr.mxu0 0.0
        %3694 = vmatpush1.msra.mxu0 0.0
        %3695 = vmatprep.subr.mxu0 0.0
        %3696 = vmatpush1.msra.mxu0 0.0
        %3697 = vmatprep.subr.mxu0 0.0
        %3698 = vmatpush1.msra.mxu0 0.0
        %3699 = vmatprep.subr.mxu0 0.0
        %3700 = vmatpush1.msra.mxu0 0.0
        %3701 = vmatprep.subr.mxu0 0.0
        %3702 = vmatpush1.msra.mxu0 0.0
        %3703 = vmatprep.subr.mxu0 0.0
        %3704 = vmatpush1.msra.mxu0 0.0
        %3705 = vmatprep.subr.mxu0 0.0
        %3706 = vmatpush1.msra.mxu0 0.0
        %3707 = vmatprep.subr.mxu0 0.0
        %3708 = vmatpush1.msra.mxu0 0.0
        %3709 = vmatprep.subr.mxu0 0.0
        %3710 = vmatpush1.msra.mxu0 0.0
        %3711 = vmatprep.subr.mxu0 0.0
        %3712 = vmatpush1.msra.mxu0 0.0
        %3713 = vmatprep.subr.mxu0 0.0
        %3714 = vmatpush1.msra.mxu0 0.0
        %3715 = vmatprep.subr.mxu0 0.0
        %3716 = vmatpush1.msra.mxu0 0.0
        %3717 = vmatprep.subr.mxu0 0.0
        %3718 = vmatpush1.msra.mxu0 0.0
        %3719 = vmatprep.subr.mxu0 0.0
        %3720 = vmatpush1.msra.mxu0 0.0
        %3721 = vmatprep.subr.mxu0 0.0
        %3722 = vmatpush1.msra.mxu0 0.0
        %3723 = vmatprep.subr.mxu0 0.0
        %3724 = vmatpush1.msra.mxu0 0.0
        %3725 = vmatprep.subr.mxu0 0.0
        %3726 = vmatpush1.msra.mxu0 0.0
        %3727 = vmatprep.subr.mxu0 0.0
        %3728 = vmatpush1.msra.mxu0 0.0
        %3729 = vmatprep.subr.mxu0 0.0
        %3730 = vmatpush1.msra.mxu0 0.0
        %3731 = vmatprep.subr.mxu0 0.0
        %3732 = vmatpush1.msra.mxu0 0.0
        %3733 = vmatprep.subr.mxu0 0.0
        %3734 = vmatpush1.msra.mxu0 0.0
        %3735 = vmatprep.subr.mxu0 0.0
        %3736 = vmatpush1.msra.mxu0 0.0
        %3737 = vmatprep.subr.mxu0 0.0
        %3738 = vmatpush1.msra.mxu0 0.0
        %3739 = vmatprep.subr.mxu0 0.0
        %3740 = vmatpush1.msra.mxu0 0.0
        %3741 = vmatprep.subr.mxu0 0.0
        %3742 = vmatpush1.msra.mxu0 0.0
        %3743 = vmatprep.mubr.f32.mxu0 0.0
        %3744 = vmatmul.mubr.f32.gmra.mrb[0].mxu0 %v3677
        %v3745 = vpop.f32.mrb[0].mxu0
        %v3746 = vadd.f32 0.0, %v3745
        %v3747 = vpop.f32.mrb[0].mxu0
        %3748 = vdwg.mxu0
        %v3750 = vsel %vm874, %v3746, 0
        %3752 = vmatprep.subr.mxu0 0.0
        %3753 = vmatpush1.msra.mxu0 %v3412
        %3754 = vmatprep.subr.mxu0 0.0
        %3755 = vmatpush1.msra.mxu0 0.0
        %3756 = vmatprep.subr.mxu0 0.0
        %3757 = vmatpush1.msra.mxu0 0.0
        %3758 = vmatprep.subr.mxu0 0.0
        %3759 = vmatpush1.msra.mxu0 0.0
        %3760 = vmatprep.subr.mxu0 0.0
        %3761 = vmatpush1.msra.mxu0 0.0
        %3762 = vmatprep.subr.mxu0 0.0
        %3763 = vmatpush1.msra.mxu0 0.0
        %3764 = vmatprep.subr.mxu0 0.0
        %3765 = vmatpush1.msra.mxu0 0.0
        %3766 = vmatprep.subr.mxu0 0.0
        %3767 = vmatpush1.msra.mxu0 0.0
        %3768 = vmatprep.subr.mxu0 0.0
        %3769 = vmatpush1.msra.mxu0 0.0
        %3770 = vmatprep.subr.mxu0 0.0
        %3771 = vmatpush1.msra.mxu0 0.0
        %3772 = vmatprep.subr.mxu0 0.0
        %3773 = vmatpush1.msra.mxu0 0.0
        %3774 = vmatprep.subr.mxu0 0.0
        %3775 = vmatpush1.msra.mxu0 0.0
        %3776 = vmatprep.subr.mxu0 0.0
        %3777 = vmatpush1.msra.mxu0 0.0
        %3778 = vmatprep.subr.mxu0 0.0
        %3779 = vmatpush1.msra.mxu0 0.0
        %3780 = vmatprep.subr.mxu0 0.0
        %3781 = vmatpush1.msra.mxu0 0.0
        %3782 = vmatprep.subr.mxu0 0.0
        %3783 = vmatpush1.msra.mxu0 0.0
        %3784 = vmatprep.subr.mxu0 0.0
        %3785 = vmatpush1.msra.mxu0 0.0
        %3786 = vmatprep.subr.mxu0 0.0
        %3787 = vmatpush1.msra.mxu0 0.0
        %3788 = vmatprep.subr.mxu0 0.0
        %3789 = vmatpush1.msra.mxu0 0.0
        %3790 = vmatprep.subr.mxu0 0.0
        %3791 = vmatpush1.msra.mxu0 0.0
        %3792 = vmatprep.subr.mxu0 0.0
        %3793 = vmatpush1.msra.mxu0 0.0
        %3794 = vmatprep.subr.mxu0 0.0
        %3795 = vmatpush1.msra.mxu0 0.0
        %3796 = vmatprep.subr.mxu0 0.0
        %3797 = vmatpush1.msra.mxu0 0.0
        %3798 = vmatprep.subr.mxu0 0.0
        %3799 = vmatpush1.msra.mxu0 0.0
        %3800 = vmatprep.subr.mxu0 0.0
        %3801 = vmatpush1.msra.mxu0 0.0
        %3802 = vmatprep.subr.mxu0 0.0
        %3803 = vmatpush1.msra.mxu0 0.0
        %3804 = vmatprep.subr.mxu0 0.0
        %3805 = vmatpush1.msra.mxu0 0.0
        %3806 = vmatprep.subr.mxu0 0.0
        %3807 = vmatpush1.msra.mxu0 0.0
        %3808 = vmatprep.subr.mxu0 0.0
        %3809 = vmatpush1.msra.mxu0 0.0
        %3810 = vmatprep.subr.mxu0 0.0
        %3811 = vmatpush1.msra.mxu0 0.0
        %3812 = vmatprep.subr.mxu0 0.0
        %3813 = vmatpush1.msra.mxu0 0.0
        %3814 = vmatprep.subr.mxu0 0.0
        %3815 = vmatpush1.msra.mxu0 0.0
        %3816 = vmatprep.mubr.f32.mxu0 0.0
        %3817 = vmatmul.mubr.f32.gmra.mrb[0].mxu0 %v3750
        %v3818 = vpop.f32.mrb[0].mxu0
        %v3819 = vadd.f32 0.0, %v3818
        %v3820 = vpop.f32.mrb[0].mxu0
        %3821 = vdwg.mxu0
        %v3823 = vsel %vm874, %v3579, 0
        %3825 = vmatprep.subr.mxu0 0.0
        %3826 = vmatpush1.msra.mxu0 %v3411
        %3827 = vmatprep.subr.mxu0 0.0
        %3828 = vmatpush1.msra.mxu0 0.0
        %3829 = vmatprep.subr.mxu0 0.0
        %3830 = vmatpush1.msra.mxu0 0.0
        %3831 = vmatprep.subr.mxu0 0.0
        %3832 = vmatpush1.msra.mxu0 0.0
        %3833 = vmatprep.subr.mxu0 0.0
        %3834 = vmatpush1.msra.mxu0 0.0
        %3835 = vmatprep.subr.mxu0 0.0
        %3836 = vmatpush1.msra.mxu0 0.0
        %3837 = vmatprep.subr.mxu0 0.0
        %3838 = vmatpush1.msra.mxu0 0.0
        %3839 = vmatprep.subr.mxu0 0.0
        %3840 = vmatpush1.msra.mxu0 0.0
        %3841 = vmatprep.subr.mxu0 0.0
        %3842 = vmatpush1.msra.mxu0 0.0
        %3843 = vmatprep.subr.mxu0 0.0
        %3844 = vmatpush1.msra.mxu0 0.0
        %3845 = vmatprep.subr.mxu0 0.0
        %3846 = vmatpush1.msra.mxu0 0.0
        %3847 = vmatprep.subr.mxu0 0.0
        %3848 = vmatpush1.msra.mxu0 0.0
        %3849 = vmatprep.subr.mxu0 0.0
        %3850 = vmatpush1.msra.mxu0 0.0
        %3851 = vmatprep.subr.mxu0 0.0
        %3852 = vmatpush1.msra.mxu0 0.0
        %3853 = vmatprep.subr.mxu0 0.0
        %3854 = vmatpush1.msra.mxu0 0.0
        %3855 = vmatprep.subr.mxu0 0.0
        %3856 = vmatpush1.msra.mxu0 0.0
        %3857 = vmatprep.subr.mxu0 0.0
        %3858 = vmatpush1.msra.mxu0 0.0
        %3859 = vmatprep.subr.mxu0 0.0
        %3860 = vmatpush1.msra.mxu0 0.0
        %3861 = vmatprep.subr.mxu0 0.0
        %3862 = vmatpush1.msra.mxu0 0.0
        %3863 = vmatprep.subr.mxu0 0.0
        %3864 = vmatpush1.msra.mxu0 0.0
        %3865 = vmatprep.subr.mxu0 0.0
        %3866 = vmatpush1.msra.mxu0 0.0
        %3867 = vmatprep.subr.mxu0 0.0
        %3868 = vmatpush1.msra.mxu0 0.0
        %3869 = vmatprep.subr.mxu0 0.0
        %3870 = vmatpush1.msra.mxu0 0.0
        %3871 = vmatprep.subr.mxu0 0.0
        %3872 = vmatpush1.msra.mxu0 0.0
        %3873 = vmatprep.subr.mxu0 0.0
        %3874 = vmatpush1.msra.mxu0 0.0
        %3875 = vmatprep.subr.mxu0 0.0
        %3876 = vmatpush1.msra.mxu0 0.0
        %3877 = vmatprep.subr.mxu0 0.0
        %3878 = vmatpush1.msra.mxu0 0.0
        %3879 = vmatprep.subr.mxu0 0.0
        %3880 = vmatpush1.msra.mxu0 0.0
        %3881 = vmatprep.subr.mxu0 0.0
        %3882 = vmatpush1.msra.mxu0 0.0
        %3883 = vmatprep.subr.mxu0 0.0
        %3884 = vmatpush1.msra.mxu0 0.0
        %3885 = vmatprep.subr.mxu0 0.0
        %3886 = vmatpush1.msra.mxu0 0.0
        %3887 = vmatprep.subr.mxu0 0.0
        %3888 = vmatpush1.msra.mxu0 0.0
        %3889 = vmatprep.mubr.f32.mxu0 0.0
        %3890 = vmatmul.mubr.f32.gmra.mrb[0].mxu0 %v3823
        %v3891 = vpop.f32.mrb[0].mxu0
        %v3892 = vadd.f32 %v3819, %v3891
        %v3893 = vpop.f32.mrb[0].mxu0
        %3894 = vdwg.mxu0
        %3895 = vrot.lane.b32.xlu0 %v3408, 112
        %v3896 = vpop.permute.xlu0 %3895
        %3897 = vrot.lane.b32.xlu0 %v3408, 80
        %v3898 = vpop.permute.xlu0 %3897
        %v3899 = vsel %vm874, %v3896, 0
        %v3901 = vsel %vm874, %v3898, 0
        %3903 = vmatprep.subr.mxu0 0.0
        %3904 = vmatpush1.xpose.msra.mxu0 %v3901
        %3905 = vmatprep.subr.mxu0 0.0
        %3906 = vmatpush1.xpose.msra.mxu0 0.0
        %3907 = vmatprep.subr.mxu0 0.0
        %3908 = vmatpush1.xpose.msra.mxu0 0.0
        %3909 = vmatprep.subr.mxu0 0.0
        %3910 = vmatpush1.xpose.msra.mxu0 0.0
        %3911 = vmatprep.subr.mxu0 0.0
        %3912 = vmatpush1.xpose.msra.mxu0 0.0
        %3913 = vmatprep.subr.mxu0 0.0
        %3914 = vmatpush1.xpose.msra.mxu0 0.0
        %3915 = vmatprep.subr.mxu0 0.0
        %3916 = vmatpush1.xpose.msra.mxu0 0.0
        %3917 = vmatprep.subr.mxu0 0.0
        %3918 = vmatpush1.xpose.msra.mxu0 0.0
        %3919 = vmatprep.subr.mxu0 0.0
        %3920 = vmatpush1.xpose.msra.mxu0 0.0
        %3921 = vmatprep.subr.mxu0 0.0
        %3922 = vmatpush1.xpose.msra.mxu0 0.0
        %3923 = vmatprep.subr.mxu0 0.0
        %3924 = vmatpush1.xpose.msra.mxu0 0.0
        %3925 = vmatprep.subr.mxu0 0.0
        %3926 = vmatpush1.xpose.msra.mxu0 0.0
        %3927 = vmatprep.subr.mxu0 0.0
        %3928 = vmatpush1.xpose.msra.mxu0 0.0
        %3929 = vmatprep.subr.mxu0 0.0
        %3930 = vmatpush1.xpose.msra.mxu0 0.0
        %3931 = vmatprep.subr.mxu0 0.0
        %3932 = vmatpush1.xpose.msra.mxu0 0.0
        %3933 = vmatprep.subr.mxu0 0.0
        %3934 = vmatpush1.xpose.msra.mxu0 0.0
        %3935 = vmatprep.subr.mxu0 0.0
        %3936 = vmatpush1.xpose.msra.mxu0 0.0
        %3937 = vmatprep.subr.mxu0 0.0
        %3938 = vmatpush1.xpose.msra.mxu0 0.0
        %3939 = vmatprep.subr.mxu0 0.0
        %3940 = vmatpush1.xpose.msra.mxu0 0.0
        %3941 = vmatprep.subr.mxu0 0.0
        %3942 = vmatpush1.xpose.msra.mxu0 0.0
        %3943 = vmatprep.subr.mxu0 0.0
        %3944 = vmatpush1.xpose.msra.mxu0 0.0
        %3945 = vmatprep.subr.mxu0 0.0
        %3946 = vmatpush1.xpose.msra.mxu0 0.0
        %3947 = vmatprep.subr.mxu0 0.0
        %3948 = vmatpush1.xpose.msra.mxu0 0.0
        %3949 = vmatprep.subr.mxu0 0.0
        %3950 = vmatpush1.xpose.msra.mxu0 0.0
        %3951 = vmatprep.subr.mxu0 0.0
        %3952 = vmatpush1.xpose.msra.mxu0 0.0
        %3953 = vmatprep.subr.mxu0 0.0
        %3954 = vmatpush1.xpose.msra.mxu0 0.0
        %3955 = vmatprep.subr.mxu0 0.0
        %3956 = vmatpush1.xpose.msra.mxu0 0.0
        %3957 = vmatprep.subr.mxu0 0.0
        %3958 = vmatpush1.xpose.msra.mxu0 0.0
        %3959 = vmatprep.subr.mxu0 0.0
        %3960 = vmatpush1.xpose.msra.mxu0 0.0
        %3961 = vmatprep.subr.mxu0 0.0
        %3962 = vmatpush1.xpose.msra.mxu0 0.0
        %3963 = vmatprep.subr.mxu0 0.0
        %3964 = vmatpush1.xpose.msra.mxu0 0.0
        %3965 = vmatprep.subr.mxu0 0.0
        %3966 = vmatpush1.xpose.msra.mxu0 0.0
        %3967 = vmatprep.mubr.f32.mxu0 0.0
        %3968 = vmatmul.mubr.f32.gmra.mrb[0].mxu0 %v3899
        %v3969 = vpop.f32.mrb[0].mxu0
        %v3970 = vadd.f32 0.0, %v3969
        %v3971 = vpop.f32.mrb[0].mxu0
        %3972 = vdwg.mxu0
        %v3973 = vmul.f32 %v3970, 0.35355338
        %v3974 = vsel %vm3493, %v3973, -1000000.0
        %v3975 = vsel %vm874, %v3974, -inf
        %3976 = vmax.xlane.f32.xlu0 %v3975
        %v3977 = vpop.xlane.xlu0 %3976
        %v3978 = vsub.f32 %v3974, %v3977
        %v3979 = vmul.f32 %v3978, 1.442695
        %v3980 = vpow.pop %v3979
        %v3981 = vsel %vm874, %v3980, 0.0
        %3982 = vadd.xlane.f32.xlu0 %v3981
        %v3983 = vpop.xlane.xlu0 %3982
        %v3984 = vrcp.pop %v3983
        %v3985 = vmul.f32 %v3980, %v3984
        %3986 = vrot.lane.b32.xlu0 %v3408, 48
        %v3987 = vpop.permute.xlu0 %3986
        %v3990 = vsel %vm874, %v3985, 0
        %3992 = vmatprep.subr.mxu0 0.0
        %3993 = vmatpush1.msra.mxu0 %v3987
        %3994 = vmatprep.subr.mxu0 0.0
        %3995 = vmatpush1.msra.mxu0 0.0
        %3996 = vmatprep.subr.mxu0 0.0
        %3997 = vmatpush1.msra.mxu0 0.0
        %3998 = vmatprep.subr.mxu0 0.0
        %3999 = vmatpush1.msra.mxu0 0.0
        %4000 = vmatprep.subr.mxu0 0.0
        %4001 = vmatpush1.msra.mxu0 0.0
        %4002 = vmatprep.subr.mxu0 0.0
        %4003 = vmatpush1.msra.mxu0 0.0
        %4004 = vmatprep.subr.mxu0 0.0
        %4005 = vmatpush1.msra.mxu0 0.0
        %4006 = vmatprep.subr.mxu0 0.0
        %4007 = vmatpush1.msra.mxu0 0.0
        %4008 = vmatprep.subr.mxu0 0.0
        %4009 = vmatpush1.msra.mxu0 0.0
        %4010 = vmatprep.subr.mxu0 0.0
        %4011 = vmatpush1.msra.mxu0 0.0
        %4012 = vmatprep.subr.mxu0 0.0
        %4013 = vmatpush1.msra.mxu0 0.0
        %4014 = vmatprep.subr.mxu0 0.0
        %4015 = vmatpush1.msra.mxu0 0.0
        %4016 = vmatprep.subr.mxu0 0.0
        %4017 = vmatpush1.msra.mxu0 0.0
        %4018 = vmatprep.subr.mxu0 0.0
        %4019 = vmatpush1.msra.mxu0 0.0
        %4020 = vmatprep.subr.mxu0 0.0
        %4021 = vmatpush1.msra.mxu0 0.0
        %4022 = vmatprep.subr.mxu0 0.0
        %4023 = vmatpush1.msra.mxu0 0.0
        %4024 = vmatprep.subr.mxu0 0.0
        %4025 = vmatpush1.msra.mxu0 0.0
        %4026 = vmatprep.subr.mxu0 0.0
        %4027 = vmatpush1.msra.mxu0 0.0
        %4028 = vmatprep.subr.mxu0 0.0
        %4029 = vmatpush1.msra.mxu0 0.0
        %4030 = vmatprep.subr.mxu0 0.0
        %4031 = vmatpush1.msra.mxu0 0.0
        %4032 = vmatprep.subr.mxu0 0.0
        %4033 = vmatpush1.msra.mxu0 0.0
        %4034 = vmatprep.subr.mxu0 0.0
        %4035 = vmatpush1.msra.mxu0 0.0
        %4036 = vmatprep.subr.mxu0 0.0
        %4037 = vmatpush1.msra.mxu0 0.0
        %4038 = vmatprep.subr.mxu0 0.0
        %4039 = vmatpush1.msra.mxu0 0.0
        %4040 = vmatprep.subr.mxu0 0.0
        %4041 = vmatpush1.msra.mxu0 0.0
        %4042 = vmatprep.subr.mxu0 0.0
        %4043 = vmatpush1.msra.mxu0 0.0
        %4044 = vmatprep.subr.mxu0 0.0
        %4045 = vmatpush1.msra.mxu0 0.0
        %4046 = vmatprep.subr.mxu0 0.0
        %4047 = vmatpush1.msra.mxu0 0.0
        %4048 = vmatprep.subr.mxu0 0.0
        %4049 = vmatpush1.msra.mxu0 0.0
        %4050 = vmatprep.subr.mxu0 0.0
        %4051 = vmatpush1.msra.mxu0 0.0
        %4052 = vmatprep.subr.mxu0 0.0
        %4053 = vmatpush1.msra.mxu0 0.0
        %4054 = vmatprep.subr.mxu0 0.0
        %4055 = vmatpush1.msra.mxu0 0.0
        %4056 = vmatprep.mubr.f32.mxu0 0.0
        %4057 = vmatmul.mubr.f32.gmra.mrb[0].mxu0 %v3990
        %v4058 = vpop.f32.mrb[0].mxu0
        %v4059 = vadd.f32 0.0, %v4058
        %v4060 = vpop.f32.mrb[0].mxu0
        %4061 = vdwg.mxu0
        %v4063 = vsel %vm874, %v4059, 0
        %4065 = vmatprep.subr.mxu0 0.0
        %4066 = vmatpush1.msra.mxu0 %v3413
        %4067 = vmatprep.subr.mxu0 0.0
        %4068 = vmatpush1.msra.mxu0 0.0
        %4069 = vmatprep.subr.mxu0 0.0
        %4070 = vmatpush1.msra.mxu0 0.0
        %4071 = vmatprep.subr.mxu0 0.0
        %4072 = vmatpush1.msra.mxu0 0.0
        %4073 = vmatprep.subr.mxu0 0.0
        %4074 = vmatpush1.msra.mxu0 0.0
        %4075 = vmatprep.subr.mxu0 0.0
        %4076 = vmatpush1.msra.mxu0 0.0
        %4077 = vmatprep.subr.mxu0 0.0
        %4078 = vmatpush1.msra.mxu0 0.0
        %4079 = vmatprep.subr.mxu0 0.0
        %4080 = vmatpush1.msra.mxu0 0.0
        %4081 = vmatprep.subr.mxu0 0.0
        %4082 = vmatpush1.msra.mxu0 0.0
        %4083 = vmatprep.subr.mxu0 0.0
        %4084 = vmatpush1.msra.mxu0 0.0
        %4085 = vmatprep.subr.mxu0 0.0
        %4086 = vmatpush1.msra.mxu0 0.0
        %4087 = vmatprep.subr.mxu0 0.0
        %4088 = vmatpush1.msra.mxu0 0.0
        %4089 = vmatprep.subr.mxu0 0.0
        %4090 = vmatpush1.msra.mxu0 0.0
        %4091 = vmatprep.subr.mxu0 0.0
        %4092 = vmatpush1.msra.mxu0 0.0
        %4093 = vmatprep.subr.mxu0 0.0
        %4094 = vmatpush1.msra.mxu0 0.0
        %4095 = vmatprep.subr.mxu0 0.0
        %4096 = vmatpush1.msra.mxu0 0.0
        %4097 = vmatprep.subr.mxu0 0.0
        %4098 = vmatpush1.msra.mxu0 0.0
        %4099 = vmatprep.subr.mxu0 0.0
        %4100 = vmatpush1.msra.mxu0 0.0
        %4101 = vmatprep.subr.mxu0 0.0
        %4102 = vmatpush1.msra.mxu0 0.0
        %4103 = vmatprep.subr.mxu0 0.0
        %4104 = vmatpush1.msra.mxu0 0.0
        %4105 = vmatprep.subr.mxu0 0.0
        %4106 = vmatpush1.msra.mxu0 0.0
        %4107 = vmatprep.subr.mxu0 0.0
        %4108 = vmatpush1.msra.mxu0 0.0
        %4109 = vmatprep.subr.mxu0 0.0
        %4110 = vmatpush1.msra.mxu0 0.0
        %4111 = vmatprep.subr.mxu0 0.0
        %4112 = vmatpush1.msra.mxu0 0.0
        %4113 = vmatprep.subr.mxu0 0.0
        %4114 = vmatpush1.msra.mxu0 0.0
        %4115 = vmatprep.subr.mxu0 0.0
        %4116 = vmatpush1.msra.mxu0 0.0
        %4117 = vmatprep.subr.mxu0 0.0
        %4118 = vmatpush1.msra.mxu0 0.0
        %4119 = vmatprep.subr.mxu0 0.0
        %4120 = vmatpush1.msra.mxu0 0.0
        %4121 = vmatprep.subr.mxu0 0.0
        %4122 = vmatpush1.msra.mxu0 0.0
        %4123 = vmatprep.subr.mxu0 0.0
        %4124 = vmatpush1.msra.mxu0 0.0
        %4125 = vmatprep.subr.mxu0 0.0
        %4126 = vmatpush1.msra.mxu0 0.0
        %4127 = vmatprep.subr.mxu0 0.0
        %4128 = vmatpush1.msra.mxu0 0.0
        %4129 = vmatprep.mubr.f32.mxu0 0.0
        %4130 = vmatmul.mubr.f32.gmra.mrb[0].mxu0 %v4063
        %v4131 = vpop.f32.mrb[0].mxu0
        %v4132 = vadd.f32 0.0, %v4131
        %v4133 = vpop.f32.mrb[0].mxu0
        %4134 = vdwg.mxu0
        %v4135 = vadd.f32 %v3892, %v4132
        %4136 = vrot.lane.b32.xlu0 %v3408, 104
        %v4137 = vpop.permute.xlu0 %4136
        %4138 = vrot.lane.b32.xlu0 %v3408, 72
        %v4139 = vpop.permute.xlu0 %4138
        %v4140 = vsel %vm874, %v4137, 0
        %v4142 = vsel %vm874, %v4139, 0
        %4144 = vmatprep.subr.mxu0 0.0
        %4145 = vmatpush1.xpose.msra.mxu0 %v4142
        %4146 = vmatprep.subr.mxu0 0.0
        %4147 = vmatpush1.xpose.msra.mxu0 0.0
        %4148 = vmatprep.subr.mxu0 0.0
        %4149 = vmatpush1.xpose.msra.mxu0 0.0
        %4150 = vmatprep.subr.mxu0 0.0
        %4151 = vmatpush1.xpose.msra.mxu0 0.0
        %4152 = vmatprep.subr.mxu0 0.0
        %4153 = vmatpush1.xpose.msra.mxu0 0.0
        %4154 = vmatprep.subr.mxu0 0.0
        %4155 = vmatpush1.xpose.msra.mxu0 0.0
        %4156 = vmatprep.subr.mxu0 0.0
        %4157 = vmatpush1.xpose.msra.mxu0 0.0
        %4158 = vmatprep.subr.mxu0 0.0
        %4159 = vmatpush1.xpose.msra.mxu0 0.0
        %4160 = vmatprep.subr.mxu0 0.0
        %4161 = vmatpush1.xpose.msra.mxu0 0.0
        %4162 = vmatprep.subr.mxu0 0.0
        %4163 = vmatpush1.xpose.msra.mxu0 0.0
        %4164 = vmatprep.subr.mxu0 0.0
        %4165 = vmatpush1.xpose.msra.mxu0 0.0
        %4166 = vmatprep.subr.mxu0 0.0
        %4167 = vmatpush1.xpose.msra.mxu0 0.0
        %4168 = vmatprep.subr.mxu0 0.0
        %4169 = vmatpush1.xpose.msra.mxu0 0.0
        %4170 = vmatprep.subr.mxu0 0.0
        %4171 = vmatpush1.xpose.msra.mxu0 0.0
        %4172 = vmatprep.subr.mxu0 0.0
        %4173 = vmatpush1.xpose.msra.mxu0 0.0
        %4174 = vmatprep.subr.mxu0 0.0
        %4175 = vmatpush1.xpose.msra.mxu0 0.0
        %4176 = vmatprep.subr.mxu0 0.0
        %4177 = vmatpush1.xpose.msra.mxu0 0.0
        %4178 = vmatprep.subr.mxu0 0.0
        %4179 = vmatpush1.xpose.msra.mxu0 0.0
        %4180 = vmatprep.subr.mxu0 0.0
        %4181 = vmatpush1.xpose.msra.mxu0 0.0
        %4182 = vmatprep.subr.mxu0 0.0
        %4183 = vmatpush1.xpose.msra.mxu0 0.0
        %4184 = vmatprep.subr.mxu0 0.0
        %4185 = vmatpush1.xpose.msra.mxu0 0.0
        %4186 = vmatprep.subr.mxu0 0.0
        %4187 = vmatpush1.xpose.msra.mxu0 0.0
        %4188 = vmatprep.subr.mxu0 0.0
        %4189 = vmatpush1.xpose.msra.mxu0 0.0
        %4190 = vmatprep.subr.mxu0 0.0
        %4191 = vmatpush1.xpose.msra.mxu0 0.0
        %4192 = vmatprep.subr.mxu0 0.0
        %4193 = vmatpush1.xpose.msra.mxu0 0.0
        %4194 = vmatprep.subr.mxu0 0.0
        %4195 = vmatpush1.xpose.msra.mxu0 0.0
        %4196 = vmatprep.subr.mxu0 0.0
        %4197 = vmatpush1.xpose.msra.mxu0 0.0
        %4198 = vmatprep.subr.mxu0 0.0
        %4199 = vmatpush1.xpose.msra.mxu0 0.0
        %4200 = vmatprep.subr.mxu0 0.0
        %4201 = vmatpush1.xpose.msra.mxu0 0.0
        %4202 = vmatprep.subr.mxu0 0.0
        %4203 = vmatpush1.xpose.msra.mxu0 0.0
        %4204 = vmatprep.subr.mxu0 0.0
        %4205 = vmatpush1.xpose.msra.mxu0 0.0
        %4206 = vmatprep.subr.mxu0 0.0
        %4207 = vmatpush1.xpose.msra.mxu0 0.0
        %4208 = vmatprep.mubr.f32.mxu0 0.0
        %4209 = vmatmul.mubr.f32.gmra.mrb[0].mxu0 %v4140
        %v4210 = vpop.f32.mrb[0].mxu0
        %v4211 = vadd.f32 0.0, %v4210
        %v4212 = vpop.f32.mrb[0].mxu0
        %4213 = vdwg.mxu0
        %v4214 = vmul.f32 %v4211, 0.35355338
        %v4215 = vsel %vm3493, %v4214, -1000000.0
        %v4216 = vsel %vm874, %v4215, -inf
        %4217 = vmax.xlane.f32.xlu0 %v4216
        %v4218 = vpop.xlane.xlu0 %4217
        %v4219 = vsub.f32 %v4215, %v4218
        %v4220 = vmul.f32 %v4219, 1.442695
        %v4221 = vpow.pop %v4220
        %v4222 = vsel %vm874, %v4221, 0.0
        %4223 = vadd.xlane.f32.xlu0 %v4222
        %v4224 = vpop.xlane.xlu0 %4223
        %v4225 = vrcp.pop %v4224
        %v4226 = vmul.f32 %v4221, %v4225
        %4227 = vrot.lane.b32.xlu0 %v3408, 40
        %v4228 = vpop.permute.xlu0 %4227
        %v4231 = vsel %vm874, %v4226, 0
        %4233 = vmatprep.subr.mxu0 0.0
        %4234 = vmatpush1.msra.mxu0 %v4228
        %4235 = vmatprep.subr.mxu0 0.0
        %4236 = vmatpush1.msra.mxu0 0.0
        %4237 = vmatprep.subr.mxu0 0.0
        %4238 = vmatpush1.msra.mxu0 0.0
        %4239 = vmatprep.subr.mxu0 0.0
        %4240 = vmatpush1.msra.mxu0 0.0
        %4241 = vmatprep.subr.mxu0 0.0
        %4242 = vmatpush1.msra.mxu0 0.0
        %4243 = vmatprep.subr.mxu0 0.0
        %4244 = vmatpush1.msra.mxu0 0.0
        %4245 = vmatprep.subr.mxu0 0.0
        %4246 = vmatpush1.msra.mxu0 0.0
        %4247 = vmatprep.subr.mxu0 0.0
        %4248 = vmatpush1.msra.mxu0 0.0
        %4249 = vmatprep.subr.mxu0 0.0
        %4250 = vmatpush1.msra.mxu0 0.0
        %4251 = vmatprep.subr.mxu0 0.0
        %4252 = vmatpush1.msra.mxu0 0.0
        %4253 = vmatprep.subr.mxu0 0.0
        %4254 = vmatpush1.msra.mxu0 0.0
        %4255 = vmatprep.subr.mxu0 0.0
        %4256 = vmatpush1.msra.mxu0 0.0
        %4257 = vmatprep.subr.mxu0 0.0
        %4258 = vmatpush1.msra.mxu0 0.0
        %4259 = vmatprep.subr.mxu0 0.0
        %4260 = vmatpush1.msra.mxu0 0.0
        %4261 = vmatprep.subr.mxu0 0.0
        %4262 = vmatpush1.msra.mxu0 0.0
        %4263 = vmatprep.subr.mxu0 0.0
        %4264 = vmatpush1.msra.mxu0 0.0
        %4265 = vmatprep.subr.mxu0 0.0
        %4266 = vmatpush1.msra.mxu0 0.0
        %4267 = vmatprep.subr.mxu0 0.0
        %4268 = vmatpush1.msra.mxu0 0.0
        %4269 = vmatprep.subr.mxu0 0.0
        %4270 = vmatpush1.msra.mxu0 0.0
        %4271 = vmatprep.subr.mxu0 0.0
        %4272 = vmatpush1.msra.mxu0 0.0
        %4273 = vmatprep.subr.mxu0 0.0
        %4274 = vmatpush1.msra.mxu0 0.0
        %4275 = vmatprep.subr.mxu0 0.0
        %4276 = vmatpush1.msra.mxu0 0.0
        %4277 = vmatprep.subr.mxu0 0.0
        %4278 = vmatpush1.msra.mxu0 0.0
        %4279 = vmatprep.subr.mxu0 0.0
        %4280 = vmatpush1.msra.mxu0 0.0
        %4281 = vmatprep.subr.mxu0 0.0
        %4282 = vmatpush1.msra.mxu0 0.0
        %4283 = vmatprep.subr.mxu0 0.0
        %4284 = vmatpush1.msra.mxu0 0.0
        %4285 = vmatprep.subr.mxu0 0.0
        %4286 = vmatpush1.msra.mxu0 0.0
        %4287 = vmatprep.subr.mxu0 0.0
        %4288 = vmatpush1.msra.mxu0 0.0
        %4289 = vmatprep.subr.mxu0 0.0
        %4290 = vmatpush1.msra.mxu0 0.0
        %4291 = vmatprep.subr.mxu0 0.0
        %4292 = vmatpush1.msra.mxu0 0.0
        %4293 = vmatprep.subr.mxu0 0.0
        %4294 = vmatpush1.msra.mxu0 0.0
        %4295 = vmatprep.subr.mxu0 0.0
        %4296 = vmatpush1.msra.mxu0 0.0
        %4297 = vmatprep.mubr.f32.mxu0 0.0
        %4298 = vmatmul.mubr.f32.gmra.mrb[0].mxu0 %v4231
        %v4299 = vpop.f32.mrb[0].mxu0
        %v4300 = vadd.f32 0.0, %v4299
        %v4301 = vpop.f32.mrb[0].mxu0
        %4302 = vdwg.mxu0
        %v4304 = vsel %vm874, %v4300, 0
        %4306 = vmatprep.subr.mxu0 0.0
        %4307 = vmatpush1.msra.mxu0 %v3414
        %4308 = vmatprep.subr.mxu0 0.0
        %4309 = vmatpush1.msra.mxu0 0.0
        %4310 = vmatprep.subr.mxu0 0.0
        %4311 = vmatpush1.msra.mxu0 0.0
        %4312 = vmatprep.subr.mxu0 0.0
        %4313 = vmatpush1.msra.mxu0 0.0
        %4314 = vmatprep.subr.mxu0 0.0
        %4315 = vmatpush1.msra.mxu0 0.0
        %4316 = vmatprep.subr.mxu0 0.0
        %4317 = vmatpush1.msra.mxu0 0.0
        %4318 = vmatprep.subr.mxu0 0.0
        %4319 = vmatpush1.msra.mxu0 0.0
        %4320 = vmatprep.subr.mxu0 0.0
        %4321 = vmatpush1.msra.mxu0 0.0
        %4322 = vmatprep.subr.mxu0 0.0
        %4323 = vmatpush1.msra.mxu0 0.0
        %4324 = vmatprep.subr.mxu0 0.0
        %4325 = vmatpush1.msra.mxu0 0.0
        %4326 = vmatprep.subr.mxu0 0.0
        %4327 = vmatpush1.msra.mxu0 0.0
        %4328 = vmatprep.subr.mxu0 0.0
        %4329 = vmatpush1.msra.mxu0 0.0
        %4330 = vmatprep.subr.mxu0 0.0
        %4331 = vmatpush1.msra.mxu0 0.0
        %4332 = vmatprep.subr.mxu0 0.0
        %4333 = vmatpush1.msra.mxu0 0.0
        %4334 = vmatprep.subr.mxu0 0.0
        %4335 = vmatpush1.msra.mxu0 0.0
        %4336 = vmatprep.subr.mxu0 0.0
        %4337 = vmatpush1.msra.mxu0 0.0
        %4338 = vmatprep.subr.mxu0 0.0
        %4339 = vmatpush1.msra.mxu0 0.0
        %4340 = vmatprep.subr.mxu0 0.0
        %4341 = vmatpush1.msra.mxu0 0.0
        %4342 = vmatprep.subr.mxu0 0.0
        %4343 = vmatpush1.msra.mxu0 0.0
        %4344 = vmatprep.subr.mxu0 0.0
        %4345 = vmatpush1.msra.mxu0 0.0
        %4346 = vmatprep.subr.mxu0 0.0
        %4347 = vmatpush1.msra.mxu0 0.0
        %4348 = vmatprep.subr.mxu0 0.0
        %4349 = vmatpush1.msra.mxu0 0.0
        %4350 = vmatprep.subr.mxu0 0.0
        %4351 = vmatpush1.msra.mxu0 0.0
        %4352 = vmatprep.subr.mxu0 0.0
        %4353 = vmatpush1.msra.mxu0 0.0
        %4354 = vmatprep.subr.mxu0 0.0
        %4355 = vmatpush1.msra.mxu0 0.0
        %4356 = vmatprep.subr.mxu0 0.0
        %4357 = vmatpush1.msra.mxu0 0.0
        %4358 = vmatprep.subr.mxu0 0.0
        %4359 = vmatpush1.msra.mxu0 0.0
        %4360 = vmatprep.subr.mxu0 0.0
        %4361 = vmatpush1.msra.mxu0 0.0
        %4362 = vmatprep.subr.mxu0 0.0
        %4363 = vmatpush1.msra.mxu0 0.0
        %4364 = vmatprep.subr.mxu0 0.0
        %4365 = vmatpush1.msra.mxu0 0.0
        %4366 = vmatprep.subr.mxu0 0.0
        %4367 = vmatpush1.msra.mxu0 0.0
        %4368 = vmatprep.subr.mxu0 0.0
        %4369 = vmatpush1.msra.mxu0 0.0
        %4370 = vmatprep.mubr.f32.mxu0 0.0
        %4371 = vmatmul.mubr.f32.gmra.mrb[0].mxu0 %v4304
        %v4372 = vpop.f32.mrb[0].mxu0
        %v4373 = vadd.f32 0.0, %v4372
        %v4374 = vpop.f32.mrb[0].mxu0
        %4375 = vdwg.mxu0
        %v4376 = vadd.f32 %v4135, %v4373
        %v4377 = vadd.f32 %v3332, %v4376
        %v4378 = vsel %vm793, %v4377, 0.0
        %4379 = vadd.xlane.f32.xlu0 %v4378
        %v4380 = vpop.xlane.xlu0 %4379
        %v4381 = vmul.f32 %v4380, %v1838
        %v4382 = vsub.f32 %v4377, %v4381
        %v4383 = vmul.f32 %v4382, %v4382
        %v4384 = vsel %vm793, %v4383, 0.0
        %4385 = vadd.xlane.f32.xlu0 %v4384
        %v4386 = vpop.xlane.xlu0 %4385
        %v4387 = vmul.f32 %v4386, %v1838
        %v4388 = vadd.f32 %v4387, 1e-05
        %v4389 = vrsqrt.pop %v4388
        %v4390 = vmul.f32 %v4382, %v4389
        %v4391 = vlaneseq
        %v4392 = vshrl.u32 %v4391, 7
        %v4393 = vsub.s32 0, %v4392
        %v4394 = vrot.slane %v3333, %v4393
        %v4395 = vmul.f32 %v4390, %v4394
        %v4396 = vlaneseq
        %v4397 = vshrl.u32 %v4396, 7
        %v4398 = vsub.s32 1, %v4397
        %v4399 = vrot.slane %v3333, %v4398
        %v4400 = vadd.f32 %v4395, %v4399
        %v4401 = vld [vmem:[%s14] sm:$0xff]
        %v4402 = vld [vmem:[%s14 + $0x8] sm:$0xff]
        %v4403 = vld [vmem:[%s14 + $0x10] sm:$0xff]
        %v4404 = vld [vmem:[%s14 + $0x18] sm:$0xff]
        %v4406 = vsel %vm793, %v4400, 0
        %4408 = vmatprep.subr.mxu0 0.0
        %4409 = vmatpush1.msra.mxu0 %v4401
        %4410 = vmatprep.subr.mxu0 0.0
        %4411 = vmatpush1.msra.mxu0 %v4402
        %4412 = vmatprep.subr.mxu0 0.0
        %4413 = vmatpush1.msra.mxu0 %v4403
        %4414 = vmatprep.subr.mxu0 0.0
        %4415 = vmatpush1.msra.mxu0 %v4404
        %4416 = vmatprep.subr.mxu0 0.0
        %4417 = vmatpush1.msra.mxu0 0.0
        %4418 = vmatprep.subr.mxu0 0.0
        %4419 = vmatpush1.msra.mxu0 0.0
        %4420 = vmatprep.subr.mxu0 0.0
        %4421 = vmatpush1.msra.mxu0 0.0
        %4422 = vmatprep.subr.mxu0 0.0
        %4423 = vmatpush1.msra.mxu0 0.0
        %4424 = vmatprep.subr.mxu0 0.0
        %4425 = vmatpush1.msra.mxu0 0.0
        %4426 = vmatprep.subr.mxu0 0.0
        %4427 = vmatpush1.msra.mxu0 0.0
        %4428 = vmatprep.subr.mxu0 0.0
        %4429 = vmatpush1.msra.mxu0 0.0
        %4430 = vmatprep.subr.mxu0 0.0
        %4431 = vmatpush1.msra.mxu0 0.0
        %4432 = vmatprep.subr.mxu0 0.0
        %4433 = vmatpush1.msra.mxu0 0.0
        %4434 = vmatprep.subr.mxu0 0.0
        %4435 = vmatpush1.msra.mxu0 0.0
        %4436 = vmatprep.subr.mxu0 0.0
        %4437 = vmatpush1.msra.mxu0 0.0
        %4438 = vmatprep.subr.mxu0 0.0
        %4439 = vmatpush1.msra.mxu0 0.0
        %4440 = vmatprep.subr.mxu0 0.0
        %4441 = vmatpush1.msra.mxu0 0.0
        %4442 = vmatprep.subr.mxu0 0.0
        %4443 = vmatpush1.msra.mxu0 0.0
        %4444 = vmatprep.subr.mxu0 0.0
        %4445 = vmatpush1.msra.mxu0 0.0
        %4446 = vmatprep.subr.mxu0 0.0
        %4447 = vmatpush1.msra.mxu0 0.0
        %4448 = vmatprep.subr.mxu0 0.0
        %4449 = vmatpush1.msra.mxu0 0.0
        %4450 = vmatprep.subr.mxu0 0.0
        %4451 = vmatpush1.msra.mxu0 0.0
        %4452 = vmatprep.subr.mxu0 0.0
        %4453 = vmatpush1.msra.mxu0 0.0
        %4454 = vmatprep.subr.mxu0 0.0
        %4455 = vmatpush1.msra.mxu0 0.0
        %4456 = vmatprep.subr.mxu0 0.0
        %4457 = vmatpush1.msra.mxu0 0.0
        %4458 = vmatprep.subr.mxu0 0.0
        %4459 = vmatpush1.msra.mxu0 0.0
        %4460 = vmatprep.subr.mxu0 0.0
        %4461 = vmatpush1.msra.mxu0 0.0
        %4462 = vmatprep.subr.mxu0 0.0
        %4463 = vmatpush1.msra.mxu0 0.0
        %4464 = vmatprep.subr.mxu0 0.0
        %4465 = vmatpush1.msra.mxu0 0.0
        %4466 = vmatprep.subr.mxu0 0.0
        %4467 = vmatpush1.msra.mxu0 0.0
        %4468 = vmatprep.subr.mxu0 0.0
        %4469 = vmatpush1.msra.mxu0 0.0
        %4470 = vmatprep.subr.mxu0 0.0
        %4471 = vmatpush1.msra.mxu0 0.0
        %4472 = vmatprep.mubr.f32.mxu0 0.0
        %4473 = vmatmul.mubr.f32.gmra.mrb[0].mxu0 %v4406
        %v4474 = vpop.f32.mrb[0].mxu0
        %v4475 = vadd.f32 0.0, %v4474
        %v4476 = vpop.f32.mrb[0].mxu0
        %4477 = vdwg.mxu0
        %v4478 = vld [vmem:[%s15] sm:$0xff]
        %v4479 = vld [vmem:[%s15 + $0x8] sm:$0xff]
        %v4480 = vld [vmem:[%s15 + $0x10] sm:$0xff]
        %v4481 = vld [vmem:[%s15 + $0x18] sm:$0xff]
        %v4483 = vsel %vm793, %v3331, 0
        %4485 = vmatprep.subr.mxu0 0.0
        %4486 = vmatpush1.msra.mxu0 %v4478
        %4487 = vmatprep.subr.mxu0 0.0
        %4488 = vmatpush1.msra.mxu0 %v4479
        %4489 = vmatprep.subr.mxu0 0.0
        %4490 = vmatpush1.msra.mxu0 %v4480
        %4491 = vmatprep.subr.mxu0 0.0
        %4492 = vmatpush1.msra.mxu0 %v4481
        %4493 = vmatprep.subr.mxu0 0.0
        %4494 = vmatpush1.msra.mxu0 0.0
        %4495 = vmatprep.subr.mxu0 0.0
        %4496 = vmatpush1.msra.mxu0 0.0
        %4497 = vmatprep.subr.mxu0 0.0
        %4498 = vmatpush1.msra.mxu0 0.0
        %4499 = vmatprep.subr.mxu0 0.0
        %4500 = vmatpush1.msra.mxu0 0.0
        %4501 = vmatprep.subr.mxu0 0.0
        %4502 = vmatpush1.msra.mxu0 0.0
        %4503 = vmatprep.subr.mxu0 0.0
        %4504 = vmatpush1.msra.mxu0 0.0
        %4505 = vmatprep.subr.mxu0 0.0
        %4506 = vmatpush1.msra.mxu0 0.0
        %4507 = vmatprep.subr.mxu0 0.0
        %4508 = vmatpush1.msra.mxu0 0.0
        %4509 = vmatprep.subr.mxu0 0.0
        %4510 = vmatpush1.msra.mxu0 0.0
        %4511 = vmatprep.subr.mxu0 0.0
        %4512 = vmatpush1.msra.mxu0 0.0
        %4513 = vmatprep.subr.mxu0 0.0
        %4514 = vmatpush1.msra.mxu0 0.0
        %4515 = vmatprep.subr.mxu0 0.0
        %4516 = vmatpush1.msra.mxu0 0.0
        %4517 = vmatprep.subr.mxu0 0.0
        %4518 = vmatpush1.msra.mxu0 0.0
        %4519 = vmatprep.subr.mxu0 0.0
        %4520 = vmatpush1.msra.mxu0 0.0
        %4521 = vmatprep.subr.mxu0 0.0
        %4522 = vmatpush1.msra.mxu0 0.0
        %4523 = vmatprep.subr.mxu0 0.0
        %4524 = vmatpush1.msra.mxu0 0.0
        %4525 = vmatprep.subr.mxu0 0.0
        %4526 = vmatpush1.msra.mxu0 0.0
        %4527 = vmatprep.subr.mxu0 0.0
        %4528 = vmatpush1.msra.mxu0 0.0
        %4529 = vmatprep.subr.mxu0 0.0
        %4530 = vmatpush1.msra.mxu0 0.0
        %4531 = vmatprep.subr.mxu0 0.0
        %4532 = vmatpush1.msra.mxu0 0.0
        %4533 = vmatprep.subr.mxu0 0.0
        %4534 = vmatpush1.msra.mxu0 0.0
        %4535 = vmatprep.subr.mxu0 0.0
        %4536 = vmatpush1.msra.mxu0 0.0
        %4537 = vmatprep.subr.mxu0 0.0
        %4538 = vmatpush1.msra.mxu0 0.0
        %4539 = vmatprep.subr.mxu0 0.0
        %4540 = vmatpush1.msra.mxu0 0.0
        %4541 = vmatprep.subr.mxu0 0.0
        %4542 = vmatpush1.msra.mxu0 0.0
        %4543 = vmatprep.subr.mxu0 0.0
        %4544 = vmatpush1.msra.mxu0 0.0
        %4545 = vmatprep.subr.mxu0 0.0
        %4546 = vmatpush1.msra.mxu0 0.0
        %4547 = vmatprep.subr.mxu0 0.0
        %4548 = vmatpush1.msra.mxu0 0.0
        %4549 = vmatprep.mubr.f32.mxu0 0.0
        %4550 = vmatmul.mubr.f32.gmra.mrb[0].mxu0 %v4483
        %v4551 = vpop.f32.mrb[0].mxu0
        %v4552 = vadd.f32 0.0, %v4551
        %v4553 = vpop.f32.mrb[0].mxu0
        %4554 = vdwg.mxu0
        %v4555 = vld [vmem:[%s16] sm:$0xff]
        %v4556 = vld [vmem:[%s16 + $0x8] sm:$0xff]
        %v4557 = vld [vmem:[%s16 + $0x10] sm:$0xff]
        %v4558 = vld [vmem:[%s16 + $0x18] sm:$0xff]
        %v4560 = vsel %vm874, %v4475, 0
        %v4563 = vsel %vm874, %v4552, 0
        %4565 = vmatprep.subr.mxu0 0.0
        %4566 = vmatpush1.xpose.msra.mxu0 %v4563
        %4567 = vmatprep.subr.mxu0 0.0
        %4568 = vmatpush1.xpose.msra.mxu0 0.0
        %4569 = vmatprep.subr.mxu0 0.0
        %4570 = vmatpush1.xpose.msra.mxu0 0.0
        %4571 = vmatprep.subr.mxu0 0.0
        %4572 = vmatpush1.xpose.msra.mxu0 0.0
        %4573 = vmatprep.subr.mxu0 0.0
        %4574 = vmatpush1.xpose.msra.mxu0 0.0
        %4575 = vmatprep.subr.mxu0 0.0
        %4576 = vmatpush1.xpose.msra.mxu0 0.0
        %4577 = vmatprep.subr.mxu0 0.0
        %4578 = vmatpush1.xpose.msra.mxu0 0.0
        %4579 = vmatprep.subr.mxu0 0.0
        %4580 = vmatpush1.xpose.msra.mxu0 0.0
        %4581 = vmatprep.subr.mxu0 0.0
        %4582 = vmatpush1.xpose.msra.mxu0 0.0
        %4583 = vmatprep.subr.mxu0 0.0
        %4584 = vmatpush1.xpose.msra.mxu0 0.0
        %4585 = vmatprep.subr.mxu0 0.0
        %4586 = vmatpush1.xpose.msra.mxu0 0.0
        %4587 = vmatprep.subr.mxu0 0.0
        %4588 = vmatpush1.xpose.msra.mxu0 0.0
        %4589 = vmatprep.subr.mxu0 0.0
        %4590 = vmatpush1.xpose.msra.mxu0 0.0
        %4591 = vmatprep.subr.mxu0 0.0
        %4592 = vmatpush1.xpose.msra.mxu0 0.0
        %4593 = vmatprep.subr.mxu0 0.0
        %4594 = vmatpush1.xpose.msra.mxu0 0.0
        %4595 = vmatprep.subr.mxu0 0.0
        %4596 = vmatpush1.xpose.msra.mxu0 0.0
        %4597 = vmatprep.subr.mxu0 0.0
        %4598 = vmatpush1.xpose.msra.mxu0 0.0
        %4599 = vmatprep.subr.mxu0 0.0
        %4600 = vmatpush1.xpose.msra.mxu0 0.0
        %4601 = vmatprep.subr.mxu0 0.0
        %4602 = vmatpush1.xpose.msra.mxu0 0.0
        %4603 = vmatprep.subr.mxu0 0.0
        %4604 = vmatpush1.xpose.msra.mxu0 0.0
        %4605 = vmatprep.subr.mxu0 0.0
        %4606 = vmatpush1.xpose.msra.mxu0 0.0
        %4607 = vmatprep.subr.mxu0 0.0
        %4608 = vmatpush1.xpose.msra.mxu0 0.0
        %4609 = vmatprep.subr.mxu0 0.0
        %4610 = vmatpush1.xpose.msra.mxu0 0.0
        %4611 = vmatprep.subr.mxu0 0.0
        %4612 = vmatpush1.xpose.msra.mxu0 0.0
        %4613 = vmatprep.subr.mxu0 0.0
        %4614 = vmatpush1.xpose.msra.mxu0 0.0
        %4615 = vmatprep.subr.mxu0 0.0
        %4616 = vmatpush1.xpose.msra.mxu0 0.0
        %4617 = vmatprep.subr.mxu0 0.0
        %4618 = vmatpush1.xpose.msra.mxu0 0.0
        %4619 = vmatprep.subr.mxu0 0.0
        %4620 = vmatpush1.xpose.msra.mxu0 0.0
        %4621 = vmatprep.subr.mxu0 0.0
        %4622 = vmatpush1.xpose.msra.mxu0 0.0
        %4623 = vmatprep.subr.mxu0 0.0
        %4624 = vmatpush1.xpose.msra.mxu0 0.0
        %4625 = vmatprep.subr.mxu0 0.0
        %4626 = vmatpush1.xpose.msra.mxu0 0.0
        %4627 = vmatprep.subr.mxu0 0.0
        %4628 = vmatpush1.xpose.msra.mxu0 0.0
        %4629 = vmatprep.mubr.f32.mxu0 0.0
        %4630 = vmatmul.mubr.f32.gmra.mrb[0].mxu0 %v4560
        %v4631 = vpop.f32.mrb[0].mxu0
        %v4632 = vadd.f32 0.0, %v4631
        %v4633 = vpop.f32.mrb[0].mxu0
        %4634 = vdwg.mxu0
        %v4635 = vmul.f32 %v4632, 0.35355338
        %vm4636 = vcmp.gt.f32.partialorder %v786, 0.5
        %v4637 = vsel %vm4636, %v4635, -1000000.0
        %v4638 = vsel %vm874, %v4637, -inf
        %4639 = vmax.xlane.f32.xlu0 %v4638
        %v4640 = vpop.xlane.xlu0 %4639
        %v4641 = vsub.f32 %v4637, %v4640
        %v4642 = vmul.f32 %v4641, 1.442695
        %v4643 = vpow.pop %v4642
        %v4644 = vsel %vm874, %v4643, 0.0
        %4645 = vadd.xlane.f32.xlu0 %v4644
        %v4646 = vpop.xlane.xlu0 %4645
        %v4647 = vrcp.pop %v4646
        %v4648 = vmul.f32 %v4643, %v4647
        %4649 = vrot.lane.b32.xlu0 %v4552, 96
        %v4650 = vpop.permute.xlu0 %4649
        %v4653 = vsel %vm874, %v4648, 0
        %4655 = vmatprep.subr.mxu0 0.0
        %4656 = vmatpush1.msra.mxu0 %v4650
        %4657 = vmatprep.subr.mxu0 0.0
        %4658 = vmatpush1.msra.mxu0 0.0
        %4659 = vmatprep.subr.mxu0 0.0
        %4660 = vmatpush1.msra.mxu0 0.0
        %4661 = vmatprep.subr.mxu0 0.0
        %4662 = vmatpush1.msra.mxu0 0.0
        %4663 = vmatprep.subr.mxu0 0.0
        %4664 = vmatpush1.msra.mxu0 0.0
        %4665 = vmatprep.subr.mxu0 0.0
        %4666 = vmatpush1.msra.mxu0 0.0
        %4667 = vmatprep.subr.mxu0 0.0
        %4668 = vmatpush1.msra.mxu0 0.0
        %4669 = vmatprep.subr.mxu0 0.0
        %4670 = vmatpush1.msra.mxu0 0.0
        %4671 = vmatprep.subr.mxu0 0.0
        %4672 = vmatpush1.msra.mxu0 0.0
        %4673 = vmatprep.subr.mxu0 0.0
        %4674 = vmatpush1.msra.mxu0 0.0
        %4675 = vmatprep.subr.mxu0 0.0
        %4676 = vmatpush1.msra.mxu0 0.0
        %4677 = vmatprep.subr.mxu0 0.0
        %4678 = vmatpush1.msra.mxu0 0.0
        %4679 = vmatprep.subr.mxu0 0.0
        %4680 = vmatpush1.msra.mxu0 0.0
        %4681 = vmatprep.subr.mxu0 0.0
        %4682 = vmatpush1.msra.mxu0 0.0
        %4683 = vmatprep.subr.mxu0 0.0
        %4684 = vmatpush1.msra.mxu0 0.0
        %4685 = vmatprep.subr.mxu0 0.0
        %4686 = vmatpush1.msra.mxu0 0.0
        %4687 = vmatprep.subr.mxu0 0.0
        %4688 = vmatpush1.msra.mxu0 0.0
        %4689 = vmatprep.subr.mxu0 0.0
        %4690 = vmatpush1.msra.mxu0 0.0
        %4691 = vmatprep.subr.mxu0 0.0
        %4692 = vmatpush1.msra.mxu0 0.0
        %4693 = vmatprep.subr.mxu0 0.0
        %4694 = vmatpush1.msra.mxu0 0.0
        %4695 = vmatprep.subr.mxu0 0.0
        %4696 = vmatpush1.msra.mxu0 0.0
        %4697 = vmatprep.subr.mxu0 0.0
        %4698 = vmatpush1.msra.mxu0 0.0
        %4699 = vmatprep.subr.mxu0 0.0
        %4700 = vmatpush1.msra.mxu0 0.0
        %4701 = vmatprep.subr.mxu0 0.0
        %4702 = vmatpush1.msra.mxu0 0.0
        %4703 = vmatprep.subr.mxu0 0.0
        %4704 = vmatpush1.msra.mxu0 0.0
        %4705 = vmatprep.subr.mxu0 0.0
        %4706 = vmatpush1.msra.mxu0 0.0
        %4707 = vmatprep.subr.mxu0 0.0
        %4708 = vmatpush1.msra.mxu0 0.0
        %4709 = vmatprep.subr.mxu0 0.0
        %4710 = vmatpush1.msra.mxu0 0.0
        %4711 = vmatprep.subr.mxu0 0.0
        %4712 = vmatpush1.msra.mxu0 0.0
        %4713 = vmatprep.subr.mxu0 0.0
        %4714 = vmatpush1.msra.mxu0 0.0
        %4715 = vmatprep.subr.mxu0 0.0
        %4716 = vmatpush1.msra.mxu0 0.0
        %4717 = vmatprep.subr.mxu0 0.0
        %4718 = vmatpush1.msra.mxu0 0.0
        %4719 = vmatprep.mubr.f32.mxu0 0.0
        %4720 = vmatmul.mubr.f32.gmra.mrb[0].mxu0 %v4653
        %v4721 = vpop.f32.mrb[0].mxu0
        %v4722 = vadd.f32 0.0, %v4721
        %v4723 = vpop.f32.mrb[0].mxu0
        %4724 = vdwg.mxu0
        %4725 = vrot.lane.b32.xlu0 %v4475, 120
        %v4726 = vpop.permute.xlu0 %4725
        %4727 = vrot.lane.b32.xlu0 %v4552, 120
        %v4728 = vpop.permute.xlu0 %4727
        %v4729 = vsel %vm874, %v4726, 0
        %v4731 = vsel %vm874, %v4728, 0
        %4733 = vmatprep.subr.mxu0 0.0
        %4734 = vmatpush1.xpose.msra.mxu0 %v4731
        %4735 = vmatprep.subr.mxu0 0.0
        %4736 = vmatpush1.xpose.msra.mxu0 0.0
        %4737 = vmatprep.subr.mxu0 0.0
        %4738 = vmatpush1.xpose.msra.mxu0 0.0
        %4739 = vmatprep.subr.mxu0 0.0
        %4740 = vmatpush1.xpose.msra.mxu0 0.0
        %4741 = vmatprep.subr.mxu0 0.0
        %4742 = vmatpush1.xpose.msra.mxu0 0.0
        %4743 = vmatprep.subr.mxu0 0.0
        %4744 = vmatpush1.xpose.msra.mxu0 0.0
        %4745 = vmatprep.subr.mxu0 0.0
        %4746 = vmatpush1.xpose.msra.mxu0 0.0
        %4747 = vmatprep.subr.mxu0 0.0
        %4748 = vmatpush1.xpose.msra.mxu0 0.0
        %4749 = vmatprep.subr.mxu0 0.0
        %4750 = vmatpush1.xpose.msra.mxu0 0.0
        %4751 = vmatprep.subr.mxu0 0.0
        %4752 = vmatpush1.xpose.msra.mxu0 0.0
        %4753 = vmatprep.subr.mxu0 0.0
        %4754 = vmatpush1.xpose.msra.mxu0 0.0
        %4755 = vmatprep.subr.mxu0 0.0
        %4756 = vmatpush1.xpose.msra.mxu0 0.0
        %4757 = vmatprep.subr.mxu0 0.0
        %4758 = vmatpush1.xpose.msra.mxu0 0.0
        %4759 = vmatprep.subr.mxu0 0.0
        %4760 = vmatpush1.xpose.msra.mxu0 0.0
        %4761 = vmatprep.subr.mxu0 0.0
        %4762 = vmatpush1.xpose.msra.mxu0 0.0
        %4763 = vmatprep.subr.mxu0 0.0
        %4764 = vmatpush1.xpose.msra.mxu0 0.0
        %4765 = vmatprep.subr.mxu0 0.0
        %4766 = vmatpush1.xpose.msra.mxu0 0.0
        %4767 = vmatprep.subr.mxu0 0.0
        %4768 = vmatpush1.xpose.msra.mxu0 0.0
        %4769 = vmatprep.subr.mxu0 0.0
        %4770 = vmatpush1.xpose.msra.mxu0 0.0
        %4771 = vmatprep.subr.mxu0 0.0
        %4772 = vmatpush1.xpose.msra.mxu0 0.0
        %4773 = vmatprep.subr.mxu0 0.0
        %4774 = vmatpush1.xpose.msra.mxu0 0.0
        %4775 = vmatprep.subr.mxu0 0.0
        %4776 = vmatpush1.xpose.msra.mxu0 0.0
        %4777 = vmatprep.subr.mxu0 0.0
        %4778 = vmatpush1.xpose.msra.mxu0 0.0
        %4779 = vmatprep.subr.mxu0 0.0
        %4780 = vmatpush1.xpose.msra.mxu0 0.0
        %4781 = vmatprep.subr.mxu0 0.0
        %4782 = vmatpush1.xpose.msra.mxu0 0.0
        %4783 = vmatprep.subr.mxu0 0.0
        %4784 = vmatpush1.xpose.msra.mxu0 0.0
        %4785 = vmatprep.subr.mxu0 0.0
        %4786 = vmatpush1.xpose.msra.mxu0 0.0
        %4787 = vmatprep.subr.mxu0 0.0
        %4788 = vmatpush1.xpose.msra.mxu0 0.0
        %4789 = vmatprep.subr.mxu0 0.0
        %4790 = vmatpush1.xpose.msra.mxu0 0.0
        %4791 = vmatprep.subr.mxu0 0.0
        %4792 = vmatpush1.xpose.msra.mxu0 0.0
        %4793 = vmatprep.subr.mxu0 0.0
        %4794 = vmatpush1.xpose.msra.mxu0 0.0
        %4795 = vmatprep.subr.mxu0 0.0
        %4796 = vmatpush1.xpose.msra.mxu0 0.0
        %4797 = vmatprep.mubr.f32.mxu0 0.0
        %4798 = vmatmul.mubr.f32.gmra.mrb[0].mxu0 %v4729
        %v4799 = vpop.f32.mrb[0].mxu0
        %v4800 = vadd.f32 0.0, %v4799
        %v4801 = vpop.f32.mrb[0].mxu0
        %4802 = vdwg.mxu0
        %v4803 = vmul.f32 %v4800, 0.35355338
        %v4804 = vsel %vm4636, %v4803, -1000000.0
        %v4805 = vsel %vm874, %v4804, -inf
        %4806 = vmax.xlane.f32.xlu0 %v4805
        %v4807 = vpop.xlane.xlu0 %4806
        %v4808 = vsub.f32 %v4804, %v4807
        %v4809 = vmul.f32 %v4808, 1.442695
        %v4810 = vpow.pop %v4809
        %v4811 = vsel %vm874, %v4810, 0.0
        %4812 = vadd.xlane.f32.xlu0 %v4811
        %v4813 = vpop.xlane.xlu0 %4812
        %v4814 = vrcp.pop %v4813
        %v4815 = vmul.f32 %v4810, %v4814
        %4816 = vrot.lane.b32.xlu0 %v4552, 88
        %v4817 = vpop.permute.xlu0 %4816
        %v4820 = vsel %vm874, %v4815, 0
        %4822 = vmatprep.subr.mxu0 0.0
        %4823 = vmatpush1.msra.mxu0 %v4817
        %4824 = vmatprep.subr.mxu0 0.0
        %4825 = vmatpush1.msra.mxu0 0.0
        %4826 = vmatprep.subr.mxu0 0.0
        %4827 = vmatpush1.msra.mxu0 0.0
        %4828 = vmatprep.subr.mxu0 0.0
        %4829 = vmatpush1.msra.mxu0 0.0
        %4830 = vmatprep.subr.mxu0 0.0
        %4831 = vmatpush1.msra.mxu0 0.0
        %4832 = vmatprep.subr.mxu0 0.0
        %4833 = vmatpush1.msra.mxu0 0.0
        %4834 = vmatprep.subr.mxu0 0.0
        %4835 = vmatpush1.msra.mxu0 0.0
        %4836 = vmatprep.subr.mxu0 0.0
        %4837 = vmatpush1.msra.mxu0 0.0
        %4838 = vmatprep.subr.mxu0 0.0
        %4839 = vmatpush1.msra.mxu0 0.0
        %4840 = vmatprep.subr.mxu0 0.0
        %4841 = vmatpush1.msra.mxu0 0.0
        %4842 = vmatprep.subr.mxu0 0.0
        %4843 = vmatpush1.msra.mxu0 0.0
        %4844 = vmatprep.subr.mxu0 0.0
        %4845 = vmatpush1.msra.mxu0 0.0
        %4846 = vmatprep.subr.mxu0 0.0
        %4847 = vmatpush1.msra.mxu0 0.0
        %4848 = vmatprep.subr.mxu0 0.0
        %4849 = vmatpush1.msra.mxu0 0.0
        %4850 = vmatprep.subr.mxu0 0.0
        %4851 = vmatpush1.msra.mxu0 0.0
        %4852 = vmatprep.subr.mxu0 0.0
        %4853 = vmatpush1.msra.mxu0 0.0
        %4854 = vmatprep.subr.mxu0 0.0
        %4855 = vmatpush1.msra.mxu0 0.0
        %4856 = vmatprep.subr.mxu0 0.0
        %4857 = vmatpush1.msra.mxu0 0.0
        %4858 = vmatprep.subr.mxu0 0.0
        %4859 = vmatpush1.msra.mxu0 0.0
        %4860 = vmatprep.subr.mxu0 0.0
        %4861 = vmatpush1.msra.mxu0 0.0
        %4862 = vmatprep.subr.mxu0 0.0
        %4863 = vmatpush1.msra.mxu0 0.0
        %4864 = vmatprep.subr.mxu0 0.0
        %4865 = vmatpush1.msra.mxu0 0.0
        %4866 = vmatprep.subr.mxu0 0.0
        %4867 = vmatpush1.msra.mxu0 0.0
        %4868 = vmatprep.subr.mxu0 0.0
        %4869 = vmatpush1.msra.mxu0 0.0
        %4870 = vmatprep.subr.mxu0 0.0
        %4871 = vmatpush1.msra.mxu0 0.0
        %4872 = vmatprep.subr.mxu0 0.0
        %4873 = vmatpush1.msra.mxu0 0.0
        %4874 = vmatprep.subr.mxu0 0.0
        %4875 = vmatpush1.msra.mxu0 0.0
        %4876 = vmatprep.subr.mxu0 0.0
        %4877 = vmatpush1.msra.mxu0 0.0
        %4878 = vmatprep.subr.mxu0 0.0
        %4879 = vmatpush1.msra.mxu0 0.0
        %4880 = vmatprep.subr.mxu0 0.0
        %4881 = vmatpush1.msra.mxu0 0.0
        %4882 = vmatprep.subr.mxu0 0.0
        %4883 = vmatpush1.msra.mxu0 0.0
        %4884 = vmatprep.subr.mxu0 0.0
        %4885 = vmatpush1.msra.mxu0 0.0
        %4886 = vmatprep.mubr.f32.mxu0 0.0
        %4887 = vmatmul.mubr.f32.gmra.mrb[0].mxu0 %v4820
        %v4888 = vpop.f32.mrb[0].mxu0
        %v4889 = vadd.f32 0.0, %v4888
        %v4890 = vpop.f32.mrb[0].mxu0
        %4891 = vdwg.mxu0
        %v4893 = vsel %vm874, %v4889, 0
        %4895 = vmatprep.subr.mxu0 0.0
        %4896 = vmatpush1.msra.mxu0 %v4556
        %4897 = vmatprep.subr.mxu0 0.0
        %4898 = vmatpush1.msra.mxu0 0.0
        %4899 = vmatprep.subr.mxu0 0.0
        %4900 = vmatpush1.msra.mxu0 0.0
        %4901 = vmatprep.subr.mxu0 0.0
        %4902 = vmatpush1.msra.mxu0 0.0
        %4903 = vmatprep.subr.mxu0 0.0
        %4904 = vmatpush1.msra.mxu0 0.0
        %4905 = vmatprep.subr.mxu0 0.0
        %4906 = vmatpush1.msra.mxu0 0.0
        %4907 = vmatprep.subr.mxu0 0.0
        %4908 = vmatpush1.msra.mxu0 0.0
        %4909 = vmatprep.subr.mxu0 0.0
        %4910 = vmatpush1.msra.mxu0 0.0
        %4911 = vmatprep.subr.mxu0 0.0
        %4912 = vmatpush1.msra.mxu0 0.0
        %4913 = vmatprep.subr.mxu0 0.0
        %4914 = vmatpush1.msra.mxu0 0.0
        %4915 = vmatprep.subr.mxu0 0.0
        %4916 = vmatpush1.msra.mxu0 0.0
        %4917 = vmatprep.subr.mxu0 0.0
        %4918 = vmatpush1.msra.mxu0 0.0
        %4919 = vmatprep.subr.mxu0 0.0
        %4920 = vmatpush1.msra.mxu0 0.0
        %4921 = vmatprep.subr.mxu0 0.0
        %4922 = vmatpush1.msra.mxu0 0.0
        %4923 = vmatprep.subr.mxu0 0.0
        %4924 = vmatpush1.msra.mxu0 0.0
        %4925 = vmatprep.subr.mxu0 0.0
        %4926 = vmatpush1.msra.mxu0 0.0
        %4927 = vmatprep.subr.mxu0 0.0
        %4928 = vmatpush1.msra.mxu0 0.0
        %4929 = vmatprep.subr.mxu0 0.0
        %4930 = vmatpush1.msra.mxu0 0.0
        %4931 = vmatprep.subr.mxu0 0.0
        %4932 = vmatpush1.msra.mxu0 0.0
        %4933 = vmatprep.subr.mxu0 0.0
        %4934 = vmatpush1.msra.mxu0 0.0
        %4935 = vmatprep.subr.mxu0 0.0
        %4936 = vmatpush1.msra.mxu0 0.0
        %4937 = vmatprep.subr.mxu0 0.0
        %4938 = vmatpush1.msra.mxu0 0.0
        %4939 = vmatprep.subr.mxu0 0.0
        %4940 = vmatpush1.msra.mxu0 0.0
        %4941 = vmatprep.subr.mxu0 0.0
        %4942 = vmatpush1.msra.mxu0 0.0
        %4943 = vmatprep.subr.mxu0 0.0
        %4944 = vmatpush1.msra.mxu0 0.0
        %4945 = vmatprep.subr.mxu0 0.0
        %4946 = vmatpush1.msra.mxu0 0.0
        %4947 = vmatprep.subr.mxu0 0.0
        %4948 = vmatpush1.msra.mxu0 0.0
        %4949 = vmatprep.subr.mxu0 0.0
        %4950 = vmatpush1.msra.mxu0 0.0
        %4951 = vmatprep.subr.mxu0 0.0
        %4952 = vmatpush1.msra.mxu0 0.0
        %4953 = vmatprep.subr.mxu0 0.0
        %4954 = vmatpush1.msra.mxu0 0.0
        %4955 = vmatprep.subr.mxu0 0.0
        %4956 = vmatpush1.msra.mxu0 0.0
        %4957 = vmatprep.subr.mxu0 0.0
        %4958 = vmatpush1.msra.mxu0 0.0
        %4959 = vmatprep.mubr.f32.mxu0 0.0
        %4960 = vmatmul.mubr.f32.gmra.mrb[0].mxu0 %v4893
        %v4961 = vpop.f32.mrb[0].mxu0
        %v4962 = vadd.f32 0.0, %v4961
        %v4963 = vpop.f32.mrb[0].mxu0
        %4964 = vdwg.mxu0
        %v4966 = vsel %vm874, %v4722, 0
        %4968 = vmatprep.subr.mxu0 0.0
        %4969 = vmatpush1.msra.mxu0 %v4555
        %4970 = vmatprep.subr.mxu0 0.0
        %4971 = vmatpush1.msra.mxu0 0.0
        %4972 = vmatprep.subr.mxu0 0.0
        %4973 = vmatpush1.msra.mxu0 0.0
        %4974 = vmatprep.subr.mxu0 0.0
        %4975 = vmatpush1.msra.mxu0 0.0
        %4976 = vmatprep.subr.mxu0 0.0
        %4977 = vmatpush1.msra.mxu0 0.0
        %4978 = vmatprep.subr.mxu0 0.0
        %4979 = vmatpush1.msra.mxu0 0.0
        %4980 = vmatprep.subr.mxu0 0.0
        %4981 = vmatpush1.msra.mxu0 0.0
        %4982 = vmatprep.subr.mxu0 0.0
        %4983 = vmatpush1.msra.mxu0 0.0
        %4984 = vmatprep.subr.mxu0 0.0
        %4985 = vmatpush1.msra.mxu0 0.0
        %4986 = vmatprep.subr.mxu0 0.0
        %4987 = vmatpush1.msra.mxu0 0.0
        %4988 = vmatprep.subr.mxu0 0.0
        %4989 = vmatpush1.msra.mxu0 0.0
        %4990 = vmatprep.subr.mxu0 0.0
        %4991 = vmatpush1.msra.mxu0 0.0
        %4992 = vmatprep.subr.mxu0 0.0
        %4993 = vmatpush1.msra.mxu0 0.0
        %4994 = vmatprep.subr.mxu0 0.0
        %4995 = vmatpush1.msra.mxu0 0.0
        %4996 = vmatprep.subr.mxu0 0.0
        %4997 = vmatpush1.msra.mxu0 0.0
        %4998 = vmatprep.subr.mxu0 0.0
        %4999 = vmatpush1.msra.mxu0 0.0
        %5000 = vmatprep.subr.mxu0 0.0
        %5001 = vmatpush1.msra.mxu0 0.0
        %5002 = vmatprep.subr.mxu0 0.0
        %5003 = vmatpush1.msra.mxu0 0.0
        %5004 = vmatprep.subr.mxu0 0.0
        %5005 = vmatpush1.msra.mxu0 0.0
        %5006 = vmatprep.subr.mxu0 0.0
        %5007 = vmatpush1.msra.mxu0 0.0
        %5008 = vmatprep.subr.mxu0 0.0
        %5009 = vmatpush1.msra.mxu0 0.0
        %5010 = vmatprep.subr.mxu0 0.0
        %5011 = vmatpush1.msra.mxu0 0.0
        %5012 = vmatprep.subr.mxu0 0.0
        %5013 = vmatpush1.msra.mxu0 0.0
        %5014 = vmatprep.subr.mxu0 0.0
        %5015 = vmatpush1.msra.mxu0 0.0
        %5016 = vmatprep.subr.mxu0 0.0
        %5017 = vmatpush1.msra.mxu0 0.0
        %5018 = vmatprep.subr.mxu0 0.0
        %5019 = vmatpush1.msra.mxu0 0.0
        %5020 = vmatprep.subr.mxu0 0.0
        %5021 = vmatpush1.msra.mxu0 0.0
        %5022 = vmatprep.subr.mxu0 0.0
        %5023 = vmatpush1.msra.mxu0 0.0
        %5024 = vmatprep.subr.mxu0 0.0
        %5025 = vmatpush1.msra.mxu0 0.0
        %5026 = vmatprep.subr.mxu0 0.0
        %5027 = vmatpush1.msra.mxu0 0.0
        %5028 = vmatprep.subr.mxu0 0.0
        %5029 = vmatpush1.msra.mxu0 0.0
        %5030 = vmatprep.subr.mxu0 0.0
        %5031 = vmatpush1.msra.mxu0 0.0
        %5032 = vmatprep.mubr.f32.mxu0 0.0
        %5033 = vmatmul.mubr.f32.gmra.mrb[0].mxu0 %v4966
        %v5034 = vpop.f32.mrb[0].mxu0
        %v5035 = vadd.f32 %v4962, %v5034
        %v5036 = vpop.f32.mrb[0].mxu0
        %5037 = vdwg.mxu0
        %5038 = vrot.lane.b32.xlu0 %v4475, 112
        %v5039 = vpop.permute.xlu0 %5038
        %5040 = vrot.lane.b32.xlu0 %v4552, 112
        %v5041 = vpop.permute.xlu0 %5040
        %v5042 = vsel %vm874, %v5039, 0
        %v5044 = vsel %vm874, %v5041, 0
        %5046 = vmatprep.subr.mxu0 0.0
        %5047 = vmatpush1.xpose.msra.mxu0 %v5044
        %5048 = vmatprep.subr.mxu0 0.0
        %5049 = vmatpush1.xpose.msra.mxu0 0.0
        %5050 = vmatprep.subr.mxu0 0.0
        %5051 = vmatpush1.xpose.msra.mxu0 0.0
        %5052 = vmatprep.subr.mxu0 0.0
        %5053 = vmatpush1.xpose.msra.mxu0 0.0
        %5054 = vmatprep.subr.mxu0 0.0
        %5055 = vmatpush1.xpose.msra.mxu0 0.0
        %5056 = vmatprep.subr.mxu0 0.0
        %5057 = vmatpush1.xpose.msra.mxu0 0.0
        %5058 = vmatprep.subr.mxu0 0.0
        %5059 = vmatpush1.xpose.msra.mxu0 0.0
        %5060 = vmatprep.subr.mxu0 0.0
        %5061 = vmatpush1.xpose.msra.mxu0 0.0
        %5062 = vmatprep.subr.mxu0 0.0
        %5063 = vmatpush1.xpose.msra.mxu0 0.0
        %5064 = vmatprep.subr.mxu0 0.0
        %5065 = vmatpush1.xpose.msra.mxu0 0.0
        %5066 = vmatprep.subr.mxu0 0.0
        %5067 = vmatpush1.xpose.msra.mxu0 0.0
        %5068 = vmatprep.subr.mxu0 0.0
        %5069 = vmatpush1.xpose.msra.mxu0 0.0
        %5070 = vmatprep.subr.mxu0 0.0
        %5071 = vmatpush1.xpose.msra.mxu0 0.0
        %5072 = vmatprep.subr.mxu0 0.0
        %5073 = vmatpush1.xpose.msra.mxu0 0.0
        %5074 = vmatprep.subr.mxu0 0.0
        %5075 = vmatpush1.xpose.msra.mxu0 0.0
        %5076 = vmatprep.subr.mxu0 0.0
        %5077 = vmatpush1.xpose.msra.mxu0 0.0
        %5078 = vmatprep.subr.mxu0 0.0
        %5079 = vmatpush1.xpose.msra.mxu0 0.0
        %5080 = vmatprep.subr.mxu0 0.0
        %5081 = vmatpush1.xpose.msra.mxu0 0.0
        %5082 = vmatprep.subr.mxu0 0.0
        %5083 = vmatpush1.xpose.msra.mxu0 0.0
        %5084 = vmatprep.subr.mxu0 0.0
        %5085 = vmatpush1.xpose.msra.mxu0 0.0
        %5086 = vmatprep.subr.mxu0 0.0
        %5087 = vmatpush1.xpose.msra.mxu0 0.0
        %5088 = vmatprep.subr.mxu0 0.0
        %5089 = vmatpush1.xpose.msra.mxu0 0.0
        %5090 = vmatprep.subr.mxu0 0.0
        %5091 = vmatpush1.xpose.msra.mxu0 0.0
        %5092 = vmatprep.subr.mxu0 0.0
        %5093 = vmatpush1.xpose.msra.mxu0 0.0
        %5094 = vmatprep.subr.mxu0 0.0
        %5095 = vmatpush1.xpose.msra.mxu0 0.0
        %5096 = vmatprep.subr.mxu0 0.0
        %5097 = vmatpush1.xpose.msra.mxu0 0.0
        %5098 = vmatprep.subr.mxu0 0.0
        %5099 = vmatpush1.xpose.msra.mxu0 0.0
        %5100 = vmatprep.subr.mxu0 0.0
        %5101 = vmatpush1.xpose.msra.mxu0 0.0
        %5102 = vmatprep.subr.mxu0 0.0
        %5103 = vmatpush1.xpose.msra.mxu0 0.0
        %5104 = vmatprep.subr.mxu0 0.0
        %5105 = vmatpush1.xpose.msra.mxu0 0.0
        %5106 = vmatprep.subr.mxu0 0.0
        %5107 = vmatpush1.xpose.msra.mxu0 0.0
        %5108 = vmatprep.subr.mxu0 0.0
        %5109 = vmatpush1.xpose.msra.mxu0 0.0
        %5110 = vmatprep.mubr.f32.mxu0 0.0
        %5111 = vmatmul.mubr.f32.gmra.mrb[0].mxu0 %v5042
        %v5112 = vpop.f32.mrb[0].mxu0
        %v5113 = vadd.f32 0.0, %v5112
        %v5114 = vpop.f32.mrb[0].mxu0
        %5115 = vdwg.mxu0
        %v5116 = vmul.f32 %v5113, 0.35355338
        %v5117 = vsel %vm4636, %v5116, -1000000.0
        %v5118 = vsel %vm874, %v5117, -inf
        %5119 = vmax.xlane.f32.xlu0 %v5118
        %v5120 = vpop.xlane.xlu0 %5119
        %v5121 = vsub.f32 %v5117, %v5120
        %v5122 = vmul.f32 %v5121, 1.442695
        %v5123 = vpow.pop %v5122
        %v5124 = vsel %vm874, %v5123, 0.0
        %5125 = vadd.xlane.f32.xlu0 %v5124
        %v5126 = vpop.xlane.xlu0 %5125
        %v5127 = vrcp.pop %v5126
        %v5128 = vmul.f32 %v5123, %v5127
        %5129 = vrot.lane.b32.xlu0 %v4552, 80
        %v5130 = vpop.permute.xlu0 %5129
        %v5133 = vsel %vm874, %v5128, 0
        %5135 = vmatprep.subr.mxu0 0.0
        %5136 = vmatpush1.msra.mxu0 %v5130
        %5137 = vmatprep.subr.mxu0 0.0
        %5138 = vmatpush1.msra.mxu0 0.0
        %5139 = vmatprep.subr.mxu0 0.0
        %5140 = vmatpush1.msra.mxu0 0.0
        %5141 = vmatprep.subr.mxu0 0.0
        %5142 = vmatpush1.msra.mxu0 0.0
        %5143 = vmatprep.subr.mxu0 0.0
        %5144 = vmatpush1.msra.mxu0 0.0
        %5145 = vmatprep.subr.mxu0 0.0
        %5146 = vmatpush1.msra.mxu0 0.0
        %5147 = vmatprep.subr.mxu0 0.0
        %5148 = vmatpush1.msra.mxu0 0.0
        %5149 = vmatprep.subr.mxu0 0.0
        %5150 = vmatpush1.msra.mxu0 0.0
        %5151 = vmatprep.subr.mxu0 0.0
        %5152 = vmatpush1.msra.mxu0 0.0
        %5153 = vmatprep.subr.mxu0 0.0
        %5154 = vmatpush1.msra.mxu0 0.0
        %5155 = vmatprep.subr.mxu0 0.0
        %5156 = vmatpush1.msra.mxu0 0.0
        %5157 = vmatprep.subr.mxu0 0.0
        %5158 = vmatpush1.msra.mxu0 0.0
        %5159 = vmatprep.subr.mxu0 0.0
        %5160 = vmatpush1.msra.mxu0 0.0
        %5161 = vmatprep.subr.mxu0 0.0
        %5162 = vmatpush1.msra.mxu0 0.0
        %5163 = vmatprep.subr.mxu0 0.0
        %5164 = vmatpush1.msra.mxu0 0.0
        %5165 = vmatprep.subr.mxu0 0.0
        %5166 = vmatpush1.msra.mxu0 0.0
        %5167 = vmatprep.subr.mxu0 0.0
        %5168 = vmatpush1.msra.mxu0 0.0
        %5169 = vmatprep.subr.mxu0 0.0
        %5170 = vmatpush1.msra.mxu0 0.0
        %5171 = vmatprep.subr.mxu0 0.0
        %5172 = vmatpush1.msra.mxu0 0.0
        %5173 = vmatprep.subr.mxu0 0.0
        %5174 = vmatpush1.msra.mxu0 0.0
        %5175 = vmatprep.subr.mxu0 0.0
        %5176 = vmatpush1.msra.mxu0 0.0
        %5177 = vmatprep.subr.mxu0 0.0
        %5178 = vmatpush1.msra.mxu0 0.0
        %5179 = vmatprep.subr.mxu0 0.0
        %5180 = vmatpush1.msra.mxu0 0.0
        %5181 = vmatprep.subr.mxu0 0.0
        %5182 = vmatpush1.msra.mxu0 0.0
        %5183 = vmatprep.subr.mxu0 0.0
        %5184 = vmatpush1.msra.mxu0 0.0
        %5185 = vmatprep.subr.mxu0 0.0
        %5186 = vmatpush1.msra.mxu0 0.0
        %5187 = vmatprep.subr.mxu0 0.0
        %5188 = vmatpush1.msra.mxu0 0.0
        %5189 = vmatprep.subr.mxu0 0.0
        %5190 = vmatpush1.msra.mxu0 0.0
        %5191 = vmatprep.subr.mxu0 0.0
        %5192 = vmatpush1.msra.mxu0 0.0
        %5193 = vmatprep.subr.mxu0 0.0
        %5194 = vmatpush1.msra.mxu0 0.0
        %5195 = vmatprep.subr.mxu0 0.0
        %5196 = vmatpush1.msra.mxu0 0.0
        %5197 = vmatprep.subr.mxu0 0.0
        %5198 = vmatpush1.msra.mxu0 0.0
        %5199 = vmatprep.mubr.f32.mxu0 0.0
        %5200 = vmatmul.mubr.f32.gmra.mrb[0].mxu0 %v5133
        %v5201 = vpop.f32.mrb[0].mxu0
        %v5202 = vadd.f32 0.0, %v5201
        %v5203 = vpop.f32.mrb[0].mxu0
        %5204 = vdwg.mxu0
        %v5206 = vsel %vm874, %v5202, 0
        %5208 = vmatprep.subr.mxu0 0.0
        %5209 = vmatpush1.msra.mxu0 %v4557
        %5210 = vmatprep.subr.mxu0 0.0
        %5211 = vmatpush1.msra.mxu0 0.0
        %5212 = vmatprep.subr.mxu0 0.0
        %5213 = vmatpush1.msra.mxu0 0.0
        %5214 = vmatprep.subr.mxu0 0.0
        %5215 = vmatpush1.msra.mxu0 0.0
        %5216 = vmatprep.subr.mxu0 0.0
        %5217 = vmatpush1.msra.mxu0 0.0
        %5218 = vmatprep.subr.mxu0 0.0
        %5219 = vmatpush1.msra.mxu0 0.0
        %5220 = vmatprep.subr.mxu0 0.0
        %5221 = vmatpush1.msra.mxu0 0.0
        %5222 = vmatprep.subr.mxu0 0.0
        %5223 = vmatpush1.msra.mxu0 0.0
        %5224 = vmatprep.subr.mxu0 0.0
        %5225 = vmatpush1.msra.mxu0 0.0
        %5226 = vmatprep.subr.mxu0 0.0
        %5227 = vmatpush1.msra.mxu0 0.0
        %5228 = vmatprep.subr.mxu0 0.0
        %5229 = vmatpush1.msra.mxu0 0.0
        %5230 = vmatprep.subr.mxu0 0.0
        %5231 = vmatpush1.msra.mxu0 0.0
        %5232 = vmatprep.subr.mxu0 0.0
        %5233 = vmatpush1.msra.mxu0 0.0
        %5234 = vmatprep.subr.mxu0 0.0
        %5235 = vmatpush1.msra.mxu0 0.0
        %5236 = vmatprep.subr.mxu0 0.0
        %5237 = vmatpush1.msra.mxu0 0.0
        %5238 = vmatprep.subr.mxu0 0.0
        %5239 = vmatpush1.msra.mxu0 0.0
        %5240 = vmatprep.subr.mxu0 0.0
        %5241 = vmatpush1.msra.mxu0 0.0
        %5242 = vmatprep.subr.mxu0 0.0
        %5243 = vmatpush1.msra.mxu0 0.0
        %5244 = vmatprep.subr.mxu0 0.0
        %5245 = vmatpush1.msra.mxu0 0.0
        %5246 = vmatprep.subr.mxu0 0.0
        %5247 = vmatpush1.msra.mxu0 0.0
        %5248 = vmatprep.subr.mxu0 0.0
        %5249 = vmatpush1.msra.mxu0 0.0
        %5250 = vmatprep.subr.mxu0 0.0
        %5251 = vmatpush1.msra.mxu0 0.0
        %5252 = vmatprep.subr.mxu0 0.0
        %5253 = vmatpush1.msra.mxu0 0.0
        %5254 = vmatprep.subr.mxu0 0.0
        %5255 = vmatpush1.msra.mxu0 0.0
        %5256 = vmatprep.subr.mxu0 0.0
        %5257 = vmatpush1.msra.mxu0 0.0
        %5258 = vmatprep.subr.mxu0 0.0
        %5259 = vmatpush1.msra.mxu0 0.0
        %5260 = vmatprep.subr.mxu0 0.0
        %5261 = vmatpush1.msra.mxu0 0.0
        %5262 = vmatprep.subr.mxu0 0.0
        %5263 = vmatpush1.msra.mxu0 0.0
        %5264 = vmatprep.subr.mxu0 0.0
        %5265 = vmatpush1.msra.mxu0 0.0
        %5266 = vmatprep.subr.mxu0 0.0
        %5267 = vmatpush1.msra.mxu0 0.0
        %5268 = vmatprep.subr.mxu0 0.0
        %5269 = vmatpush1.msra.mxu0 0.0
        %5270 = vmatprep.subr.mxu0 0.0
        %5271 = vmatpush1.msra.mxu0 0.0
        %5272 = vmatprep.mubr.f32.mxu0 0.0
        %5273 = vmatmul.mubr.f32.gmra.mrb[0].mxu0 %v5206
        %v5274 = vpop.f32.mrb[0].mxu0
        %v5275 = vadd.f32 0.0, %v5274
        %v5276 = vpop.f32.mrb[0].mxu0
        %5277 = vdwg.mxu0
        %v5278 = vadd.f32 %v5035, %v5275
        %5279 = vrot.lane.b32.xlu0 %v4475, 104
        %v5280 = vpop.permute.xlu0 %5279
        %5281 = vrot.lane.b32.xlu0 %v4552, 104
        %v5282 = vpop.permute.xlu0 %5281
        %v5283 = vsel %vm874, %v5280, 0
        %v5285 = vsel %vm874, %v5282, 0
        %5287 = vmatprep.subr.mxu0 0.0
        %5288 = vmatpush1.xpose.msra.mxu0 %v5285
        %5289 = vmatprep.subr.mxu0 0.0
        %5290 = vmatpush1.xpose.msra.mxu0 0.0
        %5291 = vmatprep.subr.mxu0 0.0
        %5292 = vmatpush1.xpose.msra.mxu0 0.0
        %5293 = vmatprep.subr.mxu0 0.0
        %5294 = vmatpush1.xpose.msra.mxu0 0.0
        %5295 = vmatprep.subr.mxu0 0.0
        %5296 = vmatpush1.xpose.msra.mxu0 0.0
        %5297 = vmatprep.subr.mxu0 0.0
        %5298 = vmatpush1.xpose.msra.mxu0 0.0
        %5299 = vmatprep.subr.mxu0 0.0
        %5300 = vmatpush1.xpose.msra.mxu0 0.0
        %5301 = vmatprep.subr.mxu0 0.0
        %5302 = vmatpush1.xpose.msra.mxu0 0.0
        %5303 = vmatprep.subr.mxu0 0.0
        %5304 = vmatpush1.xpose.msra.mxu0 0.0
        %5305 = vmatprep.subr.mxu0 0.0
        %5306 = vmatpush1.xpose.msra.mxu0 0.0
        %5307 = vmatprep.subr.mxu0 0.0
        %5308 = vmatpush1.xpose.msra.mxu0 0.0
        %5309 = vmatprep.subr.mxu0 0.0
        %5310 = vmatpush1.xpose.msra.mxu0 0.0
        %5311 = vmatprep.subr.mxu0 0.0
        %5312 = vmatpush1.xpose.msra.mxu0 0.0
        %5313 = vmatprep.subr.mxu0 0.0
        %5314 = vmatpush1.xpose.msra.mxu0 0.0
        %5315 = vmatprep.subr.mxu0 0.0
        %5316 = vmatpush1.xpose.msra.mxu0 0.0
        %5317 = vmatprep.subr.mxu0 0.0
        %5318 = vmatpush1.xpose.msra.mxu0 0.0
        %5319 = vmatprep.subr.mxu0 0.0
        %5320 = vmatpush1.xpose.msra.mxu0 0.0
        %5321 = vmatprep.subr.mxu0 0.0
        %5322 = vmatpush1.xpose.msra.mxu0 0.0
        %5323 = vmatprep.subr.mxu0 0.0
        %5324 = vmatpush1.xpose.msra.mxu0 0.0
        %5325 = vmatprep.subr.mxu0 0.0
        %5326 = vmatpush1.xpose.msra.mxu0 0.0
        %5327 = vmatprep.subr.mxu0 0.0
        %5328 = vmatpush1.xpose.msra.mxu0 0.0
        %5329 = vmatprep.subr.mxu0 0.0
        %5330 = vmatpush1.xpose.msra.mxu0 0.0
        %5331 = vmatprep.subr.mxu0 0.0
        %5332 = vmatpush1.xpose.msra.mxu0 0.0
        %5333 = vmatprep.subr.mxu0 0.0
        %5334 = vmatpush1.xpose.msra.mxu0 0.0
        %5335 = vmatprep.subr.mxu0 0.0
        %5336 = vmatpush1.xpose.msra.mxu0 0.0
        %5337 = vmatprep.subr.mxu0 0.0
        %5338 = vmatpush1.xpose.msra.mxu0 0.0
        %5339 = vmatprep.subr.mxu0 0.0
        %5340 = vmatpush1.xpose.msra.mxu0 0.0
        %5341 = vmatprep.subr.mxu0 0.0
        %5342 = vmatpush1.xpose.msra.mxu0 0.0
        %5343 = vmatprep.subr.mxu0 0.0
        %5344 = vmatpush1.xpose.msra.mxu0 0.0
        %5345 = vmatprep.subr.mxu0 0.0
        %5346 = vmatpush1.xpose.msra.mxu0 0.0
        %5347 = vmatprep.subr.mxu0 0.0
        %5348 = vmatpush1.xpose.msra.mxu0 0.0
        %5349 = vmatprep.subr.mxu0 0.0
        %5350 = vmatpush1.xpose.msra.mxu0 0.0
        %5351 = vmatprep.mubr.f32.mxu0 0.0
        %5352 = vmatmul.mubr.f32.gmra.mrb[0].mxu0 %v5283
        %v5353 = vpop.f32.mrb[0].mxu0
        %v5354 = vadd.f32 0.0, %v5353
        %v5355 = vpop.f32.mrb[0].mxu0
        %5356 = vdwg.mxu0
        %v5357 = vmul.f32 %v5354, 0.35355338
        %v5358 = vsel %vm4636, %v5357, -1000000.0
        %v5359 = vsel %vm874, %v5358, -inf
        %5360 = vmax.xlane.f32.xlu0 %v5359
        %v5361 = vpop.xlane.xlu0 %5360
        %v5362 = vsub.f32 %v5358, %v5361
        %v5363 = vmul.f32 %v5362, 1.442695
        %v5364 = vpow.pop %v5363
        %v5365 = vsel %vm874, %v5364, 0.0
        %5366 = vadd.xlane.f32.xlu0 %v5365
        %v5367 = vpop.xlane.xlu0 %5366
        %v5368 = vrcp.pop %v5367
        %v5369 = vmul.f32 %v5364, %v5368
        %5370 = vrot.lane.b32.xlu0 %v4552, 72
        %v5371 = vpop.permute.xlu0 %5370
        %v5374 = vsel %vm874, %v5369, 0
        %5376 = vmatprep.subr.mxu0 0.0
        %5377 = vmatpush1.msra.mxu0 %v5371
        %5378 = vmatprep.subr.mxu0 0.0
        %5379 = vmatpush1.msra.mxu0 0.0
        %5380 = vmatprep.subr.mxu0 0.0
        %5381 = vmatpush1.msra.mxu0 0.0
        %5382 = vmatprep.subr.mxu0 0.0
        %5383 = vmatpush1.msra.mxu0 0.0
        %5384 = vmatprep.subr.mxu0 0.0
        %5385 = vmatpush1.msra.mxu0 0.0
        %5386 = vmatprep.subr.mxu0 0.0
        %5387 = vmatpush1.msra.mxu0 0.0
        %5388 = vmatprep.subr.mxu0 0.0
        %5389 = vmatpush1.msra.mxu0 0.0
        %5390 = vmatprep.subr.mxu0 0.0
        %5391 = vmatpush1.msra.mxu0 0.0
        %5392 = vmatprep.subr.mxu0 0.0
        %5393 = vmatpush1.msra.mxu0 0.0
        %5394 = vmatprep.subr.mxu0 0.0
        %5395 = vmatpush1.msra.mxu0 0.0
        %5396 = vmatprep.subr.mxu0 0.0
        %5397 = vmatpush1.msra.mxu0 0.0
        %5398 = vmatprep.subr.mxu0 0.0
        %5399 = vmatpush1.msra.mxu0 0.0
        %5400 = vmatprep.subr.mxu0 0.0
        %5401 = vmatpush1.msra.mxu0 0.0
        %5402 = vmatprep.subr.mxu0 0.0
        %5403 = vmatpush1.msra.mxu0 0.0
        %5404 = vmatprep.subr.mxu0 0.0
        %5405 = vmatpush1.msra.mxu0 0.0
        %5406 = vmatprep.subr.mxu0 0.0
        %5407 = vmatpush1.msra.mxu0 0.0
        %5408 = vmatprep.subr.mxu0 0.0
        %5409 = vmatpush1.msra.mxu0 0.0
        %5410 = vmatprep.subr.mxu0 0.0
        %5411 = vmatpush1.msra.mxu0 0.0
        %5412 = vmatprep.subr.mxu0 0.0
        %5413 = vmatpush1.msra.mxu0 0.0
        %5414 = vmatprep.subr.mxu0 0.0
        %5415 = vmatpush1.msra.mxu0 0.0
        %5416 = vmatprep.subr.mxu0 0.0
        %5417 = vmatpush1.msra.mxu0 0.0
        %5418 = vmatprep.subr.mxu0 0.0
        %5419 = vmatpush1.msra.mxu0 0.0
        %5420 = vmatprep.subr.mxu0 0.0
        %5421 = vmatpush1.msra.mxu0 0.0
        %5422 = vmatprep.subr.mxu0 0.0
        %5423 = vmatpush1.msra.mxu0 0.0
        %5424 = vmatprep.subr.mxu0 0.0
        %5425 = vmatpush1.msra.mxu0 0.0
        %5426 = vmatprep.subr.mxu0 0.0
        %5427 = vmatpush1.msra.mxu0 0.0
        %5428 = vmatprep.subr.mxu0 0.0
        %5429 = vmatpush1.msra.mxu0 0.0
        %5430 = vmatprep.subr.mxu0 0.0
        %5431 = vmatpush1.msra.mxu0 0.0
        %5432 = vmatprep.subr.mxu0 0.0
        %5433 = vmatpush1.msra.mxu0 0.0
        %5434 = vmatprep.subr.mxu0 0.0
        %5435 = vmatpush1.msra.mxu0 0.0
        %5436 = vmatprep.subr.mxu0 0.0
        %5437 = vmatpush1.msra.mxu0 0.0
        %5438 = vmatprep.subr.mxu0 0.0
        %5439 = vmatpush1.msra.mxu0 0.0
        %5440 = vmatprep.mubr.f32.mxu0 0.0
        %5441 = vmatmul.mubr.f32.gmra.mrb[0].mxu0 %v5374
        %v5442 = vpop.f32.mrb[0].mxu0
        %v5443 = vadd.f32 0.0, %v5442
        %v5444 = vpop.f32.mrb[0].mxu0
        %5445 = vdwg.mxu0
        %v5447 = vsel %vm874, %v5443, 0
        %5449 = vmatprep.subr.mxu0 0.0
        %5450 = vmatpush1.msra.mxu0 %v4558
        %5451 = vmatprep.subr.mxu0 0.0
        %5452 = vmatpush1.msra.mxu0 0.0
        %5453 = vmatprep.subr.mxu0 0.0
        %5454 = vmatpush1.msra.mxu0 0.0
        %5455 = vmatprep.subr.mxu0 0.0
        %5456 = vmatpush1.msra.mxu0 0.0
        %5457 = vmatprep.subr.mxu0 0.0
        %5458 = vmatpush1.msra.mxu0 0.0
        %5459 = vmatprep.subr.mxu0 0.0
        %5460 = vmatpush1.msra.mxu0 0.0
        %5461 = vmatprep.subr.mxu0 0.0
        %5462 = vmatpush1.msra.mxu0 0.0
        %5463 = vmatprep.subr.mxu0 0.0
        %5464 = vmatpush1.msra.mxu0 0.0
        %5465 = vmatprep.subr.mxu0 0.0
        %5466 = vmatpush1.msra.mxu0 0.0
        %5467 = vmatprep.subr.mxu0 0.0
        %5468 = vmatpush1.msra.mxu0 0.0
        %5469 = vmatprep.subr.mxu0 0.0
        %5470 = vmatpush1.msra.mxu0 0.0
        %5471 = vmatprep.subr.mxu0 0.0
        %5472 = vmatpush1.msra.mxu0 0.0
        %5473 = vmatprep.subr.mxu0 0.0
        %5474 = vmatpush1.msra.mxu0 0.0
        %5475 = vmatprep.subr.mxu0 0.0
        %5476 = vmatpush1.msra.mxu0 0.0
        %5477 = vmatprep.subr.mxu0 0.0
        %5478 = vmatpush1.msra.mxu0 0.0
        %5479 = vmatprep.subr.mxu0 0.0
        %5480 = vmatpush1.msra.mxu0 0.0
        %5481 = vmatprep.subr.mxu0 0.0
        %5482 = vmatpush1.msra.mxu0 0.0
        %5483 = vmatprep.subr.mxu0 0.0
        %5484 = vmatpush1.msra.mxu0 0.0
        %5485 = vmatprep.subr.mxu0 0.0
        %5486 = vmatpush1.msra.mxu0 0.0
        %5487 = vmatprep.subr.mxu0 0.0
        %5488 = vmatpush1.msra.mxu0 0.0
        %5489 = vmatprep.subr.mxu0 0.0
        %5490 = vmatpush1.msra.mxu0 0.0
        %5491 = vmatprep.subr.mxu0 0.0
        %5492 = vmatpush1.msra.mxu0 0.0
        %5493 = vmatprep.subr.mxu0 0.0
        %5494 = vmatpush1.msra.mxu0 0.0
        %5495 = vmatprep.subr.mxu0 0.0
        %5496 = vmatpush1.msra.mxu0 0.0
        %5497 = vmatprep.subr.mxu0 0.0
        %5498 = vmatpush1.msra.mxu0 0.0
        %5499 = vmatprep.subr.mxu0 0.0
        %5500 = vmatpush1.msra.mxu0 0.0
        %5501 = vmatprep.subr.mxu0 0.0
        %5502 = vmatpush1.msra.mxu0 0.0
        %5503 = vmatprep.subr.mxu0 0.0
        %5504 = vmatpush1.msra.mxu0 0.0
        %5505 = vmatprep.subr.mxu0 0.0
        %5506 = vmatpush1.msra.mxu0 0.0
        %5507 = vmatprep.subr.mxu0 0.0
        %5508 = vmatpush1.msra.mxu0 0.0
        %5509 = vmatprep.subr.mxu0 0.0
        %5510 = vmatpush1.msra.mxu0 0.0
        %5511 = vmatprep.subr.mxu0 0.0
        %5512 = vmatpush1.msra.mxu0 0.0
        %5513 = vmatprep.mubr.f32.mxu0 0.0
        %5514 = vmatmul.mubr.f32.gmra.mrb[0].mxu0 %v5447
        %v5515 = vpop.f32.mrb[0].mxu0
        %v5516 = vadd.f32 0.0, %v5515
        %v5517 = vpop.f32.mrb[0].mxu0
        %5518 = vdwg.mxu0
        %v5519 = vadd.f32 %v5278, %v5516
        %v5520 = vadd.f32 %v4400, %v5519
        %v5521 = vsel %vm793, %v5520, 0.0
        %5522 = vadd.xlane.f32.xlu0 %v5521
        %v5523 = vpop.xlane.xlu0 %5522
        %v5524 = vmul.f32 %v5523, %v1838
        %v5525 = vsub.f32 %v5520, %v5524
        %v5526 = vmul.f32 %v5525, %v5525
        %v5527 = vsel %vm793, %v5526, 0.0
        %5528 = vadd.xlane.f32.xlu0 %v5527
        %v5529 = vpop.xlane.xlu0 %5528
        %v5530 = vmul.f32 %v5529, %v1838
        %v5531 = vadd.f32 %v5530, 1e-05
        %v5532 = vrsqrt.pop %v5531
        %v5533 = vmul.f32 %v5525, %v5532
        %v5534 = vlaneseq
        %v5535 = vshrl.u32 %v5534, 7
        %v5536 = vsub.s32 2, %v5535
        %v5537 = vrot.slane %v3333, %v5536
        %v5538 = vmul.f32 %v5533, %v5537
        %v5539 = vlaneseq
        %v5540 = vshrl.u32 %v5539, 7
        %v5541 = vsub.s32 3, %v5540
        %v5542 = vrot.slane %v3333, %v5541
        %v5543 = vadd.f32 %v5538, %v5542
        %v5544 = vld [vmem:[%s18] sm:$0xff]
        %v5545 = vld [vmem:[%s18 + $0x8] sm:$0xff]
        %v5546 = vld [vmem:[%s18 + $0x10] sm:$0xff]
        %v5547 = vld [vmem:[%s18 + $0x18] sm:$0xff]
        %v5548 = vld [vmem:[%s19] sm:$0x1]
        %v5549 = vld [vmem:[%s20] sm:$0xff]
        %v5550 = vld [vmem:[%s20 + $0x8] sm:$0xff]
        %v5551 = vld [vmem:[%s20 + $0x10] sm:$0xff]
        %v5552 = vld [vmem:[%s20 + $0x18] sm:$0xff]
        %v5553 = vld [vmem:[%s20 + $0x20] sm:$0xff]
        %v5554 = vld [vmem:[%s20 + $0x28] sm:$0xff]
        %v5555 = vld [vmem:[%s20 + $0x30] sm:$0xff]
        %v5556 = vld [vmem:[%s20 + $0x38] sm:$0xff]
        %v5557 = vld [vmem:[%s21] sm:$0x1]
        %v5559 = vlaneseq
        %v5560 = vshrl.u32 %v5559, 7
        %v5561 = vsub.s32 0, %v5560
        %v5562 = vrot.slane %v5548, %v5561
        %v5565 = vsel %vm793, %v5543, 0
        %5567 = vmatprep.subr.mxu0 0.0
        %5568 = vmatpush1.msra.mxu0 %v5544
        %5569 = vmatprep.subr.mxu0 0.0
        %5570 = vmatpush1.msra.mxu0 %v5545
        %5571 = vmatprep.subr.mxu0 0.0
        %5572 = vmatpush1.msra.mxu0 %v5546
        %5573 = vmatprep.subr.mxu0 0.0
        %5574 = vmatpush1.msra.mxu0 %v5547
        %5575 = vmatprep.subr.mxu0 0.0
        %5576 = vmatpush1.msra.mxu0 0.0
        %5577 = vmatprep.subr.mxu0 0.0
        %5578 = vmatpush1.msra.mxu0 0.0
        %5579 = vmatprep.subr.mxu0 0.0
        %5580 = vmatpush1.msra.mxu0 0.0
        %5581 = vmatprep.subr.mxu0 0.0
        %5582 = vmatpush1.msra.mxu0 0.0
        %5583 = vmatprep.subr.mxu0 0.0
        %5584 = vmatpush1.msra.mxu0 0.0
        %5585 = vmatprep.subr.mxu0 0.0
        %5586 = vmatpush1.msra.mxu0 0.0
        %5587 = vmatprep.subr.mxu0 0.0
        %5588 = vmatpush1.msra.mxu0 0.0
        %5589 = vmatprep.subr.mxu0 0.0
        %5590 = vmatpush1.msra.mxu0 0.0
        %5591 = vmatprep.subr.mxu0 0.0
        %5592 = vmatpush1.msra.mxu0 0.0
        %5593 = vmatprep.subr.mxu0 0.0
        %5594 = vmatpush1.msra.mxu0 0.0
        %5595 = vmatprep.subr.mxu0 0.0
        %5596 = vmatpush1.msra.mxu0 0.0
        %5597 = vmatprep.subr.mxu0 0.0
        %5598 = vmatpush1.msra.mxu0 0.0
        %5599 = vmatprep.subr.mxu0 0.0
        %5600 = vmatpush1.msra.mxu0 0.0
        %5601 = vmatprep.subr.mxu0 0.0
        %5602 = vmatpush1.msra.mxu0 0.0
        %5603 = vmatprep.subr.mxu0 0.0
        %5604 = vmatpush1.msra.mxu0 0.0
        %5605 = vmatprep.subr.mxu0 0.0
        %5606 = vmatpush1.msra.mxu0 0.0
        %5607 = vmatprep.subr.mxu0 0.0
        %5608 = vmatpush1.msra.mxu0 0.0
        %5609 = vmatprep.subr.mxu0 0.0
        %5610 = vmatpush1.msra.mxu0 0.0
        %5611 = vmatprep.subr.mxu0 0.0
        %5612 = vmatpush1.msra.mxu0 0.0
        %5613 = vmatprep.subr.mxu0 0.0
        %5614 = vmatpush1.msra.mxu0 0.0
        %5615 = vmatprep.subr.mxu0 0.0
        %5616 = vmatpush1.msra.mxu0 0.0
        %5617 = vmatprep.subr.mxu0 0.0
        %5618 = vmatpush1.msra.mxu0 0.0
        %5619 = vmatprep.subr.mxu0 0.0
        %5620 = vmatpush1.msra.mxu0 0.0
        %5621 = vmatprep.subr.mxu0 0.0
        %5622 = vmatpush1.msra.mxu0 0.0
        %5623 = vmatprep.subr.mxu0 0.0
        %5624 = vmatpush1.msra.mxu0 0.0
        %5625 = vmatprep.subr.mxu0 0.0
        %5626 = vmatpush1.msra.mxu0 0.0
        %5627 = vmatprep.subr.mxu0 0.0
        %5628 = vmatpush1.msra.mxu0 0.0
        %5629 = vmatprep.subr.mxu0 0.0
        %5630 = vmatpush1.msra.mxu0 0.0
        %5631 = vmatprep.mubr.f32.mxu0 0.0
        %5632 = vmatmul.mubr.f32.gmra.mrb[0].mxu0 %v5565
        %v5633 = vpop.f32.mrb[0].mxu0
        %v5634 = vadd.f32 %v5562, %v5633
        %v5635 = vpop.f32.mrb[0].mxu0
        %5636 = vdwg.mxu0
        %vm5637 = vcmp.gt.f32.partialorder %v5634, 0.0
        %v5638 = vmul.f32 %v5634, 0.01
        %v5639 = vsel %vm5637, %v5634, %v5638
        %v5641 = vlaneseq
        %v5642 = vshrl.u32 %v5641, 7
        %v5643 = vsub.s32 0, %v5642
        %v5644 = vrot.slane %v5557, %v5643
        %v5647 = vsel %vm1961, %v5639, 0
        %5649 = vmatprep.subr.mxu0 0.0
        %5650 = vmatpush1.msra.mxu0 %v5549
        %5651 = vmatprep.subr.mxu0 0.0
        %5652 = vmatpush1.msra.mxu0 %v5550
        %5653 = vmatprep.subr.mxu0 0.0
        %5654 = vmatpush1.msra.mxu0 %v5551
        %5655 = vmatprep.subr.mxu0 0.0
        %5656 = vmatpush1.msra.mxu0 %v5552
        %5657 = vmatprep.subr.mxu0 0.0
        %5658 = vmatpush1.msra.mxu0 %v5553
        %5659 = vmatprep.subr.mxu0 0.0
        %5660 = vmatpush1.msra.mxu0 %v5554
        %5661 = vmatprep.subr.mxu0 0.0
        %5662 = vmatpush1.msra.mxu0 %v5555
        %5663 = vmatprep.subr.mxu0 0.0
        %5664 = vmatpush1.msra.mxu0 %v5556
        %5665 = vmatprep.subr.mxu0 0.0
        %5666 = vmatpush1.msra.mxu0 0.0
        %5667 = vmatprep.subr.mxu0 0.0
        %5668 = vmatpush1.msra.mxu0 0.0
        %5669 = vmatprep.subr.mxu0 0.0
        %5670 = vmatpush1.msra.mxu0 0.0
        %5671 = vmatprep.subr.mxu0 0.0
        %5672 = vmatpush1.msra.mxu0 0.0
        %5673 = vmatprep.subr.mxu0 0.0
        %5674 = vmatpush1.msra.mxu0 0.0
        %5675 = vmatprep.subr.mxu0 0.0
        %5676 = vmatpush1.msra.mxu0 0.0
        %5677 = vmatprep.subr.mxu0 0.0
        %5678 = vmatpush1.msra.mxu0 0.0
        %5679 = vmatprep.subr.mxu0 0.0
        %5680 = vmatpush1.msra.mxu0 0.0
        %5681 = vmatprep.subr.mxu0 0.0
        %5682 = vmatpush1.msra.mxu0 0.0
        %5683 = vmatprep.subr.mxu0 0.0
        %5684 = vmatpush1.msra.mxu0 0.0
        %5685 = vmatprep.subr.mxu0 0.0
        %5686 = vmatpush1.msra.mxu0 0.0
        %5687 = vmatprep.subr.mxu0 0.0
        %5688 = vmatpush1.msra.mxu0 0.0
        %5689 = vmatprep.subr.mxu0 0.0
        %5690 = vmatpush1.msra.mxu0 0.0
        %5691 = vmatprep.subr.mxu0 0.0
        %5692 = vmatpush1.msra.mxu0 0.0
        %5693 = vmatprep.subr.mxu0 0.0
        %5694 = vmatpush1.msra.mxu0 0.0
        %5695 = vmatprep.subr.mxu0 0.0
        %5696 = vmatpush1.msra.mxu0 0.0
        %5697 = vmatprep.subr.mxu0 0.0
        %5698 = vmatpush1.msra.mxu0 0.0
        %5699 = vmatprep.subr.mxu0 0.0
        %5700 = vmatpush1.msra.mxu0 0.0
        %5701 = vmatprep.subr.mxu0 0.0
        %5702 = vmatpush1.msra.mxu0 0.0
        %5703 = vmatprep.subr.mxu0 0.0
        %5704 = vmatpush1.msra.mxu0 0.0
        %5705 = vmatprep.subr.mxu0 0.0
        %5706 = vmatpush1.msra.mxu0 0.0
        %5707 = vmatprep.subr.mxu0 0.0
        %5708 = vmatpush1.msra.mxu0 0.0
        %5709 = vmatprep.subr.mxu0 0.0
        %5710 = vmatpush1.msra.mxu0 0.0
        %5711 = vmatprep.subr.mxu0 0.0
        %5712 = vmatpush1.msra.mxu0 0.0
        %5713 = vmatprep.mubr.f32.mxu0 0.0
        %5714 = vmatmul.mubr.f32.gmra.mrb[0].mxu0 %v5647
        %v5715 = vpop.f32.mrb[0].mxu0
        %v5716 = vadd.f32 %v5644, %v5715
        %v5717 = vpop.f32.mrb[0].mxu0
        %5718 = vdwg.mxu0
        %v5719 = vadd.f32 %v5543, %v5716
        %v5720 = vsel %vm793, %v5719, 0.0
        %5721 = vadd.xlane.f32.xlu0 %v5720
        %v5722 = vpop.xlane.xlu0 %5721
        %v5723 = vmul.f32 %v5722, %v1838
        %v5724 = vsub.f32 %v5719, %v5723
        %v5725 = vmul.f32 %v5724, %v5724
        %v5726 = vsel %vm793, %v5725, 0.0
        %5727 = vadd.xlane.f32.xlu0 %v5726
        %v5728 = vpop.xlane.xlu0 %5727
        %v5729 = vmul.f32 %v5728, %v1838
        %v5730 = vadd.f32 %v5729, 1e-05
        %v5731 = vrsqrt.pop %v5730
        %v5732 = vmul.f32 %v5724, %v5731
        %v5733 = vlaneseq
        %v5734 = vshrl.u32 %v5733, 7
        %v5735 = vsub.s32 4, %v5734
        %v5736 = vrot.slane %v3333, %v5735
        %v5737 = vmul.f32 %v5732, %v5736
        %v5738 = vlaneseq
        %v5739 = vshrl.u32 %v5738, 7
        %v5740 = vsub.s32 5, %v5739
        %v5741 = vrot.slane %v3333, %v5740
        %v5742 = vadd.f32 %v5737, %v5741
        %s5743 = scalar_lea.vmem %s17, 8
        %v5744 = vld [vmem:[%s5743] sm:$0x3f]
        %s5745 = scalar_lea.vmem %s12, 32
        %v5746 = vld [vmem:[%s5745] sm:$0xff]
        %v5747 = vld [vmem:[%s5745 + $0x8] sm:$0xff]
        %v5748 = vld [vmem:[%s5745 + $0x10] sm:$0xff]
        %v5749 = vld [vmem:[%s5745 + $0x18] sm:$0xff]
        %v5751 = vsel %vm793, %v5742, 0
        %5753 = vmatprep.subr.mxu0 0.0
        %5754 = vmatpush1.msra.mxu0 %v5746
        %5755 = vmatprep.subr.mxu0 0.0
        %5756 = vmatpush1.msra.mxu0 %v5747
        %5757 = vmatprep.subr.mxu0 0.0
        %5758 = vmatpush1.msra.mxu0 %v5748
        %5759 = vmatprep.subr.mxu0 0.0
        %5760 = vmatpush1.msra.mxu0 %v5749
        %5761 = vmatprep.subr.mxu0 0.0
        %5762 = vmatpush1.msra.mxu0 0.0
        %5763 = vmatprep.subr.mxu0 0.0
        %5764 = vmatpush1.msra.mxu0 0.0
        %5765 = vmatprep.subr.mxu0 0.0
        %5766 = vmatpush1.msra.mxu0 0.0
        %5767 = vmatprep.subr.mxu0 0.0
        %5768 = vmatpush1.msra.mxu0 0.0
        %5769 = vmatprep.subr.mxu0 0.0
        %5770 = vmatpush1.msra.mxu0 0.0
        %5771 = vmatprep.subr.mxu0 0.0
        %5772 = vmatpush1.msra.mxu0 0.0
        %5773 = vmatprep.subr.mxu0 0.0
        %5774 = vmatpush1.msra.mxu0 0.0
        %5775 = vmatprep.subr.mxu0 0.0
        %5776 = vmatpush1.msra.mxu0 0.0
        %5777 = vmatprep.subr.mxu0 0.0
        %5778 = vmatpush1.msra.mxu0 0.0
        %5779 = vmatprep.subr.mxu0 0.0
        %5780 = vmatpush1.msra.mxu0 0.0
        %5781 = vmatprep.subr.mxu0 0.0
        %5782 = vmatpush1.msra.mxu0 0.0
        %5783 = vmatprep.subr.mxu0 0.0
        %5784 = vmatpush1.msra.mxu0 0.0
        %5785 = vmatprep.subr.mxu0 0.0
        %5786 = vmatpush1.msra.mxu0 0.0
        %5787 = vmatprep.subr.mxu0 0.0
        %5788 = vmatpush1.msra.mxu0 0.0
        %5789 = vmatprep.subr.mxu0 0.0
        %5790 = vmatpush1.msra.mxu0 0.0
        %5791 = vmatprep.subr.mxu0 0.0
        %5792 = vmatpush1.msra.mxu0 0.0
        %5793 = vmatprep.subr.mxu0 0.0
        %5794 = vmatpush1.msra.mxu0 0.0
        %5795 = vmatprep.subr.mxu0 0.0
        %5796 = vmatpush1.msra.mxu0 0.0
        %5797 = vmatprep.subr.mxu0 0.0
        %5798 = vmatpush1.msra.mxu0 0.0
        %5799 = vmatprep.subr.mxu0 0.0
        %5800 = vmatpush1.msra.mxu0 0.0
        %5801 = vmatprep.subr.mxu0 0.0
        %5802 = vmatpush1.msra.mxu0 0.0
        %5803 = vmatprep.subr.mxu0 0.0
        %5804 = vmatpush1.msra.mxu0 0.0
        %5805 = vmatprep.subr.mxu0 0.0
        %5806 = vmatpush1.msra.mxu0 0.0
        %5807 = vmatprep.subr.mxu0 0.0
        %5808 = vmatpush1.msra.mxu0 0.0
        %5809 = vmatprep.subr.mxu0 0.0
        %5810 = vmatpush1.msra.mxu0 0.0
        %5811 = vmatprep.subr.mxu0 0.0
        %5812 = vmatpush1.msra.mxu0 0.0
        %5813 = vmatprep.subr.mxu0 0.0
        %5814 = vmatpush1.msra.mxu0 0.0
        %5815 = vmatprep.subr.mxu0 0.0
        %5816 = vmatpush1.msra.mxu0 0.0
        %5817 = vmatprep.mubr.f32.mxu0 0.0
        %5818 = vmatmul.mubr.f32.gmra.mrb[0].mxu0 %v5751
        %v5819 = vpop.f32.mrb[0].mxu0
        %v5820 = vadd.f32 0.0, %v5819
        %v5821 = vpop.f32.mrb[0].mxu0
        %5822 = vdwg.mxu0
        %s5823 = scalar_lea.vmem %s13, 32
        %v5824 = vld [vmem:[%s5823] sm:$0xff]
        %v5825 = vld [vmem:[%s5823 + $0x8] sm:$0xff]
        %v5826 = vld [vmem:[%s5823 + $0x10] sm:$0xff]
        %v5827 = vld [vmem:[%s5823 + $0x18] sm:$0xff]
        %5829 = vrot.lane.b32.xlu0 %v5820, 96
        %v5830 = vpop.permute.xlu0 %5829
        %v5831 = vsel %vm874, %v5820, 0
        %v5833 = vsel %vm874, %v5830, 0
        %5835 = vmatprep.subr.mxu0 0.0
        %5836 = vmatpush1.xpose.msra.mxu0 %v5833
        %5837 = vmatprep.subr.mxu0 0.0
        %5838 = vmatpush1.xpose.msra.mxu0 0.0
        %5839 = vmatprep.subr.mxu0 0.0
        %5840 = vmatpush1.xpose.msra.mxu0 0.0
        %5841 = vmatprep.subr.mxu0 0.0
        %5842 = vmatpush1.xpose.msra.mxu0 0.0
        %5843 = vmatprep.subr.mxu0 0.0
        %5844 = vmatpush1.xpose.msra.mxu0 0.0
        %5845 = vmatprep.subr.mxu0 0.0
        %5846 = vmatpush1.xpose.msra.mxu0 0.0
        %5847 = vmatprep.subr.mxu0 0.0
        %5848 = vmatpush1.xpose.msra.mxu0 0.0
        %5849 = vmatprep.subr.mxu0 0.0
        %5850 = vmatpush1.xpose.msra.mxu0 0.0
        %5851 = vmatprep.subr.mxu0 0.0
        %5852 = vmatpush1.xpose.msra.mxu0 0.0
        %5853 = vmatprep.subr.mxu0 0.0
        %5854 = vmatpush1.xpose.msra.mxu0 0.0
        %5855 = vmatprep.subr.mxu0 0.0
        %5856 = vmatpush1.xpose.msra.mxu0 0.0
        %5857 = vmatprep.subr.mxu0 0.0
        %5858 = vmatpush1.xpose.msra.mxu0 0.0
        %5859 = vmatprep.subr.mxu0 0.0
        %5860 = vmatpush1.xpose.msra.mxu0 0.0
        %5861 = vmatprep.subr.mxu0 0.0
        %5862 = vmatpush1.xpose.msra.mxu0 0.0
        %5863 = vmatprep.subr.mxu0 0.0
        %5864 = vmatpush1.xpose.msra.mxu0 0.0
        %5865 = vmatprep.subr.mxu0 0.0
        %5866 = vmatpush1.xpose.msra.mxu0 0.0
        %5867 = vmatprep.subr.mxu0 0.0
        %5868 = vmatpush1.xpose.msra.mxu0 0.0
        %5869 = vmatprep.subr.mxu0 0.0
        %5870 = vmatpush1.xpose.msra.mxu0 0.0
        %5871 = vmatprep.subr.mxu0 0.0
        %5872 = vmatpush1.xpose.msra.mxu0 0.0
        %5873 = vmatprep.subr.mxu0 0.0
        %5874 = vmatpush1.xpose.msra.mxu0 0.0
        %5875 = vmatprep.subr.mxu0 0.0
        %5876 = vmatpush1.xpose.msra.mxu0 0.0
        %5877 = vmatprep.subr.mxu0 0.0
        %5878 = vmatpush1.xpose.msra.mxu0 0.0
        %5879 = vmatprep.subr.mxu0 0.0
        %5880 = vmatpush1.xpose.msra.mxu0 0.0
        %5881 = vmatprep.subr.mxu0 0.0
        %5882 = vmatpush1.xpose.msra.mxu0 0.0
        %5883 = vmatprep.subr.mxu0 0.0
        %5884 = vmatpush1.xpose.msra.mxu0 0.0
        %5885 = vmatprep.subr.mxu0 0.0
        %5886 = vmatpush1.xpose.msra.mxu0 0.0
        %5887 = vmatprep.subr.mxu0 0.0
        %5888 = vmatpush1.xpose.msra.mxu0 0.0
        %5889 = vmatprep.subr.mxu0 0.0
        %5890 = vmatpush1.xpose.msra.mxu0 0.0
        %5891 = vmatprep.subr.mxu0 0.0
        %5892 = vmatpush1.xpose.msra.mxu0 0.0
        %5893 = vmatprep.subr.mxu0 0.0
        %5894 = vmatpush1.xpose.msra.mxu0 0.0
        %5895 = vmatprep.subr.mxu0 0.0
        %5896 = vmatpush1.xpose.msra.mxu0 0.0
        %5897 = vmatprep.subr.mxu0 0.0
        %5898 = vmatpush1.xpose.msra.mxu0 0.0
        %5899 = vmatprep.mubr.f32.mxu0 0.0
        %5900 = vmatmul.mubr.f32.gmra.mrb[0].mxu0 %v5831
        %v5901 = vpop.f32.mrb[0].mxu0
        %v5902 = vadd.f32 0.0, %v5901
        %v5903 = vpop.f32.mrb[0].mxu0
        %5904 = vdwg.mxu0
        %v5905 = vmul.f32 %v5902, 0.35355338
        %v5906 = vsel %vm3493, %v5905, -1000000.0
        %v5907 = vsel %vm874, %v5906, -inf
        %5908 = vmax.xlane.f32.xlu0 %v5907
        %v5909 = vpop.xlane.xlu0 %5908
        %v5910 = vsub.f32 %v5906, %v5909
        %v5911 = vmul.f32 %v5910, 1.442695
        %v5912 = vpow.pop %v5911
        %v5913 = vsel %vm874, %v5912, 0.0
        %5914 = vadd.xlane.f32.xlu0 %v5913
        %v5915 = vpop.xlane.xlu0 %5914
        %v5916 = vrcp.pop %v5915
        %v5917 = vmul.f32 %v5912, %v5916
        %5918 = vrot.lane.b32.xlu0 %v5820, 64
        %v5919 = vpop.permute.xlu0 %5918
        %v5922 = vsel %vm874, %v5917, 0
        %5924 = vmatprep.subr.mxu0 0.0
        %5925 = vmatpush1.msra.mxu0 %v5919
        %5926 = vmatprep.subr.mxu0 0.0
        %5927 = vmatpush1.msra.mxu0 0.0
        %5928 = vmatprep.subr.mxu0 0.0
        %5929 = vmatpush1.msra.mxu0 0.0
        %5930 = vmatprep.subr.mxu0 0.0
        %5931 = vmatpush1.msra.mxu0 0.0
        %5932 = vmatprep.subr.mxu0 0.0
        %5933 = vmatpush1.msra.mxu0 0.0
        %5934 = vmatprep.subr.mxu0 0.0
        %5935 = vmatpush1.msra.mxu0 0.0
        %5936 = vmatprep.subr.mxu0 0.0
        %5937 = vmatpush1.msra.mxu0 0.0
        %5938 = vmatprep.subr.mxu0 0.0
        %5939 = vmatpush1.msra.mxu0 0.0
        %5940 = vmatprep.subr.mxu0 0.0
        %5941 = vmatpush1.msra.mxu0 0.0
        %5942 = vmatprep.subr.mxu0 0.0
        %5943 = vmatpush1.msra.mxu0 0.0
        %5944 = vmatprep.subr.mxu0 0.0
        %5945 = vmatpush1.msra.mxu0 0.0
        %5946 = vmatprep.subr.mxu0 0.0
        %5947 = vmatpush1.msra.mxu0 0.0
        %5948 = vmatprep.subr.mxu0 0.0
        %5949 = vmatpush1.msra.mxu0 0.0
        %5950 = vmatprep.subr.mxu0 0.0
        %5951 = vmatpush1.msra.mxu0 0.0
        %5952 = vmatprep.subr.mxu0 0.0
        %5953 = vmatpush1.msra.mxu0 0.0
        %5954 = vmatprep.subr.mxu0 0.0
        %5955 = vmatpush1.msra.mxu0 0.0
        %5956 = vmatprep.subr.mxu0 0.0
        %5957 = vmatpush1.msra.mxu0 0.0
        %5958 = vmatprep.subr.mxu0 0.0
        %5959 = vmatpush1.msra.mxu0 0.0
        %5960 = vmatprep.subr.mxu0 0.0
        %5961 = vmatpush1.msra.mxu0 0.0
        %5962 = vmatprep.subr.mxu0 0.0
        %5963 = vmatpush1.msra.mxu0 0.0
        %5964 = vmatprep.subr.mxu0 0.0
        %5965 = vmatpush1.msra.mxu0 0.0
        %5966 = vmatprep.subr.mxu0 0.0
        %5967 = vmatpush1.msra.mxu0 0.0
        %5968 = vmatprep.subr.mxu0 0.0
        %5969 = vmatpush1.msra.mxu0 0.0
        %5970 = vmatprep.subr.mxu0 0.0
        %5971 = vmatpush1.msra.mxu0 0.0
        %5972 = vmatprep.subr.mxu0 0.0
        %5973 = vmatpush1.msra.mxu0 0.0
        %5974 = vmatprep.subr.mxu0 0.0
        %5975 = vmatpush1.msra.mxu0 0.0
        %5976 = vmatprep.subr.mxu0 0.0
        %5977 = vmatpush1.msra.mxu0 0.0
        %5978 = vmatprep.subr.mxu0 0.0
        %5979 = vmatpush1.msra.mxu0 0.0
        %5980 = vmatprep.subr.mxu0 0.0
        %5981 = vmatpush1.msra.mxu0 0.0
        %5982 = vmatprep.subr.mxu0 0.0
        %5983 = vmatpush1.msra.mxu0 0.0
        %5984 = vmatprep.subr.mxu0 0.0
        %5985 = vmatpush1.msra.mxu0 0.0
        %5986 = vmatprep.subr.mxu0 0.0
        %5987 = vmatpush1.msra.mxu0 0.0
        %5988 = vmatprep.mubr.f32.mxu0 0.0
        %5989 = vmatmul.mubr.f32.gmra.mrb[0].mxu0 %v5922
        %v5990 = vpop.f32.mrb[0].mxu0
        %v5991 = vadd.f32 0.0, %v5990
        %v5992 = vpop.f32.mrb[0].mxu0
        %5993 = vdwg.mxu0
        %5994 = vrot.lane.b32.xlu0 %v5820, 120
        %v5995 = vpop.permute.xlu0 %5994
        %5996 = vrot.lane.b32.xlu0 %v5820, 88
        %v5997 = vpop.permute.xlu0 %5996
        %v5998 = vsel %vm874, %v5995, 0
        %v6000 = vsel %vm874, %v5997, 0
        %6002 = vmatprep.subr.mxu0 0.0
        %6003 = vmatpush1.xpose.msra.mxu0 %v6000
        %6004 = vmatprep.subr.mxu0 0.0
        %6005 = vmatpush1.xpose.msra.mxu0 0.0
        %6006 = vmatprep.subr.mxu0 0.0
        %6007 = vmatpush1.xpose.msra.mxu0 0.0
        %6008 = vmatprep.subr.mxu0 0.0
        %6009 = vmatpush1.xpose.msra.mxu0 0.0
        %6010 = vmatprep.subr.mxu0 0.0
        %6011 = vmatpush1.xpose.msra.mxu0 0.0
        %6012 = vmatprep.subr.mxu0 0.0
        %6013 = vmatpush1.xpose.msra.mxu0 0.0
        %6014 = vmatprep.subr.mxu0 0.0
        %6015 = vmatpush1.xpose.msra.mxu0 0.0
        %6016 = vmatprep.subr.mxu0 0.0
        %6017 = vmatpush1.xpose.msra.mxu0 0.0
        %6018 = vmatprep.subr.mxu0 0.0
        %6019 = vmatpush1.xpose.msra.mxu0 0.0
        %6020 = vmatprep.subr.mxu0 0.0
        %6021 = vmatpush1.xpose.msra.mxu0 0.0
        %6022 = vmatprep.subr.mxu0 0.0
        %6023 = vmatpush1.xpose.msra.mxu0 0.0
        %6024 = vmatprep.subr.mxu0 0.0
        %6025 = vmatpush1.xpose.msra.mxu0 0.0
        %6026 = vmatprep.subr.mxu0 0.0
        %6027 = vmatpush1.xpose.msra.mxu0 0.0
        %6028 = vmatprep.subr.mxu0 0.0
        %6029 = vmatpush1.xpose.msra.mxu0 0.0
        %6030 = vmatprep.subr.mxu0 0.0
        %6031 = vmatpush1.xpose.msra.mxu0 0.0
        %6032 = vmatprep.subr.mxu0 0.0
        %6033 = vmatpush1.xpose.msra.mxu0 0.0
        %6034 = vmatprep.subr.mxu0 0.0
        %6035 = vmatpush1.xpose.msra.mxu0 0.0
        %6036 = vmatprep.subr.mxu0 0.0
        %6037 = vmatpush1.xpose.msra.mxu0 0.0
        %6038 = vmatprep.subr.mxu0 0.0
        %6039 = vmatpush1.xpose.msra.mxu0 0.0
        %6040 = vmatprep.subr.mxu0 0.0
        %6041 = vmatpush1.xpose.msra.mxu0 0.0
        %6042 = vmatprep.subr.mxu0 0.0
        %6043 = vmatpush1.xpose.msra.mxu0 0.0
        %6044 = vmatprep.subr.mxu0 0.0
        %6045 = vmatpush1.xpose.msra.mxu0 0.0
        %6046 = vmatprep.subr.mxu0 0.0
        %6047 = vmatpush1.xpose.msra.mxu0 0.0
        %6048 = vmatprep.subr.mxu0 0.0
        %6049 = vmatpush1.xpose.msra.mxu0 0.0
        %6050 = vmatprep.subr.mxu0 0.0
        %6051 = vmatpush1.xpose.msra.mxu0 0.0
        %6052 = vmatprep.subr.mxu0 0.0
        %6053 = vmatpush1.xpose.msra.mxu0 0.0
        %6054 = vmatprep.subr.mxu0 0.0
        %6055 = vmatpush1.xpose.msra.mxu0 0.0
        %6056 = vmatprep.subr.mxu0 0.0
        %6057 = vmatpush1.xpose.msra.mxu0 0.0
        %6058 = vmatprep.subr.mxu0 0.0
        %6059 = vmatpush1.xpose.msra.mxu0 0.0
        %6060 = vmatprep.subr.mxu0 0.0
        %6061 = vmatpush1.xpose.msra.mxu0 0.0
        %6062 = vmatprep.subr.mxu0 0.0
        %6063 = vmatpush1.xpose.msra.mxu0 0.0
        %6064 = vmatprep.subr.mxu0 0.0
        %6065 = vmatpush1.xpose.msra.mxu0 0.0
        %6066 = vmatprep.mubr.f32.mxu0 0.0
        %6067 = vmatmul.mubr.f32.gmra.mrb[0].mxu0 %v5998
        %v6068 = vpop.f32.mrb[0].mxu0
        %v6069 = vadd.f32 0.0, %v6068
        %v6070 = vpop.f32.mrb[0].mxu0
        %6071 = vdwg.mxu0
        %v6072 = vmul.f32 %v6069, 0.35355338
        %v6073 = vsel %vm3493, %v6072, -1000000.0
        %v6074 = vsel %vm874, %v6073, -inf
        %6075 = vmax.xlane.f32.xlu0 %v6074
        %v6076 = vpop.xlane.xlu0 %6075
        %v6077 = vsub.f32 %v6073, %v6076
        %v6078 = vmul.f32 %v6077, 1.442695
        %v6079 = vpow.pop %v6078
        %v6080 = vsel %vm874, %v6079, 0.0
        %6081 = vadd.xlane.f32.xlu0 %v6080
        %v6082 = vpop.xlane.xlu0 %6081
        %v6083 = vrcp.pop %v6082
        %v6084 = vmul.f32 %v6079, %v6083
        %6085 = vrot.lane.b32.xlu0 %v5820, 56
        %v6086 = vpop.permute.xlu0 %6085
        %v6089 = vsel %vm874, %v6084, 0
        %6091 = vmatprep.subr.mxu0 0.0
        %6092 = vmatpush1.msra.mxu0 %v6086
        %6093 = vmatprep.subr.mxu0 0.0
        %6094 = vmatpush1.msra.mxu0 0.0
        %6095 = vmatprep.subr.mxu0 0.0
        %6096 = vmatpush1.msra.mxu0 0.0
        %6097 = vmatprep.subr.mxu0 0.0
        %6098 = vmatpush1.msra.mxu0 0.0
        %6099 = vmatprep.subr.mxu0 0.0
        %6100 = vmatpush1.msra.mxu0 0.0
        %6101 = vmatprep.subr.mxu0 0.0
        %6102 = vmatpush1.msra.mxu0 0.0
        %6103 = vmatprep.subr.mxu0 0.0
        %6104 = vmatpush1.msra.mxu0 0.0
        %6105 = vmatprep.subr.mxu0 0.0
        %6106 = vmatpush1.msra.mxu0 0.0
        %6107 = vmatprep.subr.mxu0 0.0
        %6108 = vmatpush1.msra.mxu0 0.0
        %6109 = vmatprep.subr.mxu0 0.0
        %6110 = vmatpush1.msra.mxu0 0.0
        %6111 = vmatprep.subr.mxu0 0.0
        %6112 = vmatpush1.msra.mxu0 0.0
        %6113 = vmatprep.subr.mxu0 0.0
        %6114 = vmatpush1.msra.mxu0 0.0
        %6115 = vmatprep.subr.mxu0 0.0
        %6116 = vmatpush1.msra.mxu0 0.0
        %6117 = vmatprep.subr.mxu0 0.0
        %6118 = vmatpush1.msra.mxu0 0.0
        %6119 = vmatprep.subr.mxu0 0.0
        %6120 = vmatpush1.msra.mxu0 0.0
        %6121 = vmatprep.subr.mxu0 0.0
        %6122 = vmatpush1.msra.mxu0 0.0
        %6123 = vmatprep.subr.mxu0 0.0
        %6124 = vmatpush1.msra.mxu0 0.0
        %6125 = vmatprep.subr.mxu0 0.0
        %6126 = vmatpush1.msra.mxu0 0.0
        %6127 = vmatprep.subr.mxu0 0.0
        %6128 = vmatpush1.msra.mxu0 0.0
        %6129 = vmatprep.subr.mxu0 0.0
        %6130 = vmatpush1.msra.mxu0 0.0
        %6131 = vmatprep.subr.mxu0 0.0
        %6132 = vmatpush1.msra.mxu0 0.0
        %6133 = vmatprep.subr.mxu0 0.0
        %6134 = vmatpush1.msra.mxu0 0.0
        %6135 = vmatprep.subr.mxu0 0.0
        %6136 = vmatpush1.msra.mxu0 0.0
        %6137 = vmatprep.subr.mxu0 0.0
        %6138 = vmatpush1.msra.mxu0 0.0
        %6139 = vmatprep.subr.mxu0 0.0
        %6140 = vmatpush1.msra.mxu0 0.0
        %6141 = vmatprep.subr.mxu0 0.0
        %6142 = vmatpush1.msra.mxu0 0.0
        %6143 = vmatprep.subr.mxu0 0.0
        %6144 = vmatpush1.msra.mxu0 0.0
        %6145 = vmatprep.subr.mxu0 0.0
        %6146 = vmatpush1.msra.mxu0 0.0
        %6147 = vmatprep.subr.mxu0 0.0
        %6148 = vmatpush1.msra.mxu0 0.0
        %6149 = vmatprep.subr.mxu0 0.0
        %6150 = vmatpush1.msra.mxu0 0.0
        %6151 = vmatprep.subr.mxu0 0.0
        %6152 = vmatpush1.msra.mxu0 0.0
        %6153 = vmatprep.subr.mxu0 0.0
        %6154 = vmatpush1.msra.mxu0 0.0
        %6155 = vmatprep.mubr.f32.mxu0 0.0
        %6156 = vmatmul.mubr.f32.gmra.mrb[0].mxu0 %v6089
        %v6157 = vpop.f32.mrb[0].mxu0
        %v6158 = vadd.f32 0.0, %v6157
        %v6159 = vpop.f32.mrb[0].mxu0
        %6160 = vdwg.mxu0
        %v6162 = vsel %vm874, %v6158, 0
        %6164 = vmatprep.subr.mxu0 0.0
        %6165 = vmatpush1.msra.mxu0 %v5825
        %6166 = vmatprep.subr.mxu0 0.0
        %6167 = vmatpush1.msra.mxu0 0.0
        %6168 = vmatprep.subr.mxu0 0.0
        %6169 = vmatpush1.msra.mxu0 0.0
        %6170 = vmatprep.subr.mxu0 0.0
        %6171 = vmatpush1.msra.mxu0 0.0
        %6172 = vmatprep.subr.mxu0 0.0
        %6173 = vmatpush1.msra.mxu0 0.0
        %6174 = vmatprep.subr.mxu0 0.0
        %6175 = vmatpush1.msra.mxu0 0.0
        %6176 = vmatprep.subr.mxu0 0.0
        %6177 = vmatpush1.msra.mxu0 0.0
        %6178 = vmatprep.subr.mxu0 0.0
        %6179 = vmatpush1.msra.mxu0 0.0
        %6180 = vmatprep.subr.mxu0 0.0
        %6181 = vmatpush1.msra.mxu0 0.0
        %6182 = vmatprep.subr.mxu0 0.0
        %6183 = vmatpush1.msra.mxu0 0.0
        %6184 = vmatprep.subr.mxu0 0.0
        %6185 = vmatpush1.msra.mxu0 0.0
        %6186 = vmatprep.subr.mxu0 0.0
        %6187 = vmatpush1.msra.mxu0 0.0
        %6188 = vmatprep.subr.mxu0 0.0
        %6189 = vmatpush1.msra.mxu0 0.0
        %6190 = vmatprep.subr.mxu0 0.0
        %6191 = vmatpush1.msra.mxu0 0.0
        %6192 = vmatprep.subr.mxu0 0.0
        %6193 = vmatpush1.msra.mxu0 0.0
        %6194 = vmatprep.subr.mxu0 0.0
        %6195 = vmatpush1.msra.mxu0 0.0
        %6196 = vmatprep.subr.mxu0 0.0
        %6197 = vmatpush1.msra.mxu0 0.0
        %6198 = vmatprep.subr.mxu0 0.0
        %6199 = vmatpush1.msra.mxu0 0.0
        %6200 = vmatprep.subr.mxu0 0.0
        %6201 = vmatpush1.msra.mxu0 0.0
        %6202 = vmatprep.subr.mxu0 0.0
        %6203 = vmatpush1.msra.mxu0 0.0
        %6204 = vmatprep.subr.mxu0 0.0
        %6205 = vmatpush1.msra.mxu0 0.0
        %6206 = vmatprep.subr.mxu0 0.0
        %6207 = vmatpush1.msra.mxu0 0.0
        %6208 = vmatprep.subr.mxu0 0.0
        %6209 = vmatpush1.msra.mxu0 0.0
        %6210 = vmatprep.subr.mxu0 0.0
        %6211 = vmatpush1.msra.mxu0 0.0
        %6212 = vmatprep.subr.mxu0 0.0
        %6213 = vmatpush1.msra.mxu0 0.0
        %6214 = vmatprep.subr.mxu0 0.0
        %6215 = vmatpush1.msra.mxu0 0.0
        %6216 = vmatprep.subr.mxu0 0.0
        %6217 = vmatpush1.msra.mxu0 0.0
        %6218 = vmatprep.subr.mxu0 0.0
        %6219 = vmatpush1.msra.mxu0 0.0
        %6220 = vmatprep.subr.mxu0 0.0
        %6221 = vmatpush1.msra.mxu0 0.0
        %6222 = vmatprep.subr.mxu0 0.0
        %6223 = vmatpush1.msra.mxu0 0.0
        %6224 = vmatprep.subr.mxu0 0.0
        %6225 = vmatpush1.msra.mxu0 0.0
        %6226 = vmatprep.subr.mxu0 0.0
        %6227 = vmatpush1.msra.mxu0 0.0
        %6228 = vmatprep.mubr.f32.mxu0 0.0
        %6229 = vmatmul.mubr.f32.gmra.mrb[0].mxu0 %v6162
        %v6230 = vpop.f32.mrb[0].mxu0
        %v6231 = vadd.f32 0.0, %v6230
        %v6232 = vpop.f32.mrb[0].mxu0
        %6233 = vdwg.mxu0
        %v6235 = vsel %vm874, %v5991, 0
        %6237 = vmatprep.subr.mxu0 0.0
        %6238 = vmatpush1.msra.mxu0 %v5824
        %6239 = vmatprep.subr.mxu0 0.0
        %6240 = vmatpush1.msra.mxu0 0.0
        %6241 = vmatprep.subr.mxu0 0.0
        %6242 = vmatpush1.msra.mxu0 0.0
        %6243 = vmatprep.subr.mxu0 0.0
        %6244 = vmatpush1.msra.mxu0 0.0
        %6245 = vmatprep.subr.mxu0 0.0
        %6246 = vmatpush1.msra.mxu0 0.0
        %6247 = vmatprep.subr.mxu0 0.0
        %6248 = vmatpush1.msra.mxu0 0.0
        %6249 = vmatprep.subr.mxu0 0.0
        %6250 = vmatpush1.msra.mxu0 0.0
        %6251 = vmatprep.subr.mxu0 0.0
        %6252 = vmatpush1.msra.mxu0 0.0
        %6253 = vmatprep.subr.mxu0 0.0
        %6254 = vmatpush1.msra.mxu0 0.0
        %6255 = vmatprep.subr.mxu0 0.0
        %6256 = vmatpush1.msra.mxu0 0.0
        %6257 = vmatprep.subr.mxu0 0.0
        %6258 = vmatpush1.msra.mxu0 0.0
        %6259 = vmatprep.subr.mxu0 0.0
        %6260 = vmatpush1.msra.mxu0 0.0
        %6261 = vmatprep.subr.mxu0 0.0
        %6262 = vmatpush1.msra.mxu0 0.0
        %6263 = vmatprep.subr.mxu0 0.0
        %6264 = vmatpush1.msra.mxu0 0.0
        %6265 = vmatprep.subr.mxu0 0.0
        %6266 = vmatpush1.msra.mxu0 0.0
        %6267 = vmatprep.subr.mxu0 0.0
        %6268 = vmatpush1.msra.mxu0 0.0
        %6269 = vmatprep.subr.mxu0 0.0
        %6270 = vmatpush1.msra.mxu0 0.0
        %6271 = vmatprep.subr.mxu0 0.0
        %6272 = vmatpush1.msra.mxu0 0.0
        %6273 = vmatprep.subr.mxu0 0.0
        %6274 = vmatpush1.msra.mxu0 0.0
        %6275 = vmatprep.subr.mxu0 0.0
        %6276 = vmatpush1.msra.mxu0 0.0
        %6277 = vmatprep.subr.mxu0 0.0
        %6278 = vmatpush1.msra.mxu0 0.0
        %6279 = vmatprep.subr.mxu0 0.0
        %6280 = vmatpush1.msra.mxu0 0.0
        %6281 = vmatprep.subr.mxu0 0.0
        %6282 = vmatpush1.msra.mxu0 0.0
        %6283 = vmatprep.subr.mxu0 0.0
        %6284 = vmatpush1.msra.mxu0 0.0
        %6285 = vmatprep.subr.mxu0 0.0
        %6286 = vmatpush1.msra.mxu0 0.0
        %6287 = vmatprep.subr.mxu0 0.0
        %6288 = vmatpush1.msra.mxu0 0.0
        %6289 = vmatprep.subr.mxu0 0.0
        %6290 = vmatpush1.msra.mxu0 0.0
        %6291 = vmatprep.subr.mxu0 0.0
        %6292 = vmatpush1.msra.mxu0 0.0
        %6293 = vmatprep.subr.mxu0 0.0
        %6294 = vmatpush1.msra.mxu0 0.0
        %6295 = vmatprep.subr.mxu0 0.0
        %6296 = vmatpush1.msra.mxu0 0.0
        %6297 = vmatprep.subr.mxu0 0.0
        %6298 = vmatpush1.msra.mxu0 0.0
        %6299 = vmatprep.subr.mxu0 0.0
        %6300 = vmatpush1.msra.mxu0 0.0
        %6301 = vmatprep.mubr.f32.mxu0 0.0
        %6302 = vmatmul.mubr.f32.gmra.mrb[0].mxu0 %v6235
        %v6303 = vpop.f32.mrb[0].mxu0
        %v6304 = vadd.f32 %v6231, %v6303
        %v6305 = vpop.f32.mrb[0].mxu0
        %6306 = vdwg.mxu0
        %6307 = vrot.lane.b32.xlu0 %v5820, 112
        %v6308 = vpop.permute.xlu0 %6307
        %6309 = vrot.lane.b32.xlu0 %v5820, 80
        %v6310 = vpop.permute.xlu0 %6309
        %v6311 = vsel %vm874, %v6308, 0
        %v6313 = vsel %vm874, %v6310, 0
        %6315 = vmatprep.subr.mxu0 0.0
        %6316 = vmatpush1.xpose.msra.mxu0 %v6313
        %6317 = vmatprep.subr.mxu0 0.0
        %6318 = vmatpush1.xpose.msra.mxu0 0.0
        %6319 = vmatprep.subr.mxu0 0.0
        %6320 = vmatpush1.xpose.msra.mxu0 0.0
        %6321 = vmatprep.subr.mxu0 0.0
        %6322 = vmatpush1.xpose.msra.mxu0 0.0
        %6323 = vmatprep.subr.mxu0 0.0
        %6324 = vmatpush1.xpose.msra.mxu0 0.0
        %6325 = vmatprep.subr.mxu0 0.0
        %6326 = vmatpush1.xpose.msra.mxu0 0.0
        %6327 = vmatprep.subr.mxu0 0.0
        %6328 = vmatpush1.xpose.msra.mxu0 0.0
        %6329 = vmatprep.subr.mxu0 0.0
        %6330 = vmatpush1.xpose.msra.mxu0 0.0
        %6331 = vmatprep.subr.mxu0 0.0
        %6332 = vmatpush1.xpose.msra.mxu0 0.0
        %6333 = vmatprep.subr.mxu0 0.0
        %6334 = vmatpush1.xpose.msra.mxu0 0.0
        %6335 = vmatprep.subr.mxu0 0.0
        %6336 = vmatpush1.xpose.msra.mxu0 0.0
        %6337 = vmatprep.subr.mxu0 0.0
        %6338 = vmatpush1.xpose.msra.mxu0 0.0
        %6339 = vmatprep.subr.mxu0 0.0
        %6340 = vmatpush1.xpose.msra.mxu0 0.0
        %6341 = vmatprep.subr.mxu0 0.0
        %6342 = vmatpush1.xpose.msra.mxu0 0.0
        %6343 = vmatprep.subr.mxu0 0.0
        %6344 = vmatpush1.xpose.msra.mxu0 0.0
        %6345 = vmatprep.subr.mxu0 0.0
        %6346 = vmatpush1.xpose.msra.mxu0 0.0
        %6347 = vmatprep.subr.mxu0 0.0
        %6348 = vmatpush1.xpose.msra.mxu0 0.0
        %6349 = vmatprep.subr.mxu0 0.0
        %6350 = vmatpush1.xpose.msra.mxu0 0.0
        %6351 = vmatprep.subr.mxu0 0.0
        %6352 = vmatpush1.xpose.msra.mxu0 0.0
        %6353 = vmatprep.subr.mxu0 0.0
        %6354 = vmatpush1.xpose.msra.mxu0 0.0
        %6355 = vmatprep.subr.mxu0 0.0
        %6356 = vmatpush1.xpose.msra.mxu0 0.0
        %6357 = vmatprep.subr.mxu0 0.0
        %6358 = vmatpush1.xpose.msra.mxu0 0.0
        %6359 = vmatprep.subr.mxu0 0.0
        %6360 = vmatpush1.xpose.msra.mxu0 0.0
        %6361 = vmatprep.subr.mxu0 0.0
        %6362 = vmatpush1.xpose.msra.mxu0 0.0
        %6363 = vmatprep.subr.mxu0 0.0
        %6364 = vmatpush1.xpose.msra.mxu0 0.0
        %6365 = vmatprep.subr.mxu0 0.0
        %6366 = vmatpush1.xpose.msra.mxu0 0.0
        %6367 = vmatprep.subr.mxu0 0.0
        %6368 = vmatpush1.xpose.msra.mxu0 0.0
        %6369 = vmatprep.subr.mxu0 0.0
        %6370 = vmatpush1.xpose.msra.mxu0 0.0
        %6371 = vmatprep.subr.mxu0 0.0
        %6372 = vmatpush1.xpose.msra.mxu0 0.0
        %6373 = vmatprep.subr.mxu0 0.0
        %6374 = vmatpush1.xpose.msra.mxu0 0.0
        %6375 = vmatprep.subr.mxu0 0.0
        %6376 = vmatpush1.xpose.msra.mxu0 0.0
        %6377 = vmatprep.subr.mxu0 0.0
        %6378 = vmatpush1.xpose.msra.mxu0 0.0
        %6379 = vmatprep.mubr.f32.mxu0 0.0
        %6380 = vmatmul.mubr.f32.gmra.mrb[0].mxu0 %v6311
        %v6381 = vpop.f32.mrb[0].mxu0
        %v6382 = vadd.f32 0.0, %v6381
        %v6383 = vpop.f32.mrb[0].mxu0
        %6384 = vdwg.mxu0
        %v6385 = vmul.f32 %v6382, 0.35355338
        %v6386 = vsel %vm3493, %v6385, -1000000.0
        %v6387 = vsel %vm874, %v6386, -inf
        %6388 = vmax.xlane.f32.xlu0 %v6387
        %v6389 = vpop.xlane.xlu0 %6388
        %v6390 = vsub.f32 %v6386, %v6389
        %v6391 = vmul.f32 %v6390, 1.442695
        %v6392 = vpow.pop %v6391
        %v6393 = vsel %vm874, %v6392, 0.0
        %6394 = vadd.xlane.f32.xlu0 %v6393
        %v6395 = vpop.xlane.xlu0 %6394
        %v6396 = vrcp.pop %v6395
        %v6397 = vmul.f32 %v6392, %v6396
        %6398 = vrot.lane.b32.xlu0 %v5820, 48
        %v6399 = vpop.permute.xlu0 %6398
        %v6402 = vsel %vm874, %v6397, 0
        %6404 = vmatprep.subr.mxu0 0.0
        %6405 = vmatpush1.msra.mxu0 %v6399
        %6406 = vmatprep.subr.mxu0 0.0
        %6407 = vmatpush1.msra.mxu0 0.0
        %6408 = vmatprep.subr.mxu0 0.0
        %6409 = vmatpush1.msra.mxu0 0.0
        %6410 = vmatprep.subr.mxu0 0.0
        %6411 = vmatpush1.msra.mxu0 0.0
        %6412 = vmatprep.subr.mxu0 0.0
        %6413 = vmatpush1.msra.mxu0 0.0
        %6414 = vmatprep.subr.mxu0 0.0
        %6415 = vmatpush1.msra.mxu0 0.0
        %6416 = vmatprep.subr.mxu0 0.0
        %6417 = vmatpush1.msra.mxu0 0.0
        %6418 = vmatprep.subr.mxu0 0.0
        %6419 = vmatpush1.msra.mxu0 0.0
        %6420 = vmatprep.subr.mxu0 0.0
        %6421 = vmatpush1.msra.mxu0 0.0
        %6422 = vmatprep.subr.mxu0 0.0
        %6423 = vmatpush1.msra.mxu0 0.0
        %6424 = vmatprep.subr.mxu0 0.0
        %6425 = vmatpush1.msra.mxu0 0.0
        %6426 = vmatprep.subr.mxu0 0.0
        %6427 = vmatpush1.msra.mxu0 0.0
        %6428 = vmatprep.subr.mxu0 0.0
        %6429 = vmatpush1.msra.mxu0 0.0
        %6430 = vmatprep.subr.mxu0 0.0
        %6431 = vmatpush1.msra.mxu0 0.0
        %6432 = vmatprep.subr.mxu0 0.0
        %6433 = vmatpush1.msra.mxu0 0.0
        %6434 = vmatprep.subr.mxu0 0.0
        %6435 = vmatpush1.msra.mxu0 0.0
        %6436 = vmatprep.subr.mxu0 0.0
        %6437 = vmatpush1.msra.mxu0 0.0
        %6438 = vmatprep.subr.mxu0 0.0
        %6439 = vmatpush1.msra.mxu0 0.0
        %6440 = vmatprep.subr.mxu0 0.0
        %6441 = vmatpush1.msra.mxu0 0.0
        %6442 = vmatprep.subr.mxu0 0.0
        %6443 = vmatpush1.msra.mxu0 0.0
        %6444 = vmatprep.subr.mxu0 0.0
        %6445 = vmatpush1.msra.mxu0 0.0
        %6446 = vmatprep.subr.mxu0 0.0
        %6447 = vmatpush1.msra.mxu0 0.0
        %6448 = vmatprep.subr.mxu0 0.0
        %6449 = vmatpush1.msra.mxu0 0.0
        %6450 = vmatprep.subr.mxu0 0.0
        %6451 = vmatpush1.msra.mxu0 0.0
        %6452 = vmatprep.subr.mxu0 0.0
        %6453 = vmatpush1.msra.mxu0 0.0
        %6454 = vmatprep.subr.mxu0 0.0
        %6455 = vmatpush1.msra.mxu0 0.0
        %6456 = vmatprep.subr.mxu0 0.0
        %6457 = vmatpush1.msra.mxu0 0.0
        %6458 = vmatprep.subr.mxu0 0.0
        %6459 = vmatpush1.msra.mxu0 0.0
        %6460 = vmatprep.subr.mxu0 0.0
        %6461 = vmatpush1.msra.mxu0 0.0
        %6462 = vmatprep.subr.mxu0 0.0
        %6463 = vmatpush1.msra.mxu0 0.0
        %6464 = vmatprep.subr.mxu0 0.0
        %6465 = vmatpush1.msra.mxu0 0.0
        %6466 = vmatprep.subr.mxu0 0.0
        %6467 = vmatpush1.msra.mxu0 0.0
        %6468 = vmatprep.mubr.f32.mxu0 0.0
        %6469 = vmatmul.mubr.f32.gmra.mrb[0].mxu0 %v6402
        %v6470 = vpop.f32.mrb[0].mxu0
        %v6471 = vadd.f32 0.0, %v6470
        %v6472 = vpop.f32.mrb[0].mxu0
        %6473 = vdwg.mxu0
        %v6475 = vsel %vm874, %v6471, 0
        %6477 = vmatprep.subr.mxu0 0.0
        %6478 = vmatpush1.msra.mxu0 %v5826
        %6479 = vmatprep.subr.mxu0 0.0
        %6480 = vmatpush1.msra.mxu0 0.0
        %6481 = vmatprep.subr.mxu0 0.0
        %6482 = vmatpush1.msra.mxu0 0.0
        %6483 = vmatprep.subr.mxu0 0.0
        %6484 = vmatpush1.msra.mxu0 0.0
        %6485 = vmatprep.subr.mxu0 0.0
        %6486 = vmatpush1.msra.mxu0 0.0
        %6487 = vmatprep.subr.mxu0 0.0
        %6488 = vmatpush1.msra.mxu0 0.0
        %6489 = vmatprep.subr.mxu0 0.0
        %6490 = vmatpush1.msra.mxu0 0.0
        %6491 = vmatprep.subr.mxu0 0.0
        %6492 = vmatpush1.msra.mxu0 0.0
        %6493 = vmatprep.subr.mxu0 0.0
        %6494 = vmatpush1.msra.mxu0 0.0
        %6495 = vmatprep.subr.mxu0 0.0
        %6496 = vmatpush1.msra.mxu0 0.0
        %6497 = vmatprep.subr.mxu0 0.0
        %6498 = vmatpush1.msra.mxu0 0.0
        %6499 = vmatprep.subr.mxu0 0.0
        %6500 = vmatpush1.msra.mxu0 0.0
        %6501 = vmatprep.subr.mxu0 0.0
        %6502 = vmatpush1.msra.mxu0 0.0
        %6503 = vmatprep.subr.mxu0 0.0
        %6504 = vmatpush1.msra.mxu0 0.0
        %6505 = vmatprep.subr.mxu0 0.0
        %6506 = vmatpush1.msra.mxu0 0.0
        %6507 = vmatprep.subr.mxu0 0.0
        %6508 = vmatpush1.msra.mxu0 0.0
        %6509 = vmatprep.subr.mxu0 0.0
        %6510 = vmatpush1.msra.mxu0 0.0
        %6511 = vmatprep.subr.mxu0 0.0
        %6512 = vmatpush1.msra.mxu0 0.0
        %6513 = vmatprep.subr.mxu0 0.0
        %6514 = vmatpush1.msra.mxu0 0.0
        %6515 = vmatprep.subr.mxu0 0.0
        %6516 = vmatpush1.msra.mxu0 0.0
        %6517 = vmatprep.subr.mxu0 0.0
        %6518 = vmatpush1.msra.mxu0 0.0
        %6519 = vmatprep.subr.mxu0 0.0
        %6520 = vmatpush1.msra.mxu0 0.0
        %6521 = vmatprep.subr.mxu0 0.0
        %6522 = vmatpush1.msra.mxu0 0.0
        %6523 = vmatprep.subr.mxu0 0.0
        %6524 = vmatpush1.msra.mxu0 0.0
        %6525 = vmatprep.subr.mxu0 0.0
        %6526 = vmatpush1.msra.mxu0 0.0
        %6527 = vmatprep.subr.mxu0 0.0
        %6528 = vmatpush1.msra.mxu0 0.0
        %6529 = vmatprep.subr.mxu0 0.0
        %6530 = vmatpush1.msra.mxu0 0.0
        %6531 = vmatprep.subr.mxu0 0.0
        %6532 = vmatpush1.msra.mxu0 0.0
        %6533 = vmatprep.subr.mxu0 0.0
        %6534 = vmatpush1.msra.mxu0 0.0
        %6535 = vmatprep.subr.mxu0 0.0
        %6536 = vmatpush1.msra.mxu0 0.0
        %6537 = vmatprep.subr.mxu0 0.0
        %6538 = vmatpush1.msra.mxu0 0.0
        %6539 = vmatprep.subr.mxu0 0.0
        %6540 = vmatpush1.msra.mxu0 0.0
        %6541 = vmatprep.mubr.f32.mxu0 0.0
        %6542 = vmatmul.mubr.f32.gmra.mrb[0].mxu0 %v6475
        %v6543 = vpop.f32.mrb[0].mxu0
        %v6544 = vadd.f32 0.0, %v6543
        %v6545 = vpop.f32.mrb[0].mxu0
        %6546 = vdwg.mxu0
        %v6547 = vadd.f32 %v6304, %v6544
        %6548 = vrot.lane.b32.xlu0 %v5820, 104
        %v6549 = vpop.permute.xlu0 %6548
        %6550 = vrot.lane.b32.xlu0 %v5820, 72
        %v6551 = vpop.permute.xlu0 %6550
        %v6552 = vsel %vm874, %v6549, 0
        %v6554 = vsel %vm874, %v6551, 0
        %6556 = vmatprep.subr.mxu0 0.0
        %6557 = vmatpush1.xpose.msra.mxu0 %v6554
        %6558 = vmatprep.subr.mxu0 0.0
        %6559 = vmatpush1.xpose.msra.mxu0 0.0
        %6560 = vmatprep.subr.mxu0 0.0
        %6561 = vmatpush1.xpose.msra.mxu0 0.0
        %6562 = vmatprep.subr.mxu0 0.0
        %6563 = vmatpush1.xpose.msra.mxu0 0.0
        %6564 = vmatprep.subr.mxu0 0.0
        %6565 = vmatpush1.xpose.msra.mxu0 0.0
        %6566 = vmatprep.subr.mxu0 0.0
        %6567 = vmatpush1.xpose.msra.mxu0 0.0
        %6568 = vmatprep.subr.mxu0 0.0
        %6569 = vmatpush1.xpose.msra.mxu0 0.0
        %6570 = vmatprep.subr.mxu0 0.0
        %6571 = vmatpush1.xpose.msra.mxu0 0.0
        %6572 = vmatprep.subr.mxu0 0.0
        %6573 = vmatpush1.xpose.msra.mxu0 0.0
        %6574 = vmatprep.subr.mxu0 0.0
        %6575 = vmatpush1.xpose.msra.mxu0 0.0
        %6576 = vmatprep.subr.mxu0 0.0
        %6577 = vmatpush1.xpose.msra.mxu0 0.0
        %6578 = vmatprep.subr.mxu0 0.0
        %6579 = vmatpush1.xpose.msra.mxu0 0.0
        %6580 = vmatprep.subr.mxu0 0.0
        %6581 = vmatpush1.xpose.msra.mxu0 0.0
        %6582 = vmatprep.subr.mxu0 0.0
        %6583 = vmatpush1.xpose.msra.mxu0 0.0
        %6584 = vmatprep.subr.mxu0 0.0
        %6585 = vmatpush1.xpose.msra.mxu0 0.0
        %6586 = vmatprep.subr.mxu0 0.0
        %6587 = vmatpush1.xpose.msra.mxu0 0.0
        %6588 = vmatprep.subr.mxu0 0.0
        %6589 = vmatpush1.xpose.msra.mxu0 0.0
        %6590 = vmatprep.subr.mxu0 0.0
        %6591 = vmatpush1.xpose.msra.mxu0 0.0
        %6592 = vmatprep.subr.mxu0 0.0
        %6593 = vmatpush1.xpose.msra.mxu0 0.0
        %6594 = vmatprep.subr.mxu0 0.0
        %6595 = vmatpush1.xpose.msra.mxu0 0.0
        %6596 = vmatprep.subr.mxu0 0.0
        %6597 = vmatpush1.xpose.msra.mxu0 0.0
        %6598 = vmatprep.subr.mxu0 0.0
        %6599 = vmatpush1.xpose.msra.mxu0 0.0
        %6600 = vmatprep.subr.mxu0 0.0
        %6601 = vmatpush1.xpose.msra.mxu0 0.0
        %6602 = vmatprep.subr.mxu0 0.0
        %6603 = vmatpush1.xpose.msra.mxu0 0.0
        %6604 = vmatprep.subr.mxu0 0.0
        %6605 = vmatpush1.xpose.msra.mxu0 0.0
        %6606 = vmatprep.subr.mxu0 0.0
        %6607 = vmatpush1.xpose.msra.mxu0 0.0
        %6608 = vmatprep.subr.mxu0 0.0
        %6609 = vmatpush1.xpose.msra.mxu0 0.0
        %6610 = vmatprep.subr.mxu0 0.0
        %6611 = vmatpush1.xpose.msra.mxu0 0.0
        %6612 = vmatprep.subr.mxu0 0.0
        %6613 = vmatpush1.xpose.msra.mxu0 0.0
        %6614 = vmatprep.subr.mxu0 0.0
        %6615 = vmatpush1.xpose.msra.mxu0 0.0
        %6616 = vmatprep.subr.mxu0 0.0
        %6617 = vmatpush1.xpose.msra.mxu0 0.0
        %6618 = vmatprep.subr.mxu0 0.0
        %6619 = vmatpush1.xpose.msra.mxu0 0.0
        %6620 = vmatprep.mubr.f32.mxu0 0.0
        %6621 = vmatmul.mubr.f32.gmra.mrb[0].mxu0 %v6552
        %v6622 = vpop.f32.mrb[0].mxu0
        %v6623 = vadd.f32 0.0, %v6622
        %v6624 = vpop.f32.mrb[0].mxu0
        %6625 = vdwg.mxu0
        %v6626 = vmul.f32 %v6623, 0.35355338
        %v6627 = vsel %vm3493, %v6626, -1000000.0
        %v6628 = vsel %vm874, %v6627, -inf
        %6629 = vmax.xlane.f32.xlu0 %v6628
        %v6630 = vpop.xlane.xlu0 %6629
        %v6631 = vsub.f32 %v6627, %v6630
        %v6632 = vmul.f32 %v6631, 1.442695
        %v6633 = vpow.pop %v6632
        %v6634 = vsel %vm874, %v6633, 0.0
        %6635 = vadd.xlane.f32.xlu0 %v6634
        %v6636 = vpop.xlane.xlu0 %6635
        %v6637 = vrcp.pop %v6636
        %v6638 = vmul.f32 %v6633, %v6637
        %6639 = vrot.lane.b32.xlu0 %v5820, 40
        %v6640 = vpop.permute.xlu0 %6639
        %v6643 = vsel %vm874, %v6638, 0
        %6645 = vmatprep.subr.mxu0 0.0
        %6646 = vmatpush1.msra.mxu0 %v6640
        %6647 = vmatprep.subr.mxu0 0.0
        %6648 = vmatpush1.msra.mxu0 0.0
        %6649 = vmatprep.subr.mxu0 0.0
        %6650 = vmatpush1.msra.mxu0 0.0
        %6651 = vmatprep.subr.mxu0 0.0
        %6652 = vmatpush1.msra.mxu0 0.0
        %6653 = vmatprep.subr.mxu0 0.0
        %6654 = vmatpush1.msra.mxu0 0.0
        %6655 = vmatprep.subr.mxu0 0.0
        %6656 = vmatpush1.msra.mxu0 0.0
        %6657 = vmatprep.subr.mxu0 0.0
        %6658 = vmatpush1.msra.mxu0 0.0
        %6659 = vmatprep.subr.mxu0 0.0
        %6660 = vmatpush1.msra.mxu0 0.0
        %6661 = vmatprep.subr.mxu0 0.0
        %6662 = vmatpush1.msra.mxu0 0.0
        %6663 = vmatprep.subr.mxu0 0.0
        %6664 = vmatpush1.msra.mxu0 0.0
        %6665 = vmatprep.subr.mxu0 0.0
        %6666 = vmatpush1.msra.mxu0 0.0
        %6667 = vmatprep.subr.mxu0 0.0
        %6668 = vmatpush1.msra.mxu0 0.0
        %6669 = vmatprep.subr.mxu0 0.0
        %6670 = vmatpush1.msra.mxu0 0.0
        %6671 = vmatprep.subr.mxu0 0.0
        %6672 = vmatpush1.msra.mxu0 0.0
        %6673 = vmatprep.subr.mxu0 0.0
        %6674 = vmatpush1.msra.mxu0 0.0
        %6675 = vmatprep.subr.mxu0 0.0
        %6676 = vmatpush1.msra.mxu0 0.0
        %6677 = vmatprep.subr.mxu0 0.0
        %6678 = vmatpush1.msra.mxu0 0.0
        %6679 = vmatprep.subr.mxu0 0.0
        %6680 = vmatpush1.msra.mxu0 0.0
        %6681 = vmatprep.subr.mxu0 0.0
        %6682 = vmatpush1.msra.mxu0 0.0
        %6683 = vmatprep.subr.mxu0 0.0
        %6684 = vmatpush1.msra.mxu0 0.0
        %6685 = vmatprep.subr.mxu0 0.0
        %6686 = vmatpush1.msra.mxu0 0.0
        %6687 = vmatprep.subr.mxu0 0.0
        %6688 = vmatpush1.msra.mxu0 0.0
        %6689 = vmatprep.subr.mxu0 0.0
        %6690 = vmatpush1.msra.mxu0 0.0
        %6691 = vmatprep.subr.mxu0 0.0
        %6692 = vmatpush1.msra.mxu0 0.0
        %6693 = vmatprep.subr.mxu0 0.0
        %6694 = vmatpush1.msra.mxu0 0.0
        %6695 = vmatprep.subr.mxu0 0.0
        %6696 = vmatpush1.msra.mxu0 0.0
        %6697 = vmatprep.subr.mxu0 0.0
        %6698 = vmatpush1.msra.mxu0 0.0
        %6699 = vmatprep.subr.mxu0 0.0
        %6700 = vmatpush1.msra.mxu0 0.0
        %6701 = vmatprep.subr.mxu0 0.0
        %6702 = vmatpush1.msra.mxu0 0.0
        %6703 = vmatprep.subr.mxu0 0.0
        %6704 = vmatpush1.msra.mxu0 0.0
        %6705 = vmatprep.subr.mxu0 0.0
        %6706 = vmatpush1.msra.mxu0 0.0
        %6707 = vmatprep.subr.mxu0 0.0
        %6708 = vmatpush1.msra.mxu0 0.0
        %6709 = vmatprep.mubr.f32.mxu0 0.0
        %6710 = vmatmul.mubr.f32.gmra.mrb[0].mxu0 %v6643
        %v6711 = vpop.f32.mrb[0].mxu0
        %v6712 = vadd.f32 0.0, %v6711
        %v6713 = vpop.f32.mrb[0].mxu0
        %6714 = vdwg.mxu0
        %v6716 = vsel %vm874, %v6712, 0
        %6718 = vmatprep.subr.mxu0 0.0
        %6719 = vmatpush1.msra.mxu0 %v5827
        %6720 = vmatprep.subr.mxu0 0.0
        %6721 = vmatpush1.msra.mxu0 0.0
        %6722 = vmatprep.subr.mxu0 0.0
        %6723 = vmatpush1.msra.mxu0 0.0
        %6724 = vmatprep.subr.mxu0 0.0
        %6725 = vmatpush1.msra.mxu0 0.0
        %6726 = vmatprep.subr.mxu0 0.0
        %6727 = vmatpush1.msra.mxu0 0.0
        %6728 = vmatprep.subr.mxu0 0.0
        %6729 = vmatpush1.msra.mxu0 0.0
        %6730 = vmatprep.subr.mxu0 0.0
        %6731 = vmatpush1.msra.mxu0 0.0
        %6732 = vmatprep.subr.mxu0 0.0
        %6733 = vmatpush1.msra.mxu0 0.0
        %6734 = vmatprep.subr.mxu0 0.0
        %6735 = vmatpush1.msra.mxu0 0.0
        %6736 = vmatprep.subr.mxu0 0.0
        %6737 = vmatpush1.msra.mxu0 0.0
        %6738 = vmatprep.subr.mxu0 0.0
        %6739 = vmatpush1.msra.mxu0 0.0
        %6740 = vmatprep.subr.mxu0 0.0
        %6741 = vmatpush1.msra.mxu0 0.0
        %6742 = vmatprep.subr.mxu0 0.0
        %6743 = vmatpush1.msra.mxu0 0.0
        %6744 = vmatprep.subr.mxu0 0.0
        %6745 = vmatpush1.msra.mxu0 0.0
        %6746 = vmatprep.subr.mxu0 0.0
        %6747 = vmatpush1.msra.mxu0 0.0
        %6748 = vmatprep.subr.mxu0 0.0
        %6749 = vmatpush1.msra.mxu0 0.0
        %6750 = vmatprep.subr.mxu0 0.0
        %6751 = vmatpush1.msra.mxu0 0.0
        %6752 = vmatprep.subr.mxu0 0.0
        %6753 = vmatpush1.msra.mxu0 0.0
        %6754 = vmatprep.subr.mxu0 0.0
        %6755 = vmatpush1.msra.mxu0 0.0
        %6756 = vmatprep.subr.mxu0 0.0
        %6757 = vmatpush1.msra.mxu0 0.0
        %6758 = vmatprep.subr.mxu0 0.0
        %6759 = vmatpush1.msra.mxu0 0.0
        %6760 = vmatprep.subr.mxu0 0.0
        %6761 = vmatpush1.msra.mxu0 0.0
        %6762 = vmatprep.subr.mxu0 0.0
        %6763 = vmatpush1.msra.mxu0 0.0
        %6764 = vmatprep.subr.mxu0 0.0
        %6765 = vmatpush1.msra.mxu0 0.0
        %6766 = vmatprep.subr.mxu0 0.0
        %6767 = vmatpush1.msra.mxu0 0.0
        %6768 = vmatprep.subr.mxu0 0.0
        %6769 = vmatpush1.msra.mxu0 0.0
        %6770 = vmatprep.subr.mxu0 0.0
        %6771 = vmatpush1.msra.mxu0 0.0
        %6772 = vmatprep.subr.mxu0 0.0
        %6773 = vmatpush1.msra.mxu0 0.0
        %6774 = vmatprep.subr.mxu0 0.0
        %6775 = vmatpush1.msra.mxu0 0.0
        %6776 = vmatprep.subr.mxu0 0.0
        %6777 = vmatpush1.msra.mxu0 0.0
        %6778 = vmatprep.subr.mxu0 0.0
        %6779 = vmatpush1.msra.mxu0 0.0
        %6780 = vmatprep.subr.mxu0 0.0
        %6781 = vmatpush1.msra.mxu0 0.0
        %6782 = vmatprep.mubr.f32.mxu0 0.0
        %6783 = vmatmul.mubr.f32.gmra.mrb[0].mxu0 %v6716
        %v6784 = vpop.f32.mrb[0].mxu0
        %v6785 = vadd.f32 0.0, %v6784
        %v6786 = vpop.f32.mrb[0].mxu0
        %6787 = vdwg.mxu0
        %v6788 = vadd.f32 %v6547, %v6785
        %v6789 = vadd.f32 %v5742, %v6788
        %v6790 = vsel %vm793, %v6789, 0.0
        %6791 = vadd.xlane.f32.xlu0 %v6790
        %v6792 = vpop.xlane.xlu0 %6791
        %v6793 = vmul.f32 %v6792, %v1838
        %v6794 = vsub.f32 %v6789, %v6793
        %v6795 = vmul.f32 %v6794, %v6794
        %v6796 = vsel %vm793, %v6795, 0.0
        %6797 = vadd.xlane.f32.xlu0 %v6796
        %v6798 = vpop.xlane.xlu0 %6797
        %v6799 = vmul.f32 %v6798, %v1838
        %v6800 = vadd.f32 %v6799, 1e-05
        %v6801 = vrsqrt.pop %v6800
        %v6802 = vmul.f32 %v6794, %v6801
        %v6803 = vlaneseq
        %v6804 = vshrl.u32 %v6803, 7
        %v6805 = vsub.s32 0, %v6804
        %v6806 = vrot.slane %v5744, %v6805
        %v6807 = vmul.f32 %v6802, %v6806
        %v6808 = vlaneseq
        %v6809 = vshrl.u32 %v6808, 7
        %v6810 = vsub.s32 1, %v6809
        %v6811 = vrot.slane %v5744, %v6810
        %v6812 = vadd.f32 %v6807, %v6811
        %s6813 = scalar_lea.vmem %s14, 32
        %v6814 = vld [vmem:[%s6813] sm:$0xff]
        %v6815 = vld [vmem:[%s6813 + $0x8] sm:$0xff]
        %v6816 = vld [vmem:[%s6813 + $0x10] sm:$0xff]
        %v6817 = vld [vmem:[%s6813 + $0x18] sm:$0xff]
        %v6819 = vsel %vm793, %v6812, 0
        %6821 = vmatprep.subr.mxu0 0.0
        %6822 = vmatpush1.msra.mxu0 %v6814
        %6823 = vmatprep.subr.mxu0 0.0
        %6824 = vmatpush1.msra.mxu0 %v6815
        %6825 = vmatprep.subr.mxu0 0.0
        %6826 = vmatpush1.msra.mxu0 %v6816
        %6827 = vmatprep.subr.mxu0 0.0
        %6828 = vmatpush1.msra.mxu0 %v6817
        %6829 = vmatprep.subr.mxu0 0.0
        %6830 = vmatpush1.msra.mxu0 0.0
        %6831 = vmatprep.subr.mxu0 0.0
        %6832 = vmatpush1.msra.mxu0 0.0
        %6833 = vmatprep.subr.mxu0 0.0
        %6834 = vmatpush1.msra.mxu0 0.0
        %6835 = vmatprep.subr.mxu0 0.0
        %6836 = vmatpush1.msra.mxu0 0.0
        %6837 = vmatprep.subr.mxu0 0.0
        %6838 = vmatpush1.msra.mxu0 0.0
        %6839 = vmatprep.subr.mxu0 0.0
        %6840 = vmatpush1.msra.mxu0 0.0
        %6841 = vmatprep.subr.mxu0 0.0
        %6842 = vmatpush1.msra.mxu0 0.0
        %6843 = vmatprep.subr.mxu0 0.0
        %6844 = vmatpush1.msra.mxu0 0.0
        %6845 = vmatprep.subr.mxu0 0.0
        %6846 = vmatpush1.msra.mxu0 0.0
        %6847 = vmatprep.subr.mxu0 0.0
        %6848 = vmatpush1.msra.mxu0 0.0
        %6849 = vmatprep.subr.mxu0 0.0
        %6850 = vmatpush1.msra.mxu0 0.0
        %6851 = vmatprep.subr.mxu0 0.0
        %6852 = vmatpush1.msra.mxu0 0.0
        %6853 = vmatprep.subr.mxu0 0.0
        %6854 = vmatpush1.msra.mxu0 0.0
        %6855 = vmatprep.subr.mxu0 0.0
        %6856 = vmatpush1.msra.mxu0 0.0
        %6857 = vmatprep.subr.mxu0 0.0
        %6858 = vmatpush1.msra.mxu0 0.0
        %6859 = vmatprep.subr.mxu0 0.0
        %6860 = vmatpush1.msra.mxu0 0.0
        %6861 = vmatprep.subr.mxu0 0.0
        %6862 = vmatpush1.msra.mxu0 0.0
        %6863 = vmatprep.subr.mxu0 0.0
        %6864 = vmatpush1.msra.mxu0 0.0
        %6865 = vmatprep.subr.mxu0 0.0
        %6866 = vmatpush1.msra.mxu0 0.0
        %6867 = vmatprep.subr.mxu0 0.0
        %6868 = vmatpush1.msra.mxu0 0.0
        %6869 = vmatprep.subr.mxu0 0.0
        %6870 = vmatpush1.msra.mxu0 0.0
        %6871 = vmatprep.subr.mxu0 0.0
        %6872 = vmatpush1.msra.mxu0 0.0
        %6873 = vmatprep.subr.mxu0 0.0
        %6874 = vmatpush1.msra.mxu0 0.0
        %6875 = vmatprep.subr.mxu0 0.0
        %6876 = vmatpush1.msra.mxu0 0.0
        %6877 = vmatprep.subr.mxu0 0.0
        %6878 = vmatpush1.msra.mxu0 0.0
        %6879 = vmatprep.subr.mxu0 0.0
        %6880 = vmatpush1.msra.mxu0 0.0
        %6881 = vmatprep.subr.mxu0 0.0
        %6882 = vmatpush1.msra.mxu0 0.0
        %6883 = vmatprep.subr.mxu0 0.0
        %6884 = vmatpush1.msra.mxu0 0.0
        %6885 = vmatprep.mubr.f32.mxu0 0.0
        %6886 = vmatmul.mubr.f32.gmra.mrb[0].mxu0 %v6819
        %v6887 = vpop.f32.mrb[0].mxu0
        %v6888 = vadd.f32 0.0, %v6887
        %v6889 = vpop.f32.mrb[0].mxu0
        %6890 = vdwg.mxu0
        %s6891 = scalar_lea.vmem %s15, 32
        %v6892 = vld [vmem:[%s6891] sm:$0xff]
        %v6893 = vld [vmem:[%s6891 + $0x8] sm:$0xff]
        %v6894 = vld [vmem:[%s6891 + $0x10] sm:$0xff]
        %v6895 = vld [vmem:[%s6891 + $0x18] sm:$0xff]
        %6896 = vmatprep.subr.mxu0 0.0
        %6897 = vmatpush1.msra.mxu0 %v6892
        %6898 = vmatprep.subr.mxu0 0.0
        %6899 = vmatpush1.msra.mxu0 %v6893
        %6900 = vmatprep.subr.mxu0 0.0
        %6901 = vmatpush1.msra.mxu0 %v6894
        %6902 = vmatprep.subr.mxu0 0.0
        %6903 = vmatpush1.msra.mxu0 %v6895
        %6904 = vmatprep.subr.mxu0 0.0
        %6905 = vmatpush1.msra.mxu0 0.0
        %6906 = vmatprep.subr.mxu0 0.0
        %6907 = vmatpush1.msra.mxu0 0.0
        %6908 = vmatprep.subr.mxu0 0.0
        %6909 = vmatpush1.msra.mxu0 0.0
        %6910 = vmatprep.subr.mxu0 0.0
        %6911 = vmatpush1.msra.mxu0 0.0
        %6912 = vmatprep.subr.mxu0 0.0
        %6913 = vmatpush1.msra.mxu0 0.0
        %6914 = vmatprep.subr.mxu0 0.0
        %6915 = vmatpush1.msra.mxu0 0.0
        %6916 = vmatprep.subr.mxu0 0.0
        %6917 = vmatpush1.msra.mxu0 0.0
        %6918 = vmatprep.subr.mxu0 0.0
        %6919 = vmatpush1.msra.mxu0 0.0
        %6920 = vmatprep.subr.mxu0 0.0
        %6921 = vmatpush1.msra.mxu0 0.0
        %6922 = vmatprep.subr.mxu0 0.0
        %6923 = vmatpush1.msra.mxu0 0.0
        %6924 = vmatprep.subr.mxu0 0.0
        %6925 = vmatpush1.msra.mxu0 0.0
        %6926 = vmatprep.subr.mxu0 0.0
        %6927 = vmatpush1.msra.mxu0 0.0
        %6928 = vmatprep.subr.mxu0 0.0
        %6929 = vmatpush1.msra.mxu0 0.0
        %6930 = vmatprep.subr.mxu0 0.0
        %6931 = vmatpush1.msra.mxu0 0.0
        %6932 = vmatprep.subr.mxu0 0.0
        %6933 = vmatpush1.msra.mxu0 0.0
        %6934 = vmatprep.subr.mxu0 0.0
        %6935 = vmatpush1.msra.mxu0 0.0
        %6936 = vmatprep.subr.mxu0 0.0
        %6937 = vmatpush1.msra.mxu0 0.0
        %6938 = vmatprep.subr.mxu0 0.0
        %6939 = vmatpush1.msra.mxu0 0.0
        %6940 = vmatprep.subr.mxu0 0.0
        %6941 = vmatpush1.msra.mxu0 0.0
        %6942 = vmatprep.subr.mxu0 0.0
        %6943 = vmatpush1.msra.mxu0 0.0
        %6944 = vmatprep.subr.mxu0 0.0
        %6945 = vmatpush1.msra.mxu0 0.0
        %6946 = vmatprep.subr.mxu0 0.0
        %6947 = vmatpush1.msra.mxu0 0.0
        %6948 = vmatprep.subr.mxu0 0.0
        %6949 = vmatpush1.msra.mxu0 0.0
        %6950 = vmatprep.subr.mxu0 0.0
        %6951 = vmatpush1.msra.mxu0 0.0
        %6952 = vmatprep.subr.mxu0 0.0
        %6953 = vmatpush1.msra.mxu0 0.0
        %6954 = vmatprep.subr.mxu0 0.0
        %6955 = vmatpush1.msra.mxu0 0.0
        %6956 = vmatprep.subr.mxu0 0.0
        %6957 = vmatpush1.msra.mxu0 0.0
        %6958 = vmatprep.subr.mxu0 0.0
        %6959 = vmatpush1.msra.mxu0 0.0
        %6960 = vmatprep.mubr.f32.mxu0 0.0
        %6961 = vmatmul.mubr.f32.gmra.mrb[0].mxu0 %v4483
        %v6962 = vpop.f32.mrb[0].mxu0
        %v6963 = vadd.f32 0.0, %v6962
        %v6964 = vpop.f32.mrb[0].mxu0
        %6965 = vdwg.mxu0
        %s6966 = scalar_lea.vmem %s16, 32
        %v6967 = vld [vmem:[%s6966] sm:$0xff]
        %v6968 = vld [vmem:[%s6966 + $0x8] sm:$0xff]
        %v6969 = vld [vmem:[%s6966 + $0x10] sm:$0xff]
        %v6970 = vld [vmem:[%s6966 + $0x18] sm:$0xff]
        %v6972 = vsel %vm874, %v6888, 0
        %v6975 = vsel %vm874, %v6963, 0
        %6977 = vmatprep.subr.mxu0 0.0
        %6978 = vmatpush1.xpose.msra.mxu0 %v6975
        %6979 = vmatprep.subr.mxu0 0.0
        %6980 = vmatpush1.xpose.msra.mxu0 0.0
        %6981 = vmatprep.subr.mxu0 0.0
        %6982 = vmatpush1.xpose.msra.mxu0 0.0
        %6983 = vmatprep.subr.mxu0 0.0
        %6984 = vmatpush1.xpose.msra.mxu0 0.0
        %6985 = vmatprep.subr.mxu0 0.0
        %6986 = vmatpush1.xpose.msra.mxu0 0.0
        %6987 = vmatprep.subr.mxu0 0.0
        %6988 = vmatpush1.xpose.msra.mxu0 0.0
        %6989 = vmatprep.subr.mxu0 0.0
        %6990 = vmatpush1.xpose.msra.mxu0 0.0
        %6991 = vmatprep.subr.mxu0 0.0
        %6992 = vmatpush1.xpose.msra.mxu0 0.0
        %6993 = vmatprep.subr.mxu0 0.0
        %6994 = vmatpush1.xpose.msra.mxu0 0.0
        %6995 = vmatprep.subr.mxu0 0.0
        %6996 = vmatpush1.xpose.msra.mxu0 0.0
        %6997 = vmatprep.subr.mxu0 0.0
        %6998 = vmatpush1.xpose.msra.mxu0 0.0
        %6999 = vmatprep.subr.mxu0 0.0
        %7000 = vmatpush1.xpose.msra.mxu0 0.0
        %7001 = vmatprep.subr.mxu0 0.0
        %7002 = vmatpush1.xpose.msra.mxu0 0.0
        %7003 = vmatprep.subr.mxu0 0.0
        %7004 = vmatpush1.xpose.msra.mxu0 0.0
        %7005 = vmatprep.subr.mxu0 0.0
        %7006 = vmatpush1.xpose.msra.mxu0 0.0
        %7007 = vmatprep.subr.mxu0 0.0
        %7008 = vmatpush1.xpose.msra.mxu0 0.0
        %7009 = vmatprep.subr.mxu0 0.0
        %7010 = vmatpush1.xpose.msra.mxu0 0.0
        %7011 = vmatprep.subr.mxu0 0.0
        %7012 = vmatpush1.xpose.msra.mxu0 0.0
        %7013 = vmatprep.subr.mxu0 0.0
        %7014 = vmatpush1.xpose.msra.mxu0 0.0
        %7015 = vmatprep.subr.mxu0 0.0
        %7016 = vmatpush1.xpose.msra.mxu0 0.0
        %7017 = vmatprep.subr.mxu0 0.0
        %7018 = vmatpush1.xpose.msra.mxu0 0.0
        %7019 = vmatprep.subr.mxu0 0.0
        %7020 = vmatpush1.xpose.msra.mxu0 0.0
        %7021 = vmatprep.subr.mxu0 0.0
        %7022 = vmatpush1.xpose.msra.mxu0 0.0
        %7023 = vmatprep.subr.mxu0 0.0
        %7024 = vmatpush1.xpose.msra.mxu0 0.0
        %7025 = vmatprep.subr.mxu0 0.0
        %7026 = vmatpush1.xpose.msra.mxu0 0.0
        %7027 = vmatprep.subr.mxu0 0.0
        %7028 = vmatpush1.xpose.msra.mxu0 0.0
        %7029 = vmatprep.subr.mxu0 0.0
        %7030 = vmatpush1.xpose.msra.mxu0 0.0
        %7031 = vmatprep.subr.mxu0 0.0
        %7032 = vmatpush1.xpose.msra.mxu0 0.0
        %7033 = vmatprep.subr.mxu0 0.0
        %7034 = vmatpush1.xpose.msra.mxu0 0.0
        %7035 = vmatprep.subr.mxu0 0.0
        %7036 = vmatpush1.xpose.msra.mxu0 0.0
        %7037 = vmatprep.subr.mxu0 0.0
        %7038 = vmatpush1.xpose.msra.mxu0 0.0
        %7039 = vmatprep.subr.mxu0 0.0
        %7040 = vmatpush1.xpose.msra.mxu0 0.0
        %7041 = vmatprep.mubr.f32.mxu0 0.0
        %7042 = vmatmul.mubr.f32.gmra.mrb[0].mxu0 %v6972
        %v7043 = vpop.f32.mrb[0].mxu0
        %v7044 = vadd.f32 0.0, %v7043
        %v7045 = vpop.f32.mrb[0].mxu0
        %7046 = vdwg.mxu0
        %v7047 = vmul.f32 %v7044, 0.35355338
        %v7048 = vsel %vm4636, %v7047, -1000000.0
        %v7049 = vsel %vm874, %v7048, -inf
        %7050 = vmax.xlane.f32.xlu0 %v7049
        %v7051 = vpop.xlane.xlu0 %7050
        %v7052 = vsub.f32 %v7048, %v7051
        %v7053 = vmul.f32 %v7052, 1.442695
        %v7054 = vpow.pop %v7053
        %v7055 = vsel %vm874, %v7054, 0.0
        %7056 = vadd.xlane.f32.xlu0 %v7055
        %v7057 = vpop.xlane.xlu0 %7056
        %v7058 = vrcp.pop %v7057
        %v7059 = vmul.f32 %v7054, %v7058
        %7060 = vrot.lane.b32.xlu0 %v6963, 96
        %v7061 = vpop.permute.xlu0 %7060
        %v7064 = vsel %vm874, %v7059, 0
        %7066 = vmatprep.subr.mxu0 0.0
        %7067 = vmatpush1.msra.mxu0 %v7061
        %7068 = vmatprep.subr.mxu0 0.0
        %7069 = vmatpush1.msra.mxu0 0.0
        %7070 = vmatprep.subr.mxu0 0.0
        %7071 = vmatpush1.msra.mxu0 0.0
        %7072 = vmatprep.subr.mxu0 0.0
        %7073 = vmatpush1.msra.mxu0 0.0
        %7074 = vmatprep.subr.mxu0 0.0
        %7075 = vmatpush1.msra.mxu0 0.0
        %7076 = vmatprep.subr.mxu0 0.0
        %7077 = vmatpush1.msra.mxu0 0.0
        %7078 = vmatprep.subr.mxu0 0.0
        %7079 = vmatpush1.msra.mxu0 0.0
        %7080 = vmatprep.subr.mxu0 0.0
        %7081 = vmatpush1.msra.mxu0 0.0
        %7082 = vmatprep.subr.mxu0 0.0
        %7083 = vmatpush1.msra.mxu0 0.0
        %7084 = vmatprep.subr.mxu0 0.0
        %7085 = vmatpush1.msra.mxu0 0.0
        %7086 = vmatprep.subr.mxu0 0.0
        %7087 = vmatpush1.msra.mxu0 0.0
        %7088 = vmatprep.subr.mxu0 0.0
        %7089 = vmatpush1.msra.mxu0 0.0
        %7090 = vmatprep.subr.mxu0 0.0
        %7091 = vmatpush1.msra.mxu0 0.0
        %7092 = vmatprep.subr.mxu0 0.0
        %7093 = vmatpush1.msra.mxu0 0.0
        %7094 = vmatprep.subr.mxu0 0.0
        %7095 = vmatpush1.msra.mxu0 0.0
        %7096 = vmatprep.subr.mxu0 0.0
        %7097 = vmatpush1.msra.mxu0 0.0
        %7098 = vmatprep.subr.mxu0 0.0
        %7099 = vmatpush1.msra.mxu0 0.0
        %7100 = vmatprep.subr.mxu0 0.0
        %7101 = vmatpush1.msra.mxu0 0.0
        %7102 = vmatprep.subr.mxu0 0.0
        %7103 = vmatpush1.msra.mxu0 0.0
        %7104 = vmatprep.subr.mxu0 0.0
        %7105 = vmatpush1.msra.mxu0 0.0
        %7106 = vmatprep.subr.mxu0 0.0
        %7107 = vmatpush1.msra.mxu0 0.0
        %7108 = vmatprep.subr.mxu0 0.0
        %7109 = vmatpush1.msra.mxu0 0.0
        %7110 = vmatprep.subr.mxu0 0.0
        %7111 = vmatpush1.msra.mxu0 0.0
        %7112 = vmatprep.subr.mxu0 0.0
        %7113 = vmatpush1.msra.mxu0 0.0
        %7114 = vmatprep.subr.mxu0 0.0
        %7115 = vmatpush1.msra.mxu0 0.0
        %7116 = vmatprep.subr.mxu0 0.0
        %7117 = vmatpush1.msra.mxu0 0.0
        %7118 = vmatprep.subr.mxu0 0.0
        %7119 = vmatpush1.msra.mxu0 0.0
        %7120 = vmatprep.subr.mxu0 0.0
        %7121 = vmatpush1.msra.mxu0 0.0
        %7122 = vmatprep.subr.mxu0 0.0
        %7123 = vmatpush1.msra.mxu0 0.0
        %7124 = vmatprep.subr.mxu0 0.0
        %7125 = vmatpush1.msra.mxu0 0.0
        %7126 = vmatprep.subr.mxu0 0.0
        %7127 = vmatpush1.msra.mxu0 0.0
        %7128 = vmatprep.subr.mxu0 0.0
        %7129 = vmatpush1.msra.mxu0 0.0
        %7130 = vmatprep.mubr.f32.mxu0 0.0
        %7131 = vmatmul.mubr.f32.gmra.mrb[0].mxu0 %v7064
        %v7132 = vpop.f32.mrb[0].mxu0
        %v7133 = vadd.f32 0.0, %v7132
        %v7134 = vpop.f32.mrb[0].mxu0
        %7135 = vdwg.mxu0
        %7136 = vrot.lane.b32.xlu0 %v6888, 120
        %v7137 = vpop.permute.xlu0 %7136
        %7138 = vrot.lane.b32.xlu0 %v6963, 120
        %v7139 = vpop.permute.xlu0 %7138
        %v7140 = vsel %vm874, %v7137, 0
        %v7142 = vsel %vm874, %v7139, 0
        %7144 = vmatprep.subr.mxu0 0.0
        %7145 = vmatpush1.xpose.msra.mxu0 %v7142
        %7146 = vmatprep.subr.mxu0 0.0
        %7147 = vmatpush1.xpose.msra.mxu0 0.0
        %7148 = vmatprep.subr.mxu0 0.0
        %7149 = vmatpush1.xpose.msra.mxu0 0.0
        %7150 = vmatprep.subr.mxu0 0.0
        %7151 = vmatpush1.xpose.msra.mxu0 0.0
        %7152 = vmatprep.subr.mxu0 0.0
        %7153 = vmatpush1.xpose.msra.mxu0 0.0
        %7154 = vmatprep.subr.mxu0 0.0
        %7155 = vmatpush1.xpose.msra.mxu0 0.0
        %7156 = vmatprep.subr.mxu0 0.0
        %7157 = vmatpush1.xpose.msra.mxu0 0.0
        %7158 = vmatprep.subr.mxu0 0.0
        %7159 = vmatpush1.xpose.msra.mxu0 0.0
        %7160 = vmatprep.subr.mxu0 0.0
        %7161 = vmatpush1.xpose.msra.mxu0 0.0
        %7162 = vmatprep.subr.mxu0 0.0
        %7163 = vmatpush1.xpose.msra.mxu0 0.0
        %7164 = vmatprep.subr.mxu0 0.0
        %7165 = vmatpush1.xpose.msra.mxu0 0.0
        %7166 = vmatprep.subr.mxu0 0.0
        %7167 = vmatpush1.xpose.msra.mxu0 0.0
        %7168 = vmatprep.subr.mxu0 0.0
        %7169 = vmatpush1.xpose.msra.mxu0 0.0
        %7170 = vmatprep.subr.mxu0 0.0
        %7171 = vmatpush1.xpose.msra.mxu0 0.0
        %7172 = vmatprep.subr.mxu0 0.0
        %7173 = vmatpush1.xpose.msra.mxu0 0.0
        %7174 = vmatprep.subr.mxu0 0.0
        %7175 = vmatpush1.xpose.msra.mxu0 0.0
        %7176 = vmatprep.subr.mxu0 0.0
        %7177 = vmatpush1.xpose.msra.mxu0 0.0
        %7178 = vmatprep.subr.mxu0 0.0
        %7179 = vmatpush1.xpose.msra.mxu0 0.0
        %7180 = vmatprep.subr.mxu0 0.0
        %7181 = vmatpush1.xpose.msra.mxu0 0.0
        %7182 = vmatprep.subr.mxu0 0.0
        %7183 = vmatpush1.xpose.msra.mxu0 0.0
        %7184 = vmatprep.subr.mxu0 0.0
        %7185 = vmatpush1.xpose.msra.mxu0 0.0
        %7186 = vmatprep.subr.mxu0 0.0
        %7187 = vmatpush1.xpose.msra.mxu0 0.0
        %7188 = vmatprep.subr.mxu0 0.0
        %7189 = vmatpush1.xpose.msra.mxu0 0.0
        %7190 = vmatprep.subr.mxu0 0.0
        %7191 = vmatpush1.xpose.msra.mxu0 0.0
        %7192 = vmatprep.subr.mxu0 0.0
        %7193 = vmatpush1.xpose.msra.mxu0 0.0
        %7194 = vmatprep.subr.mxu0 0.0
        %7195 = vmatpush1.xpose.msra.mxu0 0.0
        %7196 = vmatprep.subr.mxu0 0.0
        %7197 = vmatpush1.xpose.msra.mxu0 0.0
        %7198 = vmatprep.subr.mxu0 0.0
        %7199 = vmatpush1.xpose.msra.mxu0 0.0
        %7200 = vmatprep.subr.mxu0 0.0
        %7201 = vmatpush1.xpose.msra.mxu0 0.0
        %7202 = vmatprep.subr.mxu0 0.0
        %7203 = vmatpush1.xpose.msra.mxu0 0.0
        %7204 = vmatprep.subr.mxu0 0.0
        %7205 = vmatpush1.xpose.msra.mxu0 0.0
        %7206 = vmatprep.subr.mxu0 0.0
        %7207 = vmatpush1.xpose.msra.mxu0 0.0
        %7208 = vmatprep.mubr.f32.mxu0 0.0
        %7209 = vmatmul.mubr.f32.gmra.mrb[0].mxu0 %v7140
        %v7210 = vpop.f32.mrb[0].mxu0
        %v7211 = vadd.f32 0.0, %v7210
        %v7212 = vpop.f32.mrb[0].mxu0
        %7213 = vdwg.mxu0
        %v7214 = vmul.f32 %v7211, 0.35355338
        %v7215 = vsel %vm4636, %v7214, -1000000.0
        %v7216 = vsel %vm874, %v7215, -inf
        %7217 = vmax.xlane.f32.xlu0 %v7216
        %v7218 = vpop.xlane.xlu0 %7217
        %v7219 = vsub.f32 %v7215, %v7218
        %v7220 = vmul.f32 %v7219, 1.442695
        %v7221 = vpow.pop %v7220
        %v7222 = vsel %vm874, %v7221, 0.0
        %7223 = vadd.xlane.f32.xlu0 %v7222
        %v7224 = vpop.xlane.xlu0 %7223
        %v7225 = vrcp.pop %v7224
        %v7226 = vmul.f32 %v7221, %v7225
        %7227 = vrot.lane.b32.xlu0 %v6963, 88
        %v7228 = vpop.permute.xlu0 %7227
        %v7231 = vsel %vm874, %v7226, 0
        %7233 = vmatprep.subr.mxu0 0.0
        %7234 = vmatpush1.msra.mxu0 %v7228
        %7235 = vmatprep.subr.mxu0 0.0
        %7236 = vmatpush1.msra.mxu0 0.0
        %7237 = vmatprep.subr.mxu0 0.0
        %7238 = vmatpush1.msra.mxu0 0.0
        %7239 = vmatprep.subr.mxu0 0.0
        %7240 = vmatpush1.msra.mxu0 0.0
        %7241 = vmatprep.subr.mxu0 0.0
        %7242 = vmatpush1.msra.mxu0 0.0
        %7243 = vmatprep.subr.mxu0 0.0
        %7244 = vmatpush1.msra.mxu0 0.0
        %7245 = vmatprep.subr.mxu0 0.0
        %7246 = vmatpush1.msra.mxu0 0.0
        %7247 = vmatprep.subr.mxu0 0.0
        %7248 = vmatpush1.msra.mxu0 0.0
        %7249 = vmatprep.subr.mxu0 0.0
        %7250 = vmatpush1.msra.mxu0 0.0
        %7251 = vmatprep.subr.mxu0 0.0
        %7252 = vmatpush1.msra.mxu0 0.0
        %7253 = vmatprep.subr.mxu0 0.0
        %7254 = vmatpush1.msra.mxu0 0.0
        %7255 = vmatprep.subr.mxu0 0.0
        %7256 = vmatpush1.msra.mxu0 0.0
        %7257 = vmatprep.subr.mxu0 0.0
        %7258 = vmatpush1.msra.mxu0 0.0
        %7259 = vmatprep.subr.mxu0 0.0
        %7260 = vmatpush1.msra.mxu0 0.0
        %7261 = vmatprep.subr.mxu0 0.0
        %7262 = vmatpush1.msra.mxu0 0.0
        %7263 = vmatprep.subr.mxu0 0.0
        %7264 = vmatpush1.msra.mxu0 0.0
        %7265 = vmatprep.subr.mxu0 0.0
        %7266 = vmatpush1.msra.mxu0 0.0
        %7267 = vmatprep.subr.mxu0 0.0
        %7268 = vmatpush1.msra.mxu0 0.0
        %7269 = vmatprep.subr.mxu0 0.0
        %7270 = vmatpush1.msra.mxu0 0.0
        %7271 = vmatprep.subr.mxu0 0.0
        %7272 = vmatpush1.msra.mxu0 0.0
        %7273 = vmatprep.subr.mxu0 0.0
        %7274 = vmatpush1.msra.mxu0 0.0
        %7275 = vmatprep.subr.mxu0 0.0
        %7276 = vmatpush1.msra.mxu0 0.0
        %7277 = vmatprep.subr.mxu0 0.0
        %7278 = vmatpush1.msra.mxu0 0.0
        %7279 = vmatprep.subr.mxu0 0.0
        %7280 = vmatpush1.msra.mxu0 0.0
        %7281 = vmatprep.subr.mxu0 0.0
        %7282 = vmatpush1.msra.mxu0 0.0
        %7283 = vmatprep.subr.mxu0 0.0
        %7284 = vmatpush1.msra.mxu0 0.0
        %7285 = vmatprep.subr.mxu0 0.0
        %7286 = vmatpush1.msra.mxu0 0.0
        %7287 = vmatprep.subr.mxu0 0.0
        %7288 = vmatpush1.msra.mxu0 0.0
        %7289 = vmatprep.subr.mxu0 0.0
        %7290 = vmatpush1.msra.mxu0 0.0
        %7291 = vmatprep.subr.mxu0 0.0
        %7292 = vmatpush1.msra.mxu0 0.0
        %7293 = vmatprep.subr.mxu0 0.0
        %7294 = vmatpush1.msra.mxu0 0.0
        %7295 = vmatprep.subr.mxu0 0.0
        %7296 = vmatpush1.msra.mxu0 0.0
        %7297 = vmatprep.mubr.f32.mxu0 0.0
        %7298 = vmatmul.mubr.f32.gmra.mrb[0].mxu0 %v7231
        %v7299 = vpop.f32.mrb[0].mxu0
        %v7300 = vadd.f32 0.0, %v7299
        %v7301 = vpop.f32.mrb[0].mxu0
        %7302 = vdwg.mxu0
        %v7304 = vsel %vm874, %v7300, 0
        %7306 = vmatprep.subr.mxu0 0.0
        %7307 = vmatpush1.msra.mxu0 %v6968
        %7308 = vmatprep.subr.mxu0 0.0
        %7309 = vmatpush1.msra.mxu0 0.0
        %7310 = vmatprep.subr.mxu0 0.0
        %7311 = vmatpush1.msra.mxu0 0.0
        %7312 = vmatprep.subr.mxu0 0.0
        %7313 = vmatpush1.msra.mxu0 0.0
        %7314 = vmatprep.subr.mxu0 0.0
        %7315 = vmatpush1.msra.mxu0 0.0
        %7316 = vmatprep.subr.mxu0 0.0
        %7317 = vmatpush1.msra.mxu0 0.0
        %7318 = vmatprep.subr.mxu0 0.0
        %7319 = vmatpush1.msra.mxu0 0.0
        %7320 = vmatprep.subr.mxu0 0.0
        %7321 = vmatpush1.msra.mxu0 0.0
        %7322 = vmatprep.subr.mxu0 0.0
        %7323 = vmatpush1.msra.mxu0 0.0
        %7324 = vmatprep.subr.mxu0 0.0
        %7325 = vmatpush1.msra.mxu0 0.0
        %7326 = vmatprep.subr.mxu0 0.0
        %7327 = vmatpush1.msra.mxu0 0.0
        %7328 = vmatprep.subr.mxu0 0.0
        %7329 = vmatpush1.msra.mxu0 0.0
        %7330 = vmatprep.subr.mxu0 0.0
        %7331 = vmatpush1.msra.mxu0 0.0
        %7332 = vmatprep.subr.mxu0 0.0
        %7333 = vmatpush1.msra.mxu0 0.0
        %7334 = vmatprep.subr.mxu0 0.0
        %7335 = vmatpush1.msra.mxu0 0.0
        %7336 = vmatprep.subr.mxu0 0.0
        %7337 = vmatpush1.msra.mxu0 0.0
        %7338 = vmatprep.subr.mxu0 0.0
        %7339 = vmatpush1.msra.mxu0 0.0
        %7340 = vmatprep.subr.mxu0 0.0
        %7341 = vmatpush1.msra.mxu0 0.0
        %7342 = vmatprep.subr.mxu0 0.0
        %7343 = vmatpush1.msra.mxu0 0.0
        %7344 = vmatprep.subr.mxu0 0.0
        %7345 = vmatpush1.msra.mxu0 0.0
        %7346 = vmatprep.subr.mxu0 0.0
        %7347 = vmatpush1.msra.mxu0 0.0
        %7348 = vmatprep.subr.mxu0 0.0
        %7349 = vmatpush1.msra.mxu0 0.0
        %7350 = vmatprep.subr.mxu0 0.0
        %7351 = vmatpush1.msra.mxu0 0.0
        %7352 = vmatprep.subr.mxu0 0.0
        %7353 = vmatpush1.msra.mxu0 0.0
        %7354 = vmatprep.subr.mxu0 0.0
        %7355 = vmatpush1.msra.mxu0 0.0
        %7356 = vmatprep.subr.mxu0 0.0
        %7357 = vmatpush1.msra.mxu0 0.0
        %7358 = vmatprep.subr.mxu0 0.0
        %7359 = vmatpush1.msra.mxu0 0.0
        %7360 = vmatprep.subr.mxu0 0.0
        %7361 = vmatpush1.msra.mxu0 0.0
        %7362 = vmatprep.subr.mxu0 0.0
        %7363 = vmatpush1.msra.mxu0 0.0
        %7364 = vmatprep.subr.mxu0 0.0
        %7365 = vmatpush1.msra.mxu0 0.0
        %7366 = vmatprep.subr.mxu0 0.0
        %7367 = vmatpush1.msra.mxu0 0.0
        %7368 = vmatprep.subr.mxu0 0.0
        %7369 = vmatpush1.msra.mxu0 0.0
        %7370 = vmatprep.mubr.f32.mxu0 0.0
        %7371 = vmatmul.mubr.f32.gmra.mrb[0].mxu0 %v7304
        %v7372 = vpop.f32.mrb[0].mxu0
        %v7373 = vadd.f32 0.0, %v7372
        %v7374 = vpop.f32.mrb[0].mxu0
        %7375 = vdwg.mxu0
        %v7377 = vsel %vm874, %v7133, 0
        %7379 = vmatprep.subr.mxu0 0.0
        %7380 = vmatpush1.msra.mxu0 %v6967
        %7381 = vmatprep.subr.mxu0 0.0
        %7382 = vmatpush1.msra.mxu0 0.0
        %7383 = vmatprep.subr.mxu0 0.0
        %7384 = vmatpush1.msra.mxu0 0.0
        %7385 = vmatprep.subr.mxu0 0.0
        %7386 = vmatpush1.msra.mxu0 0.0
        %7387 = vmatprep.subr.mxu0 0.0
        %7388 = vmatpush1.msra.mxu0 0.0
        %7389 = vmatprep.subr.mxu0 0.0
        %7390 = vmatpush1.msra.mxu0 0.0
        %7391 = vmatprep.subr.mxu0 0.0
        %7392 = vmatpush1.msra.mxu0 0.0
        %7393 = vmatprep.subr.mxu0 0.0
        %7394 = vmatpush1.msra.mxu0 0.0
        %7395 = vmatprep.subr.mxu0 0.0
        %7396 = vmatpush1.msra.mxu0 0.0
        %7397 = vmatprep.subr.mxu0 0.0
        %7398 = vmatpush1.msra.mxu0 0.0
        %7399 = vmatprep.subr.mxu0 0.0
        %7400 = vmatpush1.msra.mxu0 0.0
        %7401 = vmatprep.subr.mxu0 0.0
        %7402 = vmatpush1.msra.mxu0 0.0
        %7403 = vmatprep.subr.mxu0 0.0
        %7404 = vmatpush1.msra.mxu0 0.0
        %7405 = vmatprep.subr.mxu0 0.0
        %7406 = vmatpush1.msra.mxu0 0.0
        %7407 = vmatprep.subr.mxu0 0.0
        %7408 = vmatpush1.msra.mxu0 0.0
        %7409 = vmatprep.subr.mxu0 0.0
        %7410 = vmatpush1.msra.mxu0 0.0
        %7411 = vmatprep.subr.mxu0 0.0
        %7412 = vmatpush1.msra.mxu0 0.0
        %7413 = vmatprep.subr.mxu0 0.0
        %7414 = vmatpush1.msra.mxu0 0.0
        %7415 = vmatprep.subr.mxu0 0.0
        %7416 = vmatpush1.msra.mxu0 0.0
        %7417 = vmatprep.subr.mxu0 0.0
        %7418 = vmatpush1.msra.mxu0 0.0
        %7419 = vmatprep.subr.mxu0 0.0
        %7420 = vmatpush1.msra.mxu0 0.0
        %7421 = vmatprep.subr.mxu0 0.0
        %7422 = vmatpush1.msra.mxu0 0.0
        %7423 = vmatprep.subr.mxu0 0.0
        %7424 = vmatpush1.msra.mxu0 0.0
        %7425 = vmatprep.subr.mxu0 0.0
        %7426 = vmatpush1.msra.mxu0 0.0
        %7427 = vmatprep.subr.mxu0 0.0
        %7428 = vmatpush1.msra.mxu0 0.0
        %7429 = vmatprep.subr.mxu0 0.0
        %7430 = vmatpush1.msra.mxu0 0.0
        %7431 = vmatprep.subr.mxu0 0.0
        %7432 = vmatpush1.msra.mxu0 0.0
        %7433 = vmatprep.subr.mxu0 0.0
        %7434 = vmatpush1.msra.mxu0 0.0
        %7435 = vmatprep.subr.mxu0 0.0
        %7436 = vmatpush1.msra.mxu0 0.0
        %7437 = vmatprep.subr.mxu0 0.0
        %7438 = vmatpush1.msra.mxu0 0.0
        %7439 = vmatprep.subr.mxu0 0.0
        %7440 = vmatpush1.msra.mxu0 0.0
        %7441 = vmatprep.subr.mxu0 0.0
        %7442 = vmatpush1.msra.mxu0 0.0
        %7443 = vmatprep.mubr.f32.mxu0 0.0
        %7444 = vmatmul.mubr.f32.gmra.mrb[0].mxu0 %v7377
        %v7445 = vpop.f32.mrb[0].mxu0
        %v7446 = vadd.f32 %v7373, %v7445
        %v7447 = vpop.f32.mrb[0].mxu0
        %7448 = vdwg.mxu0
        %7449 = vrot.lane.b32.xlu0 %v6888, 112
        %v7450 = vpop.permute.xlu0 %7449
        %7451 = vrot.lane.b32.xlu0 %v6963, 112
        %v7452 = vpop.permute.xlu0 %7451
        %v7453 = vsel %vm874, %v7450, 0
        %v7455 = vsel %vm874, %v7452, 0
        %7457 = vmatprep.subr.mxu0 0.0
        %7458 = vmatpush1.xpose.msra.mxu0 %v7455
        %7459 = vmatprep.subr.mxu0 0.0
        %7460 = vmatpush1.xpose.msra.mxu0 0.0
        %7461 = vmatprep.subr.mxu0 0.0
        %7462 = vmatpush1.xpose.msra.mxu0 0.0
        %7463 = vmatprep.subr.mxu0 0.0
        %7464 = vmatpush1.xpose.msra.mxu0 0.0
        %7465 = vmatprep.subr.mxu0 0.0
        %7466 = vmatpush1.xpose.msra.mxu0 0.0
        %7467 = vmatprep.subr.mxu0 0.0
        %7468 = vmatpush1.xpose.msra.mxu0 0.0
        %7469 = vmatprep.subr.mxu0 0.0
        %7470 = vmatpush1.xpose.msra.mxu0 0.0
        %7471 = vmatprep.subr.mxu0 0.0
        %7472 = vmatpush1.xpose.msra.mxu0 0.0
        %7473 = vmatprep.subr.mxu0 0.0
        %7474 = vmatpush1.xpose.msra.mxu0 0.0
        %7475 = vmatprep.subr.mxu0 0.0
        %7476 = vmatpush1.xpose.msra.mxu0 0.0
        %7477 = vmatprep.subr.mxu0 0.0
        %7478 = vmatpush1.xpose.msra.mxu0 0.0
        %7479 = vmatprep.subr.mxu0 0.0
        %7480 = vmatpush1.xpose.msra.mxu0 0.0
        %7481 = vmatprep.subr.mxu0 0.0
        %7482 = vmatpush1.xpose.msra.mxu0 0.0
        %7483 = vmatprep.subr.mxu0 0.0
        %7484 = vmatpush1.xpose.msra.mxu0 0.0
        %7485 = vmatprep.subr.mxu0 0.0
        %7486 = vmatpush1.xpose.msra.mxu0 0.0
        %7487 = vmatprep.subr.mxu0 0.0
        %7488 = vmatpush1.xpose.msra.mxu0 0.0
        %7489 = vmatprep.subr.mxu0 0.0
        %7490 = vmatpush1.xpose.msra.mxu0 0.0
        %7491 = vmatprep.subr.mxu0 0.0
        %7492 = vmatpush1.xpose.msra.mxu0 0.0
        %7493 = vmatprep.subr.mxu0 0.0
        %7494 = vmatpush1.xpose.msra.mxu0 0.0
        %7495 = vmatprep.subr.mxu0 0.0
        %7496 = vmatpush1.xpose.msra.mxu0 0.0
        %7497 = vmatprep.subr.mxu0 0.0
        %7498 = vmatpush1.xpose.msra.mxu0 0.0
        %7499 = vmatprep.subr.mxu0 0.0
        %7500 = vmatpush1.xpose.msra.mxu0 0.0
        %7501 = vmatprep.subr.mxu0 0.0
        %7502 = vmatpush1.xpose.msra.mxu0 0.0
        %7503 = vmatprep.subr.mxu0 0.0
        %7504 = vmatpush1.xpose.msra.mxu0 0.0
        %7505 = vmatprep.subr.mxu0 0.0
        %7506 = vmatpush1.xpose.msra.mxu0 0.0
        %7507 = vmatprep.subr.mxu0 0.0
        %7508 = vmatpush1.xpose.msra.mxu0 0.0
        %7509 = vmatprep.subr.mxu0 0.0
        %7510 = vmatpush1.xpose.msra.mxu0 0.0
        %7511 = vmatprep.subr.mxu0 0.0
        %7512 = vmatpush1.xpose.msra.mxu0 0.0
        %7513 = vmatprep.subr.mxu0 0.0
        %7514 = vmatpush1.xpose.msra.mxu0 0.0
        %7515 = vmatprep.subr.mxu0 0.0
        %7516 = vmatpush1.xpose.msra.mxu0 0.0
        %7517 = vmatprep.subr.mxu0 0.0
        %7518 = vmatpush1.xpose.msra.mxu0 0.0
        %7519 = vmatprep.subr.mxu0 0.0
        %7520 = vmatpush1.xpose.msra.mxu0 0.0
        %7521 = vmatprep.mubr.f32.mxu0 0.0
        %7522 = vmatmul.mubr.f32.gmra.mrb[0].mxu0 %v7453
        %v7523 = vpop.f32.mrb[0].mxu0
        %v7524 = vadd.f32 0.0, %v7523
        %v7525 = vpop.f32.mrb[0].mxu0
        %7526 = vdwg.mxu0
        %v7527 = vmul.f32 %v7524, 0.35355338
        %v7528 = vsel %vm4636, %v7527, -1000000.0
        %v7529 = vsel %vm874, %v7528, -inf
        %7530 = vmax.xlane.f32.xlu0 %v7529
        %v7531 = vpop.xlane.xlu0 %7530
        %v7532 = vsub.f32 %v7528, %v7531
        %v7533 = vmul.f32 %v7532, 1.442695
        %v7534 = vpow.pop %v7533
        %v7535 = vsel %vm874, %v7534, 0.0
        %7536 = vadd.xlane.f32.xlu0 %v7535
        %v7537 = vpop.xlane.xlu0 %7536
        %v7538 = vrcp.pop %v7537
        %v7539 = vmul.f32 %v7534, %v7538
        %7540 = vrot.lane.b32.xlu0 %v6963, 80
        %v7541 = vpop.permute.xlu0 %7540
        %v7544 = vsel %vm874, %v7539, 0
        %7546 = vmatprep.subr.mxu0 0.0
        %7547 = vmatpush1.msra.mxu0 %v7541
        %7548 = vmatprep.subr.mxu0 0.0
        %7549 = vmatpush1.msra.mxu0 0.0
        %7550 = vmatprep.subr.mxu0 0.0
        %7551 = vmatpush1.msra.mxu0 0.0
        %7552 = vmatprep.subr.mxu0 0.0
        %7553 = vmatpush1.msra.mxu0 0.0
        %7554 = vmatprep.subr.mxu0 0.0
        %7555 = vmatpush1.msra.mxu0 0.0
        %7556 = vmatprep.subr.mxu0 0.0
        %7557 = vmatpush1.msra.mxu0 0.0
        %7558 = vmatprep.subr.mxu0 0.0
        %7559 = vmatpush1.msra.mxu0 0.0
        %7560 = vmatprep.subr.mxu0 0.0
        %7561 = vmatpush1.msra.mxu0 0.0
        %7562 = vmatprep.subr.mxu0 0.0
        %7563 = vmatpush1.msra.mxu0 0.0
        %7564 = vmatprep.subr.mxu0 0.0
        %7565 = vmatpush1.msra.mxu0 0.0
        %7566 = vmatprep.subr.mxu0 0.0
        %7567 = vmatpush1.msra.mxu0 0.0
        %7568 = vmatprep.subr.mxu0 0.0
        %7569 = vmatpush1.msra.mxu0 0.0
        %7570 = vmatprep.subr.mxu0 0.0
        %7571 = vmatpush1.msra.mxu0 0.0
        %7572 = vmatprep.subr.mxu0 0.0
        %7573 = vmatpush1.msra.mxu0 0.0
        %7574 = vmatprep.subr.mxu0 0.0
        %7575 = vmatpush1.msra.mxu0 0.0
        %7576 = vmatprep.subr.mxu0 0.0
        %7577 = vmatpush1.msra.mxu0 0.0
        %7578 = vmatprep.subr.mxu0 0.0
        %7579 = vmatpush1.msra.mxu0 0.0
        %7580 = vmatprep.subr.mxu0 0.0
        %7581 = vmatpush1.msra.mxu0 0.0
        %7582 = vmatprep.subr.mxu0 0.0
        %7583 = vmatpush1.msra.mxu0 0.0
        %7584 = vmatprep.subr.mxu0 0.0
        %7585 = vmatpush1.msra.mxu0 0.0
        %7586 = vmatprep.subr.mxu0 0.0
        %7587 = vmatpush1.msra.mxu0 0.0
        %7588 = vmatprep.subr.mxu0 0.0
        %7589 = vmatpush1.msra.mxu0 0.0
        %7590 = vmatprep.subr.mxu0 0.0
        %7591 = vmatpush1.msra.mxu0 0.0
        %7592 = vmatprep.subr.mxu0 0.0
        %7593 = vmatpush1.msra.mxu0 0.0
        %7594 = vmatprep.subr.mxu0 0.0
        %7595 = vmatpush1.msra.mxu0 0.0
        %7596 = vmatprep.subr.mxu0 0.0
        %7597 = vmatpush1.msra.mxu0 0.0
        %7598 = vmatprep.subr.mxu0 0.0
        %7599 = vmatpush1.msra.mxu0 0.0
        %7600 = vmatprep.subr.mxu0 0.0
        %7601 = vmatpush1.msra.mxu0 0.0
        %7602 = vmatprep.subr.mxu0 0.0
        %7603 = vmatpush1.msra.mxu0 0.0
        %7604 = vmatprep.subr.mxu0 0.0
        %7605 = vmatpush1.msra.mxu0 0.0
        %7606 = vmatprep.subr.mxu0 0.0
        %7607 = vmatpush1.msra.mxu0 0.0
        %7608 = vmatprep.subr.mxu0 0.0
        %7609 = vmatpush1.msra.mxu0 0.0
        %7610 = vmatprep.mubr.f32.mxu0 0.0
        %7611 = vmatmul.mubr.f32.gmra.mrb[0].mxu0 %v7544
        %v7612 = vpop.f32.mrb[0].mxu0
        %v7613 = vadd.f32 0.0, %v7612
        %v7614 = vpop.f32.mrb[0].mxu0
        %7615 = vdwg.mxu0
        %v7617 = vsel %vm874, %v7613, 0
        %7619 = vmatprep.subr.mxu0 0.0
        %7620 = vmatpush1.msra.mxu0 %v6969
        %7621 = vmatprep.subr.mxu0 0.0
        %7622 = vmatpush1.msra.mxu0 0.0
        %7623 = vmatprep.subr.mxu0 0.0
        %7624 = vmatpush1.msra.mxu0 0.0
        %7625 = vmatprep.subr.mxu0 0.0
        %7626 = vmatpush1.msra.mxu0 0.0
        %7627 = vmatprep.subr.mxu0 0.0
        %7628 = vmatpush1.msra.mxu0 0.0
        %7629 = vmatprep.subr.mxu0 0.0
        %7630 = vmatpush1.msra.mxu0 0.0
        %7631 = vmatprep.subr.mxu0 0.0
        %7632 = vmatpush1.msra.mxu0 0.0
        %7633 = vmatprep.subr.mxu0 0.0
        %7634 = vmatpush1.msra.mxu0 0.0
        %7635 = vmatprep.subr.mxu0 0.0
        %7636 = vmatpush1.msra.mxu0 0.0
        %7637 = vmatprep.subr.mxu0 0.0
        %7638 = vmatpush1.msra.mxu0 0.0
        %7639 = vmatprep.subr.mxu0 0.0
        %7640 = vmatpush1.msra.mxu0 0.0
        %7641 = vmatprep.subr.mxu0 0.0
        %7642 = vmatpush1.msra.mxu0 0.0
        %7643 = vmatprep.subr.mxu0 0.0
        %7644 = vmatpush1.msra.mxu0 0.0
        %7645 = vmatprep.subr.mxu0 0.0
        %7646 = vmatpush1.msra.mxu0 0.0
        %7647 = vmatprep.subr.mxu0 0.0
        %7648 = vmatpush1.msra.mxu0 0.0
        %7649 = vmatprep.subr.mxu0 0.0
        %7650 = vmatpush1.msra.mxu0 0.0
        %7651 = vmatprep.subr.mxu0 0.0
        %7652 = vmatpush1.msra.mxu0 0.0
        %7653 = vmatprep.subr.mxu0 0.0
        %7654 = vmatpush1.msra.mxu0 0.0
        %7655 = vmatprep.subr.mxu0 0.0
        %7656 = vmatpush1.msra.mxu0 0.0
        %7657 = vmatprep.subr.mxu0 0.0
        %7658 = vmatpush1.msra.mxu0 0.0
        %7659 = vmatprep.subr.mxu0 0.0
        %7660 = vmatpush1.msra.mxu0 0.0
        %7661 = vmatprep.subr.mxu0 0.0
        %7662 = vmatpush1.msra.mxu0 0.0
        %7663 = vmatprep.subr.mxu0 0.0
        %7664 = vmatpush1.msra.mxu0 0.0
        %7665 = vmatprep.subr.mxu0 0.0
        %7666 = vmatpush1.msra.mxu0 0.0
        %7667 = vmatprep.subr.mxu0 0.0
        %7668 = vmatpush1.msra.mxu0 0.0
        %7669 = vmatprep.subr.mxu0 0.0
        %7670 = vmatpush1.msra.mxu0 0.0
        %7671 = vmatprep.subr.mxu0 0.0
        %7672 = vmatpush1.msra.mxu0 0.0
        %7673 = vmatprep.subr.mxu0 0.0
        %7674 = vmatpush1.msra.mxu0 0.0
        %7675 = vmatprep.subr.mxu0 0.0
        %7676 = vmatpush1.msra.mxu0 0.0
        %7677 = vmatprep.subr.mxu0 0.0
        %7678 = vmatpush1.msra.mxu0 0.0
        %7679 = vmatprep.subr.mxu0 0.0
        %7680 = vmatpush1.msra.mxu0 0.0
        %7681 = vmatprep.subr.mxu0 0.0
        %7682 = vmatpush1.msra.mxu0 0.0
        %7683 = vmatprep.mubr.f32.mxu0 0.0
        %7684 = vmatmul.mubr.f32.gmra.mrb[0].mxu0 %v7617
        %v7685 = vpop.f32.mrb[0].mxu0
        %v7686 = vadd.f32 0.0, %v7685
        %v7687 = vpop.f32.mrb[0].mxu0
        %7688 = vdwg.mxu0
        %v7689 = vadd.f32 %v7446, %v7686
        %7690 = vrot.lane.b32.xlu0 %v6888, 104
        %v7691 = vpop.permute.xlu0 %7690
        %7692 = vrot.lane.b32.xlu0 %v6963, 104
        %v7693 = vpop.permute.xlu0 %7692
        %v7694 = vsel %vm874, %v7691, 0
        %v7696 = vsel %vm874, %v7693, 0
        %7698 = vmatprep.subr.mxu0 0.0
        %7699 = vmatpush1.xpose.msra.mxu0 %v7696
        %7700 = vmatprep.subr.mxu0 0.0
        %7701 = vmatpush1.xpose.msra.mxu0 0.0
        %7702 = vmatprep.subr.mxu0 0.0
        %7703 = vmatpush1.xpose.msra.mxu0 0.0
        %7704 = vmatprep.subr.mxu0 0.0
        %7705 = vmatpush1.xpose.msra.mxu0 0.0
        %7706 = vmatprep.subr.mxu0 0.0
        %7707 = vmatpush1.xpose.msra.mxu0 0.0
        %7708 = vmatprep.subr.mxu0 0.0
        %7709 = vmatpush1.xpose.msra.mxu0 0.0
        %7710 = vmatprep.subr.mxu0 0.0
        %7711 = vmatpush1.xpose.msra.mxu0 0.0
        %7712 = vmatprep.subr.mxu0 0.0
        %7713 = vmatpush1.xpose.msra.mxu0 0.0
        %7714 = vmatprep.subr.mxu0 0.0
        %7715 = vmatpush1.xpose.msra.mxu0 0.0
        %7716 = vmatprep.subr.mxu0 0.0
        %7717 = vmatpush1.xpose.msra.mxu0 0.0
        %7718 = vmatprep.subr.mxu0 0.0
        %7719 = vmatpush1.xpose.msra.mxu0 0.0
        %7720 = vmatprep.subr.mxu0 0.0
        %7721 = vmatpush1.xpose.msra.mxu0 0.0
        %7722 = vmatprep.subr.mxu0 0.0
        %7723 = vmatpush1.xpose.msra.mxu0 0.0
        %7724 = vmatprep.subr.mxu0 0.0
        %7725 = vmatpush1.xpose.msra.mxu0 0.0
        %7726 = vmatprep.subr.mxu0 0.0
        %7727 = vmatpush1.xpose.msra.mxu0 0.0
        %7728 = vmatprep.subr.mxu0 0.0
        %7729 = vmatpush1.xpose.msra.mxu0 0.0
        %7730 = vmatprep.subr.mxu0 0.0
        %7731 = vmatpush1.xpose.msra.mxu0 0.0
        %7732 = vmatprep.subr.mxu0 0.0
        %7733 = vmatpush1.xpose.msra.mxu0 0.0
        %7734 = vmatprep.subr.mxu0 0.0
        %7735 = vmatpush1.xpose.msra.mxu0 0.0
        %7736 = vmatprep.subr.mxu0 0.0
        %7737 = vmatpush1.xpose.msra.mxu0 0.0
        %7738 = vmatprep.subr.mxu0 0.0
        %7739 = vmatpush1.xpose.msra.mxu0 0.0
        %7740 = vmatprep.subr.mxu0 0.0
        %7741 = vmatpush1.xpose.msra.mxu0 0.0
        %7742 = vmatprep.subr.mxu0 0.0
        %7743 = vmatpush1.xpose.msra.mxu0 0.0
        %7744 = vmatprep.subr.mxu0 0.0
        %7745 = vmatpush1.xpose.msra.mxu0 0.0
        %7746 = vmatprep.subr.mxu0 0.0
        %7747 = vmatpush1.xpose.msra.mxu0 0.0
        %7748 = vmatprep.subr.mxu0 0.0
        %7749 = vmatpush1.xpose.msra.mxu0 0.0
        %7750 = vmatprep.subr.mxu0 0.0
        %7751 = vmatpush1.xpose.msra.mxu0 0.0
        %7752 = vmatprep.subr.mxu0 0.0
        %7753 = vmatpush1.xpose.msra.mxu0 0.0
        %7754 = vmatprep.subr.mxu0 0.0
        %7755 = vmatpush1.xpose.msra.mxu0 0.0
        %7756 = vmatprep.subr.mxu0 0.0
        %7757 = vmatpush1.xpose.msra.mxu0 0.0
        %7758 = vmatprep.subr.mxu0 0.0
        %7759 = vmatpush1.xpose.msra.mxu0 0.0
        %7760 = vmatprep.subr.mxu0 0.0
        %7761 = vmatpush1.xpose.msra.mxu0 0.0
        %7762 = vmatprep.mubr.f32.mxu0 0.0
        %7763 = vmatmul.mubr.f32.gmra.mrb[0].mxu0 %v7694
        %v7764 = vpop.f32.mrb[0].mxu0
        %v7765 = vadd.f32 0.0, %v7764
        %v7766 = vpop.f32.mrb[0].mxu0
        %7767 = vdwg.mxu0
        %v7768 = vmul.f32 %v7765, 0.35355338
        %v7769 = vsel %vm4636, %v7768, -1000000.0
        %v7770 = vsel %vm874, %v7769, -inf
        %7771 = vmax.xlane.f32.xlu0 %v7770
        %v7772 = vpop.xlane.xlu0 %7771
        %v7773 = vsub.f32 %v7769, %v7772
        %v7774 = vmul.f32 %v7773, 1.442695
        %v7775 = vpow.pop %v7774
        %v7776 = vsel %vm874, %v7775, 0.0
        %7777 = vadd.xlane.f32.xlu0 %v7776
        %v7778 = vpop.xlane.xlu0 %7777
        %v7779 = vrcp.pop %v7778
        %v7780 = vmul.f32 %v7775, %v7779
        %7781 = vrot.lane.b32.xlu0 %v6963, 72
        %v7782 = vpop.permute.xlu0 %7781
        %v7785 = vsel %vm874, %v7780, 0
        %7787 = vmatprep.subr.mxu0 0.0
        %7788 = vmatpush1.msra.mxu0 %v7782
        %7789 = vmatprep.subr.mxu0 0.0
        %7790 = vmatpush1.msra.mxu0 0.0
        %7791 = vmatprep.subr.mxu0 0.0
        %7792 = vmatpush1.msra.mxu0 0.0
        %7793 = vmatprep.subr.mxu0 0.0
        %7794 = vmatpush1.msra.mxu0 0.0
        %7795 = vmatprep.subr.mxu0 0.0
        %7796 = vmatpush1.msra.mxu0 0.0
        %7797 = vmatprep.subr.mxu0 0.0
        %7798 = vmatpush1.msra.mxu0 0.0
        %7799 = vmatprep.subr.mxu0 0.0
        %7800 = vmatpush1.msra.mxu0 0.0
        %7801 = vmatprep.subr.mxu0 0.0
        %7802 = vmatpush1.msra.mxu0 0.0
        %7803 = vmatprep.subr.mxu0 0.0
        %7804 = vmatpush1.msra.mxu0 0.0
        %7805 = vmatprep.subr.mxu0 0.0
        %7806 = vmatpush1.msra.mxu0 0.0
        %7807 = vmatprep.subr.mxu0 0.0
        %7808 = vmatpush1.msra.mxu0 0.0
        %7809 = vmatprep.subr.mxu0 0.0
        %7810 = vmatpush1.msra.mxu0 0.0
        %7811 = vmatprep.subr.mxu0 0.0
        %7812 = vmatpush1.msra.mxu0 0.0
        %7813 = vmatprep.subr.mxu0 0.0
        %7814 = vmatpush1.msra.mxu0 0.0
        %7815 = vmatprep.subr.mxu0 0.0
        %7816 = vmatpush1.msra.mxu0 0.0
        %7817 = vmatprep.subr.mxu0 0.0
        %7818 = vmatpush1.msra.mxu0 0.0
        %7819 = vmatprep.subr.mxu0 0.0
        %7820 = vmatpush1.msra.mxu0 0.0
        %7821 = vmatprep.subr.mxu0 0.0
        %7822 = vmatpush1.msra.mxu0 0.0
        %7823 = vmatprep.subr.mxu0 0.0
        %7824 = vmatpush1.msra.mxu0 0.0
        %7825 = vmatprep.subr.mxu0 0.0
        %7826 = vmatpush1.msra.mxu0 0.0
        %7827 = vmatprep.subr.mxu0 0.0
        %7828 = vmatpush1.msra.mxu0 0.0
        %7829 = vmatprep.subr.mxu0 0.0
        %7830 = vmatpush1.msra.mxu0 0.0
        %7831 = vmatprep.subr.mxu0 0.0
        %7832 = vmatpush1.msra.mxu0 0.0
        %7833 = vmatprep.subr.mxu0 0.0
        %7834 = vmatpush1.msra.mxu0 0.0
        %7835 = vmatprep.subr.mxu0 0.0
        %7836 = vmatpush1.msra.mxu0 0.0
        %7837 = vmatprep.subr.mxu0 0.0
        %7838 = vmatpush1.msra.mxu0 0.0
        %7839 = vmatprep.subr.mxu0 0.0
        %7840 = vmatpush1.msra.mxu0 0.0
        %7841 = vmatprep.subr.mxu0 0.0
        %7842 = vmatpush1.msra.mxu0 0.0
        %7843 = vmatprep.subr.mxu0 0.0
        %7844 = vmatpush1.msra.mxu0 0.0
        %7845 = vmatprep.subr.mxu0 0.0
        %7846 = vmatpush1.msra.mxu0 0.0
        %7847 = vmatprep.subr.mxu0 0.0
        %7848 = vmatpush1.msra.mxu0 0.0
        %7849 = vmatprep.subr.mxu0 0.0
        %7850 = vmatpush1.msra.mxu0 0.0
        %7851 = vmatprep.mubr.f32.mxu0 0.0
        %7852 = vmatmul.mubr.f32.gmra.mrb[0].mxu0 %v7785
        %v7853 = vpop.f32.mrb[0].mxu0
        %v7854 = vadd.f32 0.0, %v7853
        %v7855 = vpop.f32.mrb[0].mxu0
        %7856 = vdwg.mxu0
        %v7858 = vsel %vm874, %v7854, 0
        %7860 = vmatprep.subr.mxu0 0.0
        %7861 = vmatpush1.msra.mxu0 %v6970
        %7862 = vmatprep.subr.mxu0 0.0
        %7863 = vmatpush1.msra.mxu0 0.0
        %7864 = vmatprep.subr.mxu0 0.0
        %7865 = vmatpush1.msra.mxu0 0.0
        %7866 = vmatprep.subr.mxu0 0.0
        %7867 = vmatpush1.msra.mxu0 0.0
        %7868 = vmatprep.subr.mxu0 0.0
        %7869 = vmatpush1.msra.mxu0 0.0
        %7870 = vmatprep.subr.mxu0 0.0
        %7871 = vmatpush1.msra.mxu0 0.0
        %7872 = vmatprep.subr.mxu0 0.0
        %7873 = vmatpush1.msra.mxu0 0.0
        %7874 = vmatprep.subr.mxu0 0.0
        %7875 = vmatpush1.msra.mxu0 0.0
        %7876 = vmatprep.subr.mxu0 0.0
        %7877 = vmatpush1.msra.mxu0 0.0
        %7878 = vmatprep.subr.mxu0 0.0
        %7879 = vmatpush1.msra.mxu0 0.0
        %7880 = vmatprep.subr.mxu0 0.0
        %7881 = vmatpush1.msra.mxu0 0.0
        %7882 = vmatprep.subr.mxu0 0.0
        %7883 = vmatpush1.msra.mxu0 0.0
        %7884 = vmatprep.subr.mxu0 0.0
        %7885 = vmatpush1.msra.mxu0 0.0
        %7886 = vmatprep.subr.mxu0 0.0
        %7887 = vmatpush1.msra.mxu0 0.0
        %7888 = vmatprep.subr.mxu0 0.0
        %7889 = vmatpush1.msra.mxu0 0.0
        %7890 = vmatprep.subr.mxu0 0.0
        %7891 = vmatpush1.msra.mxu0 0.0
        %7892 = vmatprep.subr.mxu0 0.0
        %7893 = vmatpush1.msra.mxu0 0.0
        %7894 = vmatprep.subr.mxu0 0.0
        %7895 = vmatpush1.msra.mxu0 0.0
        %7896 = vmatprep.subr.mxu0 0.0
        %7897 = vmatpush1.msra.mxu0 0.0
        %7898 = vmatprep.subr.mxu0 0.0
        %7899 = vmatpush1.msra.mxu0 0.0
        %7900 = vmatprep.subr.mxu0 0.0
        %7901 = vmatpush1.msra.mxu0 0.0
        %7902 = vmatprep.subr.mxu0 0.0
        %7903 = vmatpush1.msra.mxu0 0.0
        %7904 = vmatprep.subr.mxu0 0.0
        %7905 = vmatpush1.msra.mxu0 0.0
        %7906 = vmatprep.subr.mxu0 0.0
        %7907 = vmatpush1.msra.mxu0 0.0
        %7908 = vmatprep.subr.mxu0 0.0
        %7909 = vmatpush1.msra.mxu0 0.0
        %7910 = vmatprep.subr.mxu0 0.0
        %7911 = vmatpush1.msra.mxu0 0.0
        %7912 = vmatprep.subr.mxu0 0.0
        %7913 = vmatpush1.msra.mxu0 0.0
        %7914 = vmatprep.subr.mxu0 0.0
        %7915 = vmatpush1.msra.mxu0 0.0
        %7916 = vmatprep.subr.mxu0 0.0
        %7917 = vmatpush1.msra.mxu0 0.0
        %7918 = vmatprep.subr.mxu0 0.0
        %7919 = vmatpush1.msra.mxu0 0.0
        %7920 = vmatprep.subr.mxu0 0.0
        %7921 = vmatpush1.msra.mxu0 0.0
        %7922 = vmatprep.subr.mxu0 0.0
        %7923 = vmatpush1.msra.mxu0 0.0
        %7924 = vmatprep.mubr.f32.mxu0 0.0
        %7925 = vmatmul.mubr.f32.gmra.mrb[0].mxu0 %v7858
        %v7926 = vpop.f32.mrb[0].mxu0
        %v7927 = vadd.f32 0.0, %v7926
        %v7928 = vpop.f32.mrb[0].mxu0
        %7929 = vdwg.mxu0
        %v7930 = vadd.f32 %v7689, %v7927
        %v7931 = vadd.f32 %v6812, %v7930
        %v7932 = vsel %vm793, %v7931, 0.0
        %7933 = vadd.xlane.f32.xlu0 %v7932
        %v7934 = vpop.xlane.xlu0 %7933
        %v7935 = vmul.f32 %v7934, %v1838
        %v7936 = vsub.f32 %v7931, %v7935
        %v7937 = vmul.f32 %v7936, %v7936
        %v7938 = vsel %vm793, %v7937, 0.0
        %7939 = vadd.xlane.f32.xlu0 %v7938
        %v7940 = vpop.xlane.xlu0 %7939
        %v7941 = vmul.f32 %v7940, %v1838
        %v7942 = vadd.f32 %v7941, 1e-05
        %v7943 = vrsqrt.pop %v7942
        %v7944 = vmul.f32 %v7936, %v7943
        %v7945 = vlaneseq
        %v7946 = vshrl.u32 %v7945, 7
        %v7947 = vsub.s32 2, %v7946
        %v7948 = vrot.slane %v5744, %v7947
        %v7949 = vmul.f32 %v7944, %v7948
        %v7950 = vlaneseq
        %v7951 = vshrl.u32 %v7950, 7
        %v7952 = vsub.s32 3, %v7951
        %v7953 = vrot.slane %v5744, %v7952
        %v7954 = vadd.f32 %v7949, %v7953
        %s7955 = scalar_lea.vmem %s18, 32
        %v7956 = vld [vmem:[%s7955] sm:$0xff]
        %v7957 = vld [vmem:[%s7955 + $0x8] sm:$0xff]
        %v7958 = vld [vmem:[%s7955 + $0x10] sm:$0xff]
        %v7959 = vld [vmem:[%s7955 + $0x18] sm:$0xff]
        %s7960 = scalar_lea.vmem %s19, 1
        %v7961 = vld [vmem:[%s7960] sm:$0x1]
        %s7962 = scalar_lea.vmem %s20, 64
        %v7963 = vld [vmem:[%s7962] sm:$0xff]
        %v7964 = vld [vmem:[%s7962 + $0x8] sm:$0xff]
        %v7965 = vld [vmem:[%s7962 + $0x10] sm:$0xff]
        %v7966 = vld [vmem:[%s7962 + $0x18] sm:$0xff]
        %v7967 = vld [vmem:[%s7962 + $0x20] sm:$0xff]
        %v7968 = vld [vmem:[%s7962 + $0x28] sm:$0xff]
        %v7969 = vld [vmem:[%s7962 + $0x30] sm:$0xff]
        %v7970 = vld [vmem:[%s7962 + $0x38] sm:$0xff]
        %s7971 = scalar_lea.vmem %s21, 1
        %v7972 = vld [vmem:[%s7971] sm:$0x1]
        %v7974 = vlaneseq
        %v7975 = vshrl.u32 %v7974, 7
        %v7976 = vsub.s32 0, %v7975
        %v7977 = vrot.slane %v7961, %v7976
        %v7980 = vsel %vm793, %v7954, 0
        %7982 = vmatprep.subr.mxu0 0.0
        %7983 = vmatpush1.msra.mxu0 %v7956
        %7984 = vmatprep.subr.mxu0 0.0
        %7985 = vmatpush1.msra.mxu0 %v7957
        %7986 = vmatprep.subr.mxu0 0.0
        %7987 = vmatpush1.msra.mxu0 %v7958
        %7988 = vmatprep.subr.mxu0 0.0
        %7989 = vmatpush1.msra.mxu0 %v7959
        %7990 = vmatprep.subr.mxu0 0.0
        %7991 = vmatpush1.msra.mxu0 0.0
        %7992 = vmatprep.subr.mxu0 0.0
        %7993 = vmatpush1.msra.mxu0 0.0
        %7994 = vmatprep.subr.mxu0 0.0
        %7995 = vmatpush1.msra.mxu0 0.0
        %7996 = vmatprep.subr.mxu0 0.0
        %7997 = vmatpush1.msra.mxu0 0.0
        %7998 = vmatprep.subr.mxu0 0.0
        %7999 = vmatpush1.msra.mxu0 0.0
        %8000 = vmatprep.subr.mxu0 0.0
        %8001 = vmatpush1.msra.mxu0 0.0
        %8002 = vmatprep.subr.mxu0 0.0
        %8003 = vmatpush1.msra.mxu0 0.0
        %8004 = vmatprep.subr.mxu0 0.0
        %8005 = vmatpush1.msra.mxu0 0.0
        %8006 = vmatprep.subr.mxu0 0.0
        %8007 = vmatpush1.msra.mxu0 0.0
        %8008 = vmatprep.subr.mxu0 0.0
        %8009 = vmatpush1.msra.mxu0 0.0
        %8010 = vmatprep.subr.mxu0 0.0
        %8011 = vmatpush1.msra.mxu0 0.0
        %8012 = vmatprep.subr.mxu0 0.0
        %8013 = vmatpush1.msra.mxu0 0.0
        %8014 = vmatprep.subr.mxu0 0.0
        %8015 = vmatpush1.msra.mxu0 0.0
        %8016 = vmatprep.subr.mxu0 0.0
        %8017 = vmatpush1.msra.mxu0 0.0
        %8018 = vmatprep.subr.mxu0 0.0
        %8019 = vmatpush1.msra.mxu0 0.0
        %8020 = vmatprep.subr.mxu0 0.0
        %8021 = vmatpush1.msra.mxu0 0.0
        %8022 = vmatprep.subr.mxu0 0.0
        %8023 = vmatpush1.msra.mxu0 0.0
        %8024 = vmatprep.subr.mxu0 0.0
        %8025 = vmatpush1.msra.mxu0 0.0
        %8026 = vmatprep.subr.mxu0 0.0
        %8027 = vmatpush1.msra.mxu0 0.0
        %8028 = vmatprep.subr.mxu0 0.0
        %8029 = vmatpush1.msra.mxu0 0.0
        %8030 = vmatprep.subr.mxu0 0.0
        %8031 = vmatpush1.msra.mxu0 0.0
        %8032 = vmatprep.subr.mxu0 0.0
        %8033 = vmatpush1.msra.mxu0 0.0
        %8034 = vmatprep.subr.mxu0 0.0
        %8035 = vmatpush1.msra.mxu0 0.0
        %8036 = vmatprep.subr.mxu0 0.0
        %8037 = vmatpush1.msra.mxu0 0.0
        %8038 = vmatprep.subr.mxu0 0.0
        %8039 = vmatpush1.msra.mxu0 0.0
        %8040 = vmatprep.subr.mxu0 0.0
        %8041 = vmatpush1.msra.mxu0 0.0
        %8042 = vmatprep.subr.mxu0 0.0
        %8043 = vmatpush1.msra.mxu0 0.0
        %8044 = vmatprep.subr.mxu0 0.0
        %8045 = vmatpush1.msra.mxu0 0.0
        %8046 = vmatprep.mubr.f32.mxu0 0.0
        %8047 = vmatmul.mubr.f32.gmra.mrb[0].mxu0 %v7980
        %v8048 = vpop.f32.mrb[0].mxu0
        %v8049 = vadd.f32 %v7977, %v8048
        %v8050 = vpop.f32.mrb[0].mxu0
        %8051 = vdwg.mxu0
        %vm8052 = vcmp.gt.f32.partialorder %v8049, 0.0
        %v8053 = vmul.f32 %v8049, 0.01
        %v8054 = vsel %vm8052, %v8049, %v8053
        %v8056 = vlaneseq
        %v8057 = vshrl.u32 %v8056, 7
        %v8058 = vsub.s32 0, %v8057
        %v8059 = vrot.slane %v7972, %v8058
        %v8062 = vsel %vm1961, %v8054, 0
        %8064 = vmatprep.subr.mxu0 0.0
        %8065 = vmatpush1.msra.mxu0 %v7963
        %8066 = vmatprep.subr.mxu0 0.0
        %8067 = vmatpush1.msra.mxu0 %v7964
        %8068 = vmatprep.subr.mxu0 0.0
        %8069 = vmatpush1.msra.mxu0 %v7965
        %8070 = vmatprep.subr.mxu0 0.0
        %8071 = vmatpush1.msra.mxu0 %v7966
        %8072 = vmatprep.subr.mxu0 0.0
        %8073 = vmatpush1.msra.mxu0 %v7967
        %8074 = vmatprep.subr.mxu0 0.0
        %8075 = vmatpush1.msra.mxu0 %v7968
        %8076 = vmatprep.subr.mxu0 0.0
        %8077 = vmatpush1.msra.mxu0 %v7969
        %8078 = vmatprep.subr.mxu0 0.0
        %8079 = vmatpush1.msra.mxu0 %v7970
        %8080 = vmatprep.subr.mxu0 0.0
        %8081 = vmatpush1.msra.mxu0 0.0
        %8082 = vmatprep.subr.mxu0 0.0
        %8083 = vmatpush1.msra.mxu0 0.0
        %8084 = vmatprep.subr.mxu0 0.0
        %8085 = vmatpush1.msra.mxu0 0.0
        %8086 = vmatprep.subr.mxu0 0.0
        %8087 = vmatpush1.msra.mxu0 0.0
        %8088 = vmatprep.subr.mxu0 0.0
        %8089 = vmatpush1.msra.mxu0 0.0
        %8090 = vmatprep.subr.mxu0 0.0
        %8091 = vmatpush1.msra.mxu0 0.0
        %8092 = vmatprep.subr.mxu0 0.0
        %8093 = vmatpush1.msra.mxu0 0.0
        %8094 = vmatprep.subr.mxu0 0.0
        %8095 = vmatpush1.msra.mxu0 0.0
        %8096 = vmatprep.subr.mxu0 0.0
        %8097 = vmatpush1.msra.mxu0 0.0
        %8098 = vmatprep.subr.mxu0 0.0
        %8099 = vmatpush1.msra.mxu0 0.0
        %8100 = vmatprep.subr.mxu0 0.0
        %8101 = vmatpush1.msra.mxu0 0.0
        %8102 = vmatprep.subr.mxu0 0.0
        %8103 = vmatpush1.msra.mxu0 0.0
        %8104 = vmatprep.subr.mxu0 0.0
        %8105 = vmatpush1.msra.mxu0 0.0
        %8106 = vmatprep.subr.mxu0 0.0
        %8107 = vmatpush1.msra.mxu0 0.0
        %8108 = vmatprep.subr.mxu0 0.0
        %8109 = vmatpush1.msra.mxu0 0.0
        %8110 = vmatprep.subr.mxu0 0.0
        %8111 = vmatpush1.msra.mxu0 0.0
        %8112 = vmatprep.subr.mxu0 0.0
        %8113 = vmatpush1.msra.mxu0 0.0
        %8114 = vmatprep.subr.mxu0 0.0
        %8115 = vmatpush1.msra.mxu0 0.0
        %8116 = vmatprep.subr.mxu0 0.0
        %8117 = vmatpush1.msra.mxu0 0.0
        %8118 = vmatprep.subr.mxu0 0.0
        %8119 = vmatpush1.msra.mxu0 0.0
        %8120 = vmatprep.subr.mxu0 0.0
        %8121 = vmatpush1.msra.mxu0 0.0
        %8122 = vmatprep.subr.mxu0 0.0
        %8123 = vmatpush1.msra.mxu0 0.0
        %8124 = vmatprep.subr.mxu0 0.0
        %8125 = vmatpush1.msra.mxu0 0.0
        %8126 = vmatprep.subr.mxu0 0.0
        %8127 = vmatpush1.msra.mxu0 0.0
        %8128 = vmatprep.mubr.f32.mxu0 0.0
        %8129 = vmatmul.mubr.f32.gmra.mrb[0].mxu0 %v8062
        %v8130 = vpop.f32.mrb[0].mxu0
        %v8131 = vadd.f32 %v8059, %v8130
        %v8132 = vpop.f32.mrb[0].mxu0
        %8133 = vdwg.mxu0
        %v8134 = vadd.f32 %v7954, %v8131
        %v8135 = vsel %vm793, %v8134, 0.0
        %8136 = vadd.xlane.f32.xlu0 %v8135
        %v8137 = vpop.xlane.xlu0 %8136
        %v8138 = vmul.f32 %v8137, %v1838
        %v8139 = vsub.f32 %v8134, %v8138
        %v8140 = vmul.f32 %v8139, %v8139
        %v8141 = vsel %vm793, %v8140, 0.0
        %8142 = vadd.xlane.f32.xlu0 %v8141
        %v8143 = vpop.xlane.xlu0 %8142
        %v8144 = vmul.f32 %v8143, %v1838
        %v8145 = vadd.f32 %v8144, 1e-05
        %v8146 = vrsqrt.pop %v8145
        %v8147 = vmul.f32 %v8139, %v8146
        %v8148 = vlaneseq
        %v8149 = vshrl.u32 %v8148, 7
        %v8150 = vsub.s32 4, %v8149
        %v8151 = vrot.slane %v5744, %v8150
        %v8152 = vmul.f32 %v8147, %v8151
        %v8153 = vlaneseq
        %v8154 = vshrl.u32 %v8153, 7
        %v8155 = vsub.s32 5, %v8154
        %v8156 = vrot.slane %v5744, %v8155
        %v8157 = vadd.f32 %v8152, %v8156
        %v8158 = vld [vmem:[%s22] sm:$0xff]
        %v8159 = vld [vmem:[%s22 + $0x8] sm:$0xff]
        %v8160 = vld [vmem:[%s22 + $0x10] sm:$0xff]
        %v8161 = vld [vmem:[%s22 + $0x18] sm:$0xff]
        %v8162 = vld [vmem:[%s23] sm:$0x1]
        %v8164 = vlaneseq
        %v8165 = vshrl.u32 %v8164, 7
        %v8166 = vsub.s32 0, %v8165
        %v8167 = vrot.slane %v8162, %v8166
        %v8170 = vsel %vm793, %v8157, 0
        %8172 = vmatprep.subr.mxu0 0.0
        %8173 = vmatpush1.msra.mxu0 %v8158
        %8174 = vmatprep.subr.mxu0 0.0
        %8175 = vmatpush1.msra.mxu0 %v8159
        %8176 = vmatprep.subr.mxu0 0.0
        %8177 = vmatpush1.msra.mxu0 %v8160
        %8178 = vmatprep.subr.mxu0 0.0
        %8179 = vmatpush1.msra.mxu0 %v8161
        %8180 = vmatprep.subr.mxu0 0.0
        %8181 = vmatpush1.msra.mxu0 0.0
        %8182 = vmatprep.subr.mxu0 0.0
        %8183 = vmatpush1.msra.mxu0 0.0
        %8184 = vmatprep.subr.mxu0 0.0
        %8185 = vmatpush1.msra.mxu0 0.0
        %8186 = vmatprep.subr.mxu0 0.0
        %8187 = vmatpush1.msra.mxu0 0.0
        %8188 = vmatprep.subr.mxu0 0.0
        %8189 = vmatpush1.msra.mxu0 0.0
        %8190 = vmatprep.subr.mxu0 0.0
        %8191 = vmatpush1.msra.mxu0 0.0
        %8192 = vmatprep.subr.mxu0 0.0
        %8193 = vmatpush1.msra.mxu0 0.0
        %8194 = vmatprep.subr.mxu0 0.0
        %8195 = vmatpush1.msra.mxu0 0.0
        %8196 = vmatprep.subr.mxu0 0.0
        %8197 = vmatpush1.msra.mxu0 0.0
        %8198 = vmatprep.subr.mxu0 0.0
        %8199 = vmatpush1.msra.mxu0 0.0
        %8200 = vmatprep.subr.mxu0 0.0
        %8201 = vmatpush1.msra.mxu0 0.0
        %8202 = vmatprep.subr.mxu0 0.0
        %8203 = vmatpush1.msra.mxu0 0.0
        %8204 = vmatprep.subr.mxu0 0.0
        %8205 = vmatpush1.msra.mxu0 0.0
        %8206 = vmatprep.subr.mxu0 0.0
        %8207 = vmatpush1.msra.mxu0 0.0
        %8208 = vmatprep.subr.mxu0 0.0
        %8209 = vmatpush1.msra.mxu0 0.0
        %8210 = vmatprep.subr.mxu0 0.0
        %8211 = vmatpush1.msra.mxu0 0.0
        %8212 = vmatprep.subr.mxu0 0.0
        %8213 = vmatpush1.msra.mxu0 0.0
        %8214 = vmatprep.subr.mxu0 0.0
        %8215 = vmatpush1.msra.mxu0 0.0
        %8216 = vmatprep.subr.mxu0 0.0
        %8217 = vmatpush1.msra.mxu0 0.0
        %8218 = vmatprep.subr.mxu0 0.0
        %8219 = vmatpush1.msra.mxu0 0.0
        %8220 = vmatprep.subr.mxu0 0.0
        %8221 = vmatpush1.msra.mxu0 0.0
        %8222 = vmatprep.subr.mxu0 0.0
        %8223 = vmatpush1.msra.mxu0 0.0
        %8224 = vmatprep.subr.mxu0 0.0
        %8225 = vmatpush1.msra.mxu0 0.0
        %8226 = vmatprep.subr.mxu0 0.0
        %8227 = vmatpush1.msra.mxu0 0.0
        %8228 = vmatprep.subr.mxu0 0.0
        %8229 = vmatpush1.msra.mxu0 0.0
        %8230 = vmatprep.subr.mxu0 0.0
        %8231 = vmatpush1.msra.mxu0 0.0
        %8232 = vmatprep.subr.mxu0 0.0
        %8233 = vmatpush1.msra.mxu0 0.0
        %8234 = vmatprep.subr.mxu0 0.0
        %8235 = vmatpush1.msra.mxu0 0.0
        %8236 = vmatprep.mubr.f32.mxu0 0.0
        %8237 = vmatmul.mubr.f32.gmra.mrb[0].mxu0 %v8170
        %v8238 = vpop.f32.mrb[0].mxu0
        %v8239 = vadd.f32 %v8167, %v8238
        %v8240 = vpop.f32.mrb[0].mxu0
        %8241 = vdwg.mxu0
        %8242 = vst [vmem:[%s767] sm:$0xff] %v8239
        %s8243 = sand.u32 %s570, 1
        %s8244 = scalar_lea.sflag [#allocation3], %s8243
        %s8245 = sand.u32 %s570, 1
        %s8246 = smul.addr %s8245, 8
        %s8247 = scalar_lea.vmem [#allocation2], %s8246
        // Predicated region
        $region117: #{transformer_forward.1} parent=115 // pred_check
          %p8248 = pneg %p580
        $region118: #{transformer_forward.1} parent=115 // pred_check_branch
          %8250 = sbr.rel (%p8248) target = $region120
        $region119: #{transformer_forward.1} parent=115 // pred_region
          %s8252 = ssub.s32 128, 128
          %8253 = vsyncadd %s8244, %s8252
          %s8254 = smul.addr %s38, 128
          %s8255 = scalar_lea.hbm %s24, %s8254
          %s8257 = sshll.u32 %s8247, 4
          %s8258 = int_to_ptr.vmem [resolvable:$true] %s8257
          %8260 = dma.vmem_to_hbm [thread:$0]  %s8258, 128, %s8255, %s8244
        $region120: #{transformer_forward.1} parent=115 // pred_fallthru
          _
      $region116: #{transformer_forward.1} parent=5 // pred_fallthru
        _
      %p8261 = scmp.le.s32.totalorder 2, %s33
      // Predicated region
      $region121: #{transformer_forward.1} parent=5 // pred_check
        %p8262 = pneg %p8261
      $region122: #{transformer_forward.1} parent=5 // pred_check_branch
        %8264 = sbr.rel (%p8262) target = $region124
      $region123: #{transformer_forward.1} parent=5 // pred_region
        %s8265 = ssub.s32 %s33, 2
        // Predicated region
        $region125: #{transformer_forward.1} parent=123 // pred_check
          %p8266 = pneg %p586
        $region126: #{transformer_forward.1} parent=123 // pred_check_branch
          %8268 = sbr.rel (%p8266) target = $region128
        $region127: #{transformer_forward.1} parent=123 // pred_region
          %s8269 = sand.u32 %s571, 1
          %s8270 = scalar_lea.sflag [#allocation3], %s8269
          %s8271 = sand.u32 %s571, 1
          %s8272 = smul.addr %s8271, 8
          %s8273 = scalar_lea.vmem [#allocation2], %s8272
          %8274 = dma.done %s8270, 128
        $region128: #{transformer_forward.1} parent=123 // pred_fallthru
          _
      $region124: #{transformer_forward.1} parent=5 // pred_fallthru
        _
    $region6: #{transformer_forward.1} parent=1 // loop_footer
      %s37 = sadd.s32 1, %s33
    $region7: #{transformer_forward.1} parent=1 // loop_footer_branch
      %32 = sbr.rel target = $region3
    $region8: #{transformer_forward.1} parent=1 // loop_exit
      _
    %8275 = vsyncpa [#allocation3], 1
    %s8276 = scalar_lea.sflag [#allocation3], 1
    %8277 = vsyncpa %s8276, 1

</llo_original>
